<compile_context>
chip_gen: v7x
topology: tpu7x:2x2x1
jax: 0.10.0
libtpu: 0.0.40
codegen_flags: <defaults>
</compile_context>

<pallas_src>
import functools

import jax
import jax.numpy as jnp
from jax import lax
from jax.experimental import pallas as pl
from jax.experimental.pallas import tpu as pltpu


# ----------------------------------------------------------------------------
# Fused Pallas kernel
# ----------------------------------------------------------------------------

def _const_spec(shape):
    """Whole (small) parameter array, replicated across the batch grid."""
    nd = len(shape)
    return pl.BlockSpec(tuple(shape), lambda b, _nd=nd: (0,) * _nd)


def sagcn_fused_kernel(x_ref, Ws_ref, bs_ref, Wtr_ref, btr_ref, Wg_ref,
                       cvec_ref, w3_ref, nvec_ref, Vw_ref, *rest,
                       dilations, l_in):
    """Full SAGCN forward for one batch element.

    Activation layout: (C, L*N), column = l*N + n  (l = time step, n = node).
    `rest` holds 6 unpadded per-layer constant refs (W2, K1, AK, lsel, msel, E)
    for each layer, followed by the output ref.
    """
    f32 = jnp.float32
    C = Ws_ref.shape[0]
    N = Vw_ref.shape[-1]

    o_ref = rest[-1]
    per_layer = rest[:-1]

    # ---- start 1x1 conv (BatchNorm folded into the weights by the wrapper) ----
    x = jnp.dot(Ws_ref[...], x_ref[0], preferred_element_type=f32) + bs_ref[...]

    Lin = l_in
    for i, d in enumerate(dilations):                                # static unroll
        Lout = Lin - d
        LN = Lout * N

        # ---- per-layer constants (all unpadded, precomputed host-side) ----------
        W2_r, K1_r, AK_r, lsel_r, msel_r, E_r = per_layer[6 * i: 6 * i + 6]
        W2 = W2_r[...]            # (Lout, C)
        K1 = K1_r[...]            # (LN, N)   = kron(W1, I_N)
        AK = AK_r[...]            # (LN, LN)  = kron(I_Lout, A)
        lsel = lsel_r[...]        # (Lout, LN) time-selector
        msel = msel_r[...]        # (LN, N)    node-selector
        E = E_r[...]              # (LN, LN)   block-diagonal mask

        Wtr = Wtr_ref[i]          # (2C, 2C) = [[Wt0, Wt1], [0, so*Wr]]
        btr = btr_ref[i]          # (2C, 1)  = [bt ; so*br + ho]
        Wg = Wg_ref[i]            # (C, 3C)  packed order-2 GCN mlp
        cv = cvec_ref[i]          # (C, 4) = [st ht bg so]
        st, ht, bg, so = cv[:, 0:1], cv[:, 1:2], cv[:, 2:3], cv[:, 3:4]
        w3r = w3_ref[i]           # (1, C)
        nv = nvec_ref[i]          # (7, N) = [s1 h1 s2 h2 s3 h3 Vb]
        s1, h1 = nv[0:1, :], nv[1:2, :]
        s2, h2 = nv[2:3, :], nv[3:4, :]
        s3, h3 = nv[4:5, :], nv[5:6, :]
        Vb = nv[6:7, :]
        Vw = Vw_ref[i]            # (N, N)

        # ---- temporal taps: contiguous column slices in the (C, L*N) layout ----
        tap0 = x[:, :LN]                      # time steps [0, Lout)
        tap1 = x[:, d * N:]                   # time steps [d, Lin)
        xt = jnp.concatenate([tap0, tap1], axis=0)                    # (2C, LN)

        # ---- fused dilated temporal conv + residual 1x1 conv (one MXU push) ----
        tr = jnp.dot(Wtr, xt, preferred_element_type=f32) + btr       # (2C, LN)
        t = tr[:C, :]
        r = tr[C:, :]                         # residual with layer BN folded in
        xg = jnp.maximum(t, 0.0) * st + ht                            # (C, LN)

        # ---- order-2 graph conv (adaptive support) as right-multiplies ----
        x1 = jnp.dot(xg, AK, preferred_element_type=f32)
        x2 = jnp.dot(x1, AK, preferred_element_type=f32)
        xh = jnp.dot(Wg, jnp.concatenate([xg, x1, x2], axis=0),
                     preferred_element_type=f32) + bg                 # (C, LN)

        # ---- spatial attention ----
        p1 = jnp.dot(xh, K1, preferred_element_type=f32) * s1 + h1    # (C, N)
        q = jnp.dot(W2, p1, preferred_element_type=f32) * s2 + h2     # (Lout, N)

        p2row = jnp.dot(w3r, xh, preferred_element_type=f32)          # (1, LN)
        p2 = jnp.dot(lsel * p2row, msel, preferred_element_type=f32)  # (Lout, N)
        p2 = p2 * s3 + h3

        sc = jnp.maximum(jnp.dot(q.T, p2, preferred_element_type=f32), 0.0)  # (N,N)
        sc = jnp.dot(sc, Vw.T, preferred_element_type=f32) + Vb
        sc = sc - jnp.max(sc, axis=-1, keepdims=True)
        e = jnp.exp(sc)
        S = e * pl.reciprocal(jnp.sum(e, axis=-1, keepdims=True), approx=True)

        # ---- apply attention: block-diag kron(I_Lout, S^T) via matmul expansion --
        sbig = jnp.dot(jnp.dot(msel, S.T, preferred_element_type=f32), msel.T,
                       preferred_element_type=f32)                    # (LN, LN)
        bd = E * sbig                                                 # block-diag
        xa = jnp.dot(xh, bd, preferred_element_type=f32)              # (C, LN)

        # ---- residual add (layer BN affine already folded into r / so) ----
        x = xa * so + r
        Lin = Lout

    # final activation is (C, N) (Lout == 1); store directly, transpose in wrapper
    o_ref[0] = x.astype(o_ref.dtype)


# ----------------------------------------------------------------------------
# Wrapper (single pallas_call for the whole forward pass)
# ----------------------------------------------------------------------------

def _run_fused(x2d, packed, dilations, l_in):
    B, F, LNin = x2d.shape
    C = packed['Ws'].shape[0]
    N = packed['Vw'].shape[-1]

    per_layer_flat = []
    for lp in packed['per_layer']:
        per_layer_flat += [lp['W2'], lp['K1'], lp['AK'],
                           lp['lsel'], lp['msel'], lp['E']]

    args = (x2d, packed['Ws'], packed['bs'], packed['Wtr'], packed['btr'],
            packed['Wg'], packed['cvec'], packed['w3'], packed['nvec'],
            packed['Vw'], *per_layer_flat)

    kern = functools.partial(sagcn_fused_kernel, dilations=dilations, l_in=l_in)
    in_specs = [pl.BlockSpec((1, F, LNin), lambda b: (b, 0, 0))]
    in_specs += [_const_spec(a.shape) for a in args[1:]]

    out = pl.pallas_call(
        kern,
        out_shape=jax.ShapeDtypeStruct((B, C, N), jnp.float32),
        grid=(B,),
        in_specs=in_specs,
        out_specs=pl.BlockSpec((1, C, N), lambda b: (b, 0, 0)),
        compiler_params=pltpu.CompilerParams(dimension_semantics=("parallel",)),
    )(*args)
    return jnp.transpose(out, (0, 2, 1))          # (B, N, C)


@functools.partial(jax.jit, static_argnums=(2, 3))
def sagcn_forward(X, packed, dilations, receptive_field):
    """X: (B, num_nodes, window_len, in_features) -> (B, num_nodes, hidden)."""
    B, N, Lwin, F = X.shape
    rf = receptive_field
    assert Lwin <= rf, "module expects window_len <= receptive_field"
    x = jnp.transpose(X, (0, 3, 2, 1)).astype(jnp.float32)        # (B, F, Lwin, N)
    if Lwin < rf:
        x = jnp.pad(x, ((0, 0), (0, 0), (rf - Lwin, 0), (0, 0)))  # left-pad time
    L = x.shape[2]
    x = x.reshape(B, F, L * N)                                    # time-major flatten
    return _run_fused(x, packed, tuple(dilations), L)


# ----------------------------------------------------------------------------
# Parameter packing (fold BN, concat weights, precompute structural constants)
# ----------------------------------------------------------------------------

def pack_sagcn_params(raw):
    C = raw['start_w'].shape[0]
    N = raw['nodevec'].shape[0]
    dil = raw['dilations']
    rf = raw['receptive_field']

    # start conv with its BatchNorm folded in (exact: no nonlinearity in between)
    sc, sh = raw['start_sc'], raw['start_sh']
    Ws = raw['start_w'] * sc[:, None]
    bs = (sc * raw['start_b'] + sh)[:, None]

    # adaptive adjacency: softmax(relu(nodevec @ nodevec.T), dim=0) (parameter-only)
    nv = raw['nodevec']
    A = jax.nn.softmax(jnp.maximum(nv @ nv.T, 0.0), axis=0)

    louts, Lin = [], rf
    for d in dil:
        Lin -= d
        louts.append(Lin)

    eyeN = jnp.eye(N, dtype=jnp.float32)

    Wtr, btr, Wg, cvec, w3, nvec, Vw, per_layer = [], [], [], [], [], [], [], []
    for i, lp in enumerate(raw['layers']):
        Lout = louts[i]
        LN = Lout * N
        so, ho = lp['so'], lp['ho']

        # fused temporal + residual weight; output-BN (so, ho) folded into residual
        Wr_f = lp['Wr'] * so[:, None]
        br_f = so * lp['br'] + ho
        Wtr.append(jnp.concatenate([
            jnp.concatenate([lp['Wt0'], lp['Wt1']], axis=1),
            jnp.concatenate([jnp.zeros((C, C), jnp.float32), Wr_f], axis=1)],
            axis=0))                                                  # (2C, 2C)
        btr.append(jnp.concatenate([lp['bt'], br_f], axis=0)[:, None])  # (2C, 1)

        Wg.append(jnp.concatenate([lp['Wg0'], lp['Wg1'], lp['Wg2']], axis=1))
        cvec.append(jnp.stack([lp['st'], lp['ht'], lp['bg'], so], axis=1))  # (C, 4)
        w3.append(lp['W3'][None, :])                                  # (1, C)
        nvec.append(jnp.stack([lp['s1'], lp['h1'], lp['s2'], lp['h2'],
                               lp['s3'], lp['h3'], lp['Vb']], axis=0))  # (7, N)
        Vw.append(lp['Vw'])

        # structural constants (unpadded, per layer)
        AK = jnp.kron(jnp.eye(Lout, dtype=jnp.float32), A)           # (LN, LN)
        K1 = jnp.kron(lp['W1'][:, None], eyeN)                       # (LN, N)
        jl = jnp.arange(LN) // N
        jm = jnp.arange(LN) % N
        lsel = (jl[None, :] == jnp.arange(Lout)[:, None]).astype(jnp.float32)
        msel = (jm[:, None] == jnp.arange(N)[None, :]).astype(jnp.float32)
        E = (jl[:, None] == jl[None, :]).astype(jnp.float32)
        per_layer.append(dict(W2=lp['W2'], K1=K1, AK=AK,
                              lsel=lsel, msel=msel, E=E))

    return dict(Ws=Ws, bs=bs, Wtr=jnp.stack(Wtr), btr=jnp.stack(btr),
                Wg=jnp.stack(Wg), cvec=jnp.stack(cvec), w3=jnp.stack(w3),
                nvec=jnp.stack(nvec), Vw=jnp.stack(Vw), per_layer=per_layer)


# ----------------------------------------------------------------------------
# Deterministic synthetic parameters (torch-layout raw weights)
# ----------------------------------------------------------------------------

def init_sagcn_params(key, num_nodes, in_features, hidden, layers=4, kernel_size=2):
    keys = iter(jax.random.split(key, 256))

    def nrm(shape, scale=0.1):
        return (scale * jax.random.normal(next(keys), shape)).astype(jnp.float32)

    def bn_affine(n):
        gamma = 1.0 + 0.1 * jax.random.normal(next(keys), (n,))
        beta = 0.1 * jax.random.normal(next(keys), (n,))
        mean = 0.1 * jax.random.normal(next(keys), (n,))
        var = jnp.abs(jax.random.normal(next(keys), (n,))) + 0.5
        scale = gamma / jnp.sqrt(var + 1e-5)
        shift = beta - mean * scale
        return scale.astype(jnp.float32), shift.astype(jnp.float32)

    dilations, d, rf, add = [], 1, 1, kernel_size - 1
    for _ in range(layers):
        dilations.append(d)
        rf += add
        add *= 2
        d *= 2

    C, N = hidden, num_nodes
    raw = {'receptive_field': rf, 'dilations': tuple(dilations)}
    raw['start_w'] = nrm((C, in_features))
    raw['start_b'] = nrm((C,))
    raw['start_sc'], raw['start_sh'] = bn_affine(C)
    raw['nodevec'] = jax.random.normal(next(keys), (N, 1)).astype(jnp.float32)

    lps, Lin = [], rf
    for i in range(layers):
        Lout = Lin - dilations[i]
        lp = {'Wr': nrm((C, C)), 'br': nrm((C,)),
              'Wt0': nrm((C, C)), 'Wt1': nrm((C, C)), 'bt': nrm((C,)),
              'Wg0': nrm((C, C)), 'Wg1': nrm((C, C)), 'Wg2': nrm((C, C)),
              'bg': nrm((C,)),
              'W1': nrm((Lout,)), 'W2': nrm((Lout, C)), 'W3': nrm((C,)),
              'Vw': nrm((N, N)), 'Vb': nrm((N,))}
        lp['st'], lp['ht'] = bn_affine(C)
        lp['s1'], lp['h1'] = bn_affine(N)
        lp['s2'], lp['h2'] = bn_affine(N)
        lp['s3'], lp['h3'] = bn_affine(N)
        lp['so'], lp['ho'] = bn_affine(C)
        lps.append(lp)
        Lin = Lout
    raw['layers'] = lps
    return raw


# ----------------------------------------------------------------------------
# Plain-JAX reference (mirrors the torch module; eval-mode BN, dropout=identity)
# ----------------------------------------------------------------------------

def sagcn_reference(X, raw):
    hp = jax.lax.Precision.HIGHEST
    rf, dil = raw['receptive_field'], raw['dilations']
    x = jnp.transpose(X, (0, 3, 1, 2)).astype(jnp.float32)        # (B, F, N, L)
    if x.shape[-1] < rf:
        x = jnp.pad(x, ((0, 0), (0, 0), (0, 0), (rf - x.shape[-1], 0)))

    def conv(W, v):
        return jnp.einsum('oc,bcnl->bonl', W, v, precision=hp)

    x = conv(raw['start_w'], x) + raw['start_b'][None, :, None, None]
    x = x * raw['start_sc'][None, :, None, None] + raw['start_sh'][None, :, None, None]
    nv = raw['nodevec']
    A = jax.nn.softmax(jnp.maximum(nv @ nv.T, 0.0), axis=0)

    for i, lp in enumerate(raw['layers']):
        d = dil[i]
        res = conv(lp['Wr'], x) + lp['br'][None, :, None, None]
        t = (conv(lp['Wt0'], x[..., :-d]) + conv(lp['Wt1'], x[..., d:])
             + lp['bt'][None, :, None, None])
        xg = (jnp.maximum(t, 0.0) * lp['st'][None, :, None, None]
              + lp['ht'][None, :, None, None])
        x1 = jnp.einsum('bcvl,vw->bcwl', xg, A, precision=hp)
        x2 = jnp.einsum('bcvl,vw->bcwl', x1, A, precision=hp)
        xh = (conv(lp['Wg0'], xg) + conv(lp['Wg1'], x1) + conv(lp['Wg2'], x2)
              + lp['bg'][None, :, None, None])
        p1 = jnp.einsum('bcnl,l->bnc', xh, lp['W1'], precision=hp)
        p1 = p1 * lp['s1'][None, :, None] + lp['h1'][None, :, None]
        p1 = jnp.einsum('bnc,lc->bnl', p1, lp['W2'], precision=hp)
        p1 = p1 * lp['s2'][None, :, None] + lp['h2'][None, :, None]
        p2 = jnp.einsum('bcnl,c->bnl', xh, lp['W3'], precision=hp)
        p2 = p2 * lp['s3'][None, :, None] + lp['h3'][None, :, None]
        p2 = jnp.transpose(p2, (0, 2, 1))
        z = jnp.maximum(jnp.einsum('bnl,blm->bnm', p1, p2, precision=hp), 0.0)
        z = jnp.einsum('bnm,km->bnk', z, lp['Vw'], precision=hp) + lp['Vb'][None, None, :]
        S = jax.nn.softmax(z, axis=-1)
        xh = jnp.einsum('bnm,bcml->bcnl', S, xh, precision=hp)
        x = xh + res[..., d:]
        x = x * lp['so'][None, :, None, None] + lp['ho'][None, :, None, None]
    return jnp.transpose(x[..., 0], (0, 2, 1))


# ----------------------------------------------------------------------------
# Main
# ----------------------------------------------------------------------------

if __name__ == "__main__":
    B, num_nodes, window_len, in_features, hidden = 2, 8, 12, 4, 32
    key = jax.random.PRNGKey(0)
    kp, kx = jax.random.split(key)
    raw = init_sagcn_params(kp, num_nodes, in_features, hidden,
                            layers=4, kernel_size=2)
    packed = pack_sagcn_params(raw)
    # torch-style input: (B, num_nodes, window_len, in_features)
    X = jax.random.normal(kx, (B, num_nodes, window_len, in_features),
                          dtype=jnp.float32)

    out = sagcn_forward(X, packed, raw['dilations'], raw['receptive_field'])
    jax.block_until_ready(out)
    assert out.shape == (B, num_nodes, hidden)

    # cross-check against the plain-JAX mirror of the torch module
    ref = sagcn_reference(X, raw)
    assert jnp.allclose(out, ref, rtol=5e-2, atol=5e-2), \
        float(jnp.max(jnp.abs(out - ref)))
    print("KERNEL_OK")
</pallas_src>

<mosaic_0001>
module attributes {stable_mosaic.version = 11 : i64} {
  func.func @sagcn_fused_kernel(%arg0: i32, %arg1: memref<1x4x128xf32, #tpu.memory_space<vmem>>, %arg2: memref<32x4xf32, #tpu.memory_space<vmem>>, %arg3: memref<32x1xf32, #tpu.memory_space<vmem>>, %arg4: memref<4x64x64xf32, #tpu.memory_space<vmem>>, %arg5: memref<4x64x1xf32, #tpu.memory_space<vmem>>, %arg6: memref<4x32x96xf32, #tpu.memory_space<vmem>>, %arg7: memref<4x32x4xf32, #tpu.memory_space<vmem>>, %arg8: memref<4x1x32xf32, #tpu.memory_space<vmem>>, %arg9: memref<4x7x8xf32, #tpu.memory_space<vmem>>, %arg10: memref<4x8x8xf32, #tpu.memory_space<vmem>>, %arg11: memref<15x32xf32, #tpu.memory_space<vmem>>, %arg12: memref<120x8xf32, #tpu.memory_space<vmem>>, %arg13: memref<120x120xf32, #tpu.memory_space<vmem>>, %arg14: memref<15x120xf32, #tpu.memory_space<vmem>>, %arg15: memref<120x8xf32, #tpu.memory_space<vmem>>, %arg16: memref<120x120xf32, #tpu.memory_space<vmem>>, %arg17: memref<13x32xf32, #tpu.memory_space<vmem>>, %arg18: memref<104x8xf32, #tpu.memory_space<vmem>>, %arg19: memref<104x104xf32, #tpu.memory_space<vmem>>, %arg20: memref<13x104xf32, #tpu.memory_space<vmem>>, %arg21: memref<104x8xf32, #tpu.memory_space<vmem>>, %arg22: memref<104x104xf32, #tpu.memory_space<vmem>>, %arg23: memref<9x32xf32, #tpu.memory_space<vmem>>, %arg24: memref<72x8xf32, #tpu.memory_space<vmem>>, %arg25: memref<72x72xf32, #tpu.memory_space<vmem>>, %arg26: memref<9x72xf32, #tpu.memory_space<vmem>>, %arg27: memref<72x8xf32, #tpu.memory_space<vmem>>, %arg28: memref<72x72xf32, #tpu.memory_space<vmem>>, %arg29: memref<1x32xf32, #tpu.memory_space<vmem>>, %arg30: memref<8x8xf32, #tpu.memory_space<vmem>>, %arg31: memref<8x8xf32, #tpu.memory_space<vmem>>, %arg32: memref<1x8xf32, #tpu.memory_space<vmem>>, %arg33: memref<8x8xf32, #tpu.memory_space<vmem>>, %arg34: memref<8x8xf32, #tpu.memory_space<vmem>>, %arg35: memref<1x32x8xf32, #tpu.memory_space<vmem>>) attributes {dimension_semantics = [#tpu.dimension_semantics<parallel>], iteration_bounds = array<i64: 2>, scalar_prefetch = 0 : i64, scratch_operands = 0 : i64, tpu.core_type = #tpu.core_type<tc>, window_params = [{transform_indices = @transform_0, window_bounds = array<i64: 1, 4, 128>}, {pipeline_mode = #tpu.pipeline_mode<synchronous>, transform_indices = @transform_1, window_bounds = array<i64: 32, 4>}, {pipeline_mode = #tpu.pipeline_mode<synchronous>, transform_indices = @transform_2, window_bounds = array<i64: 32, 1>}, {pipeline_mode = #tpu.pipeline_mode<synchronous>, transform_indices = @transform_3, window_bounds = array<i64: 4, 64, 64>}, {pipeline_mode = #tpu.pipeline_mode<synchronous>, transform_indices = @transform_4, window_bounds = array<i64: 4, 64, 1>}, {pipeline_mode = #tpu.pipeline_mode<synchronous>, transform_indices = @transform_5, window_bounds = array<i64: 4, 32, 96>}, {pipeline_mode = #tpu.pipeline_mode<synchronous>, transform_indices = @transform_6, window_bounds = array<i64: 4, 32, 4>}, {pipeline_mode = #tpu.pipeline_mode<synchronous>, transform_indices = @transform_7, window_bounds = array<i64: 4, 1, 32>}, {pipeline_mode = #tpu.pipeline_mode<synchronous>, transform_indices = @transform_8, window_bounds = array<i64: 4, 7, 8>}, {pipeline_mode = #tpu.pipeline_mode<synchronous>, transform_indices = @transform_9, window_bounds = array<i64: 4, 8, 8>}, {pipeline_mode = #tpu.pipeline_mode<synchronous>, transform_indices = @transform_10, window_bounds = array<i64: 15, 32>}, {pipeline_mode = #tpu.pipeline_mode<synchronous>, transform_indices = @transform_11, window_bounds = array<i64: 120, 8>}, {pipeline_mode = #tpu.pipeline_mode<synchronous>, transform_indices = @transform_12, window_bounds = array<i64: 120, 120>}, {pipeline_mode = #tpu.pipeline_mode<synchronous>, transform_indices = @transform_13, window_bounds = array<i64: 15, 120>}, {pipeline_mode = #tpu.pipeline_mode<synchronous>, transform_indices = @transform_14, window_bounds = array<i64: 120, 8>}, {pipeline_mode = #tpu.pipeline_mode<synchronous>, transform_indices = @transform_15, window_bounds = array<i64: 120, 120>}, {pipeline_mode = #tpu.pipeline_mode<synchronous>, transform_indices = @transform_16, window_bounds = array<i64: 13, 32>}, {pipeline_mode = #tpu.pipeline_mode<synchronous>, transform_indices = @transform_17, window_bounds = array<i64: 104, 8>}, {pipeline_mode = #tpu.pipeline_mode<synchronous>, transform_indices = @transform_18, window_bounds = array<i64: 104, 104>}, {pipeline_mode = #tpu.pipeline_mode<synchronous>, transform_indices = @transform_19, window_bounds = array<i64: 13, 104>}, {pipeline_mode = #tpu.pipeline_mode<synchronous>, transform_indices = @transform_20, window_bounds = array<i64: 104, 8>}, {pipeline_mode = #tpu.pipeline_mode<synchronous>, transform_indices = @transform_21, window_bounds = array<i64: 104, 104>}, {pipeline_mode = #tpu.pipeline_mode<synchronous>, transform_indices = @transform_22, window_bounds = array<i64: 9, 32>}, {pipeline_mode = #tpu.pipeline_mode<synchronous>, transform_indices = @transform_23, window_bounds = array<i64: 72, 8>}, {pipeline_mode = #tpu.pipeline_mode<synchronous>, transform_indices = @transform_24, window_bounds = array<i64: 72, 72>}, {pipeline_mode = #tpu.pipeline_mode<synchronous>, transform_indices = @transform_25, window_bounds = array<i64: 9, 72>}, {pipeline_mode = #tpu.pipeline_mode<synchronous>, transform_indices = @transform_26, window_bounds = array<i64: 72, 8>}, {pipeline_mode = #tpu.pipeline_mode<synchronous>, transform_indices = @transform_27, window_bounds = array<i64: 72, 72>}, {pipeline_mode = #tpu.pipeline_mode<synchronous>, transform_indices = @transform_28, window_bounds = array<i64: 1, 32>}, {pipeline_mode = #tpu.pipeline_mode<synchronous>, transform_indices = @transform_29, window_bounds = array<i64: 8, 8>}, {pipeline_mode = #tpu.pipeline_mode<synchronous>, transform_indices = @transform_30, window_bounds = array<i64: 8, 8>}, {pipeline_mode = #tpu.pipeline_mode<synchronous>, transform_indices = @transform_31, window_bounds = array<i64: 1, 8>}, {pipeline_mode = #tpu.pipeline_mode<synchronous>, transform_indices = @transform_32, window_bounds = array<i64: 8, 8>}, {pipeline_mode = #tpu.pipeline_mode<synchronous>, transform_indices = @transform_33, window_bounds = array<i64: 8, 8>}, {transform_indices = @transform_34, window_bounds = array<i64: 1, 32, 8>}]} {
    %c0 = arith.constant 0 : index
    %c0_0 = arith.constant 0 : index
    %0 = vector.load %arg2[%c0, %c0_0] : memref<32x4xf32, #tpu.memory_space<vmem>>, vector<32x4xf32>
    %c0_1 = arith.constant 0 : index
    %c0_2 = arith.constant 0 : index
    %c0_3 = arith.constant 0 : index
    %1 = vector.load %arg1[%c0_1, %c0_2, %c0_3] : memref<1x4x128xf32, #tpu.memory_space<vmem>>, vector<1x4x128xf32>
    %2 = vector.shape_cast %1 : vector<1x4x128xf32> to vector<4x128xf32>
    %cst = arith.constant dense<0.000000e+00> : vector<32x128xf32>
    %3 = tpu.matmul %0, %2, %cst {dimension_numbers = #tpu.dot_dimension_numbers<[1], [0], [0], [1], [0, 0, 1, 1], [], []>} : vector<32x4xf32>, vector<4x128xf32>, vector<32x128xf32> -> vector<32x128xf32>
    %c0_4 = arith.constant 0 : index
    %c0_5 = arith.constant 0 : index
    %4 = vector.load %arg3[%c0_4, %c0_5] : memref<32x1xf32, #tpu.memory_space<vmem>>, vector<32x1xf32>
    %5 = vector.broadcast %4 : vector<32x1xf32> to vector<32x128xf32>
    %6 = arith.addf %3, %5 : vector<32x128xf32>
    %c0_6 = arith.constant 0 : index
    %c0_7 = arith.constant 0 : index
    %7 = vector.load %arg11[%c0_6, %c0_7] : memref<15x32xf32, #tpu.memory_space<vmem>>, vector<15x32xf32>
    %c0_8 = arith.constant 0 : index
    %c0_9 = arith.constant 0 : index
    %8 = vector.load %arg12[%c0_8, %c0_9] : memref<120x8xf32, #tpu.memory_space<vmem>>, vector<120x8xf32>
    %c0_10 = arith.constant 0 : index
    %c0_11 = arith.constant 0 : index
    %9 = vector.load %arg13[%c0_10, %c0_11] : memref<120x120xf32, #tpu.memory_space<vmem>>, vector<120x120xf32>
    %c0_12 = arith.constant 0 : index
    %c0_13 = arith.constant 0 : index
    %10 = vector.load %arg14[%c0_12, %c0_13] : memref<15x120xf32, #tpu.memory_space<vmem>>, vector<15x120xf32>
    %c0_14 = arith.constant 0 : index
    %c0_15 = arith.constant 0 : index
    %11 = vector.load %arg15[%c0_14, %c0_15] : memref<120x8xf32, #tpu.memory_space<vmem>>, vector<120x8xf32>
    %c0_16 = arith.constant 0 : index
    %c0_17 = arith.constant 0 : index
    %12 = vector.load %arg16[%c0_16, %c0_17] : memref<120x120xf32, #tpu.memory_space<vmem>>, vector<120x120xf32>
    %c0_18 = arith.constant 0 : index
    %c0_19 = arith.constant 0 : index
    %c0_20 = arith.constant 0 : index
    %13 = vector.load %arg4[%c0_18, %c0_19, %c0_20] : memref<4x64x64xf32, #tpu.memory_space<vmem>>, vector<1x64x64xf32>
    %14 = vector.shape_cast %13 : vector<1x64x64xf32> to vector<64x64xf32>
    %c0_21 = arith.constant 0 : index
    %c0_22 = arith.constant 0 : index
    %c0_23 = arith.constant 0 : index
    %15 = vector.load %arg5[%c0_21, %c0_22, %c0_23] : memref<4x64x1xf32, #tpu.memory_space<vmem>>, vector<1x64x1xf32>
    %16 = vector.shape_cast %15 : vector<1x64x1xf32> to vector<64x1xf32>
    %c0_24 = arith.constant 0 : index
    %c0_25 = arith.constant 0 : index
    %c0_26 = arith.constant 0 : index
    %17 = vector.load %arg6[%c0_24, %c0_25, %c0_26] : memref<4x32x96xf32, #tpu.memory_space<vmem>>, vector<1x32x96xf32>
    %18 = vector.shape_cast %17 : vector<1x32x96xf32> to vector<32x96xf32>
    %c0_27 = arith.constant 0 : index
    %c0_28 = arith.constant 0 : index
    %c0_29 = arith.constant 0 : index
    %19 = vector.load %arg7[%c0_27, %c0_28, %c0_29] : memref<4x32x4xf32, #tpu.memory_space<vmem>>, vector<1x32x4xf32>
    %20 = vector.shape_cast %19 : vector<1x32x4xf32> to vector<32x4xf32>
    %21 = vector.extract_strided_slice %20 {offsets = [0, 0], sizes = [32, 1], strides = [1, 1]} : vector<32x4xf32> to vector<32x1xf32>
    %22 = vector.extract_strided_slice %20 {offsets = [0, 1], sizes = [32, 1], strides = [1, 1]} : vector<32x4xf32> to vector<32x1xf32>
    %23 = vector.extract_strided_slice %20 {offsets = [0, 2], sizes = [32, 1], strides = [1, 1]} : vector<32x4xf32> to vector<32x1xf32>
    %24 = vector.extract_strided_slice %20 {offsets = [0, 3], sizes = [32, 1], strides = [1, 1]} : vector<32x4xf32> to vector<32x1xf32>
    %c0_30 = arith.constant 0 : index
    %c0_31 = arith.constant 0 : index
    %c0_32 = arith.constant 0 : index
    %25 = vector.load %arg8[%c0_30, %c0_31, %c0_32] : memref<4x1x32xf32, #tpu.memory_space<vmem>>, vector<1x1x32xf32>
    %26 = vector.shape_cast %25 : vector<1x1x32xf32> to vector<1x32xf32>
    %c0_33 = arith.constant 0 : index
    %c0_34 = arith.constant 0 : index
    %c0_35 = arith.constant 0 : index
    %27 = vector.load %arg9[%c0_33, %c0_34, %c0_35] : memref<4x7x8xf32, #tpu.memory_space<vmem>>, vector<1x7x8xf32>
    %28 = vector.shape_cast %27 : vector<1x7x8xf32> to vector<7x8xf32>
    %29 = vector.extract_strided_slice %28 {offsets = [0, 0], sizes = [1, 8], strides = [1, 1]} : vector<7x8xf32> to vector<1x8xf32>
    %30 = vector.extract_strided_slice %28 {offsets = [1, 0], sizes = [1, 8], strides = [1, 1]} : vector<7x8xf32> to vector<1x8xf32>
    %31 = vector.extract_strided_slice %28 {offsets = [2, 0], sizes = [1, 8], strides = [1, 1]} : vector<7x8xf32> to vector<1x8xf32>
    %32 = vector.extract_strided_slice %28 {offsets = [3, 0], sizes = [1, 8], strides = [1, 1]} : vector<7x8xf32> to vector<1x8xf32>
    %33 = vector.extract_strided_slice %28 {offsets = [4, 0], sizes = [1, 8], strides = [1, 1]} : vector<7x8xf32> to vector<1x8xf32>
    %34 = vector.extract_strided_slice %28 {offsets = [5, 0], sizes = [1, 8], strides = [1, 1]} : vector<7x8xf32> to vector<1x8xf32>
    %35 = vector.extract_strided_slice %28 {offsets = [6, 0], sizes = [1, 8], strides = [1, 1]} : vector<7x8xf32> to vector<1x8xf32>
    %c0_36 = arith.constant 0 : index
    %c0_37 = arith.constant 0 : index
    %c0_38 = arith.constant 0 : index
    %36 = vector.load %arg10[%c0_36, %c0_37, %c0_38] : memref<4x8x8xf32, #tpu.memory_space<vmem>>, vector<1x8x8xf32>
    %37 = vector.shape_cast %36 : vector<1x8x8xf32> to vector<8x8xf32>
    %38 = vector.extract_strided_slice %6 {offsets = [0, 0], sizes = [32, 120], strides = [1, 1]} : vector<32x128xf32> to vector<32x120xf32>
    %39 = vector.extract_strided_slice %6 {offsets = [0, 8], sizes = [32, 120], strides = [1, 1]} : vector<32x128xf32> to vector<32x120xf32>
    %40 = tpu.concatenate %38, %39 in 0 : vector<32x120xf32>, vector<32x120xf32> -> vector<64x120xf32>
    %cst_39 = arith.constant dense<0.000000e+00> : vector<64x120xf32>
    %41 = tpu.matmul %14, %40, %cst_39 {dimension_numbers = #tpu.dot_dimension_numbers<[1], [0], [0], [1], [0, 0, 1, 1], [], []>} : vector<64x64xf32>, vector<64x120xf32>, vector<64x120xf32> -> vector<64x120xf32>
    %42 = vector.broadcast %16 : vector<64x1xf32> to vector<64x120xf32>
    %43 = arith.addf %41, %42 : vector<64x120xf32>
    %44 = vector.extract_strided_slice %43 {offsets = [0, 0], sizes = [32, 120], strides = [1, 1]} : vector<64x120xf32> to vector<32x120xf32>
    %45 = vector.extract_strided_slice %43 {offsets = [32, 0], sizes = [32, 120], strides = [1, 1]} : vector<64x120xf32> to vector<32x120xf32>
    %cst_40 = arith.constant 0.000000e+00 : f32
    %46 = vector.broadcast %cst_40 : f32 to vector<32x120xf32>
    %47 = arith.maximumf %44, %46 : vector<32x120xf32>
    %48 = vector.broadcast %21 : vector<32x1xf32> to vector<32x120xf32>
    %49 = arith.mulf %47, %48 : vector<32x120xf32>
    %50 = vector.broadcast %22 : vector<32x1xf32> to vector<32x120xf32>
    %51 = arith.addf %49, %50 : vector<32x120xf32>
    %cst_41 = arith.constant dense<0.000000e+00> : vector<32x120xf32>
    %52 = tpu.matmul %51, %9, %cst_41 {dimension_numbers = #tpu.dot_dimension_numbers<[1], [0], [0], [1], [0, 0, 1, 1], [], []>} : vector<32x120xf32>, vector<120x120xf32>, vector<32x120xf32> -> vector<32x120xf32>
    %cst_42 = arith.constant dense<0.000000e+00> : vector<32x120xf32>
    %53 = tpu.matmul %52, %9, %cst_42 {dimension_numbers = #tpu.dot_dimension_numbers<[1], [0], [0], [1], [0, 0, 1, 1], [], []>} : vector<32x120xf32>, vector<120x120xf32>, vector<32x120xf32> -> vector<32x120xf32>
    %54 = tpu.concatenate %51, %52, %53 in 0 : vector<32x120xf32>, vector<32x120xf32>, vector<32x120xf32> -> vector<96x120xf32>
    %cst_43 = arith.constant dense<0.000000e+00> : vector<32x120xf32>
    %55 = tpu.matmul %18, %54, %cst_43 {dimension_numbers = #tpu.dot_dimension_numbers<[1], [0], [0], [1], [0, 0, 1, 1], [], []>} : vector<32x96xf32>, vector<96x120xf32>, vector<32x120xf32> -> vector<32x120xf32>
    %56 = vector.broadcast %23 : vector<32x1xf32> to vector<32x120xf32>
    %57 = arith.addf %55, %56 : vector<32x120xf32>
    %cst_44 = arith.constant dense<0.000000e+00> : vector<32x8xf32>
    %58 = tpu.matmul %57, %8, %cst_44 {dimension_numbers = #tpu.dot_dimension_numbers<[1], [0], [0], [1], [0, 0, 1, 1], [], []>} : vector<32x120xf32>, vector<120x8xf32>, vector<32x8xf32> -> vector<32x8xf32>
    %59 = vector.broadcast %29 : vector<1x8xf32> to vector<32x8xf32>
    %60 = arith.mulf %58, %59 : vector<32x8xf32>
    %61 = vector.broadcast %30 : vector<1x8xf32> to vector<32x8xf32>
    %62 = arith.addf %60, %61 : vector<32x8xf32>
    %cst_45 = arith.constant dense<0.000000e+00> : vector<15x8xf32>
    %63 = tpu.matmul %7, %62, %cst_45 {dimension_numbers = #tpu.dot_dimension_numbers<[1], [0], [0], [1], [0, 0, 1, 1], [], []>} : vector<15x32xf32>, vector<32x8xf32>, vector<15x8xf32> -> vector<15x8xf32>
    %64 = vector.broadcast %31 : vector<1x8xf32> to vector<15x8xf32>
    %65 = arith.mulf %63, %64 : vector<15x8xf32>
    %66 = vector.broadcast %32 : vector<1x8xf32> to vector<15x8xf32>
    %67 = arith.addf %65, %66 : vector<15x8xf32>
    %cst_46 = arith.constant dense<0.000000e+00> : vector<1x120xf32>
    %68 = tpu.matmul %26, %57, %cst_46 {dimension_numbers = #tpu.dot_dimension_numbers<[1], [0], [0], [1], [0, 0, 1, 1], [], []>} : vector<1x32xf32>, vector<32x120xf32>, vector<1x120xf32> -> vector<1x120xf32>
    %69 = vector.broadcast %68 : vector<1x120xf32> to vector<15x120xf32>
    %70 = arith.mulf %10, %69 : vector<15x120xf32>
    %cst_47 = arith.constant dense<0.000000e+00> : vector<15x8xf32>
    %71 = tpu.matmul %70, %11, %cst_47 {dimension_numbers = #tpu.dot_dimension_numbers<[1], [0], [0], [1], [0, 0, 1, 1], [], []>} : vector<15x120xf32>, vector<120x8xf32>, vector<15x8xf32> -> vector<15x8xf32>
    %72 = vector.broadcast %33 : vector<1x8xf32> to vector<15x8xf32>
    %73 = arith.mulf %71, %72 : vector<15x8xf32>
    %74 = vector.broadcast %34 : vector<1x8xf32> to vector<15x8xf32>
    %75 = arith.addf %73, %74 : vector<15x8xf32>
    %76 = tpu.transpose %67, [1, 0] : vector<15x8xf32> -> vector<8x15xf32>
    %cst_48 = arith.constant dense<0.000000e+00> : vector<8x8xf32>
    %77 = tpu.matmul %76, %75, %cst_48 {dimension_numbers = #tpu.dot_dimension_numbers<[1], [0], [0], [1], [0, 0, 1, 1], [], []>} : vector<8x15xf32>, vector<15x8xf32>, vector<8x8xf32> -> vector<8x8xf32>
    %cst_49 = arith.constant 0.000000e+00 : f32
    %78 = vector.broadcast %cst_49 : f32 to vector<8x8xf32>
    %79 = arith.maximumf %77, %78 : vector<8x8xf32>
    %80 = tpu.transpose %37, [1, 0] : vector<8x8xf32> -> vector<8x8xf32>
    %cst_50 = arith.constant dense<0.000000e+00> : vector<8x8xf32>
    %81 = tpu.matmul %79, %80, %cst_50 {dimension_numbers = #tpu.dot_dimension_numbers<[1], [0], [0], [1], [0, 0, 1, 1], [], []>} : vector<8x8xf32>, vector<8x8xf32>, vector<8x8xf32> -> vector<8x8xf32>
    %82 = vector.broadcast %35 : vector<1x8xf32> to vector<8x8xf32>
    %83 = arith.addf %81, %82 : vector<8x8xf32>
    %cst_51 = arith.constant dense<0xFF800000> : vector<8xf32>
    %84 = vector.multi_reduction <maximumf>, %83, %cst_51 [1] : vector<8x8xf32> to vector<8xf32>
    %85 = vector.shape_cast %84 : vector<8xf32> to vector<8x1xf32>
    %86 = vector.broadcast %85 : vector<8x1xf32> to vector<8x8xf32>
    %87 = arith.subf %83, %86 : vector<8x8xf32>
    %88 = math.exp %87 : vector<8x8xf32>
    %cst_52 = arith.constant dense<0.000000e+00> : vector<8xf32>
    %89 = vector.multi_reduction <add>, %88, %cst_52 [1] : vector<8x8xf32> to vector<8xf32>
    %90 = vector.shape_cast %89 : vector<8xf32> to vector<8x1xf32>
    %91 = tpu.reciprocal %90 {approx = true} : vector<8x1xf32> -> vector<8x1xf32>
    %92 = vector.broadcast %91 : vector<8x1xf32> to vector<8x8xf32>
    %93 = arith.mulf %88, %92 : vector<8x8xf32>
    %94 = tpu.transpose %93, [1, 0] : vector<8x8xf32> -> vector<8x8xf32>
    %cst_53 = arith.constant dense<0.000000e+00> : vector<120x8xf32>
    %95 = tpu.matmul %11, %94, %cst_53 {dimension_numbers = #tpu.dot_dimension_numbers<[1], [0], [0], [1], [0, 0, 1, 1], [], []>} : vector<120x8xf32>, vector<8x8xf32>, vector<120x8xf32> -> vector<120x8xf32>
    %96 = tpu.transpose %11, [1, 0] : vector<120x8xf32> -> vector<8x120xf32>
    %cst_54 = arith.constant dense<0.000000e+00> : vector<120x120xf32>
    %97 = tpu.matmul %95, %96, %cst_54 {dimension_numbers = #tpu.dot_dimension_numbers<[1], [0], [0], [1], [0, 0, 1, 1], [], []>} : vector<120x8xf32>, vector<8x120xf32>, vector<120x120xf32> -> vector<120x120xf32>
    %98 = arith.mulf %12, %97 : vector<120x120xf32>
    %cst_55 = arith.constant dense<0.000000e+00> : vector<32x120xf32>
    %99 = tpu.matmul %57, %98, %cst_55 {dimension_numbers = #tpu.dot_dimension_numbers<[1], [0], [0], [1], [0, 0, 1, 1], [], []>} : vector<32x120xf32>, vector<120x120xf32>, vector<32x120xf32> -> vector<32x120xf32>
    %100 = vector.broadcast %24 : vector<32x1xf32> to vector<32x120xf32>
    %101 = arith.mulf %99, %100 : vector<32x120xf32>
    %102 = arith.addf %101, %45 : vector<32x120xf32>
    %c0_56 = arith.constant 0 : index
    %c0_57 = arith.constant 0 : index
    %103 = vector.load %arg17[%c0_56, %c0_57] : memref<13x32xf32, #tpu.memory_space<vmem>>, vector<13x32xf32>
    %c0_58 = arith.constant 0 : index
    %c0_59 = arith.constant 0 : index
    %104 = vector.load %arg18[%c0_58, %c0_59] : memref<104x8xf32, #tpu.memory_space<vmem>>, vector<104x8xf32>
    %c0_60 = arith.constant 0 : index
    %c0_61 = arith.constant 0 : index
    %105 = vector.load %arg19[%c0_60, %c0_61] : memref<104x104xf32, #tpu.memory_space<vmem>>, vector<104x104xf32>
    %c0_62 = arith.constant 0 : index
    %c0_63 = arith.constant 0 : index
    %106 = vector.load %arg20[%c0_62, %c0_63] : memref<13x104xf32, #tpu.memory_space<vmem>>, vector<13x104xf32>
    %c0_64 = arith.constant 0 : index
    %c0_65 = arith.constant 0 : index
    %107 = vector.load %arg21[%c0_64, %c0_65] : memref<104x8xf32, #tpu.memory_space<vmem>>, vector<104x8xf32>
    %c0_66 = arith.constant 0 : index
    %c0_67 = arith.constant 0 : index
    %108 = vector.load %arg22[%c0_66, %c0_67] : memref<104x104xf32, #tpu.memory_space<vmem>>, vector<104x104xf32>
    %c1 = arith.constant 1 : index
    %c0_68 = arith.constant 0 : index
    %c0_69 = arith.constant 0 : index
    %109 = vector.load %arg4[%c1, %c0_68, %c0_69] : memref<4x64x64xf32, #tpu.memory_space<vmem>>, vector<1x64x64xf32>
    %110 = vector.shape_cast %109 : vector<1x64x64xf32> to vector<64x64xf32>
    %c1_70 = arith.constant 1 : index
    %c0_71 = arith.constant 0 : index
    %c0_72 = arith.constant 0 : index
    %111 = vector.load %arg5[%c1_70, %c0_71, %c0_72] : memref<4x64x1xf32, #tpu.memory_space<vmem>>, vector<1x64x1xf32>
    %112 = vector.shape_cast %111 : vector<1x64x1xf32> to vector<64x1xf32>
    %c1_73 = arith.constant 1 : index
    %c0_74 = arith.constant 0 : index
    %c0_75 = arith.constant 0 : index
    %113 = vector.load %arg6[%c1_73, %c0_74, %c0_75] : memref<4x32x96xf32, #tpu.memory_space<vmem>>, vector<1x32x96xf32>
    %114 = vector.shape_cast %113 : vector<1x32x96xf32> to vector<32x96xf32>
    %c1_76 = arith.constant 1 : index
    %c0_77 = arith.constant 0 : index
    %c0_78 = arith.constant 0 : index
    %115 = vector.load %arg7[%c1_76, %c0_77, %c0_78] : memref<4x32x4xf32, #tpu.memory_space<vmem>>, vector<1x32x4xf32>
    %116 = vector.shape_cast %115 : vector<1x32x4xf32> to vector<32x4xf32>
    %117 = vector.extract_strided_slice %116 {offsets = [0, 0], sizes = [32, 1], strides = [1, 1]} : vector<32x4xf32> to vector<32x1xf32>
    %118 = vector.extract_strided_slice %116 {offsets = [0, 1], sizes = [32, 1], strides = [1, 1]} : vector<32x4xf32> to vector<32x1xf32>
    %119 = vector.extract_strided_slice %116 {offsets = [0, 2], sizes = [32, 1], strides = [1, 1]} : vector<32x4xf32> to vector<32x1xf32>
    %120 = vector.extract_strided_slice %116 {offsets = [0, 3], sizes = [32, 1], strides = [1, 1]} : vector<32x4xf32> to vector<32x1xf32>
    %c1_79 = arith.constant 1 : index
    %c0_80 = arith.constant 0 : index
    %c0_81 = arith.constant 0 : index
    %121 = vector.load %arg8[%c1_79, %c0_80, %c0_81] : memref<4x1x32xf32, #tpu.memory_space<vmem>>, vector<1x1x32xf32>
    %122 = vector.shape_cast %121 : vector<1x1x32xf32> to vector<1x32xf32>
    %c1_82 = arith.constant 1 : index
    %c0_83 = arith.constant 0 : index
    %c0_84 = arith.constant 0 : index
    %123 = vector.load %arg9[%c1_82, %c0_83, %c0_84] : memref<4x7x8xf32, #tpu.memory_space<vmem>>, vector<1x7x8xf32>
    %124 = vector.shape_cast %123 : vector<1x7x8xf32> to vector<7x8xf32>
    %125 = vector.extract_strided_slice %124 {offsets = [0, 0], sizes = [1, 8], strides = [1, 1]} : vector<7x8xf32> to vector<1x8xf32>
    %126 = vector.extract_strided_slice %124 {offsets = [1, 0], sizes = [1, 8], strides = [1, 1]} : vector<7x8xf32> to vector<1x8xf32>
    %127 = vector.extract_strided_slice %124 {offsets = [2, 0], sizes = [1, 8], strides = [1, 1]} : vector<7x8xf32> to vector<1x8xf32>
    %128 = vector.extract_strided_slice %124 {offsets = [3, 0], sizes = [1, 8], strides = [1, 1]} : vector<7x8xf32> to vector<1x8xf32>
    %129 = vector.extract_strided_slice %124 {offsets = [4, 0], sizes = [1, 8], strides = [1, 1]} : vector<7x8xf32> to vector<1x8xf32>
    %130 = vector.extract_strided_slice %124 {offsets = [5, 0], sizes = [1, 8], strides = [1, 1]} : vector<7x8xf32> to vector<1x8xf32>
    %131 = vector.extract_strided_slice %124 {offsets = [6, 0], sizes = [1, 8], strides = [1, 1]} : vector<7x8xf32> to vector<1x8xf32>
    %c1_85 = arith.constant 1 : index
    %c0_86 = arith.constant 0 : index
    %c0_87 = arith.constant 0 : index
    %132 = vector.load %arg10[%c1_85, %c0_86, %c0_87] : memref<4x8x8xf32, #tpu.memory_space<vmem>>, vector<1x8x8xf32>
    %133 = vector.shape_cast %132 : vector<1x8x8xf32> to vector<8x8xf32>
    %134 = vector.extract_strided_slice %102 {offsets = [0, 0], sizes = [32, 104], strides = [1, 1]} : vector<32x120xf32> to vector<32x104xf32>
    %135 = vector.extract_strided_slice %102 {offsets = [0, 16], sizes = [32, 104], strides = [1, 1]} : vector<32x120xf32> to vector<32x104xf32>
    %136 = tpu.concatenate %134, %135 in 0 : vector<32x104xf32>, vector<32x104xf32> -> vector<64x104xf32>
    %cst_88 = arith.constant dense<0.000000e+00> : vector<64x104xf32>
    %137 = tpu.matmul %110, %136, %cst_88 {dimension_numbers = #tpu.dot_dimension_numbers<[1], [0], [0], [1], [0, 0, 1, 1], [], []>} : vector<64x64xf32>, vector<64x104xf32>, vector<64x104xf32> -> vector<64x104xf32>
    %138 = vector.broadcast %112 : vector<64x1xf32> to vector<64x104xf32>
    %139 = arith.addf %137, %138 : vector<64x104xf32>
    %140 = vector.extract_strided_slice %139 {offsets = [0, 0], sizes = [32, 104], strides = [1, 1]} : vector<64x104xf32> to vector<32x104xf32>
    %141 = vector.extract_strided_slice %139 {offsets = [32, 0], sizes = [32, 104], strides = [1, 1]} : vector<64x104xf32> to vector<32x104xf32>
    %cst_89 = arith.constant 0.000000e+00 : f32
    %142 = vector.broadcast %cst_89 : f32 to vector<32x104xf32>
    %143 = arith.maximumf %140, %142 : vector<32x104xf32>
    %144 = vector.broadcast %117 : vector<32x1xf32> to vector<32x104xf32>
    %145 = arith.mulf %143, %144 : vector<32x104xf32>
    %146 = vector.broadcast %118 : vector<32x1xf32> to vector<32x104xf32>
    %147 = arith.addf %145, %146 : vector<32x104xf32>
    %cst_90 = arith.constant dense<0.000000e+00> : vector<32x104xf32>
    %148 = tpu.matmul %147, %105, %cst_90 {dimension_numbers = #tpu.dot_dimension_numbers<[1], [0], [0], [1], [0, 0, 1, 1], [], []>} : vector<32x104xf32>, vector<104x104xf32>, vector<32x104xf32> -> vector<32x104xf32>
    %cst_91 = arith.constant dense<0.000000e+00> : vector<32x104xf32>
    %149 = tpu.matmul %148, %105, %cst_91 {dimension_numbers = #tpu.dot_dimension_numbers<[1], [0], [0], [1], [0, 0, 1, 1], [], []>} : vector<32x104xf32>, vector<104x104xf32>, vector<32x104xf32> -> vector<32x104xf32>
    %150 = tpu.concatenate %147, %148, %149 in 0 : vector<32x104xf32>, vector<32x104xf32>, vector<32x104xf32> -> vector<96x104xf32>
    %cst_92 = arith.constant dense<0.000000e+00> : vector<32x104xf32>
    %151 = tpu.matmul %114, %150, %cst_92 {dimension_numbers = #tpu.dot_dimension_numbers<[1], [0], [0], [1], [0, 0, 1, 1], [], []>} : vector<32x96xf32>, vector<96x104xf32>, vector<32x104xf32> -> vector<32x104xf32>
    %152 = vector.broadcast %119 : vector<32x1xf32> to vector<32x104xf32>
    %153 = arith.addf %151, %152 : vector<32x104xf32>
    %cst_93 = arith.constant dense<0.000000e+00> : vector<32x8xf32>
    %154 = tpu.matmul %153, %104, %cst_93 {dimension_numbers = #tpu.dot_dimension_numbers<[1], [0], [0], [1], [0, 0, 1, 1], [], []>} : vector<32x104xf32>, vector<104x8xf32>, vector<32x8xf32> -> vector<32x8xf32>
    %155 = vector.broadcast %125 : vector<1x8xf32> to vector<32x8xf32>
    %156 = arith.mulf %154, %155 : vector<32x8xf32>
    %157 = vector.broadcast %126 : vector<1x8xf32> to vector<32x8xf32>
    %158 = arith.addf %156, %157 : vector<32x8xf32>
    %cst_94 = arith.constant dense<0.000000e+00> : vector<13x8xf32>
    %159 = tpu.matmul %103, %158, %cst_94 {dimension_numbers = #tpu.dot_dimension_numbers<[1], [0], [0], [1], [0, 0, 1, 1], [], []>} : vector<13x32xf32>, vector<32x8xf32>, vector<13x8xf32> -> vector<13x8xf32>
    %160 = vector.broadcast %127 : vector<1x8xf32> to vector<13x8xf32>
    %161 = arith.mulf %159, %160 : vector<13x8xf32>
    %162 = vector.broadcast %128 : vector<1x8xf32> to vector<13x8xf32>
    %163 = arith.addf %161, %162 : vector<13x8xf32>
    %cst_95 = arith.constant dense<0.000000e+00> : vector<1x104xf32>
    %164 = tpu.matmul %122, %153, %cst_95 {dimension_numbers = #tpu.dot_dimension_numbers<[1], [0], [0], [1], [0, 0, 1, 1], [], []>} : vector<1x32xf32>, vector<32x104xf32>, vector<1x104xf32> -> vector<1x104xf32>
    %165 = vector.broadcast %164 : vector<1x104xf32> to vector<13x104xf32>
    %166 = arith.mulf %106, %165 : vector<13x104xf32>
    %cst_96 = arith.constant dense<0.000000e+00> : vector<13x8xf32>
    %167 = tpu.matmul %166, %107, %cst_96 {dimension_numbers = #tpu.dot_dimension_numbers<[1], [0], [0], [1], [0, 0, 1, 1], [], []>} : vector<13x104xf32>, vector<104x8xf32>, vector<13x8xf32> -> vector<13x8xf32>
    %168 = vector.broadcast %129 : vector<1x8xf32> to vector<13x8xf32>
    %169 = arith.mulf %167, %168 : vector<13x8xf32>
    %170 = vector.broadcast %130 : vector<1x8xf32> to vector<13x8xf32>
    %171 = arith.addf %169, %170 : vector<13x8xf32>
    %172 = tpu.transpose %163, [1, 0] : vector<13x8xf32> -> vector<8x13xf32>
    %cst_97 = arith.constant dense<0.000000e+00> : vector<8x8xf32>
    %173 = tpu.matmul %172, %171, %cst_97 {dimension_numbers = #tpu.dot_dimension_numbers<[1], [0], [0], [1], [0, 0, 1, 1], [], []>} : vector<8x13xf32>, vector<13x8xf32>, vector<8x8xf32> -> vector<8x8xf32>
    %cst_98 = arith.constant 0.000000e+00 : f32
    %174 = vector.broadcast %cst_98 : f32 to vector<8x8xf32>
    %175 = arith.maximumf %173, %174 : vector<8x8xf32>
    %176 = tpu.transpose %133, [1, 0] : vector<8x8xf32> -> vector<8x8xf32>
    %cst_99 = arith.constant dense<0.000000e+00> : vector<8x8xf32>
    %177 = tpu.matmul %175, %176, %cst_99 {dimension_numbers = #tpu.dot_dimension_numbers<[1], [0], [0], [1], [0, 0, 1, 1], [], []>} : vector<8x8xf32>, vector<8x8xf32>, vector<8x8xf32> -> vector<8x8xf32>
    %178 = vector.broadcast %131 : vector<1x8xf32> to vector<8x8xf32>
    %179 = arith.addf %177, %178 : vector<8x8xf32>
    %cst_100 = arith.constant dense<0xFF800000> : vector<8xf32>
    %180 = vector.multi_reduction <maximumf>, %179, %cst_100 [1] : vector<8x8xf32> to vector<8xf32>
    %181 = vector.shape_cast %180 : vector<8xf32> to vector<8x1xf32>
    %182 = vector.broadcast %181 : vector<8x1xf32> to vector<8x8xf32>
    %183 = arith.subf %179, %182 : vector<8x8xf32>
    %184 = math.exp %183 : vector<8x8xf32>
    %cst_101 = arith.constant dense<0.000000e+00> : vector<8xf32>
    %185 = vector.multi_reduction <add>, %184, %cst_101 [1] : vector<8x8xf32> to vector<8xf32>
    %186 = vector.shape_cast %185 : vector<8xf32> to vector<8x1xf32>
    %187 = tpu.reciprocal %186 {approx = true} : vector<8x1xf32> -> vector<8x1xf32>
    %188 = vector.broadcast %187 : vector<8x1xf32> to vector<8x8xf32>
    %189 = arith.mulf %184, %188 : vector<8x8xf32>
    %190 = tpu.transpose %189, [1, 0] : vector<8x8xf32> -> vector<8x8xf32>
    %cst_102 = arith.constant dense<0.000000e+00> : vector<104x8xf32>
    %191 = tpu.matmul %107, %190, %cst_102 {dimension_numbers = #tpu.dot_dimension_numbers<[1], [0], [0], [1], [0, 0, 1, 1], [], []>} : vector<104x8xf32>, vector<8x8xf32>, vector<104x8xf32> -> vector<104x8xf32>
    %192 = tpu.transpose %107, [1, 0] : vector<104x8xf32> -> vector<8x104xf32>
    %cst_103 = arith.constant dense<0.000000e+00> : vector<104x104xf32>
    %193 = tpu.matmul %191, %192, %cst_103 {dimension_numbers = #tpu.dot_dimension_numbers<[1], [0], [0], [1], [0, 0, 1, 1], [], []>} : vector<104x8xf32>, vector<8x104xf32>, vector<104x104xf32> -> vector<104x104xf32>
    %194 = arith.mulf %108, %193 : vector<104x104xf32>
    %cst_104 = arith.constant dense<0.000000e+00> : vector<32x104xf32>
    %195 = tpu.matmul %153, %194, %cst_104 {dimension_numbers = #tpu.dot_dimension_numbers<[1], [0], [0], [1], [0, 0, 1, 1], [], []>} : vector<32x104xf32>, vector<104x104xf32>, vector<32x104xf32> -> vector<32x104xf32>
    %196 = vector.broadcast %120 : vector<32x1xf32> to vector<32x104xf32>
    %197 = arith.mulf %195, %196 : vector<32x104xf32>
    %198 = arith.addf %197, %141 : vector<32x104xf32>
    %c0_105 = arith.constant 0 : index
    %c0_106 = arith.constant 0 : index
    %199 = vector.load %arg23[%c0_105, %c0_106] : memref<9x32xf32, #tpu.memory_space<vmem>>, vector<9x32xf32>
    %c0_107 = arith.constant 0 : index
    %c0_108 = arith.constant 0 : index
    %200 = vector.load %arg24[%c0_107, %c0_108] : memref<72x8xf32, #tpu.memory_space<vmem>>, vector<72x8xf32>
    %c0_109 = arith.constant 0 : index
    %c0_110 = arith.constant 0 : index
    %201 = vector.load %arg25[%c0_109, %c0_110] : memref<72x72xf32, #tpu.memory_space<vmem>>, vector<72x72xf32>
    %c0_111 = arith.constant 0 : index
    %c0_112 = arith.constant 0 : index
    %202 = vector.load %arg26[%c0_111, %c0_112] : memref<9x72xf32, #tpu.memory_space<vmem>>, vector<9x72xf32>
    %c0_113 = arith.constant 0 : index
    %c0_114 = arith.constant 0 : index
    %203 = vector.load %arg27[%c0_113, %c0_114] : memref<72x8xf32, #tpu.memory_space<vmem>>, vector<72x8xf32>
    %c0_115 = arith.constant 0 : index
    %c0_116 = arith.constant 0 : index
    %204 = vector.load %arg28[%c0_115, %c0_116] : memref<72x72xf32, #tpu.memory_space<vmem>>, vector<72x72xf32>
    %c2 = arith.constant 2 : index
    %c0_117 = arith.constant 0 : index
    %c0_118 = arith.constant 0 : index
    %205 = vector.load %arg4[%c2, %c0_117, %c0_118] : memref<4x64x64xf32, #tpu.memory_space<vmem>>, vector<1x64x64xf32>
    %206 = vector.shape_cast %205 : vector<1x64x64xf32> to vector<64x64xf32>
    %c2_119 = arith.constant 2 : index
    %c0_120 = arith.constant 0 : index
    %c0_121 = arith.constant 0 : index
    %207 = vector.load %arg5[%c2_119, %c0_120, %c0_121] : memref<4x64x1xf32, #tpu.memory_space<vmem>>, vector<1x64x1xf32>
    %208 = vector.shape_cast %207 : vector<1x64x1xf32> to vector<64x1xf32>
    %c2_122 = arith.constant 2 : index
    %c0_123 = arith.constant 0 : index
    %c0_124 = arith.constant 0 : index
    %209 = vector.load %arg6[%c2_122, %c0_123, %c0_124] : memref<4x32x96xf32, #tpu.memory_space<vmem>>, vector<1x32x96xf32>
    %210 = vector.shape_cast %209 : vector<1x32x96xf32> to vector<32x96xf32>
    %c2_125 = arith.constant 2 : index
    %c0_126 = arith.constant 0 : index
    %c0_127 = arith.constant 0 : index
    %211 = vector.load %arg7[%c2_125, %c0_126, %c0_127] : memref<4x32x4xf32, #tpu.memory_space<vmem>>, vector<1x32x4xf32>
    %212 = vector.shape_cast %211 : vector<1x32x4xf32> to vector<32x4xf32>
    %213 = vector.extract_strided_slice %212 {offsets = [0, 0], sizes = [32, 1], strides = [1, 1]} : vector<32x4xf32> to vector<32x1xf32>
    %214 = vector.extract_strided_slice %212 {offsets = [0, 1], sizes = [32, 1], strides = [1, 1]} : vector<32x4xf32> to vector<32x1xf32>
    %215 = vector.extract_strided_slice %212 {offsets = [0, 2], sizes = [32, 1], strides = [1, 1]} : vector<32x4xf32> to vector<32x1xf32>
    %216 = vector.extract_strided_slice %212 {offsets = [0, 3], sizes = [32, 1], strides = [1, 1]} : vector<32x4xf32> to vector<32x1xf32>
    %c2_128 = arith.constant 2 : index
    %c0_129 = arith.constant 0 : index
    %c0_130 = arith.constant 0 : index
    %217 = vector.load %arg8[%c2_128, %c0_129, %c0_130] : memref<4x1x32xf32, #tpu.memory_space<vmem>>, vector<1x1x32xf32>
    %218 = vector.shape_cast %217 : vector<1x1x32xf32> to vector<1x32xf32>
    %c2_131 = arith.constant 2 : index
    %c0_132 = arith.constant 0 : index
    %c0_133 = arith.constant 0 : index
    %219 = vector.load %arg9[%c2_131, %c0_132, %c0_133] : memref<4x7x8xf32, #tpu.memory_space<vmem>>, vector<1x7x8xf32>
    %220 = vector.shape_cast %219 : vector<1x7x8xf32> to vector<7x8xf32>
    %221 = vector.extract_strided_slice %220 {offsets = [0, 0], sizes = [1, 8], strides = [1, 1]} : vector<7x8xf32> to vector<1x8xf32>
    %222 = vector.extract_strided_slice %220 {offsets = [1, 0], sizes = [1, 8], strides = [1, 1]} : vector<7x8xf32> to vector<1x8xf32>
    %223 = vector.extract_strided_slice %220 {offsets = [2, 0], sizes = [1, 8], strides = [1, 1]} : vector<7x8xf32> to vector<1x8xf32>
    %224 = vector.extract_strided_slice %220 {offsets = [3, 0], sizes = [1, 8], strides = [1, 1]} : vector<7x8xf32> to vector<1x8xf32>
    %225 = vector.extract_strided_slice %220 {offsets = [4, 0], sizes = [1, 8], strides = [1, 1]} : vector<7x8xf32> to vector<1x8xf32>
    %226 = vector.extract_strided_slice %220 {offsets = [5, 0], sizes = [1, 8], strides = [1, 1]} : vector<7x8xf32> to vector<1x8xf32>
    %227 = vector.extract_strided_slice %220 {offsets = [6, 0], sizes = [1, 8], strides = [1, 1]} : vector<7x8xf32> to vector<1x8xf32>
    %c2_134 = arith.constant 2 : index
    %c0_135 = arith.constant 0 : index
    %c0_136 = arith.constant 0 : index
    %228 = vector.load %arg10[%c2_134, %c0_135, %c0_136] : memref<4x8x8xf32, #tpu.memory_space<vmem>>, vector<1x8x8xf32>
    %229 = vector.shape_cast %228 : vector<1x8x8xf32> to vector<8x8xf32>
    %230 = vector.extract_strided_slice %198 {offsets = [0, 0], sizes = [32, 72], strides = [1, 1]} : vector<32x104xf32> to vector<32x72xf32>
    %231 = vector.extract_strided_slice %198 {offsets = [0, 32], sizes = [32, 72], strides = [1, 1]} : vector<32x104xf32> to vector<32x72xf32>
    %232 = tpu.concatenate %230, %231 in 0 : vector<32x72xf32>, vector<32x72xf32> -> vector<64x72xf32>
    %cst_137 = arith.constant dense<0.000000e+00> : vector<64x72xf32>
    %233 = tpu.matmul %206, %232, %cst_137 {dimension_numbers = #tpu.dot_dimension_numbers<[1], [0], [0], [1], [0, 0, 1, 1], [], []>} : vector<64x64xf32>, vector<64x72xf32>, vector<64x72xf32> -> vector<64x72xf32>
    %234 = vector.broadcast %208 : vector<64x1xf32> to vector<64x72xf32>
    %235 = arith.addf %233, %234 : vector<64x72xf32>
    %236 = vector.extract_strided_slice %235 {offsets = [0, 0], sizes = [32, 72], strides = [1, 1]} : vector<64x72xf32> to vector<32x72xf32>
    %237 = vector.extract_strided_slice %235 {offsets = [32, 0], sizes = [32, 72], strides = [1, 1]} : vector<64x72xf32> to vector<32x72xf32>
    %cst_138 = arith.constant 0.000000e+00 : f32
    %238 = vector.broadcast %cst_138 : f32 to vector<32x72xf32>
    %239 = arith.maximumf %236, %238 : vector<32x72xf32>
    %240 = vector.broadcast %213 : vector<32x1xf32> to vector<32x72xf32>
    %241 = arith.mulf %239, %240 : vector<32x72xf32>
    %242 = vector.broadcast %214 : vector<32x1xf32> to vector<32x72xf32>
    %243 = arith.addf %241, %242 : vector<32x72xf32>
    %cst_139 = arith.constant dense<0.000000e+00> : vector<32x72xf32>
    %244 = tpu.matmul %243, %201, %cst_139 {dimension_numbers = #tpu.dot_dimension_numbers<[1], [0], [0], [1], [0, 0, 1, 1], [], []>} : vector<32x72xf32>, vector<72x72xf32>, vector<32x72xf32> -> vector<32x72xf32>
    %cst_140 = arith.constant dense<0.000000e+00> : vector<32x72xf32>
    %245 = tpu.matmul %244, %201, %cst_140 {dimension_numbers = #tpu.dot_dimension_numbers<[1], [0], [0], [1], [0, 0, 1, 1], [], []>} : vector<32x72xf32>, vector<72x72xf32>, vector<32x72xf32> -> vector<32x72xf32>
    %246 = tpu.concatenate %243, %244, %245 in 0 : vector<32x72xf32>, vector<32x72xf32>, vector<32x72xf32> -> vector<96x72xf32>
    %cst_141 = arith.constant dense<0.000000e+00> : vector<32x72xf32>
    %247 = tpu.matmul %210, %246, %cst_141 {dimension_numbers = #tpu.dot_dimension_numbers<[1], [0], [0], [1], [0, 0, 1, 1], [], []>} : vector<32x96xf32>, vector<96x72xf32>, vector<32x72xf32> -> vector<32x72xf32>
    %248 = vector.broadcast %215 : vector<32x1xf32> to vector<32x72xf32>
    %249 = arith.addf %247, %248 : vector<32x72xf32>
    %cst_142 = arith.constant dense<0.000000e+00> : vector<32x8xf32>
    %250 = tpu.matmul %249, %200, %cst_142 {dimension_numbers = #tpu.dot_dimension_numbers<[1], [0], [0], [1], [0, 0, 1, 1], [], []>} : vector<32x72xf32>, vector<72x8xf32>, vector<32x8xf32> -> vector<32x8xf32>
    %251 = vector.broadcast %221 : vector<1x8xf32> to vector<32x8xf32>
    %252 = arith.mulf %250, %251 : vector<32x8xf32>
    %253 = vector.broadcast %222 : vector<1x8xf32> to vector<32x8xf32>
    %254 = arith.addf %252, %253 : vector<32x8xf32>
    %cst_143 = arith.constant dense<0.000000e+00> : vector<9x8xf32>
    %255 = tpu.matmul %199, %254, %cst_143 {dimension_numbers = #tpu.dot_dimension_numbers<[1], [0], [0], [1], [0, 0, 1, 1], [], []>} : vector<9x32xf32>, vector<32x8xf32>, vector<9x8xf32> -> vector<9x8xf32>
    %256 = vector.broadcast %223 : vector<1x8xf32> to vector<9x8xf32>
    %257 = arith.mulf %255, %256 : vector<9x8xf32>
    %258 = vector.broadcast %224 : vector<1x8xf32> to vector<9x8xf32>
    %259 = arith.addf %257, %258 : vector<9x8xf32>
    %cst_144 = arith.constant dense<0.000000e+00> : vector<1x72xf32>
    %260 = tpu.matmul %218, %249, %cst_144 {dimension_numbers = #tpu.dot_dimension_numbers<[1], [0], [0], [1], [0, 0, 1, 1], [], []>} : vector<1x32xf32>, vector<32x72xf32>, vector<1x72xf32> -> vector<1x72xf32>
    %261 = vector.broadcast %260 : vector<1x72xf32> to vector<9x72xf32>
    %262 = arith.mulf %202, %261 : vector<9x72xf32>
    %cst_145 = arith.constant dense<0.000000e+00> : vector<9x8xf32>
    %263 = tpu.matmul %262, %203, %cst_145 {dimension_numbers = #tpu.dot_dimension_numbers<[1], [0], [0], [1], [0, 0, 1, 1], [], []>} : vector<9x72xf32>, vector<72x8xf32>, vector<9x8xf32> -> vector<9x8xf32>
    %264 = vector.broadcast %225 : vector<1x8xf32> to vector<9x8xf32>
    %265 = arith.mulf %263, %264 : vector<9x8xf32>
    %266 = vector.broadcast %226 : vector<1x8xf32> to vector<9x8xf32>
    %267 = arith.addf %265, %266 : vector<9x8xf32>
    %268 = tpu.transpose %259, [1, 0] : vector<9x8xf32> -> vector<8x9xf32>
    %cst_146 = arith.constant dense<0.000000e+00> : vector<8x8xf32>
    %269 = tpu.matmul %268, %267, %cst_146 {dimension_numbers = #tpu.dot_dimension_numbers<[1], [0], [0], [1], [0, 0, 1, 1], [], []>} : vector<8x9xf32>, vector<9x8xf32>, vector<8x8xf32> -> vector<8x8xf32>
    %cst_147 = arith.constant 0.000000e+00 : f32
    %270 = vector.broadcast %cst_147 : f32 to vector<8x8xf32>
    %271 = arith.maximumf %269, %270 : vector<8x8xf32>
    %272 = tpu.transpose %229, [1, 0] : vector<8x8xf32> -> vector<8x8xf32>
    %cst_148 = arith.constant dense<0.000000e+00> : vector<8x8xf32>
    %273 = tpu.matmul %271, %272, %cst_148 {dimension_numbers = #tpu.dot_dimension_numbers<[1], [0], [0], [1], [0, 0, 1, 1], [], []>} : vector<8x8xf32>, vector<8x8xf32>, vector<8x8xf32> -> vector<8x8xf32>
    %274 = vector.broadcast %227 : vector<1x8xf32> to vector<8x8xf32>
    %275 = arith.addf %273, %274 : vector<8x8xf32>
    %cst_149 = arith.constant dense<0xFF800000> : vector<8xf32>
    %276 = vector.multi_reduction <maximumf>, %275, %cst_149 [1] : vector<8x8xf32> to vector<8xf32>
    %277 = vector.shape_cast %276 : vector<8xf32> to vector<8x1xf32>
    %278 = vector.broadcast %277 : vector<8x1xf32> to vector<8x8xf32>
    %279 = arith.subf %275, %278 : vector<8x8xf32>
    %280 = math.exp %279 : vector<8x8xf32>
    %cst_150 = arith.constant dense<0.000000e+00> : vector<8xf32>
    %281 = vector.multi_reduction <add>, %280, %cst_150 [1] : vector<8x8xf32> to vector<8xf32>
    %282 = vector.shape_cast %281 : vector<8xf32> to vector<8x1xf32>
    %283 = tpu.reciprocal %282 {approx = true} : vector<8x1xf32> -> vector<8x1xf32>
    %284 = vector.broadcast %283 : vector<8x1xf32> to vector<8x8xf32>
    %285 = arith.mulf %280, %284 : vector<8x8xf32>
    %286 = tpu.transpose %285, [1, 0] : vector<8x8xf32> -> vector<8x8xf32>
    %cst_151 = arith.constant dense<0.000000e+00> : vector<72x8xf32>
    %287 = tpu.matmul %203, %286, %cst_151 {dimension_numbers = #tpu.dot_dimension_numbers<[1], [0], [0], [1], [0, 0, 1, 1], [], []>} : vector<72x8xf32>, vector<8x8xf32>, vector<72x8xf32> -> vector<72x8xf32>
    %288 = tpu.transpose %203, [1, 0] : vector<72x8xf32> -> vector<8x72xf32>
    %cst_152 = arith.constant dense<0.000000e+00> : vector<72x72xf32>
    %289 = tpu.matmul %287, %288, %cst_152 {dimension_numbers = #tpu.dot_dimension_numbers<[1], [0], [0], [1], [0, 0, 1, 1], [], []>} : vector<72x8xf32>, vector<8x72xf32>, vector<72x72xf32> -> vector<72x72xf32>
    %290 = arith.mulf %204, %289 : vector<72x72xf32>
    %cst_153 = arith.constant dense<0.000000e+00> : vector<32x72xf32>
    %291 = tpu.matmul %249, %290, %cst_153 {dimension_numbers = #tpu.dot_dimension_numbers<[1], [0], [0], [1], [0, 0, 1, 1], [], []>} : vector<32x72xf32>, vector<72x72xf32>, vector<32x72xf32> -> vector<32x72xf32>
    %292 = vector.broadcast %216 : vector<32x1xf32> to vector<32x72xf32>
    %293 = arith.mulf %291, %292 : vector<32x72xf32>
    %294 = arith.addf %293, %237 : vector<32x72xf32>
    %c0_154 = arith.constant 0 : index
    %c0_155 = arith.constant 0 : index
    %295 = vector.load %arg29[%c0_154, %c0_155] : memref<1x32xf32, #tpu.memory_space<vmem>>, vector<1x32xf32>
    %c0_156 = arith.constant 0 : index
    %c0_157 = arith.constant 0 : index
    %296 = vector.load %arg30[%c0_156, %c0_157] : memref<8x8xf32, #tpu.memory_space<vmem>>, vector<8x8xf32>
    %c0_158 = arith.constant 0 : index
    %c0_159 = arith.constant 0 : index
    %297 = vector.load %arg31[%c0_158, %c0_159] : memref<8x8xf32, #tpu.memory_space<vmem>>, vector<8x8xf32>
    %c0_160 = arith.constant 0 : index
    %c0_161 = arith.constant 0 : index
    %298 = vector.load %arg32[%c0_160, %c0_161] : memref<1x8xf32, #tpu.memory_space<vmem>>, vector<1x8xf32>
    %c0_162 = arith.constant 0 : index
    %c0_163 = arith.constant 0 : index
    %299 = vector.load %arg33[%c0_162, %c0_163] : memref<8x8xf32, #tpu.memory_space<vmem>>, vector<8x8xf32>
    %c0_164 = arith.constant 0 : index
    %c0_165 = arith.constant 0 : index
    %300 = vector.load %arg34[%c0_164, %c0_165] : memref<8x8xf32, #tpu.memory_space<vmem>>, vector<8x8xf32>
    %c3 = arith.constant 3 : index
    %c0_166 = arith.constant 0 : index
    %c0_167 = arith.constant 0 : index
    %301 = vector.load %arg4[%c3, %c0_166, %c0_167] : memref<4x64x64xf32, #tpu.memory_space<vmem>>, vector<1x64x64xf32>
    %302 = vector.shape_cast %301 : vector<1x64x64xf32> to vector<64x64xf32>
    %c3_168 = arith.constant 3 : index
    %c0_169 = arith.constant 0 : index
    %c0_170 = arith.constant 0 : index
    %303 = vector.load %arg5[%c3_168, %c0_169, %c0_170] : memref<4x64x1xf32, #tpu.memory_space<vmem>>, vector<1x64x1xf32>
    %304 = vector.shape_cast %303 : vector<1x64x1xf32> to vector<64x1xf32>
    %c3_171 = arith.constant 3 : index
    %c0_172 = arith.constant 0 : index
    %c0_173 = arith.constant 0 : index
    %305 = vector.load %arg6[%c3_171, %c0_172, %c0_173] : memref<4x32x96xf32, #tpu.memory_space<vmem>>, vector<1x32x96xf32>
    %306 = vector.shape_cast %305 : vector<1x32x96xf32> to vector<32x96xf32>
    %c3_174 = arith.constant 3 : index
    %c0_175 = arith.constant 0 : index
    %c0_176 = arith.constant 0 : index
    %307 = vector.load %arg7[%c3_174, %c0_175, %c0_176] : memref<4x32x4xf32, #tpu.memory_space<vmem>>, vector<1x32x4xf32>
    %308 = vector.shape_cast %307 : vector<1x32x4xf32> to vector<32x4xf32>
    %309 = vector.extract_strided_slice %308 {offsets = [0, 0], sizes = [32, 1], strides = [1, 1]} : vector<32x4xf32> to vector<32x1xf32>
    %310 = vector.extract_strided_slice %308 {offsets = [0, 1], sizes = [32, 1], strides = [1, 1]} : vector<32x4xf32> to vector<32x1xf32>
    %311 = vector.extract_strided_slice %308 {offsets = [0, 2], sizes = [32, 1], strides = [1, 1]} : vector<32x4xf32> to vector<32x1xf32>
    %312 = vector.extract_strided_slice %308 {offsets = [0, 3], sizes = [32, 1], strides = [1, 1]} : vector<32x4xf32> to vector<32x1xf32>
    %c3_177 = arith.constant 3 : index
    %c0_178 = arith.constant 0 : index
    %c0_179 = arith.constant 0 : index
    %313 = vector.load %arg8[%c3_177, %c0_178, %c0_179] : memref<4x1x32xf32, #tpu.memory_space<vmem>>, vector<1x1x32xf32>
    %314 = vector.shape_cast %313 : vector<1x1x32xf32> to vector<1x32xf32>
    %c3_180 = arith.constant 3 : index
    %c0_181 = arith.constant 0 : index
    %c0_182 = arith.constant 0 : index
    %315 = vector.load %arg9[%c3_180, %c0_181, %c0_182] : memref<4x7x8xf32, #tpu.memory_space<vmem>>, vector<1x7x8xf32>
    %316 = vector.shape_cast %315 : vector<1x7x8xf32> to vector<7x8xf32>
    %317 = vector.extract_strided_slice %316 {offsets = [0, 0], sizes = [1, 8], strides = [1, 1]} : vector<7x8xf32> to vector<1x8xf32>
    %318 = vector.extract_strided_slice %316 {offsets = [1, 0], sizes = [1, 8], strides = [1, 1]} : vector<7x8xf32> to vector<1x8xf32>
    %319 = vector.extract_strided_slice %316 {offsets = [2, 0], sizes = [1, 8], strides = [1, 1]} : vector<7x8xf32> to vector<1x8xf32>
    %320 = vector.extract_strided_slice %316 {offsets = [3, 0], sizes = [1, 8], strides = [1, 1]} : vector<7x8xf32> to vector<1x8xf32>
    %321 = vector.extract_strided_slice %316 {offsets = [4, 0], sizes = [1, 8], strides = [1, 1]} : vector<7x8xf32> to vector<1x8xf32>
    %322 = vector.extract_strided_slice %316 {offsets = [5, 0], sizes = [1, 8], strides = [1, 1]} : vector<7x8xf32> to vector<1x8xf32>
    %323 = vector.extract_strided_slice %316 {offsets = [6, 0], sizes = [1, 8], strides = [1, 1]} : vector<7x8xf32> to vector<1x8xf32>
    %c3_183 = arith.constant 3 : index
    %c0_184 = arith.constant 0 : index
    %c0_185 = arith.constant 0 : index
    %324 = vector.load %arg10[%c3_183, %c0_184, %c0_185] : memref<4x8x8xf32, #tpu.memory_space<vmem>>, vector<1x8x8xf32>
    %325 = vector.shape_cast %324 : vector<1x8x8xf32> to vector<8x8xf32>
    %326 = vector.extract_strided_slice %294 {offsets = [0, 0], sizes = [32, 8], strides = [1, 1]} : vector<32x72xf32> to vector<32x8xf32>
    %327 = vector.extract_strided_slice %294 {offsets = [0, 64], sizes = [32, 8], strides = [1, 1]} : vector<32x72xf32> to vector<32x8xf32>
    %328 = tpu.concatenate %326, %327 in 0 : vector<32x8xf32>, vector<32x8xf32> -> vector<64x8xf32>
    %cst_186 = arith.constant dense<0.000000e+00> : vector<64x8xf32>
    %329 = tpu.matmul %302, %328, %cst_186 {dimension_numbers = #tpu.dot_dimension_numbers<[1], [0], [0], [1], [0, 0, 1, 1], [], []>} : vector<64x64xf32>, vector<64x8xf32>, vector<64x8xf32> -> vector<64x8xf32>
    %330 = vector.broadcast %304 : vector<64x1xf32> to vector<64x8xf32>
    %331 = arith.addf %329, %330 : vector<64x8xf32>
    %332 = vector.extract_strided_slice %331 {offsets = [0, 0], sizes = [32, 8], strides = [1, 1]} : vector<64x8xf32> to vector<32x8xf32>
    %333 = vector.extract_strided_slice %331 {offsets = [32, 0], sizes = [32, 8], strides = [1, 1]} : vector<64x8xf32> to vector<32x8xf32>
    %cst_187 = arith.constant 0.000000e+00 : f32
    %334 = vector.broadcast %cst_187 : f32 to vector<32x8xf32>
    %335 = arith.maximumf %332, %334 : vector<32x8xf32>
    %336 = vector.broadcast %309 : vector<32x1xf32> to vector<32x8xf32>
    %337 = arith.mulf %335, %336 : vector<32x8xf32>
    %338 = vector.broadcast %310 : vector<32x1xf32> to vector<32x8xf32>
    %339 = arith.addf %337, %338 : vector<32x8xf32>
    %cst_188 = arith.constant dense<0.000000e+00> : vector<32x8xf32>
    %340 = tpu.matmul %339, %297, %cst_188 {dimension_numbers = #tpu.dot_dimension_numbers<[1], [0], [0], [1], [0, 0, 1, 1], [], []>} : vector<32x8xf32>, vector<8x8xf32>, vector<32x8xf32> -> vector<32x8xf32>
    %cst_189 = arith.constant dense<0.000000e+00> : vector<32x8xf32>
    %341 = tpu.matmul %340, %297, %cst_189 {dimension_numbers = #tpu.dot_dimension_numbers<[1], [0], [0], [1], [0, 0, 1, 1], [], []>} : vector<32x8xf32>, vector<8x8xf32>, vector<32x8xf32> -> vector<32x8xf32>
    %342 = tpu.concatenate %339, %340, %341 in 0 : vector<32x8xf32>, vector<32x8xf32>, vector<32x8xf32> -> vector<96x8xf32>
    %cst_190 = arith.constant dense<0.000000e+00> : vector<32x8xf32>
    %343 = tpu.matmul %306, %342, %cst_190 {dimension_numbers = #tpu.dot_dimension_numbers<[1], [0], [0], [1], [0, 0, 1, 1], [], []>} : vector<32x96xf32>, vector<96x8xf32>, vector<32x8xf32> -> vector<32x8xf32>
    %344 = vector.broadcast %311 : vector<32x1xf32> to vector<32x8xf32>
    %345 = arith.addf %343, %344 : vector<32x8xf32>
    %cst_191 = arith.constant dense<0.000000e+00> : vector<32x8xf32>
    %346 = tpu.matmul %345, %296, %cst_191 {dimension_numbers = #tpu.dot_dimension_numbers<[1], [0], [0], [1], [0, 0, 1, 1], [], []>} : vector<32x8xf32>, vector<8x8xf32>, vector<32x8xf32> -> vector<32x8xf32>
    %347 = vector.broadcast %317 : vector<1x8xf32> to vector<32x8xf32>
    %348 = arith.mulf %346, %347 : vector<32x8xf32>
    %349 = vector.broadcast %318 : vector<1x8xf32> to vector<32x8xf32>
    %350 = arith.addf %348, %349 : vector<32x8xf32>
    %cst_192 = arith.constant dense<0.000000e+00> : vector<1x8xf32>
    %351 = tpu.matmul %295, %350, %cst_192 {dimension_numbers = #tpu.dot_dimension_numbers<[1], [0], [0], [1], [0, 0, 1, 1], [], []>} : vector<1x32xf32>, vector<32x8xf32>, vector<1x8xf32> -> vector<1x8xf32>
    %352 = arith.mulf %351, %319 : vector<1x8xf32>
    %353 = arith.addf %352, %320 : vector<1x8xf32>
    %cst_193 = arith.constant dense<0.000000e+00> : vector<1x8xf32>
    %354 = tpu.matmul %314, %345, %cst_193 {dimension_numbers = #tpu.dot_dimension_numbers<[1], [0], [0], [1], [0, 0, 1, 1], [], []>} : vector<1x32xf32>, vector<32x8xf32>, vector<1x8xf32> -> vector<1x8xf32>
    %355 = arith.mulf %298, %354 : vector<1x8xf32>
    %cst_194 = arith.constant dense<0.000000e+00> : vector<1x8xf32>
    %356 = tpu.matmul %355, %299, %cst_194 {dimension_numbers = #tpu.dot_dimension_numbers<[1], [0], [0], [1], [0, 0, 1, 1], [], []>} : vector<1x8xf32>, vector<8x8xf32>, vector<1x8xf32> -> vector<1x8xf32>
    %357 = arith.mulf %356, %321 : vector<1x8xf32>
    %358 = arith.addf %357, %322 : vector<1x8xf32>
    %359 = tpu.transpose %353, [1, 0] : vector<1x8xf32> -> vector<8x1xf32>
    %cst_195 = arith.constant dense<0.000000e+00> : vector<8x8xf32>
    %360 = tpu.matmul %359, %358, %cst_195 {dimension_numbers = #tpu.dot_dimension_numbers<[1], [0], [0], [1], [0, 0, 1, 1], [], []>} : vector<8x1xf32>, vector<1x8xf32>, vector<8x8xf32> -> vector<8x8xf32>
    %cst_196 = arith.constant 0.000000e+00 : f32
    %361 = vector.broadcast %cst_196 : f32 to vector<8x8xf32>
    %362 = arith.maximumf %360, %361 : vector<8x8xf32>
    %363 = tpu.transpose %325, [1, 0] : vector<8x8xf32> -> vector<8x8xf32>
    %cst_197 = arith.constant dense<0.000000e+00> : vector<8x8xf32>
    %364 = tpu.matmul %362, %363, %cst_197 {dimension_numbers = #tpu.dot_dimension_numbers<[1], [0], [0], [1], [0, 0, 1, 1], [], []>} : vector<8x8xf32>, vector<8x8xf32>, vector<8x8xf32> -> vector<8x8xf32>
    %365 = vector.broadcast %323 : vector<1x8xf32> to vector<8x8xf32>
    %366 = arith.addf %364, %365 : vector<8x8xf32>
    %cst_198 = arith.constant dense<0xFF800000> : vector<8xf32>
    %367 = vector.multi_reduction <maximumf>, %366, %cst_198 [1] : vector<8x8xf32> to vector<8xf32>
    %368 = vector.shape_cast %367 : vector<8xf32> to vector<8x1xf32>
    %369 = vector.broadcast %368 : vector<8x1xf32> to vector<8x8xf32>
    %370 = arith.subf %366, %369 : vector<8x8xf32>
    %371 = math.exp %370 : vector<8x8xf32>
    %cst_199 = arith.constant dense<0.000000e+00> : vector<8xf32>
    %372 = vector.multi_reduction <add>, %371, %cst_199 [1] : vector<8x8xf32> to vector<8xf32>
    %373 = vector.shape_cast %372 : vector<8xf32> to vector<8x1xf32>
    %374 = tpu.reciprocal %373 {approx = true} : vector<8x1xf32> -> vector<8x1xf32>
    %375 = vector.broadcast %374 : vector<8x1xf32> to vector<8x8xf32>
    %376 = arith.mulf %371, %375 : vector<8x8xf32>
    %377 = tpu.transpose %376, [1, 0] : vector<8x8xf32> -> vector<8x8xf32>
    %cst_200 = arith.constant dense<0.000000e+00> : vector<8x8xf32>
    %378 = tpu.matmul %299, %377, %cst_200 {dimension_numbers = #tpu.dot_dimension_numbers<[1], [0], [0], [1], [0, 0, 1, 1], [], []>} : vector<8x8xf32>, vector<8x8xf32>, vector<8x8xf32> -> vector<8x8xf32>
    %379 = tpu.transpose %299, [1, 0] : vector<8x8xf32> -> vector<8x8xf32>
    %cst_201 = arith.constant dense<0.000000e+00> : vector<8x8xf32>
    %380 = tpu.matmul %378, %379, %cst_201 {dimension_numbers = #tpu.dot_dimension_numbers<[1], [0], [0], [1], [0, 0, 1, 1], [], []>} : vector<8x8xf32>, vector<8x8xf32>, vector<8x8xf32> -> vector<8x8xf32>
    %381 = arith.mulf %300, %380 : vector<8x8xf32>
    %cst_202 = arith.constant dense<0.000000e+00> : vector<32x8xf32>
    %382 = tpu.matmul %345, %381, %cst_202 {dimension_numbers = #tpu.dot_dimension_numbers<[1], [0], [0], [1], [0, 0, 1, 1], [], []>} : vector<32x8xf32>, vector<8x8xf32>, vector<32x8xf32> -> vector<32x8xf32>
    %383 = vector.broadcast %312 : vector<32x1xf32> to vector<32x8xf32>
    %384 = arith.mulf %382, %383 : vector<32x8xf32>
    %385 = arith.addf %384, %333 : vector<32x8xf32>
    %c0_203 = arith.constant 0 : index
    %c0_204 = arith.constant 0 : index
    %c0_205 = arith.constant 0 : index
    %386 = vector.load %arg35[%c0_203, %c0_204, %c0_205] : memref<1x32x8xf32, #tpu.memory_space<vmem>>, vector<1x32x8xf32>
    %387 = vector.shape_cast %386 : vector<1x32x8xf32> to vector<32x8xf32>
    %388 = vector.shape_cast %385 : vector<32x8xf32> to vector<1x32x8xf32>
    tpu.vector_store %arg35[%c0_203, %c0_204, %c0_205], %388 {strides = array<i32>} : memref<1x32x8xf32, #tpu.memory_space<vmem>>, vector<1x32x8xf32>,
    return
  }
  func.func @transform_0(%arg0: i32) -> (i32, i32, i32) {
    %c0_i32 = arith.constant 0 : i32
    %c0_i32_0 = arith.constant 0 : i32
    %c0_i32_1 = arith.constant 0 : i32
    return %arg0, %c0_i32, %c0_i32_0 : i32, i32, i32
  }
  func.func @transform_1(%arg0: i32) -> (i32, i32) {
    %c0_i32 = arith.constant 0 : i32
    %c0_i32_0 = arith.constant 0 : i32
    %c0_i32_1 = arith.constant 0 : i32
    return %c0_i32, %c0_i32_0 : i32, i32
  }
  func.func @transform_2(%arg0: i32) -> (i32, i32) {
    %c0_i32 = arith.constant 0 : i32
    %c0_i32_0 = arith.constant 0 : i32
    %c0_i32_1 = arith.constant 0 : i32
    return %c0_i32, %c0_i32_0 : i32, i32
  }
  func.func @transform_3(%arg0: i32) -> (i32, i32, i32) {
    %c0_i32 = arith.constant 0 : i32
    %c0_i32_0 = arith.constant 0 : i32
    %c0_i32_1 = arith.constant 0 : i32
    %c0_i32_2 = arith.constant 0 : i32
    return %c0_i32, %c0_i32_0, %c0_i32_1 : i32, i32, i32
  }
  func.func @transform_4(%arg0: i32) -> (i32, i32, i32) {
    %c0_i32 = arith.constant 0 : i32
    %c0_i32_0 = arith.constant 0 : i32
    %c0_i32_1 = arith.constant 0 : i32
    %c0_i32_2 = arith.constant 0 : i32
    return %c0_i32, %c0_i32_0, %c0_i32_1 : i32, i32, i32
  }
  func.func @transform_5(%arg0: i32) -> (i32, i32, i32) {
    %c0_i32 = arith.constant 0 : i32
    %c0_i32_0 = arith.constant 0 : i32
    %c0_i32_1 = arith.constant 0 : i32
    %c0_i32_2 = arith.constant 0 : i32
    return %c0_i32, %c0_i32_0, %c0_i32_1 : i32, i32, i32
  }
  func.func @transform_6(%arg0: i32) -> (i32, i32, i32) {
    %c0_i32 = arith.constant 0 : i32
    %c0_i32_0 = arith.constant 0 : i32
    %c0_i32_1 = arith.constant 0 : i32
    %c0_i32_2 = arith.constant 0 : i32
    return %c0_i32, %c0_i32_0, %c0_i32_1 : i32, i32, i32
  }
  func.func @transform_7(%arg0: i32) -> (i32, i32, i32) {
    %c0_i32 = arith.constant 0 : i32
    %c0_i32_0 = arith.constant 0 : i32
    %c0_i32_1 = arith.constant 0 : i32
    %c0_i32_2 = arith.constant 0 : i32
    return %c0_i32, %c0_i32_0, %c0_i32_1 : i32, i32, i32
  }
  func.func @transform_8(%arg0: i32) -> (i32, i32, i32) {
    %c0_i32 = arith.constant 0 : i32
    %c0_i32_0 = arith.constant 0 : i32
    %c0_i32_1 = arith.constant 0 : i32
    %c0_i32_2 = arith.constant 0 : i32
    return %c0_i32, %c0_i32_0, %c0_i32_1 : i32, i32, i32
  }
  func.func @transform_9(%arg0: i32) -> (i32, i32, i32) {
    %c0_i32 = arith.constant 0 : i32
    %c0_i32_0 = arith.constant 0 : i32
    %c0_i32_1 = arith.constant 0 : i32
    %c0_i32_2 = arith.constant 0 : i32
    return %c0_i32, %c0_i32_0, %c0_i32_1 : i32, i32, i32
  }
  func.func @transform_10(%arg0: i32) -> (i32, i32) {
    %c0_i32 = arith.constant 0 : i32
    %c0_i32_0 = arith.constant 0 : i32
    %c0_i32_1 = arith.constant 0 : i32
    return %c0_i32, %c0_i32_0 : i32, i32
  }
  func.func @transform_11(%arg0: i32) -> (i32, i32) {
    %c0_i32 = arith.constant 0 : i32
    %c0_i32_0 = arith.constant 0 : i32
    %c0_i32_1 = arith.constant 0 : i32
    return %c0_i32, %c0_i32_0 : i32, i32
  }
  func.func @transform_12(%arg0: i32) -> (i32, i32) {
    %c0_i32 = arith.constant 0 : i32
    %c0_i32_0 = arith.constant 0 : i32
    %c0_i32_1 = arith.constant 0 : i32
    return %c0_i32, %c0_i32_0 : i32, i32
  }
  func.func @transform_13(%arg0: i32) -> (i32, i32) {
    %c0_i32 = arith.constant 0 : i32
    %c0_i32_0 = arith.constant 0 : i32
    %c0_i32_1 = arith.constant 0 : i32
    return %c0_i32, %c0_i32_0 : i32, i32
  }
  func.func @transform_14(%arg0: i32) -> (i32, i32) {
    %c0_i32 = arith.constant 0 : i32
    %c0_i32_0 = arith.constant 0 : i32
    %c0_i32_1 = arith.constant 0 : i32
    return %c0_i32, %c0_i32_0 : i32, i32
  }
  func.func @transform_15(%arg0: i32) -> (i32, i32) {
    %c0_i32 = arith.constant 0 : i32
    %c0_i32_0 = arith.constant 0 : i32
    %c0_i32_1 = arith.constant 0 : i32
    return %c0_i32, %c0_i32_0 : i32, i32
  }
  func.func @transform_16(%arg0: i32) -> (i32, i32) {
    %c0_i32 = arith.constant 0 : i32
    %c0_i32_0 = arith.constant 0 : i32
    %c0_i32_1 = arith.constant 0 : i32
    return %c0_i32, %c0_i32_0 : i32, i32
  }
  func.func @transform_17(%arg0: i32) -> (i32, i32) {
    %c0_i32 = arith.constant 0 : i32
    %c0_i32_0 = arith.constant 0 : i32
    %c0_i32_1 = arith.constant 0 : i32
    return %c0_i32, %c0_i32_0 : i32, i32
  }
  func.func @transform_18(%arg0: i32) -> (i32, i32) {
    %c0_i32 = arith.constant 0 : i32
    %c0_i32_0 = arith.constant 0 : i32
    %c0_i32_1 = arith.constant 0 : i32
    return %c0_i32, %c0_i32_0 : i32, i32
  }
  func.func @transform_19(%arg0: i32) -> (i32, i32) {
    %c0_i32 = arith.constant 0 : i32
    %c0_i32_0 = arith.constant 0 : i32
    %c0_i32_1 = arith.constant 0 : i32
    return %c0_i32, %c0_i32_0 : i32, i32
  }
  func.func @transform_20(%arg0: i32) -> (i32, i32) {
    %c0_i32 = arith.constant 0 : i32
    %c0_i32_0 = arith.constant 0 : i32
    %c0_i32_1 = arith.constant 0 : i32
    return %c0_i32, %c0_i32_0 : i32, i32
  }
  func.func @transform_21(%arg0: i32) -> (i32, i32) {
    %c0_i32 = arith.constant 0 : i32
    %c0_i32_0 = arith.constant 0 : i32
    %c0_i32_1 = arith.constant 0 : i32
    return %c0_i32, %c0_i32_0 : i32, i32
  }
  func.func @transform_22(%arg0: i32) -> (i32, i32) {
    %c0_i32 = arith.constant 0 : i32
    %c0_i32_0 = arith.constant 0 : i32
    %c0_i32_1 = arith.constant 0 : i32
    return %c0_i32, %c0_i32_0 : i32, i32
  }
  func.func @transform_23(%arg0: i32) -> (i32, i32) {
    %c0_i32 = arith.constant 0 : i32
    %c0_i32_0 = arith.constant 0 : i32
    %c0_i32_1 = arith.constant 0 : i32
    return %c0_i32, %c0_i32_0 : i32, i32
  }
  func.func @transform_24(%arg0: i32) -> (i32, i32) {
    %c0_i32 = arith.constant 0 : i32
    %c0_i32_0 = arith.constant 0 : i32
    %c0_i32_1 = arith.constant 0 : i32
    return %c0_i32, %c0_i32_0 : i32, i32
  }
  func.func @transform_25(%arg0: i32) -> (i32, i32) {
    %c0_i32 = arith.constant 0 : i32
    %c0_i32_0 = arith.constant 0 : i32
    %c0_i32_1 = arith.constant 0 : i32
    return %c0_i32, %c0_i32_0 : i32, i32
  }
  func.func @transform_26(%arg0: i32) -> (i32, i32) {
    %c0_i32 = arith.constant 0 : i32
    %c0_i32_0 = arith.constant 0 : i32
    %c0_i32_1 = arith.constant 0 : i32
    return %c0_i32, %c0_i32_0 : i32, i32
  }
  func.func @transform_27(%arg0: i32) -> (i32, i32) {
    %c0_i32 = arith.constant 0 : i32
    %c0_i32_0 = arith.constant 0 : i32
    %c0_i32_1 = arith.constant 0 : i32
    return %c0_i32, %c0_i32_0 : i32, i32
  }
  func.func @transform_28(%arg0: i32) -> (i32, i32) {
    %c0_i32 = arith.constant 0 : i32
    %c0_i32_0 = arith.constant 0 : i32
    %c0_i32_1 = arith.constant 0 : i32
    return %c0_i32, %c0_i32_0 : i32, i32
  }
  func.func @transform_29(%arg0: i32) -> (i32, i32) {
    %c0_i32 = arith.constant 0 : i32
    %c0_i32_0 = arith.constant 0 : i32
    %c0_i32_1 = arith.constant 0 : i32
    return %c0_i32, %c0_i32_0 : i32, i32
  }
  func.func @transform_30(%arg0: i32) -> (i32, i32) {
    %c0_i32 = arith.constant 0 : i32
    %c0_i32_0 = arith.constant 0 : i32
    %c0_i32_1 = arith.constant 0 : i32
    return %c0_i32, %c0_i32_0 : i32, i32
  }
  func.func @transform_31(%arg0: i32) -> (i32, i32) {
    %c0_i32 = arith.constant 0 : i32
    %c0_i32_0 = arith.constant 0 : i32
    %c0_i32_1 = arith.constant 0 : i32
    return %c0_i32, %c0_i32_0 : i32, i32
  }
  func.func @transform_32(%arg0: i32) -> (i32, i32) {
    %c0_i32 = arith.constant 0 : i32
    %c0_i32_0 = arith.constant 0 : i32
    %c0_i32_1 = arith.constant 0 : i32
    return %c0_i32, %c0_i32_0 : i32, i32
  }
  func.func @transform_33(%arg0: i32) -> (i32, i32) {
    %c0_i32 = arith.constant 0 : i32
    %c0_i32_0 = arith.constant 0 : i32
    %c0_i32_1 = arith.constant 0 : i32
    return %c0_i32, %c0_i32_0 : i32, i32
  }
  func.func @transform_34(%arg0: i32) -> (i32, i32, i32) {
    %c0_i32 = arith.constant 0 : i32
    %c0_i32_0 = arith.constant 0 : i32
    %c0_i32_1 = arith.constant 0 : i32
    return %arg0, %c0_i32, %c0_i32_0 : i32, i32, i32
  }
}

</mosaic_0001>

<llo_original>
// kernel: sagcn_forward.1
$region0: #{sagcn_forward.1}
  #allocation0 [shape = 'u32[]', space=smem, size = 0x4, offset = 0x4, fixed_abs, tag = 'smem constant byte address 0x4 - core index']
  #allocation1 [shape = 'u32[144,128]{1,0:T(1,128)}', space=vmem, size = 0x12000, scoped, tag = 'internal scratch']
  %s0 = inlined_call_operand.smem [shape: u32[35], index: -1, kind: input, shape index: {}]
  %s1 = sld [smem:[%s0]]
  %s2 = scalar_lea.smem %s0, 1
  %s3 = sld [smem:[%s2]]
  %s4 = scalar_lea.smem %s0, 2
  %s5 = sld [smem:[%s4]]
  %s6 = scalar_lea.smem %s0, 3
  %s7 = sld [smem:[%s6]]
  %s8 = scalar_lea.smem %s0, 4
  %s9 = sld [smem:[%s8]]
  %s10 = scalar_lea.smem %s0, 5
  %s11 = sld [smem:[%s10]]
  %s12 = scalar_lea.smem %s0, 6
  %s13 = sld [smem:[%s12]]
  %s14 = scalar_lea.smem %s0, 7
  %s15 = sld [smem:[%s14]]
  %s16 = scalar_lea.smem %s0, 8
  %s17 = sld [smem:[%s16]]
  %s18 = scalar_lea.smem %s0, 9
  %s19 = sld [smem:[%s18]]
  %s20 = scalar_lea.smem %s0, 10
  %s21 = sld [smem:[%s20]]
  %s22 = scalar_lea.smem %s0, 11
  %s23 = sld [smem:[%s22]]
  %s24 = scalar_lea.smem %s0, 12
  %s25 = sld [smem:[%s24]]
  %s26 = scalar_lea.smem %s0, 13
  %s27 = sld [smem:[%s26]]
  %s28 = scalar_lea.smem %s0, 14
  %s29 = sld [smem:[%s28]]
  %s30 = scalar_lea.smem %s0, 15
  %s31 = sld [smem:[%s30]]
  %s32 = scalar_lea.smem %s0, 16
  %s33 = sld [smem:[%s32]]
  %s34 = scalar_lea.smem %s0, 17
  %s35 = sld [smem:[%s34]]
  %s36 = scalar_lea.smem %s0, 18
  %s37 = sld [smem:[%s36]]
  %s38 = scalar_lea.smem %s0, 19
  %s39 = sld [smem:[%s38]]
  %s40 = scalar_lea.smem %s0, 20
  %s41 = sld [smem:[%s40]]
  %s42 = scalar_lea.smem %s0, 21
  %s43 = sld [smem:[%s42]]
  %s44 = scalar_lea.smem %s0, 22
  %s45 = sld [smem:[%s44]]
  %s46 = scalar_lea.smem %s0, 23
  %s47 = sld [smem:[%s46]]
  %s48 = scalar_lea.smem %s0, 24
  %s49 = sld [smem:[%s48]]
  %s50 = scalar_lea.smem %s0, 25
  %s51 = sld [smem:[%s50]]
  %s52 = scalar_lea.smem %s0, 26
  %s53 = sld [smem:[%s52]]
  %s54 = scalar_lea.smem %s0, 27
  %s55 = sld [smem:[%s54]]
  %s56 = scalar_lea.smem %s0, 28
  %s57 = sld [smem:[%s56]]
  %s58 = scalar_lea.smem %s0, 29
  %s59 = sld [smem:[%s58]]
  %s60 = scalar_lea.smem %s0, 30
  %s61 = sld [smem:[%s60]]
  %s62 = scalar_lea.smem %s0, 31
  %s63 = sld [smem:[%s62]]
  %s64 = scalar_lea.smem %s0, 32
  %s65 = sld [smem:[%s64]]
  %s66 = scalar_lea.smem %s0, 33
  %s67 = sld [smem:[%s66]]
  %s68 = scalar_lea.smem %s0, 34
  %s69 = sld [smem:[%s68]]
  %s70 = sld [smem:[#allocation0]]
  $region169: #{sagcn_forward.1} parent=0
    _
  %s72 = ssub.s32 1, %s70
  %s73 = scalar_select 0, %s72, %s70
  loop: start=0, step=1, limit=4
  $region2: #{sagcn_forward.1} parent=0 // loop_pre_header
    _
  $region3: #{sagcn_forward.1} parent=0 // loop_header
    %s75 = sphi 0, %s79
    %p76 = scmp.ge.s32.totalorder %s75, 4
    %s85 = sphi 0, %s87
    %s88 = sphi 0, %s85
    %s89 = sphi 0, %s88
    %s105 = sphi 0, %s89
    %s109 = sphi 0, %s109
    %s111 = sphi 0, %s109
    %s112 = sphi 0, %s111
    %s126 = sphi 0, %s112
    %s130 = sphi 0, %s130
    %s132 = sphi 0, %s130
    %s133 = sphi 0, %s132
    %s147 = sphi 0, %s133
    %s151 = sphi 0, %s151
    %s153 = sphi 0, %s151
    %s154 = sphi 0, %s153
    %s168 = sphi 0, %s154
    %s172 = sphi 0, %s172
    %s174 = sphi 0, %s172
    %s175 = sphi 0, %s174
    %s189 = sphi 0, %s175
    %s193 = sphi 0, %s193
    %s195 = sphi 0, %s193
    %s196 = sphi 0, %s195
    %s210 = sphi 0, %s196
    %s214 = sphi 0, %s214
    %s216 = sphi 0, %s214
    %s217 = sphi 0, %s216
    %s231 = sphi 0, %s217
    %s235 = sphi 0, %s235
    %s237 = sphi 0, %s235
    %s238 = sphi 0, %s237
    %s252 = sphi 0, %s238
    %s256 = sphi 0, %s256
    %s258 = sphi 0, %s256
    %s259 = sphi 0, %s258
    %s273 = sphi 0, %s259
    %s277 = sphi 0, %s277
    %s279 = sphi 0, %s277
    %s280 = sphi 0, %s279
    %s294 = sphi 0, %s280
    %s298 = sphi 0, %s298
    %s300 = sphi 0, %s298
    %s301 = sphi 0, %s300
    %s315 = sphi 0, %s301
    %s319 = sphi 0, %s319
    %s321 = sphi 0, %s319
    %s322 = sphi 0, %s321
    %s336 = sphi 0, %s322
    %s340 = sphi 0, %s340
    %s342 = sphi 0, %s340
    %s343 = sphi 0, %s342
    %s357 = sphi 0, %s343
    %s361 = sphi 0, %s361
    %s363 = sphi 0, %s361
    %s364 = sphi 0, %s363
    %s378 = sphi 0, %s364
    %s382 = sphi 0, %s382
    %s384 = sphi 0, %s382
    %s385 = sphi 0, %s384
    %s399 = sphi 0, %s385
    %s403 = sphi 0, %s403
    %s405 = sphi 0, %s403
    %s406 = sphi 0, %s405
    %s420 = sphi 0, %s406
    %s424 = sphi 0, %s424
    %s426 = sphi 0, %s424
    %s427 = sphi 0, %s426
    %s441 = sphi 0, %s427
    %s445 = sphi 0, %s445
    %s447 = sphi 0, %s445
    %s448 = sphi 0, %s447
    %s462 = sphi 0, %s448
    %s466 = sphi 0, %s466
    %s468 = sphi 0, %s466
    %s469 = sphi 0, %s468
    %s483 = sphi 0, %s469
    %s487 = sphi 0, %s487
    %s489 = sphi 0, %s487
    %s490 = sphi 0, %s489
    %s504 = sphi 0, %s490
    %s508 = sphi 0, %s508
    %s510 = sphi 0, %s508
    %s511 = sphi 0, %s510
    %s525 = sphi 0, %s511
    %s529 = sphi 0, %s529
    %s531 = sphi 0, %s529
    %s532 = sphi 0, %s531
    %s546 = sphi 0, %s532
    %s550 = sphi 0, %s550
    %s552 = sphi 0, %s550
    %s553 = sphi 0, %s552
    %s567 = sphi 0, %s553
    %s571 = sphi 0, %s571
    %s573 = sphi 0, %s571
    %s574 = sphi 0, %s573
    %s588 = sphi 0, %s574
    %s592 = sphi 0, %s592
    %s594 = sphi 0, %s592
    %s595 = sphi 0, %s594
    %s609 = sphi 0, %s595
    %s613 = sphi 0, %s613
    %s615 = sphi 0, %s613
    %s616 = sphi 0, %s615
    %s630 = sphi 0, %s616
    %s634 = sphi 0, %s634
    %s636 = sphi 0, %s634
    %s637 = sphi 0, %s636
    %s651 = sphi 0, %s637
    %s655 = sphi 0, %s655
    %s657 = sphi 0, %s655
    %s658 = sphi 0, %s657
    %s672 = sphi 0, %s658
    %s676 = sphi 0, %s676
    %s678 = sphi 0, %s676
    %s679 = sphi 0, %s678
    %s693 = sphi 0, %s679
    %s697 = sphi 0, %s697
    %s699 = sphi 0, %s697
    %s700 = sphi 0, %s699
    %s714 = sphi 0, %s700
    %s718 = sphi 0, %s718
    %s720 = sphi 0, %s718
    %s721 = sphi 0, %s720
    %s735 = sphi 0, %s721
    %s739 = sphi 0, %s739
    %s741 = sphi 0, %s739
    %s742 = sphi 0, %s741
    %s756 = sphi 0, %s742
    %s760 = sphi 0, %s760
    %s762 = sphi 0, %s760
    %s763 = sphi 0, %s762
    %s777 = sphi 0, %s763
    %s781 = sphi 0, %s781
    %s783 = sphi 0, %s781
    %s784 = sphi 0, %s783
    %s798 = sphi 0, %s784
    %s804 = sphi 0, %s806
    %s807 = sphi 0, %s804
    %s808 = sphi 0, %s807
    %s824 = sphi 0, %s808
  $region4: #{sagcn_forward.1} parent=0 // loop_header_branch
    %78 = sbr.rel (%p76) target = $region8
  $region5: #{sagcn_forward.1} parent=0 // loop_body
    %s80 = ssub.s32 %s75, 1
    %s81 = ssub.s32 %s75, 2
    %s82 = sadd.s32 %s75, 1
    %s83 = ssub.s32 %s75, %s82
    %p84 = scmp.eq.s32.totalorder %s83, 0
    %s86 = sadd.s32 %s85, 1
    %s87 = scalar_select %p84, %s85, %s86
    %p90 = pneg %p84
    %p91 = scmp.eq.s32.totalorder %s75, 1
    %p92 = por %p90, %p91
    %p93 = scmp.ne.s32.totalorder %s85, %s88
    %p94 = scmp.eq.s32.totalorder %s75, 0
    %p95 = por %p93, %p94
    %p96 = scmp.ne.s32.totalorder %s85, %s88
    %p97 = scmp.eq.s32.totalorder %s80, 1
    %p98 = por %p96, %p97
    %p99 = scmp.ne.s32.totalorder %s88, %s89
    %p100 = scmp.eq.s32.totalorder %s80, 0
    %p101 = por %p99, %p100
    %p102 = scmp.ne.s32.totalorder %s88, %s89
    %p103 = scmp.eq.s32.totalorder %s81, 1
    %p104 = por %p102, %p103
    %p106 = scmp.ne.s32.totalorder %s89, %s105
    %p107 = scmp.eq.s32.totalorder %s81, 0
    %p108 = por %p106, %p107
    %s110 = sadd.s32 %s109, 1
    %p113 = scmp.eq.s32.totalorder %s75, 1
    %p114 = scmp.ne.s32.totalorder %s109, %s111
    %p115 = scmp.eq.s32.totalorder %s75, 0
    %p116 = por %p114, %p115
    %p117 = scmp.ne.s32.totalorder %s109, %s111
    %p118 = scmp.eq.s32.totalorder %s80, 1
    %p119 = por %p117, %p118
    %p120 = scmp.ne.s32.totalorder %s111, %s112
    %p121 = scmp.eq.s32.totalorder %s80, 0
    %p122 = por %p120, %p121
    %p123 = scmp.ne.s32.totalorder %s111, %s112
    %p124 = scmp.eq.s32.totalorder %s81, 1
    %p125 = por %p123, %p124
    %p127 = scmp.ne.s32.totalorder %s112, %s126
    %p128 = scmp.eq.s32.totalorder %s81, 0
    %p129 = por %p127, %p128
    %s131 = sadd.s32 %s130, 1
    %p134 = scmp.eq.s32.totalorder %s75, 1
    %p135 = scmp.ne.s32.totalorder %s130, %s132
    %p136 = scmp.eq.s32.totalorder %s75, 0
    %p137 = por %p135, %p136
    %p138 = scmp.ne.s32.totalorder %s130, %s132
    %p139 = scmp.eq.s32.totalorder %s80, 1
    %p140 = por %p138, %p139
    %p141 = scmp.ne.s32.totalorder %s132, %s133
    %p142 = scmp.eq.s32.totalorder %s80, 0
    %p143 = por %p141, %p142
    %p144 = scmp.ne.s32.totalorder %s132, %s133
    %p145 = scmp.eq.s32.totalorder %s81, 1
    %p146 = por %p144, %p145
    %p148 = scmp.ne.s32.totalorder %s133, %s147
    %p149 = scmp.eq.s32.totalorder %s81, 0
    %p150 = por %p148, %p149
    %s152 = sadd.s32 %s151, 1
    %p155 = scmp.eq.s32.totalorder %s75, 1
    %p156 = scmp.ne.s32.totalorder %s151, %s153
    %p157 = scmp.eq.s32.totalorder %s75, 0
    %p158 = por %p156, %p157
    %p159 = scmp.ne.s32.totalorder %s151, %s153
    %p160 = scmp.eq.s32.totalorder %s80, 1
    %p161 = por %p159, %p160
    %p162 = scmp.ne.s32.totalorder %s153, %s154
    %p163 = scmp.eq.s32.totalorder %s80, 0
    %p164 = por %p162, %p163
    %p165 = scmp.ne.s32.totalorder %s153, %s154
    %p166 = scmp.eq.s32.totalorder %s81, 1
    %p167 = por %p165, %p166
    %p169 = scmp.ne.s32.totalorder %s154, %s168
    %p170 = scmp.eq.s32.totalorder %s81, 0
    %p171 = por %p169, %p170
    %s173 = sadd.s32 %s172, 1
    %p176 = scmp.eq.s32.totalorder %s75, 1
    %p177 = scmp.ne.s32.totalorder %s172, %s174
    %p178 = scmp.eq.s32.totalorder %s75, 0
    %p179 = por %p177, %p178
    %p180 = scmp.ne.s32.totalorder %s172, %s174
    %p181 = scmp.eq.s32.totalorder %s80, 1
    %p182 = por %p180, %p181
    %p183 = scmp.ne.s32.totalorder %s174, %s175
    %p184 = scmp.eq.s32.totalorder %s80, 0
    %p185 = por %p183, %p184
    %p186 = scmp.ne.s32.totalorder %s174, %s175
    %p187 = scmp.eq.s32.totalorder %s81, 1
    %p188 = por %p186, %p187
    %p190 = scmp.ne.s32.totalorder %s175, %s189
    %p191 = scmp.eq.s32.totalorder %s81, 0
    %p192 = por %p190, %p191
    %s194 = sadd.s32 %s193, 1
    %p197 = scmp.eq.s32.totalorder %s75, 1
    %p198 = scmp.ne.s32.totalorder %s193, %s195
    %p199 = scmp.eq.s32.totalorder %s75, 0
    %p200 = por %p198, %p199
    %p201 = scmp.ne.s32.totalorder %s193, %s195
    %p202 = scmp.eq.s32.totalorder %s80, 1
    %p203 = por %p201, %p202
    %p204 = scmp.ne.s32.totalorder %s195, %s196
    %p205 = scmp.eq.s32.totalorder %s80, 0
    %p206 = por %p204, %p205
    %p207 = scmp.ne.s32.totalorder %s195, %s196
    %p208 = scmp.eq.s32.totalorder %s81, 1
    %p209 = por %p207, %p208
    %p211 = scmp.ne.s32.totalorder %s196, %s210
    %p212 = scmp.eq.s32.totalorder %s81, 0
    %p213 = por %p211, %p212
    %s215 = sadd.s32 %s214, 1
    %p218 = scmp.eq.s32.totalorder %s75, 1
    %p219 = scmp.ne.s32.totalorder %s214, %s216
    %p220 = scmp.eq.s32.totalorder %s75, 0
    %p221 = por %p219, %p220
    %p222 = scmp.ne.s32.totalorder %s214, %s216
    %p223 = scmp.eq.s32.totalorder %s80, 1
    %p224 = por %p222, %p223
    %p225 = scmp.ne.s32.totalorder %s216, %s217
    %p226 = scmp.eq.s32.totalorder %s80, 0
    %p227 = por %p225, %p226
    %p228 = scmp.ne.s32.totalorder %s216, %s217
    %p229 = scmp.eq.s32.totalorder %s81, 1
    %p230 = por %p228, %p229
    %p232 = scmp.ne.s32.totalorder %s217, %s231
    %p233 = scmp.eq.s32.totalorder %s81, 0
    %p234 = por %p232, %p233
    %s236 = sadd.s32 %s235, 1
    %p239 = scmp.eq.s32.totalorder %s75, 1
    %p240 = scmp.ne.s32.totalorder %s235, %s237
    %p241 = scmp.eq.s32.totalorder %s75, 0
    %p242 = por %p240, %p241
    %p243 = scmp.ne.s32.totalorder %s235, %s237
    %p244 = scmp.eq.s32.totalorder %s80, 1
    %p245 = por %p243, %p244
    %p246 = scmp.ne.s32.totalorder %s237, %s238
    %p247 = scmp.eq.s32.totalorder %s80, 0
    %p248 = por %p246, %p247
    %p249 = scmp.ne.s32.totalorder %s237, %s238
    %p250 = scmp.eq.s32.totalorder %s81, 1
    %p251 = por %p249, %p250
    %p253 = scmp.ne.s32.totalorder %s238, %s252
    %p254 = scmp.eq.s32.totalorder %s81, 0
    %p255 = por %p253, %p254
    %s257 = sadd.s32 %s256, 1
    %p260 = scmp.eq.s32.totalorder %s75, 1
    %p261 = scmp.ne.s32.totalorder %s256, %s258
    %p262 = scmp.eq.s32.totalorder %s75, 0
    %p263 = por %p261, %p262
    %p264 = scmp.ne.s32.totalorder %s256, %s258
    %p265 = scmp.eq.s32.totalorder %s80, 1
    %p266 = por %p264, %p265
    %p267 = scmp.ne.s32.totalorder %s258, %s259
    %p268 = scmp.eq.s32.totalorder %s80, 0
    %p269 = por %p267, %p268
    %p270 = scmp.ne.s32.totalorder %s258, %s259
    %p271 = scmp.eq.s32.totalorder %s81, 1
    %p272 = por %p270, %p271
    %p274 = scmp.ne.s32.totalorder %s259, %s273
    %p275 = scmp.eq.s32.totalorder %s81, 0
    %p276 = por %p274, %p275
    %s278 = sadd.s32 %s277, 1
    %p281 = scmp.eq.s32.totalorder %s75, 1
    %p282 = scmp.ne.s32.totalorder %s277, %s279
    %p283 = scmp.eq.s32.totalorder %s75, 0
    %p284 = por %p282, %p283
    %p285 = scmp.ne.s32.totalorder %s277, %s279
    %p286 = scmp.eq.s32.totalorder %s80, 1
    %p287 = por %p285, %p286
    %p288 = scmp.ne.s32.totalorder %s279, %s280
    %p289 = scmp.eq.s32.totalorder %s80, 0
    %p290 = por %p288, %p289
    %p291 = scmp.ne.s32.totalorder %s279, %s280
    %p292 = scmp.eq.s32.totalorder %s81, 1
    %p293 = por %p291, %p292
    %p295 = scmp.ne.s32.totalorder %s280, %s294
    %p296 = scmp.eq.s32.totalorder %s81, 0
    %p297 = por %p295, %p296
    %s299 = sadd.s32 %s298, 1
    %p302 = scmp.eq.s32.totalorder %s75, 1
    %p303 = scmp.ne.s32.totalorder %s298, %s300
    %p304 = scmp.eq.s32.totalorder %s75, 0
    %p305 = por %p303, %p304
    %p306 = scmp.ne.s32.totalorder %s298, %s300
    %p307 = scmp.eq.s32.totalorder %s80, 1
    %p308 = por %p306, %p307
    %p309 = scmp.ne.s32.totalorder %s300, %s301
    %p310 = scmp.eq.s32.totalorder %s80, 0
    %p311 = por %p309, %p310
    %p312 = scmp.ne.s32.totalorder %s300, %s301
    %p313 = scmp.eq.s32.totalorder %s81, 1
    %p314 = por %p312, %p313
    %p316 = scmp.ne.s32.totalorder %s301, %s315
    %p317 = scmp.eq.s32.totalorder %s81, 0
    %p318 = por %p316, %p317
    %s320 = sadd.s32 %s319, 1
    %p323 = scmp.eq.s32.totalorder %s75, 1
    %p324 = scmp.ne.s32.totalorder %s319, %s321
    %p325 = scmp.eq.s32.totalorder %s75, 0
    %p326 = por %p324, %p325
    %p327 = scmp.ne.s32.totalorder %s319, %s321
    %p328 = scmp.eq.s32.totalorder %s80, 1
    %p329 = por %p327, %p328
    %p330 = scmp.ne.s32.totalorder %s321, %s322
    %p331 = scmp.eq.s32.totalorder %s80, 0
    %p332 = por %p330, %p331
    %p333 = scmp.ne.s32.totalorder %s321, %s322
    %p334 = scmp.eq.s32.totalorder %s81, 1
    %p335 = por %p333, %p334
    %p337 = scmp.ne.s32.totalorder %s322, %s336
    %p338 = scmp.eq.s32.totalorder %s81, 0
    %p339 = por %p337, %p338
    %s341 = sadd.s32 %s340, 1
    %p344 = scmp.eq.s32.totalorder %s75, 1
    %p345 = scmp.ne.s32.totalorder %s340, %s342
    %p346 = scmp.eq.s32.totalorder %s75, 0
    %p347 = por %p345, %p346
    %p348 = scmp.ne.s32.totalorder %s340, %s342
    %p349 = scmp.eq.s32.totalorder %s80, 1
    %p350 = por %p348, %p349
    %p351 = scmp.ne.s32.totalorder %s342, %s343
    %p352 = scmp.eq.s32.totalorder %s80, 0
    %p353 = por %p351, %p352
    %p354 = scmp.ne.s32.totalorder %s342, %s343
    %p355 = scmp.eq.s32.totalorder %s81, 1
    %p356 = por %p354, %p355
    %p358 = scmp.ne.s32.totalorder %s343, %s357
    %p359 = scmp.eq.s32.totalorder %s81, 0
    %p360 = por %p358, %p359
    %s362 = sadd.s32 %s361, 1
    %p365 = scmp.eq.s32.totalorder %s75, 1
    %p366 = scmp.ne.s32.totalorder %s361, %s363
    %p367 = scmp.eq.s32.totalorder %s75, 0
    %p368 = por %p366, %p367
    %p369 = scmp.ne.s32.totalorder %s361, %s363
    %p370 = scmp.eq.s32.totalorder %s80, 1
    %p371 = por %p369, %p370
    %p372 = scmp.ne.s32.totalorder %s363, %s364
    %p373 = scmp.eq.s32.totalorder %s80, 0
    %p374 = por %p372, %p373
    %p375 = scmp.ne.s32.totalorder %s363, %s364
    %p376 = scmp.eq.s32.totalorder %s81, 1
    %p377 = por %p375, %p376
    %p379 = scmp.ne.s32.totalorder %s364, %s378
    %p380 = scmp.eq.s32.totalorder %s81, 0
    %p381 = por %p379, %p380
    %s383 = sadd.s32 %s382, 1
    %p386 = scmp.eq.s32.totalorder %s75, 1
    %p387 = scmp.ne.s32.totalorder %s382, %s384
    %p388 = scmp.eq.s32.totalorder %s75, 0
    %p389 = por %p387, %p388
    %p390 = scmp.ne.s32.totalorder %s382, %s384
    %p391 = scmp.eq.s32.totalorder %s80, 1
    %p392 = por %p390, %p391
    %p393 = scmp.ne.s32.totalorder %s384, %s385
    %p394 = scmp.eq.s32.totalorder %s80, 0
    %p395 = por %p393, %p394
    %p396 = scmp.ne.s32.totalorder %s384, %s385
    %p397 = scmp.eq.s32.totalorder %s81, 1
    %p398 = por %p396, %p397
    %p400 = scmp.ne.s32.totalorder %s385, %s399
    %p401 = scmp.eq.s32.totalorder %s81, 0
    %p402 = por %p400, %p401
    %s404 = sadd.s32 %s403, 1
    %p407 = scmp.eq.s32.totalorder %s75, 1
    %p408 = scmp.ne.s32.totalorder %s403, %s405
    %p409 = scmp.eq.s32.totalorder %s75, 0
    %p410 = por %p408, %p409
    %p411 = scmp.ne.s32.totalorder %s403, %s405
    %p412 = scmp.eq.s32.totalorder %s80, 1
    %p413 = por %p411, %p412
    %p414 = scmp.ne.s32.totalorder %s405, %s406
    %p415 = scmp.eq.s32.totalorder %s80, 0
    %p416 = por %p414, %p415
    %p417 = scmp.ne.s32.totalorder %s405, %s406
    %p418 = scmp.eq.s32.totalorder %s81, 1
    %p419 = por %p417, %p418
    %p421 = scmp.ne.s32.totalorder %s406, %s420
    %p422 = scmp.eq.s32.totalorder %s81, 0
    %p423 = por %p421, %p422
    %s425 = sadd.s32 %s424, 1
    %p428 = scmp.eq.s32.totalorder %s75, 1
    %p429 = scmp.ne.s32.totalorder %s424, %s426
    %p430 = scmp.eq.s32.totalorder %s75, 0
    %p431 = por %p429, %p430
    %p432 = scmp.ne.s32.totalorder %s424, %s426
    %p433 = scmp.eq.s32.totalorder %s80, 1
    %p434 = por %p432, %p433
    %p435 = scmp.ne.s32.totalorder %s426, %s427
    %p436 = scmp.eq.s32.totalorder %s80, 0
    %p437 = por %p435, %p436
    %p438 = scmp.ne.s32.totalorder %s426, %s427
    %p439 = scmp.eq.s32.totalorder %s81, 1
    %p440 = por %p438, %p439
    %p442 = scmp.ne.s32.totalorder %s427, %s441
    %p443 = scmp.eq.s32.totalorder %s81, 0
    %p444 = por %p442, %p443
    %s446 = sadd.s32 %s445, 1
    %p449 = scmp.eq.s32.totalorder %s75, 1
    %p450 = scmp.ne.s32.totalorder %s445, %s447
    %p451 = scmp.eq.s32.totalorder %s75, 0
    %p452 = por %p450, %p451
    %p453 = scmp.ne.s32.totalorder %s445, %s447
    %p454 = scmp.eq.s32.totalorder %s80, 1
    %p455 = por %p453, %p454
    %p456 = scmp.ne.s32.totalorder %s447, %s448
    %p457 = scmp.eq.s32.totalorder %s80, 0
    %p458 = por %p456, %p457
    %p459 = scmp.ne.s32.totalorder %s447, %s448
    %p460 = scmp.eq.s32.totalorder %s81, 1
    %p461 = por %p459, %p460
    %p463 = scmp.ne.s32.totalorder %s448, %s462
    %p464 = scmp.eq.s32.totalorder %s81, 0
    %p465 = por %p463, %p464
    %s467 = sadd.s32 %s466, 1
    %p470 = scmp.eq.s32.totalorder %s75, 1
    %p471 = scmp.ne.s32.totalorder %s466, %s468
    %p472 = scmp.eq.s32.totalorder %s75, 0
    %p473 = por %p471, %p472
    %p474 = scmp.ne.s32.totalorder %s466, %s468
    %p475 = scmp.eq.s32.totalorder %s80, 1
    %p476 = por %p474, %p475
    %p477 = scmp.ne.s32.totalorder %s468, %s469
    %p478 = scmp.eq.s32.totalorder %s80, 0
    %p479 = por %p477, %p478
    %p480 = scmp.ne.s32.totalorder %s468, %s469
    %p481 = scmp.eq.s32.totalorder %s81, 1
    %p482 = por %p480, %p481
    %p484 = scmp.ne.s32.totalorder %s469, %s483
    %p485 = scmp.eq.s32.totalorder %s81, 0
    %p486 = por %p484, %p485
    %s488 = sadd.s32 %s487, 1
    %p491 = scmp.eq.s32.totalorder %s75, 1
    %p492 = scmp.ne.s32.totalorder %s487, %s489
    %p493 = scmp.eq.s32.totalorder %s75, 0
    %p494 = por %p492, %p493
    %p495 = scmp.ne.s32.totalorder %s487, %s489
    %p496 = scmp.eq.s32.totalorder %s80, 1
    %p497 = por %p495, %p496
    %p498 = scmp.ne.s32.totalorder %s489, %s490
    %p499 = scmp.eq.s32.totalorder %s80, 0
    %p500 = por %p498, %p499
    %p501 = scmp.ne.s32.totalorder %s489, %s490
    %p502 = scmp.eq.s32.totalorder %s81, 1
    %p503 = por %p501, %p502
    %p505 = scmp.ne.s32.totalorder %s490, %s504
    %p506 = scmp.eq.s32.totalorder %s81, 0
    %p507 = por %p505, %p506
    %s509 = sadd.s32 %s508, 1
    %p512 = scmp.eq.s32.totalorder %s75, 1
    %p513 = scmp.ne.s32.totalorder %s508, %s510
    %p514 = scmp.eq.s32.totalorder %s75, 0
    %p515 = por %p513, %p514
    %p516 = scmp.ne.s32.totalorder %s508, %s510
    %p517 = scmp.eq.s32.totalorder %s80, 1
    %p518 = por %p516, %p517
    %p519 = scmp.ne.s32.totalorder %s510, %s511
    %p520 = scmp.eq.s32.totalorder %s80, 0
    %p521 = por %p519, %p520
    %p522 = scmp.ne.s32.totalorder %s510, %s511
    %p523 = scmp.eq.s32.totalorder %s81, 1
    %p524 = por %p522, %p523
    %p526 = scmp.ne.s32.totalorder %s511, %s525
    %p527 = scmp.eq.s32.totalorder %s81, 0
    %p528 = por %p526, %p527
    %s530 = sadd.s32 %s529, 1
    %p533 = scmp.eq.s32.totalorder %s75, 1
    %p534 = scmp.ne.s32.totalorder %s529, %s531
    %p535 = scmp.eq.s32.totalorder %s75, 0
    %p536 = por %p534, %p535
    %p537 = scmp.ne.s32.totalorder %s529, %s531
    %p538 = scmp.eq.s32.totalorder %s80, 1
    %p539 = por %p537, %p538
    %p540 = scmp.ne.s32.totalorder %s531, %s532
    %p541 = scmp.eq.s32.totalorder %s80, 0
    %p542 = por %p540, %p541
    %p543 = scmp.ne.s32.totalorder %s531, %s532
    %p544 = scmp.eq.s32.totalorder %s81, 1
    %p545 = por %p543, %p544
    %p547 = scmp.ne.s32.totalorder %s532, %s546
    %p548 = scmp.eq.s32.totalorder %s81, 0
    %p549 = por %p547, %p548
    %s551 = sadd.s32 %s550, 1
    %p554 = scmp.eq.s32.totalorder %s75, 1
    %p555 = scmp.ne.s32.totalorder %s550, %s552
    %p556 = scmp.eq.s32.totalorder %s75, 0
    %p557 = por %p555, %p556
    %p558 = scmp.ne.s32.totalorder %s550, %s552
    %p559 = scmp.eq.s32.totalorder %s80, 1
    %p560 = por %p558, %p559
    %p561 = scmp.ne.s32.totalorder %s552, %s553
    %p562 = scmp.eq.s32.totalorder %s80, 0
    %p563 = por %p561, %p562
    %p564 = scmp.ne.s32.totalorder %s552, %s553
    %p565 = scmp.eq.s32.totalorder %s81, 1
    %p566 = por %p564, %p565
    %p568 = scmp.ne.s32.totalorder %s553, %s567
    %p569 = scmp.eq.s32.totalorder %s81, 0
    %p570 = por %p568, %p569
    %s572 = sadd.s32 %s571, 1
    %p575 = scmp.eq.s32.totalorder %s75, 1
    %p576 = scmp.ne.s32.totalorder %s571, %s573
    %p577 = scmp.eq.s32.totalorder %s75, 0
    %p578 = por %p576, %p577
    %p579 = scmp.ne.s32.totalorder %s571, %s573
    %p580 = scmp.eq.s32.totalorder %s80, 1
    %p581 = por %p579, %p580
    %p582 = scmp.ne.s32.totalorder %s573, %s574
    %p583 = scmp.eq.s32.totalorder %s80, 0
    %p584 = por %p582, %p583
    %p585 = scmp.ne.s32.totalorder %s573, %s574
    %p586 = scmp.eq.s32.totalorder %s81, 1
    %p587 = por %p585, %p586
    %p589 = scmp.ne.s32.totalorder %s574, %s588
    %p590 = scmp.eq.s32.totalorder %s81, 0
    %p591 = por %p589, %p590
    %s593 = sadd.s32 %s592, 1
    %p596 = scmp.eq.s32.totalorder %s75, 1
    %p597 = scmp.ne.s32.totalorder %s592, %s594
    %p598 = scmp.eq.s32.totalorder %s75, 0
    %p599 = por %p597, %p598
    %p600 = scmp.ne.s32.totalorder %s592, %s594
    %p601 = scmp.eq.s32.totalorder %s80, 1
    %p602 = por %p600, %p601
    %p603 = scmp.ne.s32.totalorder %s594, %s595
    %p604 = scmp.eq.s32.totalorder %s80, 0
    %p605 = por %p603, %p604
    %p606 = scmp.ne.s32.totalorder %s594, %s595
    %p607 = scmp.eq.s32.totalorder %s81, 1
    %p608 = por %p606, %p607
    %p610 = scmp.ne.s32.totalorder %s595, %s609
    %p611 = scmp.eq.s32.totalorder %s81, 0
    %p612 = por %p610, %p611
    %s614 = sadd.s32 %s613, 1
    %p617 = scmp.eq.s32.totalorder %s75, 1
    %p618 = scmp.ne.s32.totalorder %s613, %s615
    %p619 = scmp.eq.s32.totalorder %s75, 0
    %p620 = por %p618, %p619
    %p621 = scmp.ne.s32.totalorder %s613, %s615
    %p622 = scmp.eq.s32.totalorder %s80, 1
    %p623 = por %p621, %p622
    %p624 = scmp.ne.s32.totalorder %s615, %s616
    %p625 = scmp.eq.s32.totalorder %s80, 0
    %p626 = por %p624, %p625
    %p627 = scmp.ne.s32.totalorder %s615, %s616
    %p628 = scmp.eq.s32.totalorder %s81, 1
    %p629 = por %p627, %p628
    %p631 = scmp.ne.s32.totalorder %s616, %s630
    %p632 = scmp.eq.s32.totalorder %s81, 0
    %p633 = por %p631, %p632
    %s635 = sadd.s32 %s634, 1
    %p638 = scmp.eq.s32.totalorder %s75, 1
    %p639 = scmp.ne.s32.totalorder %s634, %s636
    %p640 = scmp.eq.s32.totalorder %s75, 0
    %p641 = por %p639, %p640
    %p642 = scmp.ne.s32.totalorder %s634, %s636
    %p643 = scmp.eq.s32.totalorder %s80, 1
    %p644 = por %p642, %p643
    %p645 = scmp.ne.s32.totalorder %s636, %s637
    %p646 = scmp.eq.s32.totalorder %s80, 0
    %p647 = por %p645, %p646
    %p648 = scmp.ne.s32.totalorder %s636, %s637
    %p649 = scmp.eq.s32.totalorder %s81, 1
    %p650 = por %p648, %p649
    %p652 = scmp.ne.s32.totalorder %s637, %s651
    %p653 = scmp.eq.s32.totalorder %s81, 0
    %p654 = por %p652, %p653
    %s656 = sadd.s32 %s655, 1
    %p659 = scmp.eq.s32.totalorder %s75, 1
    %p660 = scmp.ne.s32.totalorder %s655, %s657
    %p661 = scmp.eq.s32.totalorder %s75, 0
    %p662 = por %p660, %p661
    %p663 = scmp.ne.s32.totalorder %s655, %s657
    %p664 = scmp.eq.s32.totalorder %s80, 1
    %p665 = por %p663, %p664
    %p666 = scmp.ne.s32.totalorder %s657, %s658
    %p667 = scmp.eq.s32.totalorder %s80, 0
    %p668 = por %p666, %p667
    %p669 = scmp.ne.s32.totalorder %s657, %s658
    %p670 = scmp.eq.s32.totalorder %s81, 1
    %p671 = por %p669, %p670
    %p673 = scmp.ne.s32.totalorder %s658, %s672
    %p674 = scmp.eq.s32.totalorder %s81, 0
    %p675 = por %p673, %p674
    %s677 = sadd.s32 %s676, 1
    %p680 = scmp.eq.s32.totalorder %s75, 1
    %p681 = scmp.ne.s32.totalorder %s676, %s678
    %p682 = scmp.eq.s32.totalorder %s75, 0
    %p683 = por %p681, %p682
    %p684 = scmp.ne.s32.totalorder %s676, %s678
    %p685 = scmp.eq.s32.totalorder %s80, 1
    %p686 = por %p684, %p685
    %p687 = scmp.ne.s32.totalorder %s678, %s679
    %p688 = scmp.eq.s32.totalorder %s80, 0
    %p689 = por %p687, %p688
    %p690 = scmp.ne.s32.totalorder %s678, %s679
    %p691 = scmp.eq.s32.totalorder %s81, 1
    %p692 = por %p690, %p691
    %p694 = scmp.ne.s32.totalorder %s679, %s693
    %p695 = scmp.eq.s32.totalorder %s81, 0
    %p696 = por %p694, %p695
    %s698 = sadd.s32 %s697, 1
    %p701 = scmp.eq.s32.totalorder %s75, 1
    %p702 = scmp.ne.s32.totalorder %s697, %s699
    %p703 = scmp.eq.s32.totalorder %s75, 0
    %p704 = por %p702, %p703
    %p705 = scmp.ne.s32.totalorder %s697, %s699
    %p706 = scmp.eq.s32.totalorder %s80, 1
    %p707 = por %p705, %p706
    %p708 = scmp.ne.s32.totalorder %s699, %s700
    %p709 = scmp.eq.s32.totalorder %s80, 0
    %p710 = por %p708, %p709
    %p711 = scmp.ne.s32.totalorder %s699, %s700
    %p712 = scmp.eq.s32.totalorder %s81, 1
    %p713 = por %p711, %p712
    %p715 = scmp.ne.s32.totalorder %s700, %s714
    %p716 = scmp.eq.s32.totalorder %s81, 0
    %p717 = por %p715, %p716
    %s719 = sadd.s32 %s718, 1
    %p722 = scmp.eq.s32.totalorder %s75, 1
    %p723 = scmp.ne.s32.totalorder %s718, %s720
    %p724 = scmp.eq.s32.totalorder %s75, 0
    %p725 = por %p723, %p724
    %p726 = scmp.ne.s32.totalorder %s718, %s720
    %p727 = scmp.eq.s32.totalorder %s80, 1
    %p728 = por %p726, %p727
    %p729 = scmp.ne.s32.totalorder %s720, %s721
    %p730 = scmp.eq.s32.totalorder %s80, 0
    %p731 = por %p729, %p730
    %p732 = scmp.ne.s32.totalorder %s720, %s721
    %p733 = scmp.eq.s32.totalorder %s81, 1
    %p734 = por %p732, %p733
    %p736 = scmp.ne.s32.totalorder %s721, %s735
    %p737 = scmp.eq.s32.totalorder %s81, 0
    %p738 = por %p736, %p737
    %s740 = sadd.s32 %s739, 1
    %p743 = scmp.eq.s32.totalorder %s75, 1
    %p744 = scmp.ne.s32.totalorder %s739, %s741
    %p745 = scmp.eq.s32.totalorder %s75, 0
    %p746 = por %p744, %p745
    %p747 = scmp.ne.s32.totalorder %s739, %s741
    %p748 = scmp.eq.s32.totalorder %s80, 1
    %p749 = por %p747, %p748
    %p750 = scmp.ne.s32.totalorder %s741, %s742
    %p751 = scmp.eq.s32.totalorder %s80, 0
    %p752 = por %p750, %p751
    %p753 = scmp.ne.s32.totalorder %s741, %s742
    %p754 = scmp.eq.s32.totalorder %s81, 1
    %p755 = por %p753, %p754
    %p757 = scmp.ne.s32.totalorder %s742, %s756
    %p758 = scmp.eq.s32.totalorder %s81, 0
    %p759 = por %p757, %p758
    %s761 = sadd.s32 %s760, 1
    %p764 = scmp.eq.s32.totalorder %s75, 1
    %p765 = scmp.ne.s32.totalorder %s760, %s762
    %p766 = scmp.eq.s32.totalorder %s75, 0
    %p767 = por %p765, %p766
    %p768 = scmp.ne.s32.totalorder %s760, %s762
    %p769 = scmp.eq.s32.totalorder %s80, 1
    %p770 = por %p768, %p769
    %p771 = scmp.ne.s32.totalorder %s762, %s763
    %p772 = scmp.eq.s32.totalorder %s80, 0
    %p773 = por %p771, %p772
    %p774 = scmp.ne.s32.totalorder %s762, %s763
    %p775 = scmp.eq.s32.totalorder %s81, 1
    %p776 = por %p774, %p775
    %p778 = scmp.ne.s32.totalorder %s763, %s777
    %p779 = scmp.eq.s32.totalorder %s81, 0
    %p780 = por %p778, %p779
    %s782 = sadd.s32 %s781, 1
    %p785 = scmp.eq.s32.totalorder %s75, 1
    %p786 = scmp.ne.s32.totalorder %s781, %s783
    %p787 = scmp.eq.s32.totalorder %s75, 0
    %p788 = por %p786, %p787
    %p789 = scmp.ne.s32.totalorder %s781, %s783
    %p790 = scmp.eq.s32.totalorder %s80, 1
    %p791 = por %p789, %p790
    %p792 = scmp.ne.s32.totalorder %s783, %s784
    %p793 = scmp.eq.s32.totalorder %s80, 0
    %p794 = por %p792, %p793
    %p795 = scmp.ne.s32.totalorder %s783, %s784
    %p796 = scmp.eq.s32.totalorder %s81, 1
    %p797 = por %p795, %p796
    %p799 = scmp.ne.s32.totalorder %s784, %s798
    %p800 = scmp.eq.s32.totalorder %s81, 0
    %p801 = por %p799, %p800
    %s802 = ssub.s32 %s75, %s82
    %p803 = scmp.eq.s32.totalorder %s802, 0
    %s805 = sadd.s32 %s804, 1
    %s806 = scalar_select %p803, %s804, %s805
    %p809 = pneg %p803
    %p810 = scmp.eq.s32.totalorder %s75, 1
    %p811 = por %p809, %p810
    %p812 = scmp.ne.s32.totalorder %s804, %s807
    %p813 = scmp.eq.s32.totalorder %s75, 0
    %p814 = por %p812, %p813
    %p815 = scmp.ne.s32.totalorder %s804, %s807
    %p816 = scmp.eq.s32.totalorder %s80, 1
    %p817 = por %p815, %p816
    %p818 = scmp.ne.s32.totalorder %s807, %s808
    %p819 = scmp.eq.s32.totalorder %s80, 0
    %p820 = por %p818, %p819
    %p821 = scmp.ne.s32.totalorder %s807, %s808
    %p822 = scmp.eq.s32.totalorder %s81, 1
    %p823 = por %p821, %p822
    %p825 = scmp.ne.s32.totalorder %s808, %s824
    %p826 = scmp.eq.s32.totalorder %s81, 0
    %p827 = por %p825, %p826
    %p828 = scmp.le.s32.totalorder 1, %s75
    %p829 = scmp.lt.s32.totalorder %s75, 3
    %p830 = pnand %p828, %p829
    %p831 = pneg %p830
    // Predicated region
    $region9: #{sagcn_forward.1} parent=5 // pred_check
      _
    $region10: #{sagcn_forward.1} parent=5 // pred_check_branch
      %833 = sbr.rel (%p830) target = $region12
    $region11: #{sagcn_forward.1} parent=5 // pred_region
      %s834 = ssub.s32 %s75, 1
      // Predicated region
      $region13: #{sagcn_forward.1} parent=11 // pred_check
        %p835 = pneg %p122
      $region14: #{sagcn_forward.1} parent=11 // pred_check_branch
        %837 = sbr.rel (%p835) target = $region16
      $region15: #{sagcn_forward.1} parent=11 // pred_region
        _
      $region16: #{sagcn_forward.1} parent=11 // pred_fallthru
        _
      // Predicated region
      $region17: #{sagcn_forward.1} parent=11 // pred_check
        %p838 = pneg %p143
      $region18: #{sagcn_forward.1} parent=11 // pred_check_branch
        %840 = sbr.rel (%p838) target = $region20
      $region19: #{sagcn_forward.1} parent=11 // pred_region
        _
      $region20: #{sagcn_forward.1} parent=11 // pred_fallthru
        _
      // Predicated region
      $region21: #{sagcn_forward.1} parent=11 // pred_check
        %p841 = pneg %p164
      $region22: #{sagcn_forward.1} parent=11 // pred_check_branch
        %843 = sbr.rel (%p841) target = $region24
      $region23: #{sagcn_forward.1} parent=11 // pred_region
        _
      $region24: #{sagcn_forward.1} parent=11 // pred_fallthru
        _
      // Predicated region
      $region25: #{sagcn_forward.1} parent=11 // pred_check
        %p844 = pneg %p185
      $region26: #{sagcn_forward.1} parent=11 // pred_check_branch
        %846 = sbr.rel (%p844) target = $region28
      $region27: #{sagcn_forward.1} parent=11 // pred_region
        _
      $region28: #{sagcn_forward.1} parent=11 // pred_fallthru
        _
      // Predicated region
      $region29: #{sagcn_forward.1} parent=11 // pred_check
        %p847 = pneg %p206
      $region30: #{sagcn_forward.1} parent=11 // pred_check_branch
        %849 = sbr.rel (%p847) target = $region32
      $region31: #{sagcn_forward.1} parent=11 // pred_region
        _
      $region32: #{sagcn_forward.1} parent=11 // pred_fallthru
        _
      // Predicated region
      $region33: #{sagcn_forward.1} parent=11 // pred_check
        %p850 = pneg %p227
      $region34: #{sagcn_forward.1} parent=11 // pred_check_branch
        %852 = sbr.rel (%p850) target = $region36
      $region35: #{sagcn_forward.1} parent=11 // pred_region
        _
      $region36: #{sagcn_forward.1} parent=11 // pred_fallthru
        _
      // Predicated region
      $region37: #{sagcn_forward.1} parent=11 // pred_check
        %p853 = pneg %p248
      $region38: #{sagcn_forward.1} parent=11 // pred_check_branch
        %855 = sbr.rel (%p853) target = $region40
      $region39: #{sagcn_forward.1} parent=11 // pred_region
        _
      $region40: #{sagcn_forward.1} parent=11 // pred_fallthru
        _
      // Predicated region
      $region41: #{sagcn_forward.1} parent=11 // pred_check
        %p856 = pneg %p269
      $region42: #{sagcn_forward.1} parent=11 // pred_check_branch
        %858 = sbr.rel (%p856) target = $region44
      $region43: #{sagcn_forward.1} parent=11 // pred_region
        _
      $region44: #{sagcn_forward.1} parent=11 // pred_fallthru
        _
      // Predicated region
      $region45: #{sagcn_forward.1} parent=11 // pred_check
        %p859 = pneg %p290
      $region46: #{sagcn_forward.1} parent=11 // pred_check_branch
        %861 = sbr.rel (%p859) target = $region48
      $region47: #{sagcn_forward.1} parent=11 // pred_region
        _
      $region48: #{sagcn_forward.1} parent=11 // pred_fallthru
        _
      // Predicated region
      $region49: #{sagcn_forward.1} parent=11 // pred_check
        %p862 = pneg %p311
      $region50: #{sagcn_forward.1} parent=11 // pred_check_branch
        %864 = sbr.rel (%p862) target = $region52
      $region51: #{sagcn_forward.1} parent=11 // pred_region
        _
      $region52: #{sagcn_forward.1} parent=11 // pred_fallthru
        _
      // Predicated region
      $region53: #{sagcn_forward.1} parent=11 // pred_check
        %p865 = pneg %p332
      $region54: #{sagcn_forward.1} parent=11 // pred_check_branch
        %867 = sbr.rel (%p865) target = $region56
      $region55: #{sagcn_forward.1} parent=11 // pred_region
        _
      $region56: #{sagcn_forward.1} parent=11 // pred_fallthru
        _
      // Predicated region
      $region57: #{sagcn_forward.1} parent=11 // pred_check
        %p868 = pneg %p353
      $region58: #{sagcn_forward.1} parent=11 // pred_check_branch
        %870 = sbr.rel (%p868) target = $region60
      $region59: #{sagcn_forward.1} parent=11 // pred_region
        _
      $region60: #{sagcn_forward.1} parent=11 // pred_fallthru
        _
      // Predicated region
      $region61: #{sagcn_forward.1} parent=11 // pred_check
        %p871 = pneg %p374
      $region62: #{sagcn_forward.1} parent=11 // pred_check_branch
        %873 = sbr.rel (%p871) target = $region64
      $region63: #{sagcn_forward.1} parent=11 // pred_region
        _
      $region64: #{sagcn_forward.1} parent=11 // pred_fallthru
        _
      // Predicated region
      $region65: #{sagcn_forward.1} parent=11 // pred_check
        %p874 = pneg %p395
      $region66: #{sagcn_forward.1} parent=11 // pred_check_branch
        %876 = sbr.rel (%p874) target = $region68
      $region67: #{sagcn_forward.1} parent=11 // pred_region
        _
      $region68: #{sagcn_forward.1} parent=11 // pred_fallthru
        _
      // Predicated region
      $region69: #{sagcn_forward.1} parent=11 // pred_check
        %p877 = pneg %p416
      $region70: #{sagcn_forward.1} parent=11 // pred_check_branch
        %879 = sbr.rel (%p877) target = $region72
      $region71: #{sagcn_forward.1} parent=11 // pred_region
        _
      $region72: #{sagcn_forward.1} parent=11 // pred_fallthru
        _
      // Predicated region
      $region73: #{sagcn_forward.1} parent=11 // pred_check
        %p880 = pneg %p437
      $region74: #{sagcn_forward.1} parent=11 // pred_check_branch
        %882 = sbr.rel (%p880) target = $region76
      $region75: #{sagcn_forward.1} parent=11 // pred_region
        _
      $region76: #{sagcn_forward.1} parent=11 // pred_fallthru
        _
      // Predicated region
      $region77: #{sagcn_forward.1} parent=11 // pred_check
        %p883 = pneg %p458
      $region78: #{sagcn_forward.1} parent=11 // pred_check_branch
        %885 = sbr.rel (%p883) target = $region80
      $region79: #{sagcn_forward.1} parent=11 // pred_region
        _
      $region80: #{sagcn_forward.1} parent=11 // pred_fallthru
        _
      // Predicated region
      $region81: #{sagcn_forward.1} parent=11 // pred_check
        %p886 = pneg %p479
      $region82: #{sagcn_forward.1} parent=11 // pred_check_branch
        %888 = sbr.rel (%p886) target = $region84
      $region83: #{sagcn_forward.1} parent=11 // pred_region
        _
      $region84: #{sagcn_forward.1} parent=11 // pred_fallthru
        _
      // Predicated region
      $region85: #{sagcn_forward.1} parent=11 // pred_check
        %p889 = pneg %p500
      $region86: #{sagcn_forward.1} parent=11 // pred_check_branch
        %891 = sbr.rel (%p889) target = $region88
      $region87: #{sagcn_forward.1} parent=11 // pred_region
        _
      $region88: #{sagcn_forward.1} parent=11 // pred_fallthru
        _
      // Predicated region
      $region89: #{sagcn_forward.1} parent=11 // pred_check
        %p892 = pneg %p521
      $region90: #{sagcn_forward.1} parent=11 // pred_check_branch
        %894 = sbr.rel (%p892) target = $region92
      $region91: #{sagcn_forward.1} parent=11 // pred_region
        _
      $region92: #{sagcn_forward.1} parent=11 // pred_fallthru
        _
      // Predicated region
      $region93: #{sagcn_forward.1} parent=11 // pred_check
        %p895 = pneg %p542
      $region94: #{sagcn_forward.1} parent=11 // pred_check_branch
        %897 = sbr.rel (%p895) target = $region96
      $region95: #{sagcn_forward.1} parent=11 // pred_region
        _
      $region96: #{sagcn_forward.1} parent=11 // pred_fallthru
        _
      // Predicated region
      $region97: #{sagcn_forward.1} parent=11 // pred_check
        %p898 = pneg %p563
      $region98: #{sagcn_forward.1} parent=11 // pred_check_branch
        %900 = sbr.rel (%p898) target = $region100
      $region99: #{sagcn_forward.1} parent=11 // pred_region
        _
      $region100: #{sagcn_forward.1} parent=11 // pred_fallthru
        _
      // Predicated region
      $region101: #{sagcn_forward.1} parent=11 // pred_check
        %p901 = pneg %p584
      $region102: #{sagcn_forward.1} parent=11 // pred_check_branch
        %903 = sbr.rel (%p901) target = $region104
      $region103: #{sagcn_forward.1} parent=11 // pred_region
        _
      $region104: #{sagcn_forward.1} parent=11 // pred_fallthru
        _
      // Predicated region
      $region105: #{sagcn_forward.1} parent=11 // pred_check
        %p904 = pneg %p605
      $region106: #{sagcn_forward.1} parent=11 // pred_check_branch
        %906 = sbr.rel (%p904) target = $region108
      $region107: #{sagcn_forward.1} parent=11 // pred_region
        _
      $region108: #{sagcn_forward.1} parent=11 // pred_fallthru
        _
      // Predicated region
      $region109: #{sagcn_forward.1} parent=11 // pred_check
        %p907 = pneg %p626
      $region110: #{sagcn_forward.1} parent=11 // pred_check_branch
        %909 = sbr.rel (%p907) target = $region112
      $region111: #{sagcn_forward.1} parent=11 // pred_region
        _
      $region112: #{sagcn_forward.1} parent=11 // pred_fallthru
        _
      // Predicated region
      $region113: #{sagcn_forward.1} parent=11 // pred_check
        %p910 = pneg %p647
      $region114: #{sagcn_forward.1} parent=11 // pred_check_branch
        %912 = sbr.rel (%p910) target = $region116
      $region115: #{sagcn_forward.1} parent=11 // pred_region
        _
      $region116: #{sagcn_forward.1} parent=11 // pred_fallthru
        _
      // Predicated region
      $region117: #{sagcn_forward.1} parent=11 // pred_check
        %p913 = pneg %p668
      $region118: #{sagcn_forward.1} parent=11 // pred_check_branch
        %915 = sbr.rel (%p913) target = $region120
      $region119: #{sagcn_forward.1} parent=11 // pred_region
        _
      $region120: #{sagcn_forward.1} parent=11 // pred_fallthru
        _
      // Predicated region
      $region121: #{sagcn_forward.1} parent=11 // pred_check
        %p916 = pneg %p689
      $region122: #{sagcn_forward.1} parent=11 // pred_check_branch
        %918 = sbr.rel (%p916) target = $region124
      $region123: #{sagcn_forward.1} parent=11 // pred_region
        _
      $region124: #{sagcn_forward.1} parent=11 // pred_fallthru
        _
      // Predicated region
      $region125: #{sagcn_forward.1} parent=11 // pred_check
        %p919 = pneg %p710
      $region126: #{sagcn_forward.1} parent=11 // pred_check_branch
        %921 = sbr.rel (%p919) target = $region128
      $region127: #{sagcn_forward.1} parent=11 // pred_region
        _
      $region128: #{sagcn_forward.1} parent=11 // pred_fallthru
        _
      // Predicated region
      $region129: #{sagcn_forward.1} parent=11 // pred_check
        %p922 = pneg %p731
      $region130: #{sagcn_forward.1} parent=11 // pred_check_branch
        %924 = sbr.rel (%p922) target = $region132
      $region131: #{sagcn_forward.1} parent=11 // pred_region
        _
      $region132: #{sagcn_forward.1} parent=11 // pred_fallthru
        _
      // Predicated region
      $region133: #{sagcn_forward.1} parent=11 // pred_check
        %p925 = pneg %p752
      $region134: #{sagcn_forward.1} parent=11 // pred_check_branch
        %927 = sbr.rel (%p925) target = $region136
      $region135: #{sagcn_forward.1} parent=11 // pred_region
        _
      $region136: #{sagcn_forward.1} parent=11 // pred_fallthru
        _
      // Predicated region
      $region137: #{sagcn_forward.1} parent=11 // pred_check
        %p928 = pneg %p773
      $region138: #{sagcn_forward.1} parent=11 // pred_check_branch
        %930 = sbr.rel (%p928) target = $region140
      $region139: #{sagcn_forward.1} parent=11 // pred_region
        _
      $region140: #{sagcn_forward.1} parent=11 // pred_fallthru
        _
      // Predicated region
      $region141: #{sagcn_forward.1} parent=11 // pred_check
        %p931 = pneg %p794
      $region142: #{sagcn_forward.1} parent=11 // pred_check_branch
        %933 = sbr.rel (%p931) target = $region144
      $region143: #{sagcn_forward.1} parent=11 // pred_region
        _
      $region144: #{sagcn_forward.1} parent=11 // pred_fallthru
        _
    $region12: #{sagcn_forward.1} parent=5 // pred_fallthru
      _
    %p934 = scmp.lt.s32.totalorder %s75, 2
    // Predicated region
    $region145: #{sagcn_forward.1} parent=5 // pred_check
      %p935 = pneg %p934
    $region146: #{sagcn_forward.1} parent=5 // pred_check_branch
      %937 = sbr.rel (%p935) target = $region148
    $region147: #{sagcn_forward.1} parent=5 // pred_region
      // Predicated region
      $region149: #{sagcn_forward.1} parent=147 // pred_check
        %p938 = pneg %p95
      $region150: #{sagcn_forward.1} parent=147 // pred_check_branch
        %940 = sbr.rel (%p938) target = $region152
      $region151: #{sagcn_forward.1} parent=147 // pred_region
        %p941 = scmp.lt.s32.totalorder %s75, 1
        %s942 = scalar_select %p941, %s75, 1
        %s943 = smul.addr %s942, 4
        %s944 = scalar_lea.vmem %s1, %s943
      $region152: #{sagcn_forward.1} parent=147 // pred_fallthru
        _
    $region148: #{sagcn_forward.1} parent=5 // pred_fallthru
      _
    %p945 = scmp.le.s32.totalorder 1, %s75
    %p946 = scmp.lt.s32.totalorder %s75, 3
    %p947 = pnand %p945, %p946
    %p948 = pneg %p947
    // Predicated region
    $region153: #{sagcn_forward.1} parent=5 // pred_check
      _
    $region154: #{sagcn_forward.1} parent=5 // pred_check_branch
      %950 = sbr.rel (%p947) target = $region156
    $region155: #{sagcn_forward.1} parent=5 // pred_region
      %s951 = ssub.s32 %s75, 1
      %p952 = scmp.lt.s32.totalorder %s80, 1
      %s953 = scalar_select %p952, %s80, 1
      %s954 = smul.addr %s953, 4
      %s955 = scalar_lea.vmem %s1, %s954
      %p956 = pneg %p101
      %p957 = pneg %p98
      %p958 = pneg %p122
      %p959 = pneg %p119
      %p960 = pneg %p143
      %p961 = pneg %p140
      %p962 = pneg %p164
      %p963 = pneg %p161
      %p964 = pneg %p185
      %p965 = pneg %p182
      %p966 = pneg %p206
      %p967 = pneg %p203
      %p968 = pneg %p227
      %p969 = pneg %p224
      %p970 = pneg %p248
      %p971 = pneg %p245
      %p972 = pneg %p269
      %p973 = pneg %p266
      %p974 = pneg %p290
      %p975 = pneg %p287
      %p976 = pneg %p311
      %p977 = pneg %p308
      %p978 = pneg %p332
      %p979 = pneg %p329
      %p980 = pneg %p353
      %p981 = pneg %p350
      %p982 = pneg %p374
      %p983 = pneg %p371
      %p984 = pneg %p395
      %p985 = pneg %p392
      %p986 = pneg %p416
      %p987 = pneg %p413
      %p988 = pneg %p437
      %p989 = pneg %p434
      %p990 = pneg %p458
      %p991 = pneg %p455
      %p992 = pneg %p479
      %p993 = pneg %p476
      %p994 = pneg %p500
      %p995 = pneg %p497
      %p996 = pneg %p521
      %p997 = pneg %p518
      %p998 = pneg %p542
      %p999 = pneg %p539
      %p1000 = pneg %p563
      %p1001 = pneg %p560
      %p1002 = pneg %p584
      %p1003 = pneg %p581
      %p1004 = pneg %p605
      %p1005 = pneg %p602
      %p1006 = pneg %p626
      %p1007 = pneg %p623
      %p1008 = pneg %p647
      %p1009 = pneg %p644
      %p1010 = pneg %p668
      %p1011 = pneg %p665
      %p1012 = pneg %p689
      %p1013 = pneg %p686
      %p1014 = pneg %p710
      %p1015 = pneg %p707
      %p1016 = pneg %p731
      %p1017 = pneg %p728
      %p1018 = pneg %p752
      %p1019 = pneg %p749
      %p1020 = pneg %p773
      %p1021 = pneg %p770
      %p1022 = pneg %p794
      %p1023 = pneg %p791
      %p1024 = pneg %p820
      %p1025 = pneg %p817
      %p1026 = scmp.lt.s32.totalorder %s80, 1
      %s1027 = scalar_select %p1026, %s80, 1
      %s1028 = smul.addr %s1027, 4
      %s1029 = smul.addr %s1028, 8
      %s1030 = scalar_lea.vmem %s69, %s1029
      %p1031 = scmp.lt.s32.totalorder %s80, 1
      %s1032 = scalar_select %p1031, %s80, 1
      %s1033 = smul.addr %s1032, 4
      %s1034 = scalar_lea.vmem %s1, %s1033
      %p1035 = scmp.lt.s32.totalorder %s80, 1
      %s1036 = scalar_select %p1035, %s80, 1
      %s1037 = smul.addr %s1036, 4
      %s1038 = smul.addr %s1037, 8
      %s1039 = scalar_lea.vmem %s69, %s1038
      %v1040 = vld [vmem:[%s3] sm:$0xff]
      %v1041 = vld [vmem:[%s3 + $0x8] sm:$0xff]
      %v1042 = vld [vmem:[%s3 + $0x10] sm:$0xff]
      %v1043 = vld [vmem:[%s3 + $0x18] sm:$0xff]
      %v1044 = vld [vmem:[%s1034] sm:$0xf]
      %v1045 = vld [vmem:[%s5] sm:$0xff]
      %v1046 = vld [vmem:[%s5 + $0x8] sm:$0xff]
      %v1047 = vld [vmem:[%s5 + $0x10] sm:$0xff]
      %v1048 = vld [vmem:[%s5 + $0x18] sm:$0xff]
      %1050 = vset.pattern.permute.xlu0 0
      %1051 = vperm.xlu0 %1050, %v1045
      %v1052 = vpop.permute.xlu0 %1051
      %1055 = vset.pattern.permute.xlu0 0
      %1056 = vperm.xlu0 %1055, %v1046
      %v1057 = vpop.permute.xlu0 %1056
      %1060 = vset.pattern.permute.xlu0 0
      %1061 = vperm.xlu0 %1060, %v1047
      %v1062 = vpop.permute.xlu0 %1061
      %1065 = vset.pattern.permute.xlu0 0
      %1066 = vperm.xlu0 %1065, %v1048
      %v1067 = vpop.permute.xlu0 %1066
      %vm1069 = vcmask 31744
      %v1071 = vsel %vm1069, %v1040, 0
      %v1074 = vsel %vm1069, %v1041, 0
      %v1077 = vsel %vm1069, %v1042, 0
      %v1080 = vsel %vm1069, %v1043, 0
      %vm1082 = vcmask 1043456
      %v1084 = vsel %vm1082, %v1044, 0
      %1086 = vmatprep.subr.mxu0 0.0
      %1087 = vmatpush1.msra.mxu0 %v1084
      %1088 = vmatprep.subr.mxu0 0.0
      %1089 = vmatpush1.msra.mxu0 0.0
      %1090 = vmatprep.subr.mxu0 0.0
      %1091 = vmatpush1.msra.mxu0 0.0
      %1092 = vmatprep.subr.mxu0 0.0
      %1093 = vmatpush1.msra.mxu0 0.0
      %1094 = vmatprep.subr.mxu0 0.0
      %1095 = vmatpush1.msra.mxu0 0.0
      %1096 = vmatprep.subr.mxu0 0.0
      %1097 = vmatpush1.msra.mxu0 0.0
      %1098 = vmatprep.subr.mxu0 0.0
      %1099 = vmatpush1.msra.mxu0 0.0
      %1100 = vmatprep.subr.mxu0 0.0
      %1101 = vmatpush1.msra.mxu0 0.0
      %1102 = vmatprep.subr.mxu0 0.0
      %1103 = vmatpush1.msra.mxu0 0.0
      %1104 = vmatprep.subr.mxu0 0.0
      %1105 = vmatpush1.msra.mxu0 0.0
      %1106 = vmatprep.subr.mxu0 0.0
      %1107 = vmatpush1.msra.mxu0 0.0
      %1108 = vmatprep.subr.mxu0 0.0
      %1109 = vmatpush1.msra.mxu0 0.0
      %1110 = vmatprep.subr.mxu0 0.0
      %1111 = vmatpush1.msra.mxu0 0.0
      %1112 = vmatprep.subr.mxu0 0.0
      %1113 = vmatpush1.msra.mxu0 0.0
      %1114 = vmatprep.subr.mxu0 0.0
      %1115 = vmatpush1.msra.mxu0 0.0
      %1116 = vmatprep.subr.mxu0 0.0
      %1117 = vmatpush1.msra.mxu0 0.0
      %1118 = vmatprep.subr.mxu0 0.0
      %1119 = vmatpush1.msra.mxu0 0.0
      %1120 = vmatprep.subr.mxu0 0.0
      %1121 = vmatpush1.msra.mxu0 0.0
      %1122 = vmatprep.subr.mxu0 0.0
      %1123 = vmatpush1.msra.mxu0 0.0
      %1124 = vmatprep.subr.mxu0 0.0
      %1125 = vmatpush1.msra.mxu0 0.0
      %1126 = vmatprep.subr.mxu0 0.0
      %1127 = vmatpush1.msra.mxu0 0.0
      %1128 = vmatprep.subr.mxu0 0.0
      %1129 = vmatpush1.msra.mxu0 0.0
      %1130 = vmatprep.subr.mxu0 0.0
      %1131 = vmatpush1.msra.mxu0 0.0
      %1132 = vmatprep.subr.mxu0 0.0
      %1133 = vmatpush1.msra.mxu0 0.0
      %1134 = vmatprep.subr.mxu0 0.0
      %1135 = vmatpush1.msra.mxu0 0.0
      %1136 = vmatprep.subr.mxu0 0.0
      %1137 = vmatpush1.msra.mxu0 0.0
      %1138 = vmatprep.subr.mxu0 0.0
      %1139 = vmatpush1.msra.mxu0 0.0
      %1140 = vmatprep.subr.mxu0 0.0
      %1141 = vmatpush1.msra.mxu0 0.0
      %1142 = vmatprep.subr.mxu0 0.0
      %1143 = vmatpush1.msra.mxu0 0.0
      %1144 = vmatprep.subr.mxu0 0.0
      %1145 = vmatpush1.msra.mxu0 0.0
      %1146 = vmatprep.subr.mxu0 0.0
      %1147 = vmatpush1.msra.mxu0 0.0
      %1148 = vmatprep.subr.mxu0 0.0
      %1149 = vmatpush1.msra.mxu0 0.0
      %1150 = vmatprep.mubr.f32.mxu0 0.0
      %1151 = vmatmul.mubr.f32.gmra.mrb[0].mxu0 %v1071
      %v1152 = vpop.f32.mrb[0].mxu0
      %v1153 = vadd.f32 %v1052, %v1152
      %v1154 = vpop.f32.mrb[0].mxu0
      %1155 = vmatprep.mubr.f32.mxu0 0.0
      %1156 = vmatmul.mubr.f32.gmra.mrb[0].mxu0 %v1074
      %v1157 = vpop.f32.mrb[0].mxu0
      %v1158 = vadd.f32 %v1057, %v1157
      %v1159 = vpop.f32.mrb[0].mxu0
      %1160 = vmatprep.mubr.f32.mxu0 0.0
      %1161 = vmatmul.mubr.f32.gmra.mrb[0].mxu0 %v1077
      %v1162 = vpop.f32.mrb[0].mxu0
      %v1163 = vadd.f32 %v1062, %v1162
      %v1164 = vpop.f32.mrb[0].mxu0
      %1165 = vmatprep.mubr.f32.mxu0 0.0
      %1166 = vmatmul.mubr.f32.gmra.mrb[0].mxu0 %v1080
      %v1167 = vpop.f32.mrb[0].mxu0
      %v1168 = vadd.f32 %v1067, %v1167
      %v1169 = vpop.f32.mrb[0].mxu0
      %1170 = vdwg.mxu0
      %v1171 = vld [vmem:[%s21] sm:$0xff]
      %v1172 = vld [vmem:[%s21 + $0x8] sm:$0x7f]
      %v1173 = vld [vmem:[%s23] sm:$0xff]
      %v1174 = vld [vmem:[%s23 + $0x8] sm:$0xff]
      %v1175 = vld [vmem:[%s23 + $0x10] sm:$0xff]
      %v1176 = vld [vmem:[%s23 + $0x18] sm:$0xff]
      %v1177 = vld [vmem:[%s23 + $0x20] sm:$0xff]
      %v1178 = vld [vmem:[%s23 + $0x28] sm:$0xff]
      %v1179 = vld [vmem:[%s23 + $0x30] sm:$0xff]
      %v1180 = vld [vmem:[%s23 + $0x38] sm:$0xff]
      %v1181 = vld [vmem:[%s23 + $0x40] sm:$0xff]
      %v1182 = vld [vmem:[%s23 + $0x48] sm:$0xff]
      %v1183 = vld [vmem:[%s23 + $0x50] sm:$0xff]
      %v1184 = vld [vmem:[%s23 + $0x58] sm:$0xff]
      %v1185 = vld [vmem:[%s23 + $0x60] sm:$0xff]
      %v1186 = vld [vmem:[%s23 + $0x68] sm:$0xff]
      %v1187 = vld [vmem:[%s23 + $0x70] sm:$0xff]
      %v1188 = vld [vmem:[%s25] sm:$0xff]
      %v1189 = vld [vmem:[%s25 + $0x8] sm:$0xff]
      %v1190 = vld [vmem:[%s25 + $0x10] sm:$0xff]
      %v1191 = vld [vmem:[%s25 + $0x18] sm:$0xff]
      %v1192 = vld [vmem:[%s25 + $0x20] sm:$0xff]
      %v1193 = vld [vmem:[%s25 + $0x28] sm:$0xff]
      %v1194 = vld [vmem:[%s25 + $0x30] sm:$0xff]
      %v1195 = vld [vmem:[%s25 + $0x38] sm:$0xff]
      %v1196 = vld [vmem:[%s25 + $0x40] sm:$0xff]
      %v1197 = vld [vmem:[%s25 + $0x48] sm:$0xff]
      %v1198 = vld [vmem:[%s25 + $0x50] sm:$0xff]
      %v1199 = vld [vmem:[%s25 + $0x58] sm:$0xff]
      %v1200 = vld [vmem:[%s25 + $0x60] sm:$0xff]
      %v1201 = vld [vmem:[%s25 + $0x68] sm:$0xff]
      %v1202 = vld [vmem:[%s25 + $0x70] sm:$0xff]
      %v1203 = vld [vmem:[%s27] sm:$0xff]
      %v1204 = vld [vmem:[%s27 + $0x8] sm:$0x7f]
      %v1205 = vld [vmem:[%s29] sm:$0xff]
      %v1206 = vld [vmem:[%s29 + $0x8] sm:$0xff]
      %v1207 = vld [vmem:[%s29 + $0x10] sm:$0xff]
      %v1208 = vld [vmem:[%s29 + $0x18] sm:$0xff]
      %v1209 = vld [vmem:[%s29 + $0x20] sm:$0xff]
      %v1210 = vld [vmem:[%s29 + $0x28] sm:$0xff]
      %v1211 = vld [vmem:[%s29 + $0x30] sm:$0xff]
      %v1212 = vld [vmem:[%s29 + $0x38] sm:$0xff]
      %v1213 = vld [vmem:[%s29 + $0x40] sm:$0xff]
      %v1214 = vld [vmem:[%s29 + $0x48] sm:$0xff]
      %v1215 = vld [vmem:[%s29 + $0x50] sm:$0xff]
      %v1216 = vld [vmem:[%s29 + $0x58] sm:$0xff]
      %v1217 = vld [vmem:[%s29 + $0x60] sm:$0xff]
      %v1218 = vld [vmem:[%s29 + $0x68] sm:$0xff]
      %v1219 = vld [vmem:[%s29 + $0x70] sm:$0xff]
      %v1220 = vld [vmem:[%s31] sm:$0xff]
      %v1221 = vld [vmem:[%s31 + $0x8] sm:$0xff]
      %v1222 = vld [vmem:[%s31 + $0x10] sm:$0xff]
      %v1223 = vld [vmem:[%s31 + $0x18] sm:$0xff]
      %v1224 = vld [vmem:[%s31 + $0x20] sm:$0xff]
      %v1225 = vld [vmem:[%s31 + $0x28] sm:$0xff]
      %v1226 = vld [vmem:[%s31 + $0x30] sm:$0xff]
      %v1227 = vld [vmem:[%s31 + $0x38] sm:$0xff]
      %v1228 = vld [vmem:[%s31 + $0x40] sm:$0xff]
      %v1229 = vld [vmem:[%s31 + $0x48] sm:$0xff]
      %v1230 = vld [vmem:[%s31 + $0x50] sm:$0xff]
      %v1231 = vld [vmem:[%s31 + $0x58] sm:$0xff]
      %v1232 = vld [vmem:[%s31 + $0x60] sm:$0xff]
      %v1233 = vld [vmem:[%s31 + $0x68] sm:$0xff]
      %v1234 = vld [vmem:[%s31 + $0x70] sm:$0xff]
      %v1235 = vld [vmem:[%s7] sm:$0xff]
      %v1236 = vld [vmem:[%s7 + $0x8] sm:$0xff]
      %v1237 = vld [vmem:[%s7 + $0x10] sm:$0xff]
      %v1238 = vld [vmem:[%s7 + $0x18] sm:$0xff]
      %v1239 = vld [vmem:[%s7 + $0x20] sm:$0xff]
      %v1240 = vld [vmem:[%s7 + $0x28] sm:$0xff]
      %v1241 = vld [vmem:[%s7 + $0x30] sm:$0xff]
      %v1242 = vld [vmem:[%s7 + $0x38] sm:$0xff]
      %v1243 = vld [vmem:[%s9] sm:$0xff]
      %v1244 = vld [vmem:[%s9 + $0x8] sm:$0xff]
      %v1245 = vld [vmem:[%s9 + $0x10] sm:$0xff]
      %v1246 = vld [vmem:[%s9 + $0x18] sm:$0xff]
      %v1247 = vld [vmem:[%s9 + $0x20] sm:$0xff]
      %v1248 = vld [vmem:[%s9 + $0x28] sm:$0xff]
      %v1249 = vld [vmem:[%s9 + $0x30] sm:$0xff]
      %v1250 = vld [vmem:[%s9 + $0x38] sm:$0xff]
      %v1251 = vld [vmem:[%s11] sm:$0xff]
      %v1252 = vld [vmem:[%s11 + $0x8] sm:$0xff]
      %v1253 = vld [vmem:[%s11 + $0x10] sm:$0xff]
      %v1254 = vld [vmem:[%s11 + $0x18] sm:$0xff]
      %v1255 = vld [vmem:[%s13] sm:$0xff]
      %v1256 = vld [vmem:[%s13 + $0x8] sm:$0xff]
      %v1257 = vld [vmem:[%s13 + $0x10] sm:$0xff]
      %v1258 = vld [vmem:[%s13 + $0x18] sm:$0xff]
      %v1259 = vld [vmem:[%s15] sm:$0x1]
      %v1260 = vld [vmem:[%s17] sm:$0x7f]
      %v1261 = vld [vmem:[%s19] sm:$0xff]
      %1266 = vrot.lane.b32.xlu0 %v1153, 120
      %v1267 = vpop.permute.xlu0 %1266
      %1268 = vrot.lane.b32.xlu0 %v1158, 120
      %v1269 = vpop.permute.xlu0 %1268
      %1270 = vrot.lane.b32.xlu0 %v1163, 120
      %v1271 = vpop.permute.xlu0 %1270
      %1272 = vrot.lane.b32.xlu0 %v1168, 120
      %v1273 = vpop.permute.xlu0 %1272
      %1279 = vset.pattern.permute.xlu0 0
      %1280 = vperm.xlu0 %1279, %v1243
      %v1281 = vpop.permute.xlu0 %1280
      %1284 = vset.pattern.permute.xlu0 0
      %1285 = vperm.xlu0 %1284, %v1244
      %v1286 = vpop.permute.xlu0 %1285
      %1289 = vset.pattern.permute.xlu0 0
      %1290 = vperm.xlu0 %1289, %v1245
      %v1291 = vpop.permute.xlu0 %1290
      %1294 = vset.pattern.permute.xlu0 0
      %1295 = vperm.xlu0 %1294, %v1246
      %v1296 = vpop.permute.xlu0 %1295
      %1299 = vset.pattern.permute.xlu0 0
      %1300 = vperm.xlu0 %1299, %v1247
      %v1301 = vpop.permute.xlu0 %1300
      %1304 = vset.pattern.permute.xlu0 0
      %1305 = vperm.xlu0 %1304, %v1248
      %v1306 = vpop.permute.xlu0 %1305
      %1309 = vset.pattern.permute.xlu0 0
      %1310 = vperm.xlu0 %1309, %v1249
      %v1311 = vpop.permute.xlu0 %1310
      %1314 = vset.pattern.permute.xlu0 0
      %1315 = vperm.xlu0 %1314, %v1250
      %v1316 = vpop.permute.xlu0 %1315
      %vm1318 = vcmask 523264
      %v1320 = vsel %vm1318, %v1235, 0
      %v1323 = vsel %vm1318, %v1236, 0
      %v1326 = vsel %vm1318, %v1237, 0
      %v1329 = vsel %vm1318, %v1238, 0
      %v1332 = vsel %vm1318, %v1239, 0
      %v1335 = vsel %vm1318, %v1240, 0
      %v1338 = vsel %vm1318, %v1241, 0
      %v1341 = vsel %vm1318, %v1242, 0
      %1343 = vmatprep.subr.mxu0 0.0
      %1344 = vmatpush1.msra.mxu0 %v1153
      %1345 = vmatprep.subr.mxu0 0.0
      %1346 = vmatpush1.msra.mxu0 %v1158
      %1347 = vmatprep.subr.mxu0 0.0
      %1348 = vmatpush1.msra.mxu0 %v1163
      %1349 = vmatprep.subr.mxu0 0.0
      %1350 = vmatpush1.msra.mxu0 %v1168
      %1351 = vmatprep.subr.mxu0 0.0
      %1352 = vmatpush1.msra.mxu0 %v1267
      %1353 = vmatprep.subr.mxu0 0.0
      %1354 = vmatpush1.msra.mxu0 %v1269
      %1355 = vmatprep.subr.mxu0 0.0
      %1356 = vmatpush1.msra.mxu0 %v1271
      %1357 = vmatprep.subr.mxu0 0.0
      %1358 = vmatpush1.msra.mxu0 %v1273
      %1359 = vmatprep.subr.mxu0 0.0
      %1360 = vmatpush1.msra.mxu0 0.0
      %1361 = vmatprep.subr.mxu0 0.0
      %1362 = vmatpush1.msra.mxu0 0.0
      %1363 = vmatprep.subr.mxu0 0.0
      %1364 = vmatpush1.msra.mxu0 0.0
      %1365 = vmatprep.subr.mxu0 0.0
      %1366 = vmatpush1.msra.mxu0 0.0
      %1367 = vmatprep.subr.mxu0 0.0
      %1368 = vmatpush1.msra.mxu0 0.0
      %1369 = vmatprep.subr.mxu0 0.0
      %1370 = vmatpush1.msra.mxu0 0.0
      %1371 = vmatprep.subr.mxu0 0.0
      %1372 = vmatpush1.msra.mxu0 0.0
      %1373 = vmatprep.subr.mxu0 0.0
      %1374 = vmatpush1.msra.mxu0 0.0
      %1375 = vmatprep.subr.mxu0 0.0
      %1376 = vmatpush1.msra.mxu0 0.0
      %1377 = vmatprep.subr.mxu0 0.0
      %1378 = vmatpush1.msra.mxu0 0.0
      %1379 = vmatprep.subr.mxu0 0.0
      %1380 = vmatpush1.msra.mxu0 0.0
      %1381 = vmatprep.subr.mxu0 0.0
      %1382 = vmatpush1.msra.mxu0 0.0
      %1383 = vmatprep.subr.mxu0 0.0
      %1384 = vmatpush1.msra.mxu0 0.0
      %1385 = vmatprep.subr.mxu0 0.0
      %1386 = vmatpush1.msra.mxu0 0.0
      %1387 = vmatprep.subr.mxu0 0.0
      %1388 = vmatpush1.msra.mxu0 0.0
      %1389 = vmatprep.subr.mxu0 0.0
      %1390 = vmatpush1.msra.mxu0 0.0
      %1391 = vmatprep.subr.mxu0 0.0
      %1392 = vmatpush1.msra.mxu0 0.0
      %1393 = vmatprep.subr.mxu0 0.0
      %1394 = vmatpush1.msra.mxu0 0.0
      %1395 = vmatprep.subr.mxu0 0.0
      %1396 = vmatpush1.msra.mxu0 0.0
      %1397 = vmatprep.subr.mxu0 0.0
      %1398 = vmatpush1.msra.mxu0 0.0
      %1399 = vmatprep.subr.mxu0 0.0
      %1400 = vmatpush1.msra.mxu0 0.0
      %1401 = vmatprep.subr.mxu0 0.0
      %1402 = vmatpush1.msra.mxu0 0.0
      %1403 = vmatprep.subr.mxu0 0.0
      %1404 = vmatpush1.msra.mxu0 0.0
      %1405 = vmatprep.subr.mxu0 0.0
      %1406 = vmatpush1.msra.mxu0 0.0
      %1407 = vmatprep.mubr.f32.mxu0 0.0
      %1408 = vmatmul.mubr.f32.gmra.mrb[0].mxu0 %v1320
      %v1409 = vpop.f32.mrb[0].mxu0
      %v1410 = vadd.f32 %v1281, %v1409
      %v1411 = vpop.f32.mrb[0].mxu0
      %1412 = vmatprep.mubr.f32.mxu0 0.0
      %1413 = vmatmul.mubr.f32.gmra.mrb[0].mxu0 %v1323
      %v1414 = vpop.f32.mrb[0].mxu0
      %v1415 = vadd.f32 %v1286, %v1414
      %v1416 = vpop.f32.mrb[0].mxu0
      %1417 = vmatprep.mubr.f32.mxu0 0.0
      %1418 = vmatmul.mubr.f32.gmra.mrb[0].mxu0 %v1326
      %v1419 = vpop.f32.mrb[0].mxu0
      %v1420 = vadd.f32 %v1291, %v1419
      %v1421 = vpop.f32.mrb[0].mxu0
      %1422 = vmatprep.mubr.f32.mxu0 0.0
      %1423 = vmatmul.mubr.f32.gmra.mrb[0].mxu0 %v1329
      %v1424 = vpop.f32.mrb[0].mxu0
      %v1425 = vadd.f32 %v1296, %v1424
      %v1426 = vpop.f32.mrb[0].mxu0
      %1427 = vmatprep.mubr.f32.mxu0 0.0
      %1428 = vmatmul.mubr.f32.gmra.mrb[0].mxu0 %v1332
      %v1429 = vpop.f32.mrb[0].mxu0
      %v1430 = vadd.f32 %v1301, %v1429
      %v1431 = vpop.f32.mrb[0].mxu0
      %1432 = vmatprep.mubr.f32.mxu0 0.0
      %1433 = vmatmul.mubr.f32.gmra.mrb[0].mxu0 %v1335
      %v1434 = vpop.f32.mrb[0].mxu0
      %v1435 = vadd.f32 %v1306, %v1434
      %v1436 = vpop.f32.mrb[0].mxu0
      %1437 = vmatprep.mubr.f32.mxu0 0.0
      %1438 = vmatmul.mubr.f32.gmra.mrb[0].mxu0 %v1338
      %v1439 = vpop.f32.mrb[0].mxu0
      %v1440 = vadd.f32 %v1311, %v1439
      %v1441 = vpop.f32.mrb[0].mxu0
      %1442 = vmatprep.mubr.f32.mxu0 0.0
      %1443 = vmatmul.mubr.f32.gmra.mrb[0].mxu0 %v1341
      %v1444 = vpop.f32.mrb[0].mxu0
      %v1445 = vadd.f32 %v1316, %v1444
      %v1446 = vpop.f32.mrb[0].mxu0
      %1447 = vdwg.mxu0
      %v1448 = vmax.f32 %v1410, 0.0
      %v1449 = vmax.f32 %v1415, 0.0
      %v1450 = vmax.f32 %v1420, 0.0
      %v1451 = vmax.f32 %v1425, 0.0
      %1453 = vset.pattern.permute.xlu0 0
      %1454 = vperm.xlu0 %1453, %v1255
      %v1455 = vpop.permute.xlu0 %1454
      %1458 = vset.pattern.permute.xlu0 0
      %1459 = vperm.xlu0 %1458, %v1256
      %v1460 = vpop.permute.xlu0 %1459
      %1463 = vset.pattern.permute.xlu0 0
      %1464 = vperm.xlu0 %1463, %v1257
      %v1465 = vpop.permute.xlu0 %1464
      %1468 = vset.pattern.permute.xlu0 0
      %1469 = vperm.xlu0 %1468, %v1258
      %v1470 = vpop.permute.xlu0 %1469
      %v1472 = vmul.f32 %v1448, %v1455
      %v1473 = vmul.f32 %v1449, %v1460
      %v1474 = vmul.f32 %v1450, %v1465
      %v1475 = vmul.f32 %v1451, %v1470
      %1476 = vset.pattern.permute.xlu0 1
      %1477 = vperm.xlu0 %1476, %v1255
      %v1478 = vpop.permute.xlu0 %1477
      %1480 = vset.pattern.permute.xlu0 1
      %1481 = vperm.xlu0 %1480, %v1256
      %v1482 = vpop.permute.xlu0 %1481
      %1484 = vset.pattern.permute.xlu0 1
      %1485 = vperm.xlu0 %1484, %v1257
      %v1486 = vpop.permute.xlu0 %1485
      %1488 = vset.pattern.permute.xlu0 1
      %1489 = vperm.xlu0 %1488, %v1258
      %v1490 = vpop.permute.xlu0 %1489
      %v1492 = vadd.f32 %v1472, %v1478
      %v1493 = vadd.f32 %v1473, %v1482
      %v1494 = vadd.f32 %v1474, %v1486
      %v1495 = vadd.f32 %v1475, %v1490
      %vm1496 = vcmask 982016
      %v1498 = vsel %vm1496, %v1492, 0
      %v1501 = vsel %vm1496, %v1493, 0
      %v1504 = vsel %vm1496, %v1494, 0
      %v1507 = vsel %vm1496, %v1495, 0
      %1509 = vmatprep.subr.mxu0 0.0
      %1510 = vmatpush1.msra.mxu0 %v1188
      %1511 = vmatprep.subr.mxu0 0.0
      %1512 = vmatpush1.msra.mxu0 %v1189
      %1513 = vmatprep.subr.mxu0 0.0
      %1514 = vmatpush1.msra.mxu0 %v1190
      %1515 = vmatprep.subr.mxu0 0.0
      %1516 = vmatpush1.msra.mxu0 %v1191
      %1517 = vmatprep.subr.mxu0 0.0
      %1518 = vmatpush1.msra.mxu0 %v1192
      %1519 = vmatprep.subr.mxu0 0.0
      %1520 = vmatpush1.msra.mxu0 %v1193
      %1521 = vmatprep.subr.mxu0 0.0
      %1522 = vmatpush1.msra.mxu0 %v1194
      %1523 = vmatprep.subr.mxu0 0.0
      %1524 = vmatpush1.msra.mxu0 %v1195
      %1525 = vmatprep.subr.mxu0 0.0
      %1526 = vmatpush1.msra.mxu0 %v1196
      %1527 = vmatprep.subr.mxu0 0.0
      %1528 = vmatpush1.msra.mxu0 %v1197
      %1529 = vmatprep.subr.mxu0 0.0
      %1530 = vmatpush1.msra.mxu0 %v1198
      %1531 = vmatprep.subr.mxu0 0.0
      %1532 = vmatpush1.msra.mxu0 %v1199
      %1533 = vmatprep.subr.mxu0 0.0
      %1534 = vmatpush1.msra.mxu0 %v1200
      %1535 = vmatprep.subr.mxu0 0.0
      %1536 = vmatpush1.msra.mxu0 %v1201
      %1537 = vmatprep.subr.mxu0 0.0
      %1538 = vmatpush1.msra.mxu0 %v1202
      %1539 = vmatprep.subr.mxu0 0.0
      %1540 = vmatpush1.msra.mxu0 0.0
      %1541 = vmatprep.subr.mxu0 0.0
      %1542 = vmatpush1.msra.mxu0 0.0
      %1543 = vmatprep.subr.mxu0 0.0
      %1544 = vmatpush1.msra.mxu0 0.0
      %1545 = vmatprep.subr.mxu0 0.0
      %1546 = vmatpush1.msra.mxu0 0.0
      %1547 = vmatprep.subr.mxu0 0.0
      %1548 = vmatpush1.msra.mxu0 0.0
      %1549 = vmatprep.subr.mxu0 0.0
      %1550 = vmatpush1.msra.mxu0 0.0
      %1551 = vmatprep.subr.mxu0 0.0
      %1552 = vmatpush1.msra.mxu0 0.0
      %1553 = vmatprep.subr.mxu0 0.0
      %1554 = vmatpush1.msra.mxu0 0.0
      %1555 = vmatprep.subr.mxu0 0.0
      %1556 = vmatpush1.msra.mxu0 0.0
      %1557 = vmatprep.subr.mxu0 0.0
      %1558 = vmatpush1.msra.mxu0 0.0
      %1559 = vmatprep.subr.mxu0 0.0
      %1560 = vmatpush1.msra.mxu0 0.0
      %1561 = vmatprep.subr.mxu0 0.0
      %1562 = vmatpush1.msra.mxu0 0.0
      %1563 = vmatprep.subr.mxu0 0.0
      %1564 = vmatpush1.msra.mxu0 0.0
      %1565 = vmatprep.subr.mxu0 0.0
      %1566 = vmatpush1.msra.mxu0 0.0
      %1567 = vmatprep.subr.mxu0 0.0
      %1568 = vmatpush1.msra.mxu0 0.0
      %1569 = vmatprep.subr.mxu0 0.0
      %1570 = vmatpush1.msra.mxu0 0.0
      %1571 = vmatprep.subr.mxu0 0.0
      %1572 = vmatpush1.msra.mxu0 0.0
      %1573 = vmatprep.mubr.f32.mxu0 0.0
      %1574 = vmatmul.mubr.f32.gmra.mrb[0].mxu0 %v1498
      %v1575 = vpop.f32.mrb[0].mxu0
      %v1576 = vadd.f32 0.0, %v1575
      %v1577 = vpop.f32.mrb[0].mxu0
      %1578 = vmatprep.mubr.f32.mxu0 0.0
      %1579 = vmatmul.mubr.f32.gmra.mrb[0].mxu0 %v1501
      %v1580 = vpop.f32.mrb[0].mxu0
      %v1581 = vadd.f32 0.0, %v1580
      %v1582 = vpop.f32.mrb[0].mxu0
      %1583 = vmatprep.mubr.f32.mxu0 0.0
      %1584 = vmatmul.mubr.f32.gmra.mrb[0].mxu0 %v1504
      %v1585 = vpop.f32.mrb[0].mxu0
      %v1586 = vadd.f32 0.0, %v1585
      %v1587 = vpop.f32.mrb[0].mxu0
      %1588 = vmatprep.mubr.f32.mxu0 0.0
      %1589 = vmatmul.mubr.f32.gmra.mrb[0].mxu0 %v1507
      %v1590 = vpop.f32.mrb[0].mxu0
      %v1591 = vadd.f32 0.0, %v1590
      %v1592 = vpop.f32.mrb[0].mxu0
      %1593 = vdwg.mxu0
      %v1595 = vsel %vm1496, %v1576, 0
      %v1598 = vsel %vm1496, %v1581, 0
      %v1601 = vsel %vm1496, %v1586, 0
      %v1604 = vsel %vm1496, %v1591, 0
      %1606 = vmatprep.subr.mxu0 0.0
      %1607 = vmatpush1.msra.mxu0 %v1188
      %1608 = vmatprep.subr.mxu0 0.0
      %1609 = vmatpush1.msra.mxu0 %v1189
      %1610 = vmatprep.subr.mxu0 0.0
      %1611 = vmatpush1.msra.mxu0 %v1190
      %1612 = vmatprep.subr.mxu0 0.0
      %1613 = vmatpush1.msra.mxu0 %v1191
      %1614 = vmatprep.subr.mxu0 0.0
      %1615 = vmatpush1.msra.mxu0 %v1192
      %1616 = vmatprep.subr.mxu0 0.0
      %1617 = vmatpush1.msra.mxu0 %v1193
      %1618 = vmatprep.subr.mxu0 0.0
      %1619 = vmatpush1.msra.mxu0 %v1194
      %1620 = vmatprep.subr.mxu0 0.0
      %1621 = vmatpush1.msra.mxu0 %v1195
      %1622 = vmatprep.subr.mxu0 0.0
      %1623 = vmatpush1.msra.mxu0 %v1196
      %1624 = vmatprep.subr.mxu0 0.0
      %1625 = vmatpush1.msra.mxu0 %v1197
      %1626 = vmatprep.subr.mxu0 0.0
      %1627 = vmatpush1.msra.mxu0 %v1198
      %1628 = vmatprep.subr.mxu0 0.0
      %1629 = vmatpush1.msra.mxu0 %v1199
      %1630 = vmatprep.subr.mxu0 0.0
      %1631 = vmatpush1.msra.mxu0 %v1200
      %1632 = vmatprep.subr.mxu0 0.0
      %1633 = vmatpush1.msra.mxu0 %v1201
      %1634 = vmatprep.subr.mxu0 0.0
      %1635 = vmatpush1.msra.mxu0 %v1202
      %1636 = vmatprep.subr.mxu0 0.0
      %1637 = vmatpush1.msra.mxu0 0.0
      %1638 = vmatprep.subr.mxu0 0.0
      %1639 = vmatpush1.msra.mxu0 0.0
      %1640 = vmatprep.subr.mxu0 0.0
      %1641 = vmatpush1.msra.mxu0 0.0
      %1642 = vmatprep.subr.mxu0 0.0
      %1643 = vmatpush1.msra.mxu0 0.0
      %1644 = vmatprep.subr.mxu0 0.0
      %1645 = vmatpush1.msra.mxu0 0.0
      %1646 = vmatprep.subr.mxu0 0.0
      %1647 = vmatpush1.msra.mxu0 0.0
      %1648 = vmatprep.subr.mxu0 0.0
      %1649 = vmatpush1.msra.mxu0 0.0
      %1650 = vmatprep.subr.mxu0 0.0
      %1651 = vmatpush1.msra.mxu0 0.0
      %1652 = vmatprep.subr.mxu0 0.0
      %1653 = vmatpush1.msra.mxu0 0.0
      %1654 = vmatprep.subr.mxu0 0.0
      %1655 = vmatpush1.msra.mxu0 0.0
      %1656 = vmatprep.subr.mxu0 0.0
      %1657 = vmatpush1.msra.mxu0 0.0
      %1658 = vmatprep.subr.mxu0 0.0
      %1659 = vmatpush1.msra.mxu0 0.0
      %1660 = vmatprep.subr.mxu0 0.0
      %1661 = vmatpush1.msra.mxu0 0.0
      %1662 = vmatprep.subr.mxu0 0.0
      %1663 = vmatpush1.msra.mxu0 0.0
      %1664 = vmatprep.subr.mxu0 0.0
      %1665 = vmatpush1.msra.mxu0 0.0
      %1666 = vmatprep.subr.mxu0 0.0
      %1667 = vmatpush1.msra.mxu0 0.0
      %1668 = vmatprep.subr.mxu0 0.0
      %1669 = vmatpush1.msra.mxu0 0.0
      %1670 = vmatprep.mubr.f32.mxu0 0.0
      %1671 = vmatmul.mubr.f32.gmra.mrb[0].mxu0 %v1595
      %v1672 = vpop.f32.mrb[0].mxu0
      %v1673 = vadd.f32 0.0, %v1672
      %v1674 = vpop.f32.mrb[0].mxu0
      %1675 = vmatprep.mubr.f32.mxu0 0.0
      %1676 = vmatmul.mubr.f32.gmra.mrb[0].mxu0 %v1598
      %v1677 = vpop.f32.mrb[0].mxu0
      %v1678 = vadd.f32 0.0, %v1677
      %v1679 = vpop.f32.mrb[0].mxu0
      %1680 = vmatprep.mubr.f32.mxu0 0.0
      %1681 = vmatmul.mubr.f32.gmra.mrb[0].mxu0 %v1601
      %v1682 = vpop.f32.mrb[0].mxu0
      %v1683 = vadd.f32 0.0, %v1682
      %v1684 = vpop.f32.mrb[0].mxu0
      %1685 = vmatprep.mubr.f32.mxu0 0.0
      %1686 = vmatmul.mubr.f32.gmra.mrb[0].mxu0 %v1604
      %v1687 = vpop.f32.mrb[0].mxu0
      %v1688 = vadd.f32 0.0, %v1687
      %v1689 = vpop.f32.mrb[0].mxu0
      %1690 = vdwg.mxu0
      %1691 = vset.pattern.permute.xlu0 2
      %1692 = vperm.xlu0 %1691, %v1255
      %v1693 = vpop.permute.xlu0 %1692
      %1695 = vset.pattern.permute.xlu0 2
      %1696 = vperm.xlu0 %1695, %v1256
      %v1697 = vpop.permute.xlu0 %1696
      %1699 = vset.pattern.permute.xlu0 2
      %1700 = vperm.xlu0 %1699, %v1257
      %v1701 = vpop.permute.xlu0 %1700
      %1703 = vset.pattern.permute.xlu0 2
      %1704 = vperm.xlu0 %1703, %v1258
      %v1705 = vpop.permute.xlu0 %1704
      %vm1707 = vcmask 785408
      %v1709 = vsel %vm1707, %v1251, 0
      %v1712 = vsel %vm1707, %v1252, 0
      %v1715 = vsel %vm1707, %v1253, 0
      %v1718 = vsel %vm1707, %v1254, 0
      %1720 = vmatprep.subr.mxu0 0.0
      %1721 = vmatpush1.msra.mxu0 %v1492
      %1722 = vmatprep.subr.mxu0 0.0
      %1723 = vmatpush1.msra.mxu0 %v1493
      %1724 = vmatprep.subr.mxu0 0.0
      %1725 = vmatpush1.msra.mxu0 %v1494
      %1726 = vmatprep.subr.mxu0 0.0
      %1727 = vmatpush1.msra.mxu0 %v1495
      %1728 = vmatprep.subr.mxu0 0.0
      %1729 = vmatpush1.msra.mxu0 %v1576
      %1730 = vmatprep.subr.mxu0 0.0
      %1731 = vmatpush1.msra.mxu0 %v1581
      %1732 = vmatprep.subr.mxu0 0.0
      %1733 = vmatpush1.msra.mxu0 %v1586
      %1734 = vmatprep.subr.mxu0 0.0
      %1735 = vmatpush1.msra.mxu0 %v1591
      %1736 = vmatprep.subr.mxu0 0.0
      %1737 = vmatpush1.msra.mxu0 %v1673
      %1738 = vmatprep.subr.mxu0 0.0
      %1739 = vmatpush1.msra.mxu0 %v1678
      %1740 = vmatprep.subr.mxu0 0.0
      %1741 = vmatpush1.msra.mxu0 %v1683
      %1742 = vmatprep.subr.mxu0 0.0
      %1743 = vmatpush1.msra.mxu0 %v1688
      %1744 = vmatprep.subr.mxu0 0.0
      %1745 = vmatpush1.msra.mxu0 0.0
      %1746 = vmatprep.subr.mxu0 0.0
      %1747 = vmatpush1.msra.mxu0 0.0
      %1748 = vmatprep.subr.mxu0 0.0
      %1749 = vmatpush1.msra.mxu0 0.0
      %1750 = vmatprep.subr.mxu0 0.0
      %1751 = vmatpush1.msra.mxu0 0.0
      %1752 = vmatprep.subr.mxu0 0.0
      %1753 = vmatpush1.msra.mxu0 0.0
      %1754 = vmatprep.subr.mxu0 0.0
      %1755 = vmatpush1.msra.mxu0 0.0
      %1756 = vmatprep.subr.mxu0 0.0
      %1757 = vmatpush1.msra.mxu0 0.0
      %1758 = vmatprep.subr.mxu0 0.0
      %1759 = vmatpush1.msra.mxu0 0.0
      %1760 = vmatprep.subr.mxu0 0.0
      %1761 = vmatpush1.msra.mxu0 0.0
      %1762 = vmatprep.subr.mxu0 0.0
      %1763 = vmatpush1.msra.mxu0 0.0
      %1764 = vmatprep.subr.mxu0 0.0
      %1765 = vmatpush1.msra.mxu0 0.0
      %1766 = vmatprep.subr.mxu0 0.0
      %1767 = vmatpush1.msra.mxu0 0.0
      %1768 = vmatprep.subr.mxu0 0.0
      %1769 = vmatpush1.msra.mxu0 0.0
      %1770 = vmatprep.subr.mxu0 0.0
      %1771 = vmatpush1.msra.mxu0 0.0
      %1772 = vmatprep.subr.mxu0 0.0
      %1773 = vmatpush1.msra.mxu0 0.0
      %1774 = vmatprep.subr.mxu0 0.0
      %1775 = vmatpush1.msra.mxu0 0.0
      %1776 = vmatprep.subr.mxu0 0.0
      %1777 = vmatpush1.msra.mxu0 0.0
      %1778 = vmatprep.subr.mxu0 0.0
      %1779 = vmatpush1.msra.mxu0 0.0
      %1780 = vmatprep.subr.mxu0 0.0
      %1781 = vmatpush1.msra.mxu0 0.0
      %1782 = vmatprep.subr.mxu0 0.0
      %1783 = vmatpush1.msra.mxu0 0.0
      %1784 = vmatprep.mubr.f32.mxu0 0.0
      %1785 = vmatmul.mubr.f32.gmra.mrb[0].mxu0 %v1709
      %v1786 = vpop.f32.mrb[0].mxu0
      %v1787 = vadd.f32 %v1693, %v1786
      %v1788 = vpop.f32.mrb[0].mxu0
      %1789 = vmatprep.mubr.f32.mxu0 0.0
      %1790 = vmatmul.mubr.f32.gmra.mrb[0].mxu0 %v1712
      %v1791 = vpop.f32.mrb[0].mxu0
      %v1792 = vadd.f32 %v1697, %v1791
      %v1793 = vpop.f32.mrb[0].mxu0
      %1794 = vmatprep.mubr.f32.mxu0 0.0
      %1795 = vmatmul.mubr.f32.gmra.mrb[0].mxu0 %v1715
      %v1796 = vpop.f32.mrb[0].mxu0
      %v1797 = vadd.f32 %v1701, %v1796
      %v1798 = vpop.f32.mrb[0].mxu0
      %1799 = vmatprep.mubr.f32.mxu0 0.0
      %1800 = vmatmul.mubr.f32.gmra.mrb[0].mxu0 %v1718
      %v1801 = vpop.f32.mrb[0].mxu0
      %v1802 = vadd.f32 %v1705, %v1801
      %v1803 = vpop.f32.mrb[0].mxu0
      %1804 = vdwg.mxu0
      %v1806 = vsel %vm1496, %v1787, 0
      %v1809 = vsel %vm1496, %v1792, 0
      %v1812 = vsel %vm1496, %v1797, 0
      %v1815 = vsel %vm1496, %v1802, 0
      %1817 = vmatprep.subr.mxu0 0.0
      %1818 = vmatpush1.msra.mxu0 %v1173
      %1819 = vmatprep.subr.mxu0 0.0
      %1820 = vmatpush1.msra.mxu0 %v1174
      %1821 = vmatprep.subr.mxu0 0.0
      %1822 = vmatpush1.msra.mxu0 %v1175
      %1823 = vmatprep.subr.mxu0 0.0
      %1824 = vmatpush1.msra.mxu0 %v1176
      %1825 = vmatprep.subr.mxu0 0.0
      %1826 = vmatpush1.msra.mxu0 %v1177
      %1827 = vmatprep.subr.mxu0 0.0
      %1828 = vmatpush1.msra.mxu0 %v1178
      %1829 = vmatprep.subr.mxu0 0.0
      %1830 = vmatpush1.msra.mxu0 %v1179
      %1831 = vmatprep.subr.mxu0 0.0
      %1832 = vmatpush1.msra.mxu0 %v1180
      %1833 = vmatprep.subr.mxu0 0.0
      %1834 = vmatpush1.msra.mxu0 %v1181
      %1835 = vmatprep.subr.mxu0 0.0
      %1836 = vmatpush1.msra.mxu0 %v1182
      %1837 = vmatprep.subr.mxu0 0.0
      %1838 = vmatpush1.msra.mxu0 %v1183
      %1839 = vmatprep.subr.mxu0 0.0
      %1840 = vmatpush1.msra.mxu0 %v1184
      %1841 = vmatprep.subr.mxu0 0.0
      %1842 = vmatpush1.msra.mxu0 %v1185
      %1843 = vmatprep.subr.mxu0 0.0
      %1844 = vmatpush1.msra.mxu0 %v1186
      %1845 = vmatprep.subr.mxu0 0.0
      %1846 = vmatpush1.msra.mxu0 %v1187
      %1847 = vmatprep.subr.mxu0 0.0
      %1848 = vmatpush1.msra.mxu0 0.0
      %1849 = vmatprep.subr.mxu0 0.0
      %1850 = vmatpush1.msra.mxu0 0.0
      %1851 = vmatprep.subr.mxu0 0.0
      %1852 = vmatpush1.msra.mxu0 0.0
      %1853 = vmatprep.subr.mxu0 0.0
      %1854 = vmatpush1.msra.mxu0 0.0
      %1855 = vmatprep.subr.mxu0 0.0
      %1856 = vmatpush1.msra.mxu0 0.0
      %1857 = vmatprep.subr.mxu0 0.0
      %1858 = vmatpush1.msra.mxu0 0.0
      %1859 = vmatprep.subr.mxu0 0.0
      %1860 = vmatpush1.msra.mxu0 0.0
      %1861 = vmatprep.subr.mxu0 0.0
      %1862 = vmatpush1.msra.mxu0 0.0
      %1863 = vmatprep.subr.mxu0 0.0
      %1864 = vmatpush1.msra.mxu0 0.0
      %1865 = vmatprep.subr.mxu0 0.0
      %1866 = vmatpush1.msra.mxu0 0.0
      %1867 = vmatprep.subr.mxu0 0.0
      %1868 = vmatpush1.msra.mxu0 0.0
      %1869 = vmatprep.subr.mxu0 0.0
      %1870 = vmatpush1.msra.mxu0 0.0
      %1871 = vmatprep.subr.mxu0 0.0
      %1872 = vmatpush1.msra.mxu0 0.0
      %1873 = vmatprep.subr.mxu0 0.0
      %1874 = vmatpush1.msra.mxu0 0.0
      %1875 = vmatprep.subr.mxu0 0.0
      %1876 = vmatpush1.msra.mxu0 0.0
      %1877 = vmatprep.subr.mxu0 0.0
      %1878 = vmatpush1.msra.mxu0 0.0
      %1879 = vmatprep.subr.mxu0 0.0
      %1880 = vmatpush1.msra.mxu0 0.0
      %1881 = vmatprep.mubr.f32.mxu0 0.0
      %1882 = vmatmul.mubr.f32.gmra.mrb[0].mxu0 %v1806
      %v1883 = vpop.f32.mrb[0].mxu0
      %v1884 = vadd.f32 0.0, %v1883
      %v1885 = vpop.f32.mrb[0].mxu0
      %1886 = vmatprep.mubr.f32.mxu0 0.0
      %1887 = vmatmul.mubr.f32.gmra.mrb[0].mxu0 %v1809
      %v1888 = vpop.f32.mrb[0].mxu0
      %v1889 = vadd.f32 0.0, %v1888
      %v1890 = vpop.f32.mrb[0].mxu0
      %1891 = vmatprep.mubr.f32.mxu0 0.0
      %1892 = vmatmul.mubr.f32.gmra.mrb[0].mxu0 %v1812
      %v1893 = vpop.f32.mrb[0].mxu0
      %v1894 = vadd.f32 0.0, %v1893
      %v1895 = vpop.f32.mrb[0].mxu0
      %1896 = vmatprep.mubr.f32.mxu0 0.0
      %1897 = vmatmul.mubr.f32.gmra.mrb[0].mxu0 %v1815
      %v1898 = vpop.f32.mrb[0].mxu0
      %v1899 = vadd.f32 0.0, %v1898
      %v1900 = vpop.f32.mrb[0].mxu0
      %1901 = vdwg.mxu0
      %v1902 = vlaneseq
      %v1903 = vshrl.u32 %v1902, 7
      %v1904 = vsub.s32 0, %v1903
      %v1905 = vrot.slane %v1260, %v1904
      %v1906 = vmul.f32 %v1884, %v1905
      %v1907 = vmul.f32 %v1889, %v1905
      %v1908 = vmul.f32 %v1894, %v1905
      %v1909 = vmul.f32 %v1899, %v1905
      %v1910 = vlaneseq
      %v1911 = vshrl.u32 %v1910, 7
      %v1912 = vsub.s32 1, %v1911
      %v1913 = vrot.slane %v1260, %v1912
      %v1914 = vadd.f32 %v1906, %v1913
      %v1915 = vadd.f32 %v1907, %v1913
      %v1916 = vadd.f32 %v1908, %v1913
      %v1917 = vadd.f32 %v1909, %v1913
      %vm1918 = vcmask 261120
      %v1920 = vsel %vm1918, %v1171, 0
      %v1923 = vsel %vm1918, %v1172, 0
      %1925 = vmatprep.subr.mxu0 0.0
      %1926 = vmatpush1.msra.mxu0 %v1914
      %1927 = vmatprep.subr.mxu0 0.0
      %1928 = vmatpush1.msra.mxu0 %v1915
      %1929 = vmatprep.subr.mxu0 0.0
      %1930 = vmatpush1.msra.mxu0 %v1916
      %1931 = vmatprep.subr.mxu0 0.0
      %1932 = vmatpush1.msra.mxu0 %v1917
      %1933 = vmatprep.subr.mxu0 0.0
      %1934 = vmatpush1.msra.mxu0 0.0
      %1935 = vmatprep.subr.mxu0 0.0
      %1936 = vmatpush1.msra.mxu0 0.0
      %1937 = vmatprep.subr.mxu0 0.0
      %1938 = vmatpush1.msra.mxu0 0.0
      %1939 = vmatprep.subr.mxu0 0.0
      %1940 = vmatpush1.msra.mxu0 0.0
      %1941 = vmatprep.subr.mxu0 0.0
      %1942 = vmatpush1.msra.mxu0 0.0
      %1943 = vmatprep.subr.mxu0 0.0
      %1944 = vmatpush1.msra.mxu0 0.0
      %1945 = vmatprep.subr.mxu0 0.0
      %1946 = vmatpush1.msra.mxu0 0.0
      %1947 = vmatprep.subr.mxu0 0.0
      %1948 = vmatpush1.msra.mxu0 0.0
      %1949 = vmatprep.subr.mxu0 0.0
      %1950 = vmatpush1.msra.mxu0 0.0
      %1951 = vmatprep.subr.mxu0 0.0
      %1952 = vmatpush1.msra.mxu0 0.0
      %1953 = vmatprep.subr.mxu0 0.0
      %1954 = vmatpush1.msra.mxu0 0.0
      %1955 = vmatprep.subr.mxu0 0.0
      %1956 = vmatpush1.msra.mxu0 0.0
      %1957 = vmatprep.subr.mxu0 0.0
      %1958 = vmatpush1.msra.mxu0 0.0
      %1959 = vmatprep.subr.mxu0 0.0
      %1960 = vmatpush1.msra.mxu0 0.0
      %1961 = vmatprep.subr.mxu0 0.0
      %1962 = vmatpush1.msra.mxu0 0.0
      %1963 = vmatprep.subr.mxu0 0.0
      %1964 = vmatpush1.msra.mxu0 0.0
      %1965 = vmatprep.subr.mxu0 0.0
      %1966 = vmatpush1.msra.mxu0 0.0
      %1967 = vmatprep.subr.mxu0 0.0
      %1968 = vmatpush1.msra.mxu0 0.0
      %1969 = vmatprep.subr.mxu0 0.0
      %1970 = vmatpush1.msra.mxu0 0.0
      %1971 = vmatprep.subr.mxu0 0.0
      %1972 = vmatpush1.msra.mxu0 0.0
      %1973 = vmatprep.subr.mxu0 0.0
      %1974 = vmatpush1.msra.mxu0 0.0
      %1975 = vmatprep.subr.mxu0 0.0
      %1976 = vmatpush1.msra.mxu0 0.0
      %1977 = vmatprep.subr.mxu0 0.0
      %1978 = vmatpush1.msra.mxu0 0.0
      %1979 = vmatprep.subr.mxu0 0.0
      %1980 = vmatpush1.msra.mxu0 0.0
      %1981 = vmatprep.subr.mxu0 0.0
      %1982 = vmatpush1.msra.mxu0 0.0
      %1983 = vmatprep.subr.mxu0 0.0
      %1984 = vmatpush1.msra.mxu0 0.0
      %1985 = vmatprep.subr.mxu0 0.0
      %1986 = vmatpush1.msra.mxu0 0.0
      %1987 = vmatprep.subr.mxu0 0.0
      %1988 = vmatpush1.msra.mxu0 0.0
      %1989 = vmatprep.mubr.f32.mxu0 0.0
      %1990 = vmatmul.mubr.f32.gmra.mrb[0].mxu0 %v1920
      %v1991 = vpop.f32.mrb[0].mxu0
      %v1992 = vadd.f32 0.0, %v1991
      %v1993 = vpop.f32.mrb[0].mxu0
      %1994 = vmatprep.mubr.f32.mxu0 0.0
      %1995 = vmatmul.mubr.f32.gmra.mrb[0].mxu0 %v1923
      %v1996 = vpop.f32.mrb[0].mxu0
      %v1997 = vadd.f32 0.0, %v1996
      %v1998 = vpop.f32.mrb[0].mxu0
      %1999 = vdwg.mxu0
      %v2000 = vlaneseq
      %v2001 = vshrl.u32 %v2000, 7
      %v2002 = vsub.s32 2, %v2001
      %v2003 = vrot.slane %v1260, %v2002
      %v2004 = vmul.f32 %v1992, %v2003
      %v2005 = vmul.f32 %v1997, %v2003
      %v2006 = vlaneseq
      %v2007 = vshrl.u32 %v2006, 7
      %v2008 = vsub.s32 3, %v2007
      %v2009 = vrot.slane %v1260, %v2008
      %v2010 = vadd.f32 %v2004, %v2009
      %v2011 = vadd.f32 %v2005, %v2009
      %v2013 = vsel %vm1918, %v1259, 0
      %2015 = vmatprep.subr.mxu0 0.0
      %2016 = vmatpush1.msra.mxu0 %v1787
      %2017 = vmatprep.subr.mxu0 0.0
      %2018 = vmatpush1.msra.mxu0 %v1792
      %2019 = vmatprep.subr.mxu0 0.0
      %2020 = vmatpush1.msra.mxu0 %v1797
      %2021 = vmatprep.subr.mxu0 0.0
      %2022 = vmatpush1.msra.mxu0 %v1802
      %2023 = vmatprep.subr.mxu0 0.0
      %2024 = vmatpush1.msra.mxu0 0.0
      %2025 = vmatprep.subr.mxu0 0.0
      %2026 = vmatpush1.msra.mxu0 0.0
      %2027 = vmatprep.subr.mxu0 0.0
      %2028 = vmatpush1.msra.mxu0 0.0
      %2029 = vmatprep.subr.mxu0 0.0
      %2030 = vmatpush1.msra.mxu0 0.0
      %2031 = vmatprep.subr.mxu0 0.0
      %2032 = vmatpush1.msra.mxu0 0.0
      %2033 = vmatprep.subr.mxu0 0.0
      %2034 = vmatpush1.msra.mxu0 0.0
      %2035 = vmatprep.subr.mxu0 0.0
      %2036 = vmatpush1.msra.mxu0 0.0
      %2037 = vmatprep.subr.mxu0 0.0
      %2038 = vmatpush1.msra.mxu0 0.0
      %2039 = vmatprep.subr.mxu0 0.0
      %2040 = vmatpush1.msra.mxu0 0.0
      %2041 = vmatprep.subr.mxu0 0.0
      %2042 = vmatpush1.msra.mxu0 0.0
      %2043 = vmatprep.subr.mxu0 0.0
      %2044 = vmatpush1.msra.mxu0 0.0
      %2045 = vmatprep.subr.mxu0 0.0
      %2046 = vmatpush1.msra.mxu0 0.0
      %2047 = vmatprep.subr.mxu0 0.0
      %2048 = vmatpush1.msra.mxu0 0.0
      %2049 = vmatprep.subr.mxu0 0.0
      %2050 = vmatpush1.msra.mxu0 0.0
      %2051 = vmatprep.subr.mxu0 0.0
      %2052 = vmatpush1.msra.mxu0 0.0
      %2053 = vmatprep.subr.mxu0 0.0
      %2054 = vmatpush1.msra.mxu0 0.0
      %2055 = vmatprep.subr.mxu0 0.0
      %2056 = vmatpush1.msra.mxu0 0.0
      %2057 = vmatprep.subr.mxu0 0.0
      %2058 = vmatpush1.msra.mxu0 0.0
      %2059 = vmatprep.subr.mxu0 0.0
      %2060 = vmatpush1.msra.mxu0 0.0
      %2061 = vmatprep.subr.mxu0 0.0
      %2062 = vmatpush1.msra.mxu0 0.0
      %2063 = vmatprep.subr.mxu0 0.0
      %2064 = vmatpush1.msra.mxu0 0.0
      %2065 = vmatprep.subr.mxu0 0.0
      %2066 = vmatpush1.msra.mxu0 0.0
      %2067 = vmatprep.subr.mxu0 0.0
      %2068 = vmatpush1.msra.mxu0 0.0
      %2069 = vmatprep.subr.mxu0 0.0
      %2070 = vmatpush1.msra.mxu0 0.0
      %2071 = vmatprep.subr.mxu0 0.0
      %2072 = vmatpush1.msra.mxu0 0.0
      %2073 = vmatprep.subr.mxu0 0.0
      %2074 = vmatpush1.msra.mxu0 0.0
      %2075 = vmatprep.subr.mxu0 0.0
      %2076 = vmatpush1.msra.mxu0 0.0
      %2077 = vmatprep.subr.mxu0 0.0
      %2078 = vmatpush1.msra.mxu0 0.0
      %2079 = vmatprep.mubr.f32.mxu0 0.0
      %2080 = vmatmul.mubr.f32.gmra.mrb[0].mxu0 %v2013
      %v2081 = vpop.f32.mrb[0].mxu0
      %v2082 = vadd.f32 0.0, %v2081
      %v2083 = vpop.f32.mrb[0].mxu0
      %2084 = vdwg.mxu0
      %v2085 = vlaneseq
      %v2086 = vshrl.u32 %v2085, 7
      %v2087 = vsub.s32 0, %v2086
      %v2088 = vrot.slane %v2082, %v2087
      %v2089 = vmul.f32 %v1203, %v2088
      %v2090 = vmul.f32 %v1204, %v2088
      %v2092 = vsel %vm1496, %v2089, 0
      %v2095 = vsel %vm1496, %v2090, 0
      %2097 = vmatprep.subr.mxu0 0.0
      %2098 = vmatpush1.msra.mxu0 %v1205
      %2099 = vmatprep.subr.mxu0 0.0
      %2100 = vmatpush1.msra.mxu0 %v1206
      %2101 = vmatprep.subr.mxu0 0.0
      %2102 = vmatpush1.msra.mxu0 %v1207
      %2103 = vmatprep.subr.mxu0 0.0
      %2104 = vmatpush1.msra.mxu0 %v1208
      %2105 = vmatprep.subr.mxu0 0.0
      %2106 = vmatpush1.msra.mxu0 %v1209
      %2107 = vmatprep.subr.mxu0 0.0
      %2108 = vmatpush1.msra.mxu0 %v1210
      %2109 = vmatprep.subr.mxu0 0.0
      %2110 = vmatpush1.msra.mxu0 %v1211
      %2111 = vmatprep.subr.mxu0 0.0
      %2112 = vmatpush1.msra.mxu0 %v1212
      %2113 = vmatprep.subr.mxu0 0.0
      %2114 = vmatpush1.msra.mxu0 %v1213
      %2115 = vmatprep.subr.mxu0 0.0
      %2116 = vmatpush1.msra.mxu0 %v1214
      %2117 = vmatprep.subr.mxu0 0.0
      %2118 = vmatpush1.msra.mxu0 %v1215
      %2119 = vmatprep.subr.mxu0 0.0
      %2120 = vmatpush1.msra.mxu0 %v1216
      %2121 = vmatprep.subr.mxu0 0.0
      %2122 = vmatpush1.msra.mxu0 %v1217
      %2123 = vmatprep.subr.mxu0 0.0
      %2124 = vmatpush1.msra.mxu0 %v1218
      %2125 = vmatprep.subr.mxu0 0.0
      %2126 = vmatpush1.msra.mxu0 %v1219
      %2127 = vmatprep.subr.mxu0 0.0
      %2128 = vmatpush1.msra.mxu0 0.0
      %2129 = vmatprep.subr.mxu0 0.0
      %2130 = vmatpush1.msra.mxu0 0.0
      %2131 = vmatprep.subr.mxu0 0.0
      %2132 = vmatpush1.msra.mxu0 0.0
      %2133 = vmatprep.subr.mxu0 0.0
      %2134 = vmatpush1.msra.mxu0 0.0
      %2135 = vmatprep.subr.mxu0 0.0
      %2136 = vmatpush1.msra.mxu0 0.0
      %2137 = vmatprep.subr.mxu0 0.0
      %2138 = vmatpush1.msra.mxu0 0.0
      %2139 = vmatprep.subr.mxu0 0.0
      %2140 = vmatpush1.msra.mxu0 0.0
      %2141 = vmatprep.subr.mxu0 0.0
      %2142 = vmatpush1.msra.mxu0 0.0
      %2143 = vmatprep.subr.mxu0 0.0
      %2144 = vmatpush1.msra.mxu0 0.0
      %2145 = vmatprep.subr.mxu0 0.0
      %2146 = vmatpush1.msra.mxu0 0.0
      %2147 = vmatprep.subr.mxu0 0.0
      %2148 = vmatpush1.msra.mxu0 0.0
      %2149 = vmatprep.subr.mxu0 0.0
      %2150 = vmatpush1.msra.mxu0 0.0
      %2151 = vmatprep.subr.mxu0 0.0
      %2152 = vmatpush1.msra.mxu0 0.0
      %2153 = vmatprep.subr.mxu0 0.0
      %2154 = vmatpush1.msra.mxu0 0.0
      %2155 = vmatprep.subr.mxu0 0.0
      %2156 = vmatpush1.msra.mxu0 0.0
      %2157 = vmatprep.subr.mxu0 0.0
      %2158 = vmatpush1.msra.mxu0 0.0
      %2159 = vmatprep.subr.mxu0 0.0
      %2160 = vmatpush1.msra.mxu0 0.0
      %2161 = vmatprep.mubr.f32.mxu0 0.0
      %2162 = vmatmul.mubr.f32.gmra.mrb[0].mxu0 %v2092
      %v2163 = vpop.f32.mrb[0].mxu0
      %v2164 = vadd.f32 0.0, %v2163
      %v2165 = vpop.f32.mrb[0].mxu0
      %2166 = vmatprep.mubr.f32.mxu0 0.0
      %2167 = vmatmul.mubr.f32.gmra.mrb[0].mxu0 %v2095
      %v2168 = vpop.f32.mrb[0].mxu0
      %v2169 = vadd.f32 0.0, %v2168
      %v2170 = vpop.f32.mrb[0].mxu0
      %2171 = vdwg.mxu0
      %v2172 = vlaneseq
      %v2173 = vshrl.u32 %v2172, 7
      %v2174 = vsub.s32 4, %v2173
      %v2175 = vrot.slane %v1260, %v2174
      %v2176 = vmul.f32 %v2164, %v2175
      %v2177 = vmul.f32 %v2169, %v2175
      %v2178 = vlaneseq
      %v2179 = vshrl.u32 %v2178, 7
      %v2180 = vsub.s32 5, %v2179
      %v2181 = vrot.slane %v1260, %v2180
      %v2182 = vadd.f32 %v2176, %v2181
      %v2183 = vadd.f32 %v2177, %v2181
      %2184 = vxpose.xlu0.b32.start [1/16] %v2010, 128
      %2185 = vxpose.xlu0.b32.cont [2/16] %v2011, 128
      %2186 = vxpose.xlu0.b32.cont [3/16] 0.0, 128
      %2187 = vxpose.xlu0.b32.cont [4/16] 0.0, 128
      %2188 = vxpose.xlu0.b32.cont [5/16] 0.0, 128
      %2189 = vxpose.xlu0.b32.cont [6/16] 0.0, 128
      %2190 = vxpose.xlu0.b32.cont [7/16] 0.0, 128
      %2191 = vxpose.xlu0.b32.cont [8/16] 0.0, 128
      %2192 = vxpose.xlu0.b32.cont [9/16] 0.0, 128
      %2193 = vxpose.xlu0.b32.cont [10/16] 0.0, 128
      %2194 = vxpose.xlu0.b32.cont [11/16] 0.0, 128
      %2195 = vxpose.xlu0.b32.cont [12/16] 0.0, 128
      %2196 = vxpose.xlu0.b32.cont [13/16] 0.0, 128
      %2197 = vxpose.xlu0.b32.cont [14/16] 0.0, 128
      %2198 = vxpose.xlu0.b32.cont [15/16] 0.0, 128
      %2199 = vxpose.xlu0.b32.end [16/16] 0.0, 128
      %v2200 = vpop.trf.xlu0
      %v2201 = vpop.trf.xlu0
      %v2202 = vpop.trf.xlu0
      %v2203 = vpop.trf.xlu0
      %v2204 = vpop.trf.xlu0
      %v2205 = vpop.trf.xlu0
      %v2206 = vpop.trf.xlu0
      %v2207 = vpop.trf.xlu0
      %v2208 = vpop.trf.xlu0
      %v2209 = vpop.trf.xlu0
      %v2210 = vpop.trf.xlu0
      %v2211 = vpop.trf.xlu0
      %v2212 = vpop.trf.xlu0
      %v2213 = vpop.trf.xlu0
      %v2214 = vpop.trf.xlu0
      %v2215 = vpop.trf.xlu0
      %vm2216 = vcmask 121856
      %v2218 = vsel %vm2216, %v2200, 0
      %vm2220 = vcmask 1046528
      %v2222 = vsel %vm2220, %v2183, 0
      %2224 = vmatprep.subr.mxu0 0.0
      %2225 = vmatpush1.msra.mxu0 %v2182
      %2226 = vmatprep.subr.mxu0 0.0
      %2227 = vmatpush1.msra.mxu0 %v2222
      %2228 = vmatprep.subr.mxu0 0.0
      %2229 = vmatpush1.msra.mxu0 0.0
      %2230 = vmatprep.subr.mxu0 0.0
      %2231 = vmatpush1.msra.mxu0 0.0
      %2232 = vmatprep.subr.mxu0 0.0
      %2233 = vmatpush1.msra.mxu0 0.0
      %2234 = vmatprep.subr.mxu0 0.0
      %2235 = vmatpush1.msra.mxu0 0.0
      %2236 = vmatprep.subr.mxu0 0.0
      %2237 = vmatpush1.msra.mxu0 0.0
      %2238 = vmatprep.subr.mxu0 0.0
      %2239 = vmatpush1.msra.mxu0 0.0
      %2240 = vmatprep.subr.mxu0 0.0
      %2241 = vmatpush1.msra.mxu0 0.0
      %2242 = vmatprep.subr.mxu0 0.0
      %2243 = vmatpush1.msra.mxu0 0.0
      %2244 = vmatprep.subr.mxu0 0.0
      %2245 = vmatpush1.msra.mxu0 0.0
      %2246 = vmatprep.subr.mxu0 0.0
      %2247 = vmatpush1.msra.mxu0 0.0
      %2248 = vmatprep.subr.mxu0 0.0
      %2249 = vmatpush1.msra.mxu0 0.0
      %2250 = vmatprep.subr.mxu0 0.0
      %2251 = vmatpush1.msra.mxu0 0.0
      %2252 = vmatprep.subr.mxu0 0.0
      %2253 = vmatpush1.msra.mxu0 0.0
      %2254 = vmatprep.subr.mxu0 0.0
      %2255 = vmatpush1.msra.mxu0 0.0
      %2256 = vmatprep.subr.mxu0 0.0
      %2257 = vmatpush1.msra.mxu0 0.0
      %2258 = vmatprep.subr.mxu0 0.0
      %2259 = vmatpush1.msra.mxu0 0.0
      %2260 = vmatprep.subr.mxu0 0.0
      %2261 = vmatpush1.msra.mxu0 0.0
      %2262 = vmatprep.subr.mxu0 0.0
      %2263 = vmatpush1.msra.mxu0 0.0
      %2264 = vmatprep.subr.mxu0 0.0
      %2265 = vmatpush1.msra.mxu0 0.0
      %2266 = vmatprep.subr.mxu0 0.0
      %2267 = vmatpush1.msra.mxu0 0.0
      %2268 = vmatprep.subr.mxu0 0.0
      %2269 = vmatpush1.msra.mxu0 0.0
      %2270 = vmatprep.subr.mxu0 0.0
      %2271 = vmatpush1.msra.mxu0 0.0
      %2272 = vmatprep.subr.mxu0 0.0
      %2273 = vmatpush1.msra.mxu0 0.0
      %2274 = vmatprep.subr.mxu0 0.0
      %2275 = vmatpush1.msra.mxu0 0.0
      %2276 = vmatprep.subr.mxu0 0.0
      %2277 = vmatpush1.msra.mxu0 0.0
      %2278 = vmatprep.subr.mxu0 0.0
      %2279 = vmatpush1.msra.mxu0 0.0
      %2280 = vmatprep.subr.mxu0 0.0
      %2281 = vmatpush1.msra.mxu0 0.0
      %2282 = vmatprep.subr.mxu0 0.0
      %2283 = vmatpush1.msra.mxu0 0.0
      %2284 = vmatprep.subr.mxu0 0.0
      %2285 = vmatpush1.msra.mxu0 0.0
      %2286 = vmatprep.subr.mxu0 0.0
      %2287 = vmatpush1.msra.mxu0 0.0
      %2288 = vmatprep.mubr.f32.mxu0 0.0
      %2289 = vmatmul.mubr.f32.gmra.mrb[0].mxu0 %v2218
      %v2290 = vpop.f32.mrb[0].mxu0
      %v2291 = vadd.f32 0.0, %v2290
      %v2292 = vpop.f32.mrb[0].mxu0
      %2293 = vdwg.mxu0
      %v2294 = vmax.f32 %v2291, 0.0
      %v2295 = vlaneseq
      %v2296 = vshrl.u32 %v2295, 7
      %v2297 = vsub.s32 6, %v2296
      %v2298 = vrot.slane %v1260, %v2297
      %vm2299 = vcmask 64512
      %v2301 = vsel %vm2299, %v2294, 0
      %v2304 = vsel %vm2299, %v1261, 0
      %2306 = vmatprep.subr.mxu0 0.0
      %2307 = vmatpush1.xpose.msra.mxu0 %v2304
      %2308 = vmatprep.subr.mxu0 0.0
      %2309 = vmatpush1.xpose.msra.mxu0 0.0
      %2310 = vmatprep.subr.mxu0 0.0
      %2311 = vmatpush1.xpose.msra.mxu0 0.0
      %2312 = vmatprep.subr.mxu0 0.0
      %2313 = vmatpush1.xpose.msra.mxu0 0.0
      %2314 = vmatprep.subr.mxu0 0.0
      %2315 = vmatpush1.xpose.msra.mxu0 0.0
      %2316 = vmatprep.subr.mxu0 0.0
      %2317 = vmatpush1.xpose.msra.mxu0 0.0
      %2318 = vmatprep.subr.mxu0 0.0
      %2319 = vmatpush1.xpose.msra.mxu0 0.0
      %2320 = vmatprep.subr.mxu0 0.0
      %2321 = vmatpush1.xpose.msra.mxu0 0.0
      %2322 = vmatprep.subr.mxu0 0.0
      %2323 = vmatpush1.xpose.msra.mxu0 0.0
      %2324 = vmatprep.subr.mxu0 0.0
      %2325 = vmatpush1.xpose.msra.mxu0 0.0
      %2326 = vmatprep.subr.mxu0 0.0
      %2327 = vmatpush1.xpose.msra.mxu0 0.0
      %2328 = vmatprep.subr.mxu0 0.0
      %2329 = vmatpush1.xpose.msra.mxu0 0.0
      %2330 = vmatprep.subr.mxu0 0.0
      %2331 = vmatpush1.xpose.msra.mxu0 0.0
      %2332 = vmatprep.subr.mxu0 0.0
      %2333 = vmatpush1.xpose.msra.mxu0 0.0
      %2334 = vmatprep.subr.mxu0 0.0
      %2335 = vmatpush1.xpose.msra.mxu0 0.0
      %2336 = vmatprep.subr.mxu0 0.0
      %2337 = vmatpush1.xpose.msra.mxu0 0.0
      %2338 = vmatprep.subr.mxu0 0.0
      %2339 = vmatpush1.xpose.msra.mxu0 0.0
      %2340 = vmatprep.subr.mxu0 0.0
      %2341 = vmatpush1.xpose.msra.mxu0 0.0
      %2342 = vmatprep.subr.mxu0 0.0
      %2343 = vmatpush1.xpose.msra.mxu0 0.0
      %2344 = vmatprep.subr.mxu0 0.0
      %2345 = vmatpush1.xpose.msra.mxu0 0.0
      %2346 = vmatprep.subr.mxu0 0.0
      %2347 = vmatpush1.xpose.msra.mxu0 0.0
      %2348 = vmatprep.subr.mxu0 0.0
      %2349 = vmatpush1.xpose.msra.mxu0 0.0
      %2350 = vmatprep.subr.mxu0 0.0
      %2351 = vmatpush1.xpose.msra.mxu0 0.0
      %2352 = vmatprep.subr.mxu0 0.0
      %2353 = vmatpush1.xpose.msra.mxu0 0.0
      %2354 = vmatprep.subr.mxu0 0.0
      %2355 = vmatpush1.xpose.msra.mxu0 0.0
      %2356 = vmatprep.subr.mxu0 0.0
      %2357 = vmatpush1.xpose.msra.mxu0 0.0
      %2358 = vmatprep.subr.mxu0 0.0
      %2359 = vmatpush1.xpose.msra.mxu0 0.0
      %2360 = vmatprep.subr.mxu0 0.0
      %2361 = vmatpush1.xpose.msra.mxu0 0.0
      %2362 = vmatprep.subr.mxu0 0.0
      %2363 = vmatpush1.xpose.msra.mxu0 0.0
      %2364 = vmatprep.subr.mxu0 0.0
      %2365 = vmatpush1.xpose.msra.mxu0 0.0
      %2366 = vmatprep.subr.mxu0 0.0
      %2367 = vmatpush1.xpose.msra.mxu0 0.0
      %2368 = vmatprep.subr.mxu0 0.0
      %2369 = vmatpush1.xpose.msra.mxu0 0.0
      %2370 = vmatprep.mubr.f32.mxu0 0.0
      %2371 = vmatmul.mubr.f32.gmra.mrb[0].mxu0 %v2301
      %v2372 = vpop.f32.mrb[0].mxu0
      %v2373 = vadd.f32 %v2298, %v2372
      %v2374 = vpop.f32.mrb[0].mxu0
      %2375 = vdwg.mxu0
      %v2376 = vsel %vm2299, %v2373, -inf
      %2377 = vmax.xlane.f32.xlu0 %v2376
      %v2378 = vpop.xlane.xlu0 %2377
      %v2379 = vsub.f32 %v2373, %v2378
      %v2380 = vmul.f32 %v2379, 1.442695
      %v2381 = vpow.pop %v2380
      %v2382 = vsel %vm2299, %v2381, 0.0
      %2383 = vadd.xlane.f32.xlu0 %v2382
      %v2384 = vpop.xlane.xlu0 %2383
      %v2385 = vrcp.pop %v2384
      %v2386 = vmul.f32 %v2381, %v2385
      %v2388 = vsel %vm2299, %v1205, 0
      %v2391 = vsel %vm2299, %v1206, 0
      %v2394 = vsel %vm2299, %v1207, 0
      %v2397 = vsel %vm2299, %v1208, 0
      %v2400 = vsel %vm2299, %v1209, 0
      %v2403 = vsel %vm2299, %v1210, 0
      %v2406 = vsel %vm2299, %v1211, 0
      %v2409 = vsel %vm2299, %v1212, 0
      %v2412 = vsel %vm2299, %v1213, 0
      %v2415 = vsel %vm2299, %v1214, 0
      %v2418 = vsel %vm2299, %v1215, 0
      %v2421 = vsel %vm2299, %v1216, 0
      %v2424 = vsel %vm2299, %v1217, 0
      %v2427 = vsel %vm2299, %v1218, 0
      %v2430 = vsel %vm2299, %v1219, 0
      %v2433 = vsel %vm2299, %v2386, 0
      %2435 = vmatprep.subr.mxu0 0.0
      %2436 = vmatpush1.xpose.msra.mxu0 %v2433
      %2437 = vmatprep.subr.mxu0 0.0
      %2438 = vmatpush1.xpose.msra.mxu0 0.0
      %2439 = vmatprep.subr.mxu0 0.0
      %2440 = vmatpush1.xpose.msra.mxu0 0.0
      %2441 = vmatprep.subr.mxu0 0.0
      %2442 = vmatpush1.xpose.msra.mxu0 0.0
      %2443 = vmatprep.subr.mxu0 0.0
      %2444 = vmatpush1.xpose.msra.mxu0 0.0
      %2445 = vmatprep.subr.mxu0 0.0
      %2446 = vmatpush1.xpose.msra.mxu0 0.0
      %2447 = vmatprep.subr.mxu0 0.0
      %2448 = vmatpush1.xpose.msra.mxu0 0.0
      %2449 = vmatprep.subr.mxu0 0.0
      %2450 = vmatpush1.xpose.msra.mxu0 0.0
      %2451 = vmatprep.subr.mxu0 0.0
      %2452 = vmatpush1.xpose.msra.mxu0 0.0
      %2453 = vmatprep.subr.mxu0 0.0
      %2454 = vmatpush1.xpose.msra.mxu0 0.0
      %2455 = vmatprep.subr.mxu0 0.0
      %2456 = vmatpush1.xpose.msra.mxu0 0.0
      %2457 = vmatprep.subr.mxu0 0.0
      %2458 = vmatpush1.xpose.msra.mxu0 0.0
      %2459 = vmatprep.subr.mxu0 0.0
      %2460 = vmatpush1.xpose.msra.mxu0 0.0
      %2461 = vmatprep.subr.mxu0 0.0
      %2462 = vmatpush1.xpose.msra.mxu0 0.0
      %2463 = vmatprep.subr.mxu0 0.0
      %2464 = vmatpush1.xpose.msra.mxu0 0.0
      %2465 = vmatprep.subr.mxu0 0.0
      %2466 = vmatpush1.xpose.msra.mxu0 0.0
      %2467 = vmatprep.subr.mxu0 0.0
      %2468 = vmatpush1.xpose.msra.mxu0 0.0
      %2469 = vmatprep.subr.mxu0 0.0
      %2470 = vmatpush1.xpose.msra.mxu0 0.0
      %2471 = vmatprep.subr.mxu0 0.0
      %2472 = vmatpush1.xpose.msra.mxu0 0.0
      %2473 = vmatprep.subr.mxu0 0.0
      %2474 = vmatpush1.xpose.msra.mxu0 0.0
      %2475 = vmatprep.subr.mxu0 0.0
      %2476 = vmatpush1.xpose.msra.mxu0 0.0
      %2477 = vmatprep.subr.mxu0 0.0
      %2478 = vmatpush1.xpose.msra.mxu0 0.0
      %2479 = vmatprep.subr.mxu0 0.0
      %2480 = vmatpush1.xpose.msra.mxu0 0.0
      %2481 = vmatprep.subr.mxu0 0.0
      %2482 = vmatpush1.xpose.msra.mxu0 0.0
      %2483 = vmatprep.subr.mxu0 0.0
      %2484 = vmatpush1.xpose.msra.mxu0 0.0
      %2485 = vmatprep.subr.mxu0 0.0
      %2486 = vmatpush1.xpose.msra.mxu0 0.0
      %2487 = vmatprep.subr.mxu0 0.0
      %2488 = vmatpush1.xpose.msra.mxu0 0.0
      %2489 = vmatprep.subr.mxu0 0.0
      %2490 = vmatpush1.xpose.msra.mxu0 0.0
      %2491 = vmatprep.subr.mxu0 0.0
      %2492 = vmatpush1.xpose.msra.mxu0 0.0
      %2493 = vmatprep.subr.mxu0 0.0
      %2494 = vmatpush1.xpose.msra.mxu0 0.0
      %2495 = vmatprep.subr.mxu0 0.0
      %2496 = vmatpush1.xpose.msra.mxu0 0.0
      %2497 = vmatprep.subr.mxu0 0.0
      %2498 = vmatpush1.xpose.msra.mxu0 0.0
      %2499 = vmatprep.mubr.f32.mxu0 0.0
      %2500 = vmatmul.mubr.f32.gmra.mrb[0].mxu0 %v2388
      %v2501 = vpop.f32.mrb[0].mxu0
      %v2502 = vadd.f32 0.0, %v2501
      %v2503 = vpop.f32.mrb[0].mxu0
      %2504 = vmatprep.mubr.f32.mxu0 0.0
      %2505 = vmatmul.mubr.f32.gmra.mrb[0].mxu0 %v2391
      %v2506 = vpop.f32.mrb[0].mxu0
      %v2507 = vadd.f32 0.0, %v2506
      %v2508 = vpop.f32.mrb[0].mxu0
      %2509 = vmatprep.mubr.f32.mxu0 0.0
      %2510 = vmatmul.mubr.f32.gmra.mrb[0].mxu0 %v2394
      %v2511 = vpop.f32.mrb[0].mxu0
      %v2512 = vadd.f32 0.0, %v2511
      %v2513 = vpop.f32.mrb[0].mxu0
      %2514 = vmatprep.mubr.f32.mxu0 0.0
      %2515 = vmatmul.mubr.f32.gmra.mrb[0].mxu0 %v2397
      %v2516 = vpop.f32.mrb[0].mxu0
      %v2517 = vadd.f32 0.0, %v2516
      %v2518 = vpop.f32.mrb[0].mxu0
      %2519 = vmatprep.mubr.f32.mxu0 0.0
      %2520 = vmatmul.mubr.f32.gmra.mrb[0].mxu0 %v2400
      %v2521 = vpop.f32.mrb[0].mxu0
      %v2522 = vadd.f32 0.0, %v2521
      %v2523 = vpop.f32.mrb[0].mxu0
      %2524 = vmatprep.mubr.f32.mxu0 0.0
      %2525 = vmatmul.mubr.f32.gmra.mrb[0].mxu0 %v2403
      %v2526 = vpop.f32.mrb[0].mxu0
      %v2527 = vadd.f32 0.0, %v2526
      %v2528 = vpop.f32.mrb[0].mxu0
      %2529 = vmatprep.mubr.f32.mxu0 0.0
      %2530 = vmatmul.mubr.f32.gmra.mrb[0].mxu0 %v2406
      %v2531 = vpop.f32.mrb[0].mxu0
      %v2532 = vadd.f32 0.0, %v2531
      %v2533 = vpop.f32.mrb[0].mxu0
      %2534 = vmatprep.mubr.f32.mxu0 0.0
      %2535 = vmatmul.mubr.f32.gmra.mrb[0].mxu0 %v2409
      %v2536 = vpop.f32.mrb[0].mxu0
      %v2537 = vadd.f32 0.0, %v2536
      %v2538 = vpop.f32.mrb[0].mxu0
      %2539 = vmatprep.mubr.f32.mxu0 0.0
      %2540 = vmatmul.mubr.f32.gmra.mrb[0].mxu0 %v2412
      %v2541 = vpop.f32.mrb[0].mxu0
      %v2542 = vadd.f32 0.0, %v2541
      %v2543 = vpop.f32.mrb[0].mxu0
      %2544 = vmatprep.mubr.f32.mxu0 0.0
      %2545 = vmatmul.mubr.f32.gmra.mrb[0].mxu0 %v2415
      %v2546 = vpop.f32.mrb[0].mxu0
      %v2547 = vadd.f32 0.0, %v2546
      %v2548 = vpop.f32.mrb[0].mxu0
      %2549 = vmatprep.mubr.f32.mxu0 0.0
      %2550 = vmatmul.mubr.f32.gmra.mrb[0].mxu0 %v2418
      %v2551 = vpop.f32.mrb[0].mxu0
      %v2552 = vadd.f32 0.0, %v2551
      %v2553 = vpop.f32.mrb[0].mxu0
      %2554 = vmatprep.mubr.f32.mxu0 0.0
      %2555 = vmatmul.mubr.f32.gmra.mrb[0].mxu0 %v2421
      %v2556 = vpop.f32.mrb[0].mxu0
      %v2557 = vadd.f32 0.0, %v2556
      %v2558 = vpop.f32.mrb[0].mxu0
      %2559 = vmatprep.mubr.f32.mxu0 0.0
      %2560 = vmatmul.mubr.f32.gmra.mrb[0].mxu0 %v2424
      %v2561 = vpop.f32.mrb[0].mxu0
      %v2562 = vadd.f32 0.0, %v2561
      %v2563 = vpop.f32.mrb[0].mxu0
      %2564 = vmatprep.mubr.f32.mxu0 0.0
      %2565 = vmatmul.mubr.f32.gmra.mrb[0].mxu0 %v2427
      %v2566 = vpop.f32.mrb[0].mxu0
      %v2567 = vadd.f32 0.0, %v2566
      %v2568 = vpop.f32.mrb[0].mxu0
      %2569 = vmatprep.mubr.f32.mxu0 0.0
      %2570 = vmatmul.mubr.f32.gmra.mrb[0].mxu0 %v2430
      %v2571 = vpop.f32.mrb[0].mxu0
      %v2572 = vadd.f32 0.0, %v2571
      %v2573 = vpop.f32.mrb[0].mxu0
      %2574 = vdwg.mxu0
      %v2576 = vsel %vm2299, %v2502, 0
      %v2579 = vsel %vm2299, %v2507, 0
      %v2582 = vsel %vm2299, %v2512, 0
      %v2585 = vsel %vm2299, %v2517, 0
      %v2588 = vsel %vm2299, %v2522, 0
      %v2591 = vsel %vm2299, %v2527, 0
      %v2594 = vsel %vm2299, %v2532, 0
      %v2597 = vsel %vm2299, %v2537, 0
      %v2600 = vsel %vm2299, %v2542, 0
      %v2603 = vsel %vm2299, %v2547, 0
      %v2606 = vsel %vm2299, %v2552, 0
      %v2609 = vsel %vm2299, %v2557, 0
      %v2612 = vsel %vm2299, %v2562, 0
      %v2615 = vsel %vm2299, %v2567, 0
      %v2618 = vsel %vm2299, %v2572, 0
      %2620 = vmatprep.subr.mxu0 0.0
      %2621 = vmatpush1.xpose.msra.mxu0 %v2388
      %2622 = vmatprep.subr.mxu0 0.0
      %2623 = vmatpush1.xpose.msra.mxu0 %v2391
      %2624 = vmatprep.subr.mxu0 0.0
      %2625 = vmatpush1.xpose.msra.mxu0 %v2394
      %2626 = vmatprep.subr.mxu0 0.0
      %2627 = vmatpush1.xpose.msra.mxu0 %v2397
      %2628 = vmatprep.subr.mxu0 0.0
      %2629 = vmatpush1.xpose.msra.mxu0 %v2400
      %2630 = vmatprep.subr.mxu0 0.0
      %2631 = vmatpush1.xpose.msra.mxu0 %v2403
      %2632 = vmatprep.subr.mxu0 0.0
      %2633 = vmatpush1.xpose.msra.mxu0 %v2406
      %2634 = vmatprep.subr.mxu0 0.0
      %2635 = vmatpush1.xpose.msra.mxu0 %v2409
      %2636 = vmatprep.subr.mxu0 0.0
      %2637 = vmatpush1.xpose.msra.mxu0 %v2412
      %2638 = vmatprep.subr.mxu0 0.0
      %2639 = vmatpush1.xpose.msra.mxu0 %v2415
      %2640 = vmatprep.subr.mxu0 0.0
      %2641 = vmatpush1.xpose.msra.mxu0 %v2418
      %2642 = vmatprep.subr.mxu0 0.0
      %2643 = vmatpush1.xpose.msra.mxu0 %v2421
      %2644 = vmatprep.subr.mxu0 0.0
      %2645 = vmatpush1.xpose.msra.mxu0 %v2424
      %2646 = vmatprep.subr.mxu0 0.0
      %2647 = vmatpush1.xpose.msra.mxu0 %v2427
      %2648 = vmatprep.subr.mxu0 0.0
      %2649 = vmatpush1.xpose.msra.mxu0 %v2430
      %2650 = vmatprep.subr.mxu0 0.0
      %2651 = vmatpush1.xpose.msra.mxu0 0.0
      %2652 = vmatprep.subr.mxu0 0.0
      %2653 = vmatpush1.xpose.msra.mxu0 0.0
      %2654 = vmatprep.subr.mxu0 0.0
      %2655 = vmatpush1.xpose.msra.mxu0 0.0
      %2656 = vmatprep.subr.mxu0 0.0
      %2657 = vmatpush1.xpose.msra.mxu0 0.0
      %2658 = vmatprep.subr.mxu0 0.0
      %2659 = vmatpush1.xpose.msra.mxu0 0.0
      %2660 = vmatprep.subr.mxu0 0.0
      %2661 = vmatpush1.xpose.msra.mxu0 0.0
      %2662 = vmatprep.subr.mxu0 0.0
      %2663 = vmatpush1.xpose.msra.mxu0 0.0
      %2664 = vmatprep.subr.mxu0 0.0
      %2665 = vmatpush1.xpose.msra.mxu0 0.0
      %2666 = vmatprep.subr.mxu0 0.0
      %2667 = vmatpush1.xpose.msra.mxu0 0.0
      %2668 = vmatprep.subr.mxu0 0.0
      %2669 = vmatpush1.xpose.msra.mxu0 0.0
      %2670 = vmatprep.subr.mxu0 0.0
      %2671 = vmatpush1.xpose.msra.mxu0 0.0
      %2672 = vmatprep.subr.mxu0 0.0
      %2673 = vmatpush1.xpose.msra.mxu0 0.0
      %2674 = vmatprep.subr.mxu0 0.0
      %2675 = vmatpush1.xpose.msra.mxu0 0.0
      %2676 = vmatprep.subr.mxu0 0.0
      %2677 = vmatpush1.xpose.msra.mxu0 0.0
      %2678 = vmatprep.subr.mxu0 0.0
      %2679 = vmatpush1.xpose.msra.mxu0 0.0
      %2680 = vmatprep.subr.mxu0 0.0
      %2681 = vmatpush1.xpose.msra.mxu0 0.0
      %2682 = vmatprep.subr.mxu0 0.0
      %2683 = vmatpush1.xpose.msra.mxu0 0.0
      %2684 = vmatprep.mubr.f32.mxu0 0.0
      %2685 = vmatmul.mubr.f32.gmra.mrb[0].mxu0 %v2576
      %v2686 = vpop.f32.mrb[0].mxu0
      %v2687 = vadd.f32 0.0, %v2686
      %v2688 = vpop.f32.mrb[0].mxu0
      %2689 = vmatprep.mubr.f32.mxu0 0.0
      %2690 = vmatmul.mubr.f32.gmra.mrb[0].mxu0 %v2579
      %v2691 = vpop.f32.mrb[0].mxu0
      %v2692 = vadd.f32 0.0, %v2691
      %v2693 = vpop.f32.mrb[0].mxu0
      %2694 = vmatprep.mubr.f32.mxu0 0.0
      %2695 = vmatmul.mubr.f32.gmra.mrb[0].mxu0 %v2582
      %v2696 = vpop.f32.mrb[0].mxu0
      %v2697 = vadd.f32 0.0, %v2696
      %v2698 = vpop.f32.mrb[0].mxu0
      %2699 = vmatprep.mubr.f32.mxu0 0.0
      %2700 = vmatmul.mubr.f32.gmra.mrb[0].mxu0 %v2585
      %v2701 = vpop.f32.mrb[0].mxu0
      %v2702 = vadd.f32 0.0, %v2701
      %v2703 = vpop.f32.mrb[0].mxu0
      %2704 = vmatprep.mubr.f32.mxu0 0.0
      %2705 = vmatmul.mubr.f32.gmra.mrb[0].mxu0 %v2588
      %v2706 = vpop.f32.mrb[0].mxu0
      %v2707 = vadd.f32 0.0, %v2706
      %v2708 = vpop.f32.mrb[0].mxu0
      %2709 = vmatprep.mubr.f32.mxu0 0.0
      %2710 = vmatmul.mubr.f32.gmra.mrb[0].mxu0 %v2591
      %v2711 = vpop.f32.mrb[0].mxu0
      %v2712 = vadd.f32 0.0, %v2711
      %v2713 = vpop.f32.mrb[0].mxu0
      %2714 = vmatprep.mubr.f32.mxu0 0.0
      %2715 = vmatmul.mubr.f32.gmra.mrb[0].mxu0 %v2594
      %v2716 = vpop.f32.mrb[0].mxu0
      %v2717 = vadd.f32 0.0, %v2716
      %v2718 = vpop.f32.mrb[0].mxu0
      %2719 = vmatprep.mubr.f32.mxu0 0.0
      %2720 = vmatmul.mubr.f32.gmra.mrb[0].mxu0 %v2597
      %v2721 = vpop.f32.mrb[0].mxu0
      %v2722 = vadd.f32 0.0, %v2721
      %v2723 = vpop.f32.mrb[0].mxu0
      %2724 = vmatprep.mubr.f32.mxu0 0.0
      %2725 = vmatmul.mubr.f32.gmra.mrb[0].mxu0 %v2600
      %v2726 = vpop.f32.mrb[0].mxu0
      %v2727 = vadd.f32 0.0, %v2726
      %v2728 = vpop.f32.mrb[0].mxu0
      %2729 = vmatprep.mubr.f32.mxu0 0.0
      %2730 = vmatmul.mubr.f32.gmra.mrb[0].mxu0 %v2603
      %v2731 = vpop.f32.mrb[0].mxu0
      %v2732 = vadd.f32 0.0, %v2731
      %v2733 = vpop.f32.mrb[0].mxu0
      %2734 = vmatprep.mubr.f32.mxu0 0.0
      %2735 = vmatmul.mubr.f32.gmra.mrb[0].mxu0 %v2606
      %v2736 = vpop.f32.mrb[0].mxu0
      %v2737 = vadd.f32 0.0, %v2736
      %v2738 = vpop.f32.mrb[0].mxu0
      %2739 = vmatprep.mubr.f32.mxu0 0.0
      %2740 = vmatmul.mubr.f32.gmra.mrb[0].mxu0 %v2609
      %v2741 = vpop.f32.mrb[0].mxu0
      %v2742 = vadd.f32 0.0, %v2741
      %v2743 = vpop.f32.mrb[0].mxu0
      %2744 = vmatprep.mubr.f32.mxu0 0.0
      %2745 = vmatmul.mubr.f32.gmra.mrb[0].mxu0 %v2612
      %v2746 = vpop.f32.mrb[0].mxu0
      %v2747 = vadd.f32 0.0, %v2746
      %v2748 = vpop.f32.mrb[0].mxu0
      %2749 = vmatprep.mubr.f32.mxu0 0.0
      %2750 = vmatmul.mubr.f32.gmra.mrb[0].mxu0 %v2615
      %v2751 = vpop.f32.mrb[0].mxu0
      %v2752 = vadd.f32 0.0, %v2751
      %v2753 = vpop.f32.mrb[0].mxu0
      %2754 = vmatprep.mubr.f32.mxu0 0.0
      %2755 = vmatmul.mubr.f32.gmra.mrb[0].mxu0 %v2618
      %v2756 = vpop.f32.mrb[0].mxu0
      %v2757 = vadd.f32 0.0, %v2756
      %v2758 = vpop.f32.mrb[0].mxu0
      %2759 = vdwg.mxu0
      %v2760 = vmul.f32 %v1220, %v2687
      %v2761 = vmul.f32 %v1221, %v2692
      %v2762 = vmul.f32 %v1222, %v2697
      %v2763 = vmul.f32 %v1223, %v2702
      %v2764 = vmul.f32 %v1224, %v2707
      %v2765 = vmul.f32 %v1225, %v2712
      %v2766 = vmul.f32 %v1226, %v2717
      %v2767 = vmul.f32 %v1227, %v2722
      %v2768 = vmul.f32 %v1228, %v2727
      %v2769 = vmul.f32 %v1229, %v2732
      %v2770 = vmul.f32 %v1230, %v2737
      %v2771 = vmul.f32 %v1231, %v2742
      %v2772 = vmul.f32 %v1232, %v2747
      %v2773 = vmul.f32 %v1233, %v2752
      %v2774 = vmul.f32 %v1234, %v2757
      %2775 = vmatprep.subr.mxu0 0.0
      %2776 = vmatpush1.msra.mxu0 %v2760
      %2777 = vmatprep.subr.mxu0 0.0
      %2778 = vmatpush1.msra.mxu0 %v2761
      %2779 = vmatprep.subr.mxu0 0.0
      %2780 = vmatpush1.msra.mxu0 %v2762
      %2781 = vmatprep.subr.mxu0 0.0
      %2782 = vmatpush1.msra.mxu0 %v2763
      %2783 = vmatprep.subr.mxu0 0.0
      %2784 = vmatpush1.msra.mxu0 %v2764
      %2785 = vmatprep.subr.mxu0 0.0
      %2786 = vmatpush1.msra.mxu0 %v2765
      %2787 = vmatprep.subr.mxu0 0.0
      %2788 = vmatpush1.msra.mxu0 %v2766
      %2789 = vmatprep.subr.mxu0 0.0
      %2790 = vmatpush1.msra.mxu0 %v2767
      %2791 = vmatprep.subr.mxu0 0.0
      %2792 = vmatpush1.msra.mxu0 %v2768
      %2793 = vmatprep.subr.mxu0 0.0
      %2794 = vmatpush1.msra.mxu0 %v2769
      %2795 = vmatprep.subr.mxu0 0.0
      %2796 = vmatpush1.msra.mxu0 %v2770
      %2797 = vmatprep.subr.mxu0 0.0
      %2798 = vmatpush1.msra.mxu0 %v2771
      %2799 = vmatprep.subr.mxu0 0.0
      %2800 = vmatpush1.msra.mxu0 %v2772
      %2801 = vmatprep.subr.mxu0 0.0
      %2802 = vmatpush1.msra.mxu0 %v2773
      %2803 = vmatprep.subr.mxu0 0.0
      %2804 = vmatpush1.msra.mxu0 %v2774
      %2805 = vmatprep.subr.mxu0 0.0
      %2806 = vmatpush1.msra.mxu0 0.0
      %2807 = vmatprep.subr.mxu0 0.0
      %2808 = vmatpush1.msra.mxu0 0.0
      %2809 = vmatprep.subr.mxu0 0.0
      %2810 = vmatpush1.msra.mxu0 0.0
      %2811 = vmatprep.subr.mxu0 0.0
      %2812 = vmatpush1.msra.mxu0 0.0
      %2813 = vmatprep.subr.mxu0 0.0
      %2814 = vmatpush1.msra.mxu0 0.0
      %2815 = vmatprep.subr.mxu0 0.0
      %2816 = vmatpush1.msra.mxu0 0.0
      %2817 = vmatprep.subr.mxu0 0.0
      %2818 = vmatpush1.msra.mxu0 0.0
      %2819 = vmatprep.subr.mxu0 0.0
      %2820 = vmatpush1.msra.mxu0 0.0
      %2821 = vmatprep.subr.mxu0 0.0
      %2822 = vmatpush1.msra.mxu0 0.0
      %2823 = vmatprep.subr.mxu0 0.0
      %2824 = vmatpush1.msra.mxu0 0.0
      %2825 = vmatprep.subr.mxu0 0.0
      %2826 = vmatpush1.msra.mxu0 0.0
      %2827 = vmatprep.subr.mxu0 0.0
      %2828 = vmatpush1.msra.mxu0 0.0
      %2829 = vmatprep.subr.mxu0 0.0
      %2830 = vmatpush1.msra.mxu0 0.0
      %2831 = vmatprep.subr.mxu0 0.0
      %2832 = vmatpush1.msra.mxu0 0.0
      %2833 = vmatprep.subr.mxu0 0.0
      %2834 = vmatpush1.msra.mxu0 0.0
      %2835 = vmatprep.subr.mxu0 0.0
      %2836 = vmatpush1.msra.mxu0 0.0
      %2837 = vmatprep.subr.mxu0 0.0
      %2838 = vmatpush1.msra.mxu0 0.0
      %2839 = vmatprep.mubr.f32.mxu0 0.0
      %2840 = vmatmul.mubr.f32.gmra.mrb[0].mxu0 %v1806
      %v2841 = vpop.f32.mrb[0].mxu0
      %v2842 = vadd.f32 0.0, %v2841
      %v2843 = vpop.f32.mrb[0].mxu0
      %2844 = vmatprep.mubr.f32.mxu0 0.0
      %2845 = vmatmul.mubr.f32.gmra.mrb[0].mxu0 %v1809
      %v2846 = vpop.f32.mrb[0].mxu0
      %v2847 = vadd.f32 0.0, %v2846
      %v2848 = vpop.f32.mrb[0].mxu0
      %2849 = vmatprep.mubr.f32.mxu0 0.0
      %2850 = vmatmul.mubr.f32.gmra.mrb[0].mxu0 %v1812
      %v2851 = vpop.f32.mrb[0].mxu0
      %v2852 = vadd.f32 0.0, %v2851
      %v2853 = vpop.f32.mrb[0].mxu0
      %2854 = vmatprep.mubr.f32.mxu0 0.0
      %2855 = vmatmul.mubr.f32.gmra.mrb[0].mxu0 %v1815
      %v2856 = vpop.f32.mrb[0].mxu0
      %v2857 = vadd.f32 0.0, %v2856
      %v2858 = vpop.f32.mrb[0].mxu0
      %2859 = vdwg.mxu0
      %2860 = vset.pattern.permute.xlu0 3
      %2861 = vperm.xlu0 %2860, %v1255
      %v2862 = vpop.permute.xlu0 %2861
      %2864 = vset.pattern.permute.xlu0 3
      %2865 = vperm.xlu0 %2864, %v1256
      %v2866 = vpop.permute.xlu0 %2865
      %2868 = vset.pattern.permute.xlu0 3
      %2869 = vperm.xlu0 %2868, %v1257
      %v2870 = vpop.permute.xlu0 %2869
      %2872 = vset.pattern.permute.xlu0 3
      %2873 = vperm.xlu0 %2872, %v1258
      %v2874 = vpop.permute.xlu0 %2873
      %v2876 = vmul.f32 %v2842, %v2862
      %v2877 = vmul.f32 %v2847, %v2866
      %v2878 = vmul.f32 %v2852, %v2870
      %v2879 = vmul.f32 %v2857, %v2874
      %v2880 = vadd.f32 %v2876, %v1430
      %v2881 = vadd.f32 %v2877, %v1435
      %v2882 = vadd.f32 %v2878, %v1440
      %v2883 = vadd.f32 %v2879, %v1445
      %v2884 = vld [vmem:[%s33] sm:$0xff]
      %v2885 = vld [vmem:[%s33 + $0x8] sm:$0x1f]
      %v2886 = vld [vmem:[%s35] sm:$0xff]
      %v2887 = vld [vmem:[%s35 + $0x8] sm:$0xff]
      %v2888 = vld [vmem:[%s35 + $0x10] sm:$0xff]
      %v2889 = vld [vmem:[%s35 + $0x18] sm:$0xff]
      %v2890 = vld [vmem:[%s35 + $0x20] sm:$0xff]
      %v2891 = vld [vmem:[%s35 + $0x28] sm:$0xff]
      %v2892 = vld [vmem:[%s35 + $0x30] sm:$0xff]
      %v2893 = vld [vmem:[%s35 + $0x38] sm:$0xff]
      %v2894 = vld [vmem:[%s35 + $0x40] sm:$0xff]
      %v2895 = vld [vmem:[%s35 + $0x48] sm:$0xff]
      %v2896 = vld [vmem:[%s35 + $0x50] sm:$0xff]
      %v2897 = vld [vmem:[%s35 + $0x58] sm:$0xff]
      %v2898 = vld [vmem:[%s35 + $0x60] sm:$0xff]
      %v2899 = vld [vmem:[%s37] sm:$0xff]
      %v2900 = vld [vmem:[%s37 + $0x8] sm:$0xff]
      %v2901 = vld [vmem:[%s37 + $0x10] sm:$0xff]
      %v2902 = vld [vmem:[%s37 + $0x18] sm:$0xff]
      %v2903 = vld [vmem:[%s37 + $0x20] sm:$0xff]
      %v2904 = vld [vmem:[%s37 + $0x28] sm:$0xff]
      %v2905 = vld [vmem:[%s37 + $0x30] sm:$0xff]
      %v2906 = vld [vmem:[%s37 + $0x38] sm:$0xff]
      %v2907 = vld [vmem:[%s37 + $0x40] sm:$0xff]
      %v2908 = vld [vmem:[%s37 + $0x48] sm:$0xff]
      %v2909 = vld [vmem:[%s37 + $0x50] sm:$0xff]
      %v2910 = vld [vmem:[%s37 + $0x58] sm:$0xff]
      %v2911 = vld [vmem:[%s37 + $0x60] sm:$0xff]
      %v2912 = vld [vmem:[%s39] sm:$0xff]
      %v2913 = vld [vmem:[%s39 + $0x8] sm:$0x1f]
      %v2914 = vld [vmem:[%s41] sm:$0xff]
      %v2915 = vld [vmem:[%s41 + $0x8] sm:$0xff]
      %v2916 = vld [vmem:[%s41 + $0x10] sm:$0xff]
      %v2917 = vld [vmem:[%s41 + $0x18] sm:$0xff]
      %v2918 = vld [vmem:[%s41 + $0x20] sm:$0xff]
      %v2919 = vld [vmem:[%s41 + $0x28] sm:$0xff]
      %v2920 = vld [vmem:[%s41 + $0x30] sm:$0xff]
      %v2921 = vld [vmem:[%s41 + $0x38] sm:$0xff]
      %v2922 = vld [vmem:[%s41 + $0x40] sm:$0xff]
      %v2923 = vld [vmem:[%s41 + $0x48] sm:$0xff]
      %v2924 = vld [vmem:[%s41 + $0x50] sm:$0xff]
      %v2925 = vld [vmem:[%s41 + $0x58] sm:$0xff]
      %v2926 = vld [vmem:[%s41 + $0x60] sm:$0xff]
      %v2927 = vld [vmem:[%s43] sm:$0xff]
      %v2928 = vld [vmem:[%s43 + $0x8] sm:$0xff]
      %v2929 = vld [vmem:[%s43 + $0x10] sm:$0xff]
      %v2930 = vld [vmem:[%s43 + $0x18] sm:$0xff]
      %v2931 = vld [vmem:[%s43 + $0x20] sm:$0xff]
      %v2932 = vld [vmem:[%s43 + $0x28] sm:$0xff]
      %v2933 = vld [vmem:[%s43 + $0x30] sm:$0xff]
      %v2934 = vld [vmem:[%s43 + $0x38] sm:$0xff]
      %v2935 = vld [vmem:[%s43 + $0x40] sm:$0xff]
      %v2936 = vld [vmem:[%s43 + $0x48] sm:$0xff]
      %v2937 = vld [vmem:[%s43 + $0x50] sm:$0xff]
      %v2938 = vld [vmem:[%s43 + $0x58] sm:$0xff]
      %v2939 = vld [vmem:[%s43 + $0x60] sm:$0xff]
      %s2940 = scalar_lea.vmem %s7, 64
      %v2941 = vld [vmem:[%s2940] sm:$0xff]
      %v2942 = vld [vmem:[%s2940 + $0x8] sm:$0xff]
      %v2943 = vld [vmem:[%s2940 + $0x10] sm:$0xff]
      %v2944 = vld [vmem:[%s2940 + $0x18] sm:$0xff]
      %v2945 = vld [vmem:[%s2940 + $0x20] sm:$0xff]
      %v2946 = vld [vmem:[%s2940 + $0x28] sm:$0xff]
      %v2947 = vld [vmem:[%s2940 + $0x30] sm:$0xff]
      %v2948 = vld [vmem:[%s2940 + $0x38] sm:$0xff]
      %s2949 = scalar_lea.vmem %s9, 64
      %v2950 = vld [vmem:[%s2949] sm:$0xff]
      %v2951 = vld [vmem:[%s2949 + $0x8] sm:$0xff]
      %v2952 = vld [vmem:[%s2949 + $0x10] sm:$0xff]
      %v2953 = vld [vmem:[%s2949 + $0x18] sm:$0xff]
      %v2954 = vld [vmem:[%s2949 + $0x20] sm:$0xff]
      %v2955 = vld [vmem:[%s2949 + $0x28] sm:$0xff]
      %v2956 = vld [vmem:[%s2949 + $0x30] sm:$0xff]
      %v2957 = vld [vmem:[%s2949 + $0x38] sm:$0xff]
      %s2958 = scalar_lea.vmem %s11, 32
      %v2959 = vld [vmem:[%s2958] sm:$0xff]
      %v2960 = vld [vmem:[%s2958 + $0x8] sm:$0xff]
      %v2961 = vld [vmem:[%s2958 + $0x10] sm:$0xff]
      %v2962 = vld [vmem:[%s2958 + $0x18] sm:$0xff]
      %s2963 = scalar_lea.vmem %s13, 32
      %v2964 = vld [vmem:[%s2963] sm:$0xff]
      %v2965 = vld [vmem:[%s2963 + $0x8] sm:$0xff]
      %v2966 = vld [vmem:[%s2963 + $0x10] sm:$0xff]
      %v2967 = vld [vmem:[%s2963 + $0x18] sm:$0xff]
      %s2968 = scalar_lea.vmem %s15, 1
      %v2969 = vld [vmem:[%s2968] sm:$0x1]
      %s2970 = scalar_lea.vmem %s17, 8
      %v2971 = vld [vmem:[%s2970] sm:$0x7f]
      %s2972 = scalar_lea.vmem %s19, 8
      %v2973 = vld [vmem:[%s2972] sm:$0xff]
      %2978 = vrot.lane.b32.xlu0 %v2880, 112
      %v2979 = vpop.permute.xlu0 %2978
      %2980 = vrot.lane.b32.xlu0 %v2881, 112
      %v2981 = vpop.permute.xlu0 %2980
      %2982 = vrot.lane.b32.xlu0 %v2882, 112
      %v2983 = vpop.permute.xlu0 %2982
      %2984 = vrot.lane.b32.xlu0 %v2883, 112
      %v2985 = vpop.permute.xlu0 %2984
      %2991 = vset.pattern.permute.xlu0 0
      %2992 = vperm.xlu0 %2991, %v2950
      %v2993 = vpop.permute.xlu0 %2992
      %2996 = vset.pattern.permute.xlu0 0
      %2997 = vperm.xlu0 %2996, %v2951
      %v2998 = vpop.permute.xlu0 %2997
      %3001 = vset.pattern.permute.xlu0 0
      %3002 = vperm.xlu0 %3001, %v2952
      %v3003 = vpop.permute.xlu0 %3002
      %3006 = vset.pattern.permute.xlu0 0
      %3007 = vperm.xlu0 %3006, %v2953
      %v3008 = vpop.permute.xlu0 %3007
      %3011 = vset.pattern.permute.xlu0 0
      %3012 = vperm.xlu0 %3011, %v2954
      %v3013 = vpop.permute.xlu0 %3012
      %3016 = vset.pattern.permute.xlu0 0
      %3017 = vperm.xlu0 %3016, %v2955
      %v3018 = vpop.permute.xlu0 %3017
      %3021 = vset.pattern.permute.xlu0 0
      %3022 = vperm.xlu0 %3021, %v2956
      %v3023 = vpop.permute.xlu0 %3022
      %3026 = vset.pattern.permute.xlu0 0
      %3027 = vperm.xlu0 %3026, %v2957
      %v3028 = vpop.permute.xlu0 %3027
      %v3031 = vsel %vm1318, %v2941, 0
      %v3034 = vsel %vm1318, %v2942, 0
      %v3037 = vsel %vm1318, %v2943, 0
      %v3040 = vsel %vm1318, %v2944, 0
      %v3043 = vsel %vm1318, %v2945, 0
      %v3046 = vsel %vm1318, %v2946, 0
      %v3049 = vsel %vm1318, %v2947, 0
      %v3052 = vsel %vm1318, %v2948, 0
      %3054 = vmatprep.subr.mxu0 0.0
      %3055 = vmatpush1.msra.mxu0 %v2880
      %3056 = vmatprep.subr.mxu0 0.0
      %3057 = vmatpush1.msra.mxu0 %v2881
      %3058 = vmatprep.subr.mxu0 0.0
      %3059 = vmatpush1.msra.mxu0 %v2882
      %3060 = vmatprep.subr.mxu0 0.0
      %3061 = vmatpush1.msra.mxu0 %v2883
      %3062 = vmatprep.subr.mxu0 0.0
      %3063 = vmatpush1.msra.mxu0 %v2979
      %3064 = vmatprep.subr.mxu0 0.0
      %3065 = vmatpush1.msra.mxu0 %v2981
      %3066 = vmatprep.subr.mxu0 0.0
      %3067 = vmatpush1.msra.mxu0 %v2983
      %3068 = vmatprep.subr.mxu0 0.0
      %3069 = vmatpush1.msra.mxu0 %v2985
      %3070 = vmatprep.subr.mxu0 0.0
      %3071 = vmatpush1.msra.mxu0 0.0
      %3072 = vmatprep.subr.mxu0 0.0
      %3073 = vmatpush1.msra.mxu0 0.0
      %3074 = vmatprep.subr.mxu0 0.0
      %3075 = vmatpush1.msra.mxu0 0.0
      %3076 = vmatprep.subr.mxu0 0.0
      %3077 = vmatpush1.msra.mxu0 0.0
      %3078 = vmatprep.subr.mxu0 0.0
      %3079 = vmatpush1.msra.mxu0 0.0
      %3080 = vmatprep.subr.mxu0 0.0
      %3081 = vmatpush1.msra.mxu0 0.0
      %3082 = vmatprep.subr.mxu0 0.0
      %3083 = vmatpush1.msra.mxu0 0.0
      %3084 = vmatprep.subr.mxu0 0.0
      %3085 = vmatpush1.msra.mxu0 0.0
      %3086 = vmatprep.subr.mxu0 0.0
      %3087 = vmatpush1.msra.mxu0 0.0
      %3088 = vmatprep.subr.mxu0 0.0
      %3089 = vmatpush1.msra.mxu0 0.0
      %3090 = vmatprep.subr.mxu0 0.0
      %3091 = vmatpush1.msra.mxu0 0.0
      %3092 = vmatprep.subr.mxu0 0.0
      %3093 = vmatpush1.msra.mxu0 0.0
      %3094 = vmatprep.subr.mxu0 0.0
      %3095 = vmatpush1.msra.mxu0 0.0
      %3096 = vmatprep.subr.mxu0 0.0
      %3097 = vmatpush1.msra.mxu0 0.0
      %3098 = vmatprep.subr.mxu0 0.0
      %3099 = vmatpush1.msra.mxu0 0.0
      %3100 = vmatprep.subr.mxu0 0.0
      %3101 = vmatpush1.msra.mxu0 0.0
      %3102 = vmatprep.subr.mxu0 0.0
      %3103 = vmatpush1.msra.mxu0 0.0
      %3104 = vmatprep.subr.mxu0 0.0
      %3105 = vmatpush1.msra.mxu0 0.0
      %3106 = vmatprep.subr.mxu0 0.0
      %3107 = vmatpush1.msra.mxu0 0.0
      %3108 = vmatprep.subr.mxu0 0.0
      %3109 = vmatpush1.msra.mxu0 0.0
      %3110 = vmatprep.subr.mxu0 0.0
      %3111 = vmatpush1.msra.mxu0 0.0
      %3112 = vmatprep.subr.mxu0 0.0
      %3113 = vmatpush1.msra.mxu0 0.0
      %3114 = vmatprep.subr.mxu0 0.0
      %3115 = vmatpush1.msra.mxu0 0.0
      %3116 = vmatprep.subr.mxu0 0.0
      %3117 = vmatpush1.msra.mxu0 0.0
      %3118 = vmatprep.mubr.f32.mxu0 0.0
      %3119 = vmatmul.mubr.f32.gmra.mrb[0].mxu0 %v3031
      %v3120 = vpop.f32.mrb[0].mxu0
      %v3121 = vadd.f32 %v2993, %v3120
      %v3122 = vpop.f32.mrb[0].mxu0
      %3123 = vmatprep.mubr.f32.mxu0 0.0
      %3124 = vmatmul.mubr.f32.gmra.mrb[0].mxu0 %v3034
      %v3125 = vpop.f32.mrb[0].mxu0
      %v3126 = vadd.f32 %v2998, %v3125
      %v3127 = vpop.f32.mrb[0].mxu0
      %3128 = vmatprep.mubr.f32.mxu0 0.0
      %3129 = vmatmul.mubr.f32.gmra.mrb[0].mxu0 %v3037
      %v3130 = vpop.f32.mrb[0].mxu0
      %v3131 = vadd.f32 %v3003, %v3130
      %v3132 = vpop.f32.mrb[0].mxu0
      %3133 = vmatprep.mubr.f32.mxu0 0.0
      %3134 = vmatmul.mubr.f32.gmra.mrb[0].mxu0 %v3040
      %v3135 = vpop.f32.mrb[0].mxu0
      %v3136 = vadd.f32 %v3008, %v3135
      %v3137 = vpop.f32.mrb[0].mxu0
      %3138 = vmatprep.mubr.f32.mxu0 0.0
      %3139 = vmatmul.mubr.f32.gmra.mrb[0].mxu0 %v3043
      %v3140 = vpop.f32.mrb[0].mxu0
      %v3141 = vadd.f32 %v3013, %v3140
      %v3142 = vpop.f32.mrb[0].mxu0
      %3143 = vmatprep.mubr.f32.mxu0 0.0
      %3144 = vmatmul.mubr.f32.gmra.mrb[0].mxu0 %v3046
      %v3145 = vpop.f32.mrb[0].mxu0
      %v3146 = vadd.f32 %v3018, %v3145
      %v3147 = vpop.f32.mrb[0].mxu0
      %3148 = vmatprep.mubr.f32.mxu0 0.0
      %3149 = vmatmul.mubr.f32.gmra.mrb[0].mxu0 %v3049
      %v3150 = vpop.f32.mrb[0].mxu0
      %v3151 = vadd.f32 %v3023, %v3150
      %v3152 = vpop.f32.mrb[0].mxu0
      %3153 = vmatprep.mubr.f32.mxu0 0.0
      %3154 = vmatmul.mubr.f32.gmra.mrb[0].mxu0 %v3052
      %v3155 = vpop.f32.mrb[0].mxu0
      %v3156 = vadd.f32 %v3028, %v3155
      %v3157 = vpop.f32.mrb[0].mxu0
      %3158 = vdwg.mxu0
      %v3159 = vmax.f32 %v3121, 0.0
      %v3160 = vmax.f32 %v3126, 0.0
      %v3161 = vmax.f32 %v3131, 0.0
      %v3162 = vmax.f32 %v3136, 0.0
      %3164 = vset.pattern.permute.xlu0 0
      %3165 = vperm.xlu0 %3164, %v2964
      %v3166 = vpop.permute.xlu0 %3165
      %3169 = vset.pattern.permute.xlu0 0
      %3170 = vperm.xlu0 %3169, %v2965
      %v3171 = vpop.permute.xlu0 %3170
      %3174 = vset.pattern.permute.xlu0 0
      %3175 = vperm.xlu0 %3174, %v2966
      %v3176 = vpop.permute.xlu0 %3175
      %3179 = vset.pattern.permute.xlu0 0
      %3180 = vperm.xlu0 %3179, %v2967
      %v3181 = vpop.permute.xlu0 %3180
      %v3183 = vmul.f32 %v3159, %v3166
      %v3184 = vmul.f32 %v3160, %v3171
      %v3185 = vmul.f32 %v3161, %v3176
      %v3186 = vmul.f32 %v3162, %v3181
      %3187 = vset.pattern.permute.xlu0 1
      %3188 = vperm.xlu0 %3187, %v2964
      %v3189 = vpop.permute.xlu0 %3188
      %3191 = vset.pattern.permute.xlu0 1
      %3192 = vperm.xlu0 %3191, %v2965
      %v3193 = vpop.permute.xlu0 %3192
      %3195 = vset.pattern.permute.xlu0 1
      %3196 = vperm.xlu0 %3195, %v2966
      %v3197 = vpop.permute.xlu0 %3196
      %3199 = vset.pattern.permute.xlu0 1
      %3200 = vperm.xlu0 %3199, %v2967
      %v3201 = vpop.permute.xlu0 %3200
      %v3203 = vadd.f32 %v3183, %v3189
      %v3204 = vadd.f32 %v3184, %v3193
      %v3205 = vadd.f32 %v3185, %v3197
      %v3206 = vadd.f32 %v3186, %v3201
      %vm3207 = vcmask 850944
      %v3209 = vsel %vm3207, %v3203, 0
      %v3212 = vsel %vm3207, %v3204, 0
      %v3215 = vsel %vm3207, %v3205, 0
      %v3218 = vsel %vm3207, %v3206, 0
      %3220 = vmatprep.subr.mxu0 0.0
      %3221 = vmatpush1.msra.mxu0 %v2899
      %3222 = vmatprep.subr.mxu0 0.0
      %3223 = vmatpush1.msra.mxu0 %v2900
      %3224 = vmatprep.subr.mxu0 0.0
      %3225 = vmatpush1.msra.mxu0 %v2901
      %3226 = vmatprep.subr.mxu0 0.0
      %3227 = vmatpush1.msra.mxu0 %v2902
      %3228 = vmatprep.subr.mxu0 0.0
      %3229 = vmatpush1.msra.mxu0 %v2903
      %3230 = vmatprep.subr.mxu0 0.0
      %3231 = vmatpush1.msra.mxu0 %v2904
      %3232 = vmatprep.subr.mxu0 0.0
      %3233 = vmatpush1.msra.mxu0 %v2905
      %3234 = vmatprep.subr.mxu0 0.0
      %3235 = vmatpush1.msra.mxu0 %v2906
      %3236 = vmatprep.subr.mxu0 0.0
      %3237 = vmatpush1.msra.mxu0 %v2907
      %3238 = vmatprep.subr.mxu0 0.0
      %3239 = vmatpush1.msra.mxu0 %v2908
      %3240 = vmatprep.subr.mxu0 0.0
      %3241 = vmatpush1.msra.mxu0 %v2909
      %3242 = vmatprep.subr.mxu0 0.0
      %3243 = vmatpush1.msra.mxu0 %v2910
      %3244 = vmatprep.subr.mxu0 0.0
      %3245 = vmatpush1.msra.mxu0 %v2911
      %3246 = vmatprep.subr.mxu0 0.0
      %3247 = vmatpush1.msra.mxu0 0.0
      %3248 = vmatprep.subr.mxu0 0.0
      %3249 = vmatpush1.msra.mxu0 0.0
      %3250 = vmatprep.subr.mxu0 0.0
      %3251 = vmatpush1.msra.mxu0 0.0
      %3252 = vmatprep.subr.mxu0 0.0
      %3253 = vmatpush1.msra.mxu0 0.0
      %3254 = vmatprep.subr.mxu0 0.0
      %3255 = vmatpush1.msra.mxu0 0.0
      %3256 = vmatprep.subr.mxu0 0.0
      %3257 = vmatpush1.msra.mxu0 0.0
      %3258 = vmatprep.subr.mxu0 0.0
      %3259 = vmatpush1.msra.mxu0 0.0
      %3260 = vmatprep.subr.mxu0 0.0
      %3261 = vmatpush1.msra.mxu0 0.0
      %3262 = vmatprep.subr.mxu0 0.0
      %3263 = vmatpush1.msra.mxu0 0.0
      %3264 = vmatprep.subr.mxu0 0.0
      %3265 = vmatpush1.msra.mxu0 0.0
      %3266 = vmatprep.subr.mxu0 0.0
      %3267 = vmatpush1.msra.mxu0 0.0
      %3268 = vmatprep.subr.mxu0 0.0
      %3269 = vmatpush1.msra.mxu0 0.0
      %3270 = vmatprep.subr.mxu0 0.0
      %3271 = vmatpush1.msra.mxu0 0.0
      %3272 = vmatprep.subr.mxu0 0.0
      %3273 = vmatpush1.msra.mxu0 0.0
      %3274 = vmatprep.subr.mxu0 0.0
      %3275 = vmatpush1.msra.mxu0 0.0
      %3276 = vmatprep.subr.mxu0 0.0
      %3277 = vmatpush1.msra.mxu0 0.0
      %3278 = vmatprep.subr.mxu0 0.0
      %3279 = vmatpush1.msra.mxu0 0.0
      %3280 = vmatprep.subr.mxu0 0.0
      %3281 = vmatpush1.msra.mxu0 0.0
      %3282 = vmatprep.subr.mxu0 0.0
      %3283 = vmatpush1.msra.mxu0 0.0
      %3284 = vmatprep.mubr.f32.mxu0 0.0
      %3285 = vmatmul.mubr.f32.gmra.mrb[0].mxu0 %v3209
      %v3286 = vpop.f32.mrb[0].mxu0
      %v3287 = vadd.f32 0.0, %v3286
      %v3288 = vpop.f32.mrb[0].mxu0
      %3289 = vmatprep.mubr.f32.mxu0 0.0
      %3290 = vmatmul.mubr.f32.gmra.mrb[0].mxu0 %v3212
      %v3291 = vpop.f32.mrb[0].mxu0
      %v3292 = vadd.f32 0.0, %v3291
      %v3293 = vpop.f32.mrb[0].mxu0
      %3294 = vmatprep.mubr.f32.mxu0 0.0
      %3295 = vmatmul.mubr.f32.gmra.mrb[0].mxu0 %v3215
      %v3296 = vpop.f32.mrb[0].mxu0
      %v3297 = vadd.f32 0.0, %v3296
      %v3298 = vpop.f32.mrb[0].mxu0
      %3299 = vmatprep.mubr.f32.mxu0 0.0
      %3300 = vmatmul.mubr.f32.gmra.mrb[0].mxu0 %v3218
      %v3301 = vpop.f32.mrb[0].mxu0
      %v3302 = vadd.f32 0.0, %v3301
      %v3303 = vpop.f32.mrb[0].mxu0
      %3304 = vdwg.mxu0
      %v3306 = vsel %vm3207, %v3287, 0
      %v3309 = vsel %vm3207, %v3292, 0
      %v3312 = vsel %vm3207, %v3297, 0
      %v3315 = vsel %vm3207, %v3302, 0
      %3317 = vmatprep.subr.mxu0 0.0
      %3318 = vmatpush1.msra.mxu0 %v2899
      %3319 = vmatprep.subr.mxu0 0.0
      %3320 = vmatpush1.msra.mxu0 %v2900
      %3321 = vmatprep.subr.mxu0 0.0
      %3322 = vmatpush1.msra.mxu0 %v2901
      %3323 = vmatprep.subr.mxu0 0.0
      %3324 = vmatpush1.msra.mxu0 %v2902
      %3325 = vmatprep.subr.mxu0 0.0
      %3326 = vmatpush1.msra.mxu0 %v2903
      %3327 = vmatprep.subr.mxu0 0.0
      %3328 = vmatpush1.msra.mxu0 %v2904
      %3329 = vmatprep.subr.mxu0 0.0
      %3330 = vmatpush1.msra.mxu0 %v2905
      %3331 = vmatprep.subr.mxu0 0.0
      %3332 = vmatpush1.msra.mxu0 %v2906
      %3333 = vmatprep.subr.mxu0 0.0
      %3334 = vmatpush1.msra.mxu0 %v2907
      %3335 = vmatprep.subr.mxu0 0.0
      %3336 = vmatpush1.msra.mxu0 %v2908
      %3337 = vmatprep.subr.mxu0 0.0
      %3338 = vmatpush1.msra.mxu0 %v2909
      %3339 = vmatprep.subr.mxu0 0.0
      %3340 = vmatpush1.msra.mxu0 %v2910
      %3341 = vmatprep.subr.mxu0 0.0
      %3342 = vmatpush1.msra.mxu0 %v2911
      %3343 = vmatprep.subr.mxu0 0.0
      %3344 = vmatpush1.msra.mxu0 0.0
      %3345 = vmatprep.subr.mxu0 0.0
      %3346 = vmatpush1.msra.mxu0 0.0
      %3347 = vmatprep.subr.mxu0 0.0
      %3348 = vmatpush1.msra.mxu0 0.0
      %3349 = vmatprep.subr.mxu0 0.0
      %3350 = vmatpush1.msra.mxu0 0.0
      %3351 = vmatprep.subr.mxu0 0.0
      %3352 = vmatpush1.msra.mxu0 0.0
      %3353 = vmatprep.subr.mxu0 0.0
      %3354 = vmatpush1.msra.mxu0 0.0
      %3355 = vmatprep.subr.mxu0 0.0
      %3356 = vmatpush1.msra.mxu0 0.0
      %3357 = vmatprep.subr.mxu0 0.0
      %3358 = vmatpush1.msra.mxu0 0.0
      %3359 = vmatprep.subr.mxu0 0.0
      %3360 = vmatpush1.msra.mxu0 0.0
      %3361 = vmatprep.subr.mxu0 0.0
      %3362 = vmatpush1.msra.mxu0 0.0
      %3363 = vmatprep.subr.mxu0 0.0
      %3364 = vmatpush1.msra.mxu0 0.0
      %3365 = vmatprep.subr.mxu0 0.0
      %3366 = vmatpush1.msra.mxu0 0.0
      %3367 = vmatprep.subr.mxu0 0.0
      %3368 = vmatpush1.msra.mxu0 0.0
      %3369 = vmatprep.subr.mxu0 0.0
      %3370 = vmatpush1.msra.mxu0 0.0
      %3371 = vmatprep.subr.mxu0 0.0
      %3372 = vmatpush1.msra.mxu0 0.0
      %3373 = vmatprep.subr.mxu0 0.0
      %3374 = vmatpush1.msra.mxu0 0.0
      %3375 = vmatprep.subr.mxu0 0.0
      %3376 = vmatpush1.msra.mxu0 0.0
      %3377 = vmatprep.subr.mxu0 0.0
      %3378 = vmatpush1.msra.mxu0 0.0
      %3379 = vmatprep.subr.mxu0 0.0
      %3380 = vmatpush1.msra.mxu0 0.0
      %3381 = vmatprep.mubr.f32.mxu0 0.0
      %3382 = vmatmul.mubr.f32.gmra.mrb[0].mxu0 %v3306
      %v3383 = vpop.f32.mrb[0].mxu0
      %v3384 = vadd.f32 0.0, %v3383
      %v3385 = vpop.f32.mrb[0].mxu0
      %3386 = vmatprep.mubr.f32.mxu0 0.0
      %3387 = vmatmul.mubr.f32.gmra.mrb[0].mxu0 %v3309
      %v3388 = vpop.f32.mrb[0].mxu0
      %v3389 = vadd.f32 0.0, %v3388
      %v3390 = vpop.f32.mrb[0].mxu0
      %3391 = vmatprep.mubr.f32.mxu0 0.0
      %3392 = vmatmul.mubr.f32.gmra.mrb[0].mxu0 %v3312
      %v3393 = vpop.f32.mrb[0].mxu0
      %v3394 = vadd.f32 0.0, %v3393
      %v3395 = vpop.f32.mrb[0].mxu0
      %3396 = vmatprep.mubr.f32.mxu0 0.0
      %3397 = vmatmul.mubr.f32.gmra.mrb[0].mxu0 %v3315
      %v3398 = vpop.f32.mrb[0].mxu0
      %v3399 = vadd.f32 0.0, %v3398
      %v3400 = vpop.f32.mrb[0].mxu0
      %3401 = vdwg.mxu0
      %3402 = vset.pattern.permute.xlu0 2
      %3403 = vperm.xlu0 %3402, %v2964
      %v3404 = vpop.permute.xlu0 %3403
      %3406 = vset.pattern.permute.xlu0 2
      %3407 = vperm.xlu0 %3406, %v2965
      %v3408 = vpop.permute.xlu0 %3407
      %3410 = vset.pattern.permute.xlu0 2
      %3411 = vperm.xlu0 %3410, %v2966
      %v3412 = vpop.permute.xlu0 %3411
      %3414 = vset.pattern.permute.xlu0 2
      %3415 = vperm.xlu0 %3414, %v2967
      %v3416 = vpop.permute.xlu0 %3415
      %v3419 = vsel %vm1707, %v2959, 0
      %v3422 = vsel %vm1707, %v2960, 0
      %v3425 = vsel %vm1707, %v2961, 0
      %v3428 = vsel %vm1707, %v2962, 0
      %3430 = vmatprep.subr.mxu0 0.0
      %3431 = vmatpush1.msra.mxu0 %v3203
      %3432 = vmatprep.subr.mxu0 0.0
      %3433 = vmatpush1.msra.mxu0 %v3204
      %3434 = vmatprep.subr.mxu0 0.0
      %3435 = vmatpush1.msra.mxu0 %v3205
      %3436 = vmatprep.subr.mxu0 0.0
      %3437 = vmatpush1.msra.mxu0 %v3206
      %3438 = vmatprep.subr.mxu0 0.0
      %3439 = vmatpush1.msra.mxu0 %v3287
      %3440 = vmatprep.subr.mxu0 0.0
      %3441 = vmatpush1.msra.mxu0 %v3292
      %3442 = vmatprep.subr.mxu0 0.0
      %3443 = vmatpush1.msra.mxu0 %v3297
      %3444 = vmatprep.subr.mxu0 0.0
      %3445 = vmatpush1.msra.mxu0 %v3302
      %3446 = vmatprep.subr.mxu0 0.0
      %3447 = vmatpush1.msra.mxu0 %v3384
      %3448 = vmatprep.subr.mxu0 0.0
      %3449 = vmatpush1.msra.mxu0 %v3389
      %3450 = vmatprep.subr.mxu0 0.0
      %3451 = vmatpush1.msra.mxu0 %v3394
      %3452 = vmatprep.subr.mxu0 0.0
      %3453 = vmatpush1.msra.mxu0 %v3399
      %3454 = vmatprep.subr.mxu0 0.0
      %3455 = vmatpush1.msra.mxu0 0.0
      %3456 = vmatprep.subr.mxu0 0.0
      %3457 = vmatpush1.msra.mxu0 0.0
      %3458 = vmatprep.subr.mxu0 0.0
      %3459 = vmatpush1.msra.mxu0 0.0
      %3460 = vmatprep.subr.mxu0 0.0
      %3461 = vmatpush1.msra.mxu0 0.0
      %3462 = vmatprep.subr.mxu0 0.0
      %3463 = vmatpush1.msra.mxu0 0.0
      %3464 = vmatprep.subr.mxu0 0.0
      %3465 = vmatpush1.msra.mxu0 0.0
      %3466 = vmatprep.subr.mxu0 0.0
      %3467 = vmatpush1.msra.mxu0 0.0
      %3468 = vmatprep.subr.mxu0 0.0
      %3469 = vmatpush1.msra.mxu0 0.0
      %3470 = vmatprep.subr.mxu0 0.0
      %3471 = vmatpush1.msra.mxu0 0.0
      %3472 = vmatprep.subr.mxu0 0.0
      %3473 = vmatpush1.msra.mxu0 0.0
      %3474 = vmatprep.subr.mxu0 0.0
      %3475 = vmatpush1.msra.mxu0 0.0
      %3476 = vmatprep.subr.mxu0 0.0
      %3477 = vmatpush1.msra.mxu0 0.0
      %3478 = vmatprep.subr.mxu0 0.0
      %3479 = vmatpush1.msra.mxu0 0.0
      %3480 = vmatprep.subr.mxu0 0.0
      %3481 = vmatpush1.msra.mxu0 0.0
      %3482 = vmatprep.subr.mxu0 0.0
      %3483 = vmatpush1.msra.mxu0 0.0
      %3484 = vmatprep.subr.mxu0 0.0
      %3485 = vmatpush1.msra.mxu0 0.0
      %3486 = vmatprep.subr.mxu0 0.0
      %3487 = vmatpush1.msra.mxu0 0.0
      %3488 = vmatprep.subr.mxu0 0.0
      %3489 = vmatpush1.msra.mxu0 0.0
      %3490 = vmatprep.subr.mxu0 0.0
      %3491 = vmatpush1.msra.mxu0 0.0
      %3492 = vmatprep.subr.mxu0 0.0
      %3493 = vmatpush1.msra.mxu0 0.0
      %3494 = vmatprep.mubr.f32.mxu0 0.0
      %3495 = vmatmul.mubr.f32.gmra.mrb[0].mxu0 %v3419
      %v3496 = vpop.f32.mrb[0].mxu0
      %v3497 = vadd.f32 %v3404, %v3496
      %v3498 = vpop.f32.mrb[0].mxu0
      %3499 = vmatprep.mubr.f32.mxu0 0.0
      %3500 = vmatmul.mubr.f32.gmra.mrb[0].mxu0 %v3422
      %v3501 = vpop.f32.mrb[0].mxu0
      %v3502 = vadd.f32 %v3408, %v3501
      %v3503 = vpop.f32.mrb[0].mxu0
      %3504 = vmatprep.mubr.f32.mxu0 0.0
      %3505 = vmatmul.mubr.f32.gmra.mrb[0].mxu0 %v3425
      %v3506 = vpop.f32.mrb[0].mxu0
      %v3507 = vadd.f32 %v3412, %v3506
      %v3508 = vpop.f32.mrb[0].mxu0
      %3509 = vmatprep.mubr.f32.mxu0 0.0
      %3510 = vmatmul.mubr.f32.gmra.mrb[0].mxu0 %v3428
      %v3511 = vpop.f32.mrb[0].mxu0
      %v3512 = vadd.f32 %v3416, %v3511
      %v3513 = vpop.f32.mrb[0].mxu0
      %3514 = vdwg.mxu0
      %v3516 = vsel %vm3207, %v3497, 0
      %v3519 = vsel %vm3207, %v3502, 0
      %v3522 = vsel %vm3207, %v3507, 0
      %v3525 = vsel %vm3207, %v3512, 0
      %3527 = vmatprep.subr.mxu0 0.0
      %3528 = vmatpush1.msra.mxu0 %v2886
      %3529 = vmatprep.subr.mxu0 0.0
      %3530 = vmatpush1.msra.mxu0 %v2887
      %3531 = vmatprep.subr.mxu0 0.0
      %3532 = vmatpush1.msra.mxu0 %v2888
      %3533 = vmatprep.subr.mxu0 0.0
      %3534 = vmatpush1.msra.mxu0 %v2889
      %3535 = vmatprep.subr.mxu0 0.0
      %3536 = vmatpush1.msra.mxu0 %v2890
      %3537 = vmatprep.subr.mxu0 0.0
      %3538 = vmatpush1.msra.mxu0 %v2891
      %3539 = vmatprep.subr.mxu0 0.0
      %3540 = vmatpush1.msra.mxu0 %v2892
      %3541 = vmatprep.subr.mxu0 0.0
      %3542 = vmatpush1.msra.mxu0 %v2893
      %3543 = vmatprep.subr.mxu0 0.0
      %3544 = vmatpush1.msra.mxu0 %v2894
      %3545 = vmatprep.subr.mxu0 0.0
      %3546 = vmatpush1.msra.mxu0 %v2895
      %3547 = vmatprep.subr.mxu0 0.0
      %3548 = vmatpush1.msra.mxu0 %v2896
      %3549 = vmatprep.subr.mxu0 0.0
      %3550 = vmatpush1.msra.mxu0 %v2897
      %3551 = vmatprep.subr.mxu0 0.0
      %3552 = vmatpush1.msra.mxu0 %v2898
      %3553 = vmatprep.subr.mxu0 0.0
      %3554 = vmatpush1.msra.mxu0 0.0
      %3555 = vmatprep.subr.mxu0 0.0
      %3556 = vmatpush1.msra.mxu0 0.0
      %3557 = vmatprep.subr.mxu0 0.0
      %3558 = vmatpush1.msra.mxu0 0.0
      %3559 = vmatprep.subr.mxu0 0.0
      %3560 = vmatpush1.msra.mxu0 0.0
      %3561 = vmatprep.subr.mxu0 0.0
      %3562 = vmatpush1.msra.mxu0 0.0
      %3563 = vmatprep.subr.mxu0 0.0
      %3564 = vmatpush1.msra.mxu0 0.0
      %3565 = vmatprep.subr.mxu0 0.0
      %3566 = vmatpush1.msra.mxu0 0.0
      %3567 = vmatprep.subr.mxu0 0.0
      %3568 = vmatpush1.msra.mxu0 0.0
      %3569 = vmatprep.subr.mxu0 0.0
      %3570 = vmatpush1.msra.mxu0 0.0
      %3571 = vmatprep.subr.mxu0 0.0
      %3572 = vmatpush1.msra.mxu0 0.0
      %3573 = vmatprep.subr.mxu0 0.0
      %3574 = vmatpush1.msra.mxu0 0.0
      %3575 = vmatprep.subr.mxu0 0.0
      %3576 = vmatpush1.msra.mxu0 0.0
      %3577 = vmatprep.subr.mxu0 0.0
      %3578 = vmatpush1.msra.mxu0 0.0
      %3579 = vmatprep.subr.mxu0 0.0
      %3580 = vmatpush1.msra.mxu0 0.0
      %3581 = vmatprep.subr.mxu0 0.0
      %3582 = vmatpush1.msra.mxu0 0.0
      %3583 = vmatprep.subr.mxu0 0.0
      %3584 = vmatpush1.msra.mxu0 0.0
      %3585 = vmatprep.subr.mxu0 0.0
      %3586 = vmatpush1.msra.mxu0 0.0
      %3587 = vmatprep.subr.mxu0 0.0
      %3588 = vmatpush1.msra.mxu0 0.0
      %3589 = vmatprep.subr.mxu0 0.0
      %3590 = vmatpush1.msra.mxu0 0.0
      %3591 = vmatprep.mubr.f32.mxu0 0.0
      %3592 = vmatmul.mubr.f32.gmra.mrb[0].mxu0 %v3516
      %v3593 = vpop.f32.mrb[0].mxu0
      %v3594 = vadd.f32 0.0, %v3593
      %v3595 = vpop.f32.mrb[0].mxu0
      %3596 = vmatprep.mubr.f32.mxu0 0.0
      %3597 = vmatmul.mubr.f32.gmra.mrb[0].mxu0 %v3519
      %v3598 = vpop.f32.mrb[0].mxu0
      %v3599 = vadd.f32 0.0, %v3598
      %v3600 = vpop.f32.mrb[0].mxu0
      %3601 = vmatprep.mubr.f32.mxu0 0.0
      %3602 = vmatmul.mubr.f32.gmra.mrb[0].mxu0 %v3522
      %v3603 = vpop.f32.mrb[0].mxu0
      %v3604 = vadd.f32 0.0, %v3603
      %v3605 = vpop.f32.mrb[0].mxu0
      %3606 = vmatprep.mubr.f32.mxu0 0.0
      %3607 = vmatmul.mubr.f32.gmra.mrb[0].mxu0 %v3525
      %v3608 = vpop.f32.mrb[0].mxu0
      %v3609 = vadd.f32 0.0, %v3608
      %v3610 = vpop.f32.mrb[0].mxu0
      %3611 = vdwg.mxu0
      %v3612 = vlaneseq
      %v3613 = vshrl.u32 %v3612, 7
      %v3614 = vsub.s32 0, %v3613
      %v3615 = vrot.slane %v2971, %v3614
      %v3616 = vmul.f32 %v3594, %v3615
      %v3617 = vmul.f32 %v3599, %v3615
      %v3618 = vmul.f32 %v3604, %v3615
      %v3619 = vmul.f32 %v3609, %v3615
      %v3620 = vlaneseq
      %v3621 = vshrl.u32 %v3620, 7
      %v3622 = vsub.s32 1, %v3621
      %v3623 = vrot.slane %v2971, %v3622
      %v3624 = vadd.f32 %v3616, %v3623
      %v3625 = vadd.f32 %v3617, %v3623
      %v3626 = vadd.f32 %v3618, %v3623
      %v3627 = vadd.f32 %v3619, %v3623
      %v3629 = vsel %vm1918, %v2884, 0
      %v3632 = vsel %vm1918, %v2885, 0
      %3634 = vmatprep.subr.mxu0 0.0
      %3635 = vmatpush1.msra.mxu0 %v3624
      %3636 = vmatprep.subr.mxu0 0.0
      %3637 = vmatpush1.msra.mxu0 %v3625
      %3638 = vmatprep.subr.mxu0 0.0
      %3639 = vmatpush1.msra.mxu0 %v3626
      %3640 = vmatprep.subr.mxu0 0.0
      %3641 = vmatpush1.msra.mxu0 %v3627
      %3642 = vmatprep.subr.mxu0 0.0
      %3643 = vmatpush1.msra.mxu0 0.0
      %3644 = vmatprep.subr.mxu0 0.0
      %3645 = vmatpush1.msra.mxu0 0.0
      %3646 = vmatprep.subr.mxu0 0.0
      %3647 = vmatpush1.msra.mxu0 0.0
      %3648 = vmatprep.subr.mxu0 0.0
      %3649 = vmatpush1.msra.mxu0 0.0
      %3650 = vmatprep.subr.mxu0 0.0
      %3651 = vmatpush1.msra.mxu0 0.0
      %3652 = vmatprep.subr.mxu0 0.0
      %3653 = vmatpush1.msra.mxu0 0.0
      %3654 = vmatprep.subr.mxu0 0.0
      %3655 = vmatpush1.msra.mxu0 0.0
      %3656 = vmatprep.subr.mxu0 0.0
      %3657 = vmatpush1.msra.mxu0 0.0
      %3658 = vmatprep.subr.mxu0 0.0
      %3659 = vmatpush1.msra.mxu0 0.0
      %3660 = vmatprep.subr.mxu0 0.0
      %3661 = vmatpush1.msra.mxu0 0.0
      %3662 = vmatprep.subr.mxu0 0.0
      %3663 = vmatpush1.msra.mxu0 0.0
      %3664 = vmatprep.subr.mxu0 0.0
      %3665 = vmatpush1.msra.mxu0 0.0
      %3666 = vmatprep.subr.mxu0 0.0
      %3667 = vmatpush1.msra.mxu0 0.0
      %3668 = vmatprep.subr.mxu0 0.0
      %3669 = vmatpush1.msra.mxu0 0.0
      %3670 = vmatprep.subr.mxu0 0.0
      %3671 = vmatpush1.msra.mxu0 0.0
      %3672 = vmatprep.subr.mxu0 0.0
      %3673 = vmatpush1.msra.mxu0 0.0
      %3674 = vmatprep.subr.mxu0 0.0
      %3675 = vmatpush1.msra.mxu0 0.0
      %3676 = vmatprep.subr.mxu0 0.0
      %3677 = vmatpush1.msra.mxu0 0.0
      %3678 = vmatprep.subr.mxu0 0.0
      %3679 = vmatpush1.msra.mxu0 0.0
      %3680 = vmatprep.subr.mxu0 0.0
      %3681 = vmatpush1.msra.mxu0 0.0
      %3682 = vmatprep.subr.mxu0 0.0
      %3683 = vmatpush1.msra.mxu0 0.0
      %3684 = vmatprep.subr.mxu0 0.0
      %3685 = vmatpush1.msra.mxu0 0.0
      %3686 = vmatprep.subr.mxu0 0.0
      %3687 = vmatpush1.msra.mxu0 0.0
      %3688 = vmatprep.subr.mxu0 0.0
      %3689 = vmatpush1.msra.mxu0 0.0
      %3690 = vmatprep.subr.mxu0 0.0
      %3691 = vmatpush1.msra.mxu0 0.0
      %3692 = vmatprep.subr.mxu0 0.0
      %3693 = vmatpush1.msra.mxu0 0.0
      %3694 = vmatprep.subr.mxu0 0.0
      %3695 = vmatpush1.msra.mxu0 0.0
      %3696 = vmatprep.subr.mxu0 0.0
      %3697 = vmatpush1.msra.mxu0 0.0
      %3698 = vmatprep.mubr.f32.mxu0 0.0
      %3699 = vmatmul.mubr.f32.gmra.mrb[0].mxu0 %v3629
      %v3700 = vpop.f32.mrb[0].mxu0
      %v3701 = vadd.f32 0.0, %v3700
      %v3702 = vpop.f32.mrb[0].mxu0
      %3703 = vmatprep.mubr.f32.mxu0 0.0
      %3704 = vmatmul.mubr.f32.gmra.mrb[0].mxu0 %v3632
      %v3705 = vpop.f32.mrb[0].mxu0
      %v3706 = vadd.f32 0.0, %v3705
      %v3707 = vpop.f32.mrb[0].mxu0
      %3708 = vdwg.mxu0
      %v3709 = vlaneseq
      %v3710 = vshrl.u32 %v3709, 7
      %v3711 = vsub.s32 2, %v3710
      %v3712 = vrot.slane %v2971, %v3711
      %v3713 = vmul.f32 %v3701, %v3712
      %v3714 = vmul.f32 %v3706, %v3712
      %v3715 = vlaneseq
      %v3716 = vshrl.u32 %v3715, 7
      %v3717 = vsub.s32 3, %v3716
      %v3718 = vrot.slane %v2971, %v3717
      %v3719 = vadd.f32 %v3713, %v3718
      %v3720 = vadd.f32 %v3714, %v3718
      %v3722 = vsel %vm1918, %v2969, 0
      %3724 = vmatprep.subr.mxu0 0.0
      %3725 = vmatpush1.msra.mxu0 %v3497
      %3726 = vmatprep.subr.mxu0 0.0
      %3727 = vmatpush1.msra.mxu0 %v3502
      %3728 = vmatprep.subr.mxu0 0.0
      %3729 = vmatpush1.msra.mxu0 %v3507
      %3730 = vmatprep.subr.mxu0 0.0
      %3731 = vmatpush1.msra.mxu0 %v3512
      %3732 = vmatprep.subr.mxu0 0.0
      %3733 = vmatpush1.msra.mxu0 0.0
      %3734 = vmatprep.subr.mxu0 0.0
      %3735 = vmatpush1.msra.mxu0 0.0
      %3736 = vmatprep.subr.mxu0 0.0
      %3737 = vmatpush1.msra.mxu0 0.0
      %3738 = vmatprep.subr.mxu0 0.0
      %3739 = vmatpush1.msra.mxu0 0.0
      %3740 = vmatprep.subr.mxu0 0.0
      %3741 = vmatpush1.msra.mxu0 0.0
      %3742 = vmatprep.subr.mxu0 0.0
      %3743 = vmatpush1.msra.mxu0 0.0
      %3744 = vmatprep.subr.mxu0 0.0
      %3745 = vmatpush1.msra.mxu0 0.0
      %3746 = vmatprep.subr.mxu0 0.0
      %3747 = vmatpush1.msra.mxu0 0.0
      %3748 = vmatprep.subr.mxu0 0.0
      %3749 = vmatpush1.msra.mxu0 0.0
      %3750 = vmatprep.subr.mxu0 0.0
      %3751 = vmatpush1.msra.mxu0 0.0
      %3752 = vmatprep.subr.mxu0 0.0
      %3753 = vmatpush1.msra.mxu0 0.0
      %3754 = vmatprep.subr.mxu0 0.0
      %3755 = vmatpush1.msra.mxu0 0.0
      %3756 = vmatprep.subr.mxu0 0.0
      %3757 = vmatpush1.msra.mxu0 0.0
      %3758 = vmatprep.subr.mxu0 0.0
      %3759 = vmatpush1.msra.mxu0 0.0
      %3760 = vmatprep.subr.mxu0 0.0
      %3761 = vmatpush1.msra.mxu0 0.0
      %3762 = vmatprep.subr.mxu0 0.0
      %3763 = vmatpush1.msra.mxu0 0.0
      %3764 = vmatprep.subr.mxu0 0.0
      %3765 = vmatpush1.msra.mxu0 0.0
      %3766 = vmatprep.subr.mxu0 0.0
      %3767 = vmatpush1.msra.mxu0 0.0
      %3768 = vmatprep.subr.mxu0 0.0
      %3769 = vmatpush1.msra.mxu0 0.0
      %3770 = vmatprep.subr.mxu0 0.0
      %3771 = vmatpush1.msra.mxu0 0.0
      %3772 = vmatprep.subr.mxu0 0.0
      %3773 = vmatpush1.msra.mxu0 0.0
      %3774 = vmatprep.subr.mxu0 0.0
      %3775 = vmatpush1.msra.mxu0 0.0
      %3776 = vmatprep.subr.mxu0 0.0
      %3777 = vmatpush1.msra.mxu0 0.0
      %3778 = vmatprep.subr.mxu0 0.0
      %3779 = vmatpush1.msra.mxu0 0.0
      %3780 = vmatprep.subr.mxu0 0.0
      %3781 = vmatpush1.msra.mxu0 0.0
      %3782 = vmatprep.subr.mxu0 0.0
      %3783 = vmatpush1.msra.mxu0 0.0
      %3784 = vmatprep.subr.mxu0 0.0
      %3785 = vmatpush1.msra.mxu0 0.0
      %3786 = vmatprep.subr.mxu0 0.0
      %3787 = vmatpush1.msra.mxu0 0.0
      %3788 = vmatprep.mubr.f32.mxu0 0.0
      %3789 = vmatmul.mubr.f32.gmra.mrb[0].mxu0 %v3722
      %v3790 = vpop.f32.mrb[0].mxu0
      %v3791 = vadd.f32 0.0, %v3790
      %v3792 = vpop.f32.mrb[0].mxu0
      %3793 = vdwg.mxu0
      %v3794 = vlaneseq
      %v3795 = vshrl.u32 %v3794, 7
      %v3796 = vsub.s32 0, %v3795
      %v3797 = vrot.slane %v3791, %v3796
      %v3798 = vmul.f32 %v2912, %v3797
      %v3799 = vmul.f32 %v2913, %v3797
      %v3801 = vsel %vm3207, %v3798, 0
      %v3804 = vsel %vm3207, %v3799, 0
      %3806 = vmatprep.subr.mxu0 0.0
      %3807 = vmatpush1.msra.mxu0 %v2914
      %3808 = vmatprep.subr.mxu0 0.0
      %3809 = vmatpush1.msra.mxu0 %v2915
      %3810 = vmatprep.subr.mxu0 0.0
      %3811 = vmatpush1.msra.mxu0 %v2916
      %3812 = vmatprep.subr.mxu0 0.0
      %3813 = vmatpush1.msra.mxu0 %v2917
      %3814 = vmatprep.subr.mxu0 0.0
      %3815 = vmatpush1.msra.mxu0 %v2918
      %3816 = vmatprep.subr.mxu0 0.0
      %3817 = vmatpush1.msra.mxu0 %v2919
      %3818 = vmatprep.subr.mxu0 0.0
      %3819 = vmatpush1.msra.mxu0 %v2920
      %3820 = vmatprep.subr.mxu0 0.0
      %3821 = vmatpush1.msra.mxu0 %v2921
      %3822 = vmatprep.subr.mxu0 0.0
      %3823 = vmatpush1.msra.mxu0 %v2922
      %3824 = vmatprep.subr.mxu0 0.0
      %3825 = vmatpush1.msra.mxu0 %v2923
      %3826 = vmatprep.subr.mxu0 0.0
      %3827 = vmatpush1.msra.mxu0 %v2924
      %3828 = vmatprep.subr.mxu0 0.0
      %3829 = vmatpush1.msra.mxu0 %v2925
      %3830 = vmatprep.subr.mxu0 0.0
      %3831 = vmatpush1.msra.mxu0 %v2926
      %3832 = vmatprep.subr.mxu0 0.0
      %3833 = vmatpush1.msra.mxu0 0.0
      %3834 = vmatprep.subr.mxu0 0.0
      %3835 = vmatpush1.msra.mxu0 0.0
      %3836 = vmatprep.subr.mxu0 0.0
      %3837 = vmatpush1.msra.mxu0 0.0
      %3838 = vmatprep.subr.mxu0 0.0
      %3839 = vmatpush1.msra.mxu0 0.0
      %3840 = vmatprep.subr.mxu0 0.0
      %3841 = vmatpush1.msra.mxu0 0.0
      %3842 = vmatprep.subr.mxu0 0.0
      %3843 = vmatpush1.msra.mxu0 0.0
      %3844 = vmatprep.subr.mxu0 0.0
      %3845 = vmatpush1.msra.mxu0 0.0
      %3846 = vmatprep.subr.mxu0 0.0
      %3847 = vmatpush1.msra.mxu0 0.0
      %3848 = vmatprep.subr.mxu0 0.0
      %3849 = vmatpush1.msra.mxu0 0.0
      %3850 = vmatprep.subr.mxu0 0.0
      %3851 = vmatpush1.msra.mxu0 0.0
      %3852 = vmatprep.subr.mxu0 0.0
      %3853 = vmatpush1.msra.mxu0 0.0
      %3854 = vmatprep.subr.mxu0 0.0
      %3855 = vmatpush1.msra.mxu0 0.0
      %3856 = vmatprep.subr.mxu0 0.0
      %3857 = vmatpush1.msra.mxu0 0.0
      %3858 = vmatprep.subr.mxu0 0.0
      %3859 = vmatpush1.msra.mxu0 0.0
      %3860 = vmatprep.subr.mxu0 0.0
      %3861 = vmatpush1.msra.mxu0 0.0
      %3862 = vmatprep.subr.mxu0 0.0
      %3863 = vmatpush1.msra.mxu0 0.0
      %3864 = vmatprep.subr.mxu0 0.0
      %3865 = vmatpush1.msra.mxu0 0.0
      %3866 = vmatprep.subr.mxu0 0.0
      %3867 = vmatpush1.msra.mxu0 0.0
      %3868 = vmatprep.subr.mxu0 0.0
      %3869 = vmatpush1.msra.mxu0 0.0
      %3870 = vmatprep.mubr.f32.mxu0 0.0
      %3871 = vmatmul.mubr.f32.gmra.mrb[0].mxu0 %v3801
      %v3872 = vpop.f32.mrb[0].mxu0
      %v3873 = vadd.f32 0.0, %v3872
      %v3874 = vpop.f32.mrb[0].mxu0
      %3875 = vmatprep.mubr.f32.mxu0 0.0
      %3876 = vmatmul.mubr.f32.gmra.mrb[0].mxu0 %v3804
      %v3877 = vpop.f32.mrb[0].mxu0
      %v3878 = vadd.f32 0.0, %v3877
      %v3879 = vpop.f32.mrb[0].mxu0
      %3880 = vdwg.mxu0
      %v3881 = vlaneseq
      %v3882 = vshrl.u32 %v3881, 7
      %v3883 = vsub.s32 4, %v3882
      %v3884 = vrot.slane %v2971, %v3883
      %v3885 = vmul.f32 %v3873, %v3884
      %v3886 = vmul.f32 %v3878, %v3884
      %v3887 = vlaneseq
      %v3888 = vshrl.u32 %v3887, 7
      %v3889 = vsub.s32 5, %v3888
      %v3890 = vrot.slane %v2971, %v3889
      %v3891 = vadd.f32 %v3885, %v3890
      %v3892 = vadd.f32 %v3886, %v3890
      %3893 = vxpose.xlu0.b32.start [1/16] %v3719, 128
      %3894 = vxpose.xlu0.b32.cont [2/16] %v3720, 128
      %3895 = vxpose.xlu0.b32.cont [3/16] 0.0, 128
      %3896 = vxpose.xlu0.b32.cont [4/16] 0.0, 128
      %3897 = vxpose.xlu0.b32.cont [5/16] 0.0, 128
      %3898 = vxpose.xlu0.b32.cont [6/16] 0.0, 128
      %3899 = vxpose.xlu0.b32.cont [7/16] 0.0, 128
      %3900 = vxpose.xlu0.b32.cont [8/16] 0.0, 128
      %3901 = vxpose.xlu0.b32.cont [9/16] 0.0, 128
      %3902 = vxpose.xlu0.b32.cont [10/16] 0.0, 128
      %3903 = vxpose.xlu0.b32.cont [11/16] 0.0, 128
      %3904 = vxpose.xlu0.b32.cont [12/16] 0.0, 128
      %3905 = vxpose.xlu0.b32.cont [13/16] 0.0, 128
      %3906 = vxpose.xlu0.b32.cont [14/16] 0.0, 128
      %3907 = vxpose.xlu0.b32.cont [15/16] 0.0, 128
      %3908 = vxpose.xlu0.b32.end [16/16] 0.0, 128
      %v3909 = vpop.trf.xlu0
      %v3910 = vpop.trf.xlu0
      %v3911 = vpop.trf.xlu0
      %v3912 = vpop.trf.xlu0
      %v3913 = vpop.trf.xlu0
      %v3914 = vpop.trf.xlu0
      %v3915 = vpop.trf.xlu0
      %v3916 = vpop.trf.xlu0
      %v3917 = vpop.trf.xlu0
      %v3918 = vpop.trf.xlu0
      %v3919 = vpop.trf.xlu0
      %v3920 = vpop.trf.xlu0
      %v3921 = vpop.trf.xlu0
      %v3922 = vpop.trf.xlu0
      %v3923 = vpop.trf.xlu0
      %v3924 = vpop.trf.xlu0
      %vm3925 = vcmask 105472
      %v3927 = vsel %vm3925, %v3909, 0
      %vm3929 = vcmask 1044480
      %v3931 = vsel %vm3929, %v3892, 0
      %3933 = vmatprep.subr.mxu0 0.0
      %3934 = vmatpush1.msra.mxu0 %v3891
      %3935 = vmatprep.subr.mxu0 0.0
      %3936 = vmatpush1.msra.mxu0 %v3931
      %3937 = vmatprep.subr.mxu0 0.0
      %3938 = vmatpush1.msra.mxu0 0.0
      %3939 = vmatprep.subr.mxu0 0.0
      %3940 = vmatpush1.msra.mxu0 0.0
      %3941 = vmatprep.subr.mxu0 0.0
      %3942 = vmatpush1.msra.mxu0 0.0
      %3943 = vmatprep.subr.mxu0 0.0
      %3944 = vmatpush1.msra.mxu0 0.0
      %3945 = vmatprep.subr.mxu0 0.0
      %3946 = vmatpush1.msra.mxu0 0.0
      %3947 = vmatprep.subr.mxu0 0.0
      %3948 = vmatpush1.msra.mxu0 0.0
      %3949 = vmatprep.subr.mxu0 0.0
      %3950 = vmatpush1.msra.mxu0 0.0
      %3951 = vmatprep.subr.mxu0 0.0
      %3952 = vmatpush1.msra.mxu0 0.0
      %3953 = vmatprep.subr.mxu0 0.0
      %3954 = vmatpush1.msra.mxu0 0.0
      %3955 = vmatprep.subr.mxu0 0.0
      %3956 = vmatpush1.msra.mxu0 0.0
      %3957 = vmatprep.subr.mxu0 0.0
      %3958 = vmatpush1.msra.mxu0 0.0
      %3959 = vmatprep.subr.mxu0 0.0
      %3960 = vmatpush1.msra.mxu0 0.0
      %3961 = vmatprep.subr.mxu0 0.0
      %3962 = vmatpush1.msra.mxu0 0.0
      %3963 = vmatprep.subr.mxu0 0.0
      %3964 = vmatpush1.msra.mxu0 0.0
      %3965 = vmatprep.subr.mxu0 0.0
      %3966 = vmatpush1.msra.mxu0 0.0
      %3967 = vmatprep.subr.mxu0 0.0
      %3968 = vmatpush1.msra.mxu0 0.0
      %3969 = vmatprep.subr.mxu0 0.0
      %3970 = vmatpush1.msra.mxu0 0.0
      %3971 = vmatprep.subr.mxu0 0.0
      %3972 = vmatpush1.msra.mxu0 0.0
      %3973 = vmatprep.subr.mxu0 0.0
      %3974 = vmatpush1.msra.mxu0 0.0
      %3975 = vmatprep.subr.mxu0 0.0
      %3976 = vmatpush1.msra.mxu0 0.0
      %3977 = vmatprep.subr.mxu0 0.0
      %3978 = vmatpush1.msra.mxu0 0.0
      %3979 = vmatprep.subr.mxu0 0.0
      %3980 = vmatpush1.msra.mxu0 0.0
      %3981 = vmatprep.subr.mxu0 0.0
      %3982 = vmatpush1.msra.mxu0 0.0
      %3983 = vmatprep.subr.mxu0 0.0
      %3984 = vmatpush1.msra.mxu0 0.0
      %3985 = vmatprep.subr.mxu0 0.0
      %3986 = vmatpush1.msra.mxu0 0.0
      %3987 = vmatprep.subr.mxu0 0.0
      %3988 = vmatpush1.msra.mxu0 0.0
      %3989 = vmatprep.subr.mxu0 0.0
      %3990 = vmatpush1.msra.mxu0 0.0
      %3991 = vmatprep.subr.mxu0 0.0
      %3992 = vmatpush1.msra.mxu0 0.0
      %3993 = vmatprep.subr.mxu0 0.0
      %3994 = vmatpush1.msra.mxu0 0.0
      %3995 = vmatprep.subr.mxu0 0.0
      %3996 = vmatpush1.msra.mxu0 0.0
      %3997 = vmatprep.mubr.f32.mxu0 0.0
      %3998 = vmatmul.mubr.f32.gmra.mrb[0].mxu0 %v3927
      %v3999 = vpop.f32.mrb[0].mxu0
      %v4000 = vadd.f32 0.0, %v3999
      %v4001 = vpop.f32.mrb[0].mxu0
      %4002 = vdwg.mxu0
      %v4003 = vmax.f32 %v4000, 0.0
      %v4004 = vlaneseq
      %v4005 = vshrl.u32 %v4004, 7
      %v4006 = vsub.s32 6, %v4005
      %v4007 = vrot.slane %v2971, %v4006
      %v4009 = vsel %vm2299, %v4003, 0
      %v4012 = vsel %vm2299, %v2973, 0
      %4014 = vmatprep.subr.mxu0 0.0
      %4015 = vmatpush1.xpose.msra.mxu0 %v4012
      %4016 = vmatprep.subr.mxu0 0.0
      %4017 = vmatpush1.xpose.msra.mxu0 0.0
      %4018 = vmatprep.subr.mxu0 0.0
      %4019 = vmatpush1.xpose.msra.mxu0 0.0
      %4020 = vmatprep.subr.mxu0 0.0
      %4021 = vmatpush1.xpose.msra.mxu0 0.0
      %4022 = vmatprep.subr.mxu0 0.0
      %4023 = vmatpush1.xpose.msra.mxu0 0.0
      %4024 = vmatprep.subr.mxu0 0.0
      %4025 = vmatpush1.xpose.msra.mxu0 0.0
      %4026 = vmatprep.subr.mxu0 0.0
      %4027 = vmatpush1.xpose.msra.mxu0 0.0
      %4028 = vmatprep.subr.mxu0 0.0
      %4029 = vmatpush1.xpose.msra.mxu0 0.0
      %4030 = vmatprep.subr.mxu0 0.0
      %4031 = vmatpush1.xpose.msra.mxu0 0.0
      %4032 = vmatprep.subr.mxu0 0.0
      %4033 = vmatpush1.xpose.msra.mxu0 0.0
      %4034 = vmatprep.subr.mxu0 0.0
      %4035 = vmatpush1.xpose.msra.mxu0 0.0
      %4036 = vmatprep.subr.mxu0 0.0
      %4037 = vmatpush1.xpose.msra.mxu0 0.0
      %4038 = vmatprep.subr.mxu0 0.0
      %4039 = vmatpush1.xpose.msra.mxu0 0.0
      %4040 = vmatprep.subr.mxu0 0.0
      %4041 = vmatpush1.xpose.msra.mxu0 0.0
      %4042 = vmatprep.subr.mxu0 0.0
      %4043 = vmatpush1.xpose.msra.mxu0 0.0
      %4044 = vmatprep.subr.mxu0 0.0
      %4045 = vmatpush1.xpose.msra.mxu0 0.0
      %4046 = vmatprep.subr.mxu0 0.0
      %4047 = vmatpush1.xpose.msra.mxu0 0.0
      %4048 = vmatprep.subr.mxu0 0.0
      %4049 = vmatpush1.xpose.msra.mxu0 0.0
      %4050 = vmatprep.subr.mxu0 0.0
      %4051 = vmatpush1.xpose.msra.mxu0 0.0
      %4052 = vmatprep.subr.mxu0 0.0
      %4053 = vmatpush1.xpose.msra.mxu0 0.0
      %4054 = vmatprep.subr.mxu0 0.0
      %4055 = vmatpush1.xpose.msra.mxu0 0.0
      %4056 = vmatprep.subr.mxu0 0.0
      %4057 = vmatpush1.xpose.msra.mxu0 0.0
      %4058 = vmatprep.subr.mxu0 0.0
      %4059 = vmatpush1.xpose.msra.mxu0 0.0
      %4060 = vmatprep.subr.mxu0 0.0
      %4061 = vmatpush1.xpose.msra.mxu0 0.0
      %4062 = vmatprep.subr.mxu0 0.0
      %4063 = vmatpush1.xpose.msra.mxu0 0.0
      %4064 = vmatprep.subr.mxu0 0.0
      %4065 = vmatpush1.xpose.msra.mxu0 0.0
      %4066 = vmatprep.subr.mxu0 0.0
      %4067 = vmatpush1.xpose.msra.mxu0 0.0
      %4068 = vmatprep.subr.mxu0 0.0
      %4069 = vmatpush1.xpose.msra.mxu0 0.0
      %4070 = vmatprep.subr.mxu0 0.0
      %4071 = vmatpush1.xpose.msra.mxu0 0.0
      %4072 = vmatprep.subr.mxu0 0.0
      %4073 = vmatpush1.xpose.msra.mxu0 0.0
      %4074 = vmatprep.subr.mxu0 0.0
      %4075 = vmatpush1.xpose.msra.mxu0 0.0
      %4076 = vmatprep.subr.mxu0 0.0
      %4077 = vmatpush1.xpose.msra.mxu0 0.0
      %4078 = vmatprep.mubr.f32.mxu0 0.0
      %4079 = vmatmul.mubr.f32.gmra.mrb[0].mxu0 %v4009
      %v4080 = vpop.f32.mrb[0].mxu0
      %v4081 = vadd.f32 %v4007, %v4080
      %v4082 = vpop.f32.mrb[0].mxu0
      %4083 = vdwg.mxu0
      %v4084 = vsel %vm2299, %v4081, -inf
      %4085 = vmax.xlane.f32.xlu0 %v4084
      %v4086 = vpop.xlane.xlu0 %4085
      %v4087 = vsub.f32 %v4081, %v4086
      %v4088 = vmul.f32 %v4087, 1.442695
      %v4089 = vpow.pop %v4088
      %v4090 = vsel %vm2299, %v4089, 0.0
      %4091 = vadd.xlane.f32.xlu0 %v4090
      %v4092 = vpop.xlane.xlu0 %4091
      %v4093 = vrcp.pop %v4092
      %v4094 = vmul.f32 %v4089, %v4093
      %v4096 = vsel %vm2299, %v2914, 0
      %v4099 = vsel %vm2299, %v2915, 0
      %v4102 = vsel %vm2299, %v2916, 0
      %v4105 = vsel %vm2299, %v2917, 0
      %v4108 = vsel %vm2299, %v2918, 0
      %v4111 = vsel %vm2299, %v2919, 0
      %v4114 = vsel %vm2299, %v2920, 0
      %v4117 = vsel %vm2299, %v2921, 0
      %v4120 = vsel %vm2299, %v2922, 0
      %v4123 = vsel %vm2299, %v2923, 0
      %v4126 = vsel %vm2299, %v2924, 0
      %v4129 = vsel %vm2299, %v2925, 0
      %v4132 = vsel %vm2299, %v2926, 0
      %v4135 = vsel %vm2299, %v4094, 0
      %4137 = vmatprep.subr.mxu0 0.0
      %4138 = vmatpush1.xpose.msra.mxu0 %v4135
      %4139 = vmatprep.subr.mxu0 0.0
      %4140 = vmatpush1.xpose.msra.mxu0 0.0
      %4141 = vmatprep.subr.mxu0 0.0
      %4142 = vmatpush1.xpose.msra.mxu0 0.0
      %4143 = vmatprep.subr.mxu0 0.0
      %4144 = vmatpush1.xpose.msra.mxu0 0.0
      %4145 = vmatprep.subr.mxu0 0.0
      %4146 = vmatpush1.xpose.msra.mxu0 0.0
      %4147 = vmatprep.subr.mxu0 0.0
      %4148 = vmatpush1.xpose.msra.mxu0 0.0
      %4149 = vmatprep.subr.mxu0 0.0
      %4150 = vmatpush1.xpose.msra.mxu0 0.0
      %4151 = vmatprep.subr.mxu0 0.0
      %4152 = vmatpush1.xpose.msra.mxu0 0.0
      %4153 = vmatprep.subr.mxu0 0.0
      %4154 = vmatpush1.xpose.msra.mxu0 0.0
      %4155 = vmatprep.subr.mxu0 0.0
      %4156 = vmatpush1.xpose.msra.mxu0 0.0
      %4157 = vmatprep.subr.mxu0 0.0
      %4158 = vmatpush1.xpose.msra.mxu0 0.0
      %4159 = vmatprep.subr.mxu0 0.0
      %4160 = vmatpush1.xpose.msra.mxu0 0.0
      %4161 = vmatprep.subr.mxu0 0.0
      %4162 = vmatpush1.xpose.msra.mxu0 0.0
      %4163 = vmatprep.subr.mxu0 0.0
      %4164 = vmatpush1.xpose.msra.mxu0 0.0
      %4165 = vmatprep.subr.mxu0 0.0
      %4166 = vmatpush1.xpose.msra.mxu0 0.0
      %4167 = vmatprep.subr.mxu0 0.0
      %4168 = vmatpush1.xpose.msra.mxu0 0.0
      %4169 = vmatprep.subr.mxu0 0.0
      %4170 = vmatpush1.xpose.msra.mxu0 0.0
      %4171 = vmatprep.subr.mxu0 0.0
      %4172 = vmatpush1.xpose.msra.mxu0 0.0
      %4173 = vmatprep.subr.mxu0 0.0
      %4174 = vmatpush1.xpose.msra.mxu0 0.0
      %4175 = vmatprep.subr.mxu0 0.0
      %4176 = vmatpush1.xpose.msra.mxu0 0.0
      %4177 = vmatprep.subr.mxu0 0.0
      %4178 = vmatpush1.xpose.msra.mxu0 0.0
      %4179 = vmatprep.subr.mxu0 0.0
      %4180 = vmatpush1.xpose.msra.mxu0 0.0
      %4181 = vmatprep.subr.mxu0 0.0
      %4182 = vmatpush1.xpose.msra.mxu0 0.0
      %4183 = vmatprep.subr.mxu0 0.0
      %4184 = vmatpush1.xpose.msra.mxu0 0.0
      %4185 = vmatprep.subr.mxu0 0.0
      %4186 = vmatpush1.xpose.msra.mxu0 0.0
      %4187 = vmatprep.subr.mxu0 0.0
      %4188 = vmatpush1.xpose.msra.mxu0 0.0
      %4189 = vmatprep.subr.mxu0 0.0
      %4190 = vmatpush1.xpose.msra.mxu0 0.0
      %4191 = vmatprep.subr.mxu0 0.0
      %4192 = vmatpush1.xpose.msra.mxu0 0.0
      %4193 = vmatprep.subr.mxu0 0.0
      %4194 = vmatpush1.xpose.msra.mxu0 0.0
      %4195 = vmatprep.subr.mxu0 0.0
      %4196 = vmatpush1.xpose.msra.mxu0 0.0
      %4197 = vmatprep.subr.mxu0 0.0
      %4198 = vmatpush1.xpose.msra.mxu0 0.0
      %4199 = vmatprep.subr.mxu0 0.0
      %4200 = vmatpush1.xpose.msra.mxu0 0.0
      %4201 = vmatprep.mubr.f32.mxu0 0.0
      %4202 = vmatmul.mubr.f32.gmra.mrb[0].mxu0 %v4096
      %v4203 = vpop.f32.mrb[0].mxu0
      %v4204 = vadd.f32 0.0, %v4203
      %v4205 = vpop.f32.mrb[0].mxu0
      %4206 = vmatprep.mubr.f32.mxu0 0.0
      %4207 = vmatmul.mubr.f32.gmra.mrb[0].mxu0 %v4099
      %v4208 = vpop.f32.mrb[0].mxu0
      %v4209 = vadd.f32 0.0, %v4208
      %v4210 = vpop.f32.mrb[0].mxu0
      %4211 = vmatprep.mubr.f32.mxu0 0.0
      %4212 = vmatmul.mubr.f32.gmra.mrb[0].mxu0 %v4102
      %v4213 = vpop.f32.mrb[0].mxu0
      %v4214 = vadd.f32 0.0, %v4213
      %v4215 = vpop.f32.mrb[0].mxu0
      %4216 = vmatprep.mubr.f32.mxu0 0.0
      %4217 = vmatmul.mubr.f32.gmra.mrb[0].mxu0 %v4105
      %v4218 = vpop.f32.mrb[0].mxu0
      %v4219 = vadd.f32 0.0, %v4218
      %v4220 = vpop.f32.mrb[0].mxu0
      %4221 = vmatprep.mubr.f32.mxu0 0.0
      %4222 = vmatmul.mubr.f32.gmra.mrb[0].mxu0 %v4108
      %v4223 = vpop.f32.mrb[0].mxu0
      %v4224 = vadd.f32 0.0, %v4223
      %v4225 = vpop.f32.mrb[0].mxu0
      %4226 = vmatprep.mubr.f32.mxu0 0.0
      %4227 = vmatmul.mubr.f32.gmra.mrb[0].mxu0 %v4111
      %v4228 = vpop.f32.mrb[0].mxu0
      %v4229 = vadd.f32 0.0, %v4228
      %v4230 = vpop.f32.mrb[0].mxu0
      %4231 = vmatprep.mubr.f32.mxu0 0.0
      %4232 = vmatmul.mubr.f32.gmra.mrb[0].mxu0 %v4114
      %v4233 = vpop.f32.mrb[0].mxu0
      %v4234 = vadd.f32 0.0, %v4233
      %v4235 = vpop.f32.mrb[0].mxu0
      %4236 = vmatprep.mubr.f32.mxu0 0.0
      %4237 = vmatmul.mubr.f32.gmra.mrb[0].mxu0 %v4117
      %v4238 = vpop.f32.mrb[0].mxu0
      %v4239 = vadd.f32 0.0, %v4238
      %v4240 = vpop.f32.mrb[0].mxu0
      %4241 = vmatprep.mubr.f32.mxu0 0.0
      %4242 = vmatmul.mubr.f32.gmra.mrb[0].mxu0 %v4120
      %v4243 = vpop.f32.mrb[0].mxu0
      %v4244 = vadd.f32 0.0, %v4243
      %v4245 = vpop.f32.mrb[0].mxu0
      %4246 = vmatprep.mubr.f32.mxu0 0.0
      %4247 = vmatmul.mubr.f32.gmra.mrb[0].mxu0 %v4123
      %v4248 = vpop.f32.mrb[0].mxu0
      %v4249 = vadd.f32 0.0, %v4248
      %v4250 = vpop.f32.mrb[0].mxu0
      %4251 = vmatprep.mubr.f32.mxu0 0.0
      %4252 = vmatmul.mubr.f32.gmra.mrb[0].mxu0 %v4126
      %v4253 = vpop.f32.mrb[0].mxu0
      %v4254 = vadd.f32 0.0, %v4253
      %v4255 = vpop.f32.mrb[0].mxu0
      %4256 = vmatprep.mubr.f32.mxu0 0.0
      %4257 = vmatmul.mubr.f32.gmra.mrb[0].mxu0 %v4129
      %v4258 = vpop.f32.mrb[0].mxu0
      %v4259 = vadd.f32 0.0, %v4258
      %v4260 = vpop.f32.mrb[0].mxu0
      %4261 = vmatprep.mubr.f32.mxu0 0.0
      %4262 = vmatmul.mubr.f32.gmra.mrb[0].mxu0 %v4132
      %v4263 = vpop.f32.mrb[0].mxu0
      %v4264 = vadd.f32 0.0, %v4263
      %v4265 = vpop.f32.mrb[0].mxu0
      %4266 = vdwg.mxu0
      %v4268 = vsel %vm2299, %v4204, 0
      %v4271 = vsel %vm2299, %v4209, 0
      %v4274 = vsel %vm2299, %v4214, 0
      %v4277 = vsel %vm2299, %v4219, 0
      %v4280 = vsel %vm2299, %v4224, 0
      %v4283 = vsel %vm2299, %v4229, 0
      %v4286 = vsel %vm2299, %v4234, 0
      %v4289 = vsel %vm2299, %v4239, 0
      %v4292 = vsel %vm2299, %v4244, 0
      %v4295 = vsel %vm2299, %v4249, 0
      %v4298 = vsel %vm2299, %v4254, 0
      %v4301 = vsel %vm2299, %v4259, 0
      %v4304 = vsel %vm2299, %v4264, 0
      %4306 = vmatprep.subr.mxu0 0.0
      %4307 = vmatpush1.xpose.msra.mxu0 %v4096
      %4308 = vmatprep.subr.mxu0 0.0
      %4309 = vmatpush1.xpose.msra.mxu0 %v4099
      %4310 = vmatprep.subr.mxu0 0.0
      %4311 = vmatpush1.xpose.msra.mxu0 %v4102
      %4312 = vmatprep.subr.mxu0 0.0
      %4313 = vmatpush1.xpose.msra.mxu0 %v4105
      %4314 = vmatprep.subr.mxu0 0.0
      %4315 = vmatpush1.xpose.msra.mxu0 %v4108
      %4316 = vmatprep.subr.mxu0 0.0
      %4317 = vmatpush1.xpose.msra.mxu0 %v4111
      %4318 = vmatprep.subr.mxu0 0.0
      %4319 = vmatpush1.xpose.msra.mxu0 %v4114
      %4320 = vmatprep.subr.mxu0 0.0
      %4321 = vmatpush1.xpose.msra.mxu0 %v4117
      %4322 = vmatprep.subr.mxu0 0.0
      %4323 = vmatpush1.xpose.msra.mxu0 %v4120
      %4324 = vmatprep.subr.mxu0 0.0
      %4325 = vmatpush1.xpose.msra.mxu0 %v4123
      %4326 = vmatprep.subr.mxu0 0.0
      %4327 = vmatpush1.xpose.msra.mxu0 %v4126
      %4328 = vmatprep.subr.mxu0 0.0
      %4329 = vmatpush1.xpose.msra.mxu0 %v4129
      %4330 = vmatprep.subr.mxu0 0.0
      %4331 = vmatpush1.xpose.msra.mxu0 %v4132
      %4332 = vmatprep.subr.mxu0 0.0
      %4333 = vmatpush1.xpose.msra.mxu0 0.0
      %4334 = vmatprep.subr.mxu0 0.0
      %4335 = vmatpush1.xpose.msra.mxu0 0.0
      %4336 = vmatprep.subr.mxu0 0.0
      %4337 = vmatpush1.xpose.msra.mxu0 0.0
      %4338 = vmatprep.subr.mxu0 0.0
      %4339 = vmatpush1.xpose.msra.mxu0 0.0
      %4340 = vmatprep.subr.mxu0 0.0
      %4341 = vmatpush1.xpose.msra.mxu0 0.0
      %4342 = vmatprep.subr.mxu0 0.0
      %4343 = vmatpush1.xpose.msra.mxu0 0.0
      %4344 = vmatprep.subr.mxu0 0.0
      %4345 = vmatpush1.xpose.msra.mxu0 0.0
      %4346 = vmatprep.subr.mxu0 0.0
      %4347 = vmatpush1.xpose.msra.mxu0 0.0
      %4348 = vmatprep.subr.mxu0 0.0
      %4349 = vmatpush1.xpose.msra.mxu0 0.0
      %4350 = vmatprep.subr.mxu0 0.0
      %4351 = vmatpush1.xpose.msra.mxu0 0.0
      %4352 = vmatprep.subr.mxu0 0.0
      %4353 = vmatpush1.xpose.msra.mxu0 0.0
      %4354 = vmatprep.subr.mxu0 0.0
      %4355 = vmatpush1.xpose.msra.mxu0 0.0
      %4356 = vmatprep.subr.mxu0 0.0
      %4357 = vmatpush1.xpose.msra.mxu0 0.0
      %4358 = vmatprep.subr.mxu0 0.0
      %4359 = vmatpush1.xpose.msra.mxu0 0.0
      %4360 = vmatprep.subr.mxu0 0.0
      %4361 = vmatpush1.xpose.msra.mxu0 0.0
      %4362 = vmatprep.subr.mxu0 0.0
      %4363 = vmatpush1.xpose.msra.mxu0 0.0
      %4364 = vmatprep.subr.mxu0 0.0
      %4365 = vmatpush1.xpose.msra.mxu0 0.0
      %4366 = vmatprep.subr.mxu0 0.0
      %4367 = vmatpush1.xpose.msra.mxu0 0.0
      %4368 = vmatprep.subr.mxu0 0.0
      %4369 = vmatpush1.xpose.msra.mxu0 0.0
      %4370 = vmatprep.mubr.f32.mxu0 0.0
      %4371 = vmatmul.mubr.f32.gmra.mrb[0].mxu0 %v4268
      %v4372 = vpop.f32.mrb[0].mxu0
      %v4373 = vadd.f32 0.0, %v4372
      %v4374 = vpop.f32.mrb[0].mxu0
      %4375 = vmatprep.mubr.f32.mxu0 0.0
      %4376 = vmatmul.mubr.f32.gmra.mrb[0].mxu0 %v4271
      %v4377 = vpop.f32.mrb[0].mxu0
      %v4378 = vadd.f32 0.0, %v4377
      %v4379 = vpop.f32.mrb[0].mxu0
      %4380 = vmatprep.mubr.f32.mxu0 0.0
      %4381 = vmatmul.mubr.f32.gmra.mrb[0].mxu0 %v4274
      %v4382 = vpop.f32.mrb[0].mxu0
      %v4383 = vadd.f32 0.0, %v4382
      %v4384 = vpop.f32.mrb[0].mxu0
      %4385 = vmatprep.mubr.f32.mxu0 0.0
      %4386 = vmatmul.mubr.f32.gmra.mrb[0].mxu0 %v4277
      %v4387 = vpop.f32.mrb[0].mxu0
      %v4388 = vadd.f32 0.0, %v4387
      %v4389 = vpop.f32.mrb[0].mxu0
      %4390 = vmatprep.mubr.f32.mxu0 0.0
      %4391 = vmatmul.mubr.f32.gmra.mrb[0].mxu0 %v4280
      %v4392 = vpop.f32.mrb[0].mxu0
      %v4393 = vadd.f32 0.0, %v4392
      %v4394 = vpop.f32.mrb[0].mxu0
      %4395 = vmatprep.mubr.f32.mxu0 0.0
      %4396 = vmatmul.mubr.f32.gmra.mrb[0].mxu0 %v4283
      %v4397 = vpop.f32.mrb[0].mxu0
      %v4398 = vadd.f32 0.0, %v4397
      %v4399 = vpop.f32.mrb[0].mxu0
      %4400 = vmatprep.mubr.f32.mxu0 0.0
      %4401 = vmatmul.mubr.f32.gmra.mrb[0].mxu0 %v4286
      %v4402 = vpop.f32.mrb[0].mxu0
      %v4403 = vadd.f32 0.0, %v4402
      %v4404 = vpop.f32.mrb[0].mxu0
      %4405 = vmatprep.mubr.f32.mxu0 0.0
      %4406 = vmatmul.mubr.f32.gmra.mrb[0].mxu0 %v4289
      %v4407 = vpop.f32.mrb[0].mxu0
      %v4408 = vadd.f32 0.0, %v4407
      %v4409 = vpop.f32.mrb[0].mxu0
      %4410 = vmatprep.mubr.f32.mxu0 0.0
      %4411 = vmatmul.mubr.f32.gmra.mrb[0].mxu0 %v4292
      %v4412 = vpop.f32.mrb[0].mxu0
      %v4413 = vadd.f32 0.0, %v4412
      %v4414 = vpop.f32.mrb[0].mxu0
      %4415 = vmatprep.mubr.f32.mxu0 0.0
      %4416 = vmatmul.mubr.f32.gmra.mrb[0].mxu0 %v4295
      %v4417 = vpop.f32.mrb[0].mxu0
      %v4418 = vadd.f32 0.0, %v4417
      %v4419 = vpop.f32.mrb[0].mxu0
      %4420 = vmatprep.mubr.f32.mxu0 0.0
      %4421 = vmatmul.mubr.f32.gmra.mrb[0].mxu0 %v4298
      %v4422 = vpop.f32.mrb[0].mxu0
      %v4423 = vadd.f32 0.0, %v4422
      %v4424 = vpop.f32.mrb[0].mxu0
      %4425 = vmatprep.mubr.f32.mxu0 0.0
      %4426 = vmatmul.mubr.f32.gmra.mrb[0].mxu0 %v4301
      %v4427 = vpop.f32.mrb[0].mxu0
      %v4428 = vadd.f32 0.0, %v4427
      %v4429 = vpop.f32.mrb[0].mxu0
      %4430 = vmatprep.mubr.f32.mxu0 0.0
      %4431 = vmatmul.mubr.f32.gmra.mrb[0].mxu0 %v4304
      %v4432 = vpop.f32.mrb[0].mxu0
      %v4433 = vadd.f32 0.0, %v4432
      %v4434 = vpop.f32.mrb[0].mxu0
      %4435 = vdwg.mxu0
      %v4436 = vmul.f32 %v2927, %v4373
      %v4437 = vmul.f32 %v2928, %v4378
      %v4438 = vmul.f32 %v2929, %v4383
      %v4439 = vmul.f32 %v2930, %v4388
      %v4440 = vmul.f32 %v2931, %v4393
      %v4441 = vmul.f32 %v2932, %v4398
      %v4442 = vmul.f32 %v2933, %v4403
      %v4443 = vmul.f32 %v2934, %v4408
      %v4444 = vmul.f32 %v2935, %v4413
      %v4445 = vmul.f32 %v2936, %v4418
      %v4446 = vmul.f32 %v2937, %v4423
      %v4447 = vmul.f32 %v2938, %v4428
      %v4448 = vmul.f32 %v2939, %v4433
      %4449 = vmatprep.subr.mxu0 0.0
      %4450 = vmatpush1.msra.mxu0 %v4436
      %4451 = vmatprep.subr.mxu0 0.0
      %4452 = vmatpush1.msra.mxu0 %v4437
      %4453 = vmatprep.subr.mxu0 0.0
      %4454 = vmatpush1.msra.mxu0 %v4438
      %4455 = vmatprep.subr.mxu0 0.0
      %4456 = vmatpush1.msra.mxu0 %v4439
      %4457 = vmatprep.subr.mxu0 0.0
      %4458 = vmatpush1.msra.mxu0 %v4440
      %4459 = vmatprep.subr.mxu0 0.0
      %4460 = vmatpush1.msra.mxu0 %v4441
      %4461 = vmatprep.subr.mxu0 0.0
      %4462 = vmatpush1.msra.mxu0 %v4442
      %4463 = vmatprep.subr.mxu0 0.0
      %4464 = vmatpush1.msra.mxu0 %v4443
      %4465 = vmatprep.subr.mxu0 0.0
      %4466 = vmatpush1.msra.mxu0 %v4444
      %4467 = vmatprep.subr.mxu0 0.0
      %4468 = vmatpush1.msra.mxu0 %v4445
      %4469 = vmatprep.subr.mxu0 0.0
      %4470 = vmatpush1.msra.mxu0 %v4446
      %4471 = vmatprep.subr.mxu0 0.0
      %4472 = vmatpush1.msra.mxu0 %v4447
      %4473 = vmatprep.subr.mxu0 0.0
      %4474 = vmatpush1.msra.mxu0 %v4448
      %4475 = vmatprep.subr.mxu0 0.0
      %4476 = vmatpush1.msra.mxu0 0.0
      %4477 = vmatprep.subr.mxu0 0.0
      %4478 = vmatpush1.msra.mxu0 0.0
      %4479 = vmatprep.subr.mxu0 0.0
      %4480 = vmatpush1.msra.mxu0 0.0
      %4481 = vmatprep.subr.mxu0 0.0
      %4482 = vmatpush1.msra.mxu0 0.0
      %4483 = vmatprep.subr.mxu0 0.0
      %4484 = vmatpush1.msra.mxu0 0.0
      %4485 = vmatprep.subr.mxu0 0.0
      %4486 = vmatpush1.msra.mxu0 0.0
      %4487 = vmatprep.subr.mxu0 0.0
      %4488 = vmatpush1.msra.mxu0 0.0
      %4489 = vmatprep.subr.mxu0 0.0
      %4490 = vmatpush1.msra.mxu0 0.0
      %4491 = vmatprep.subr.mxu0 0.0
      %4492 = vmatpush1.msra.mxu0 0.0
      %4493 = vmatprep.subr.mxu0 0.0
      %4494 = vmatpush1.msra.mxu0 0.0
      %4495 = vmatprep.subr.mxu0 0.0
      %4496 = vmatpush1.msra.mxu0 0.0
      %4497 = vmatprep.subr.mxu0 0.0
      %4498 = vmatpush1.msra.mxu0 0.0
      %4499 = vmatprep.subr.mxu0 0.0
      %4500 = vmatpush1.msra.mxu0 0.0
      %4501 = vmatprep.subr.mxu0 0.0
      %4502 = vmatpush1.msra.mxu0 0.0
      %4503 = vmatprep.subr.mxu0 0.0
      %4504 = vmatpush1.msra.mxu0 0.0
      %4505 = vmatprep.subr.mxu0 0.0
      %4506 = vmatpush1.msra.mxu0 0.0
      %4507 = vmatprep.subr.mxu0 0.0
      %4508 = vmatpush1.msra.mxu0 0.0
      %4509 = vmatprep.subr.mxu0 0.0
      %4510 = vmatpush1.msra.mxu0 0.0
      %4511 = vmatprep.subr.mxu0 0.0
      %4512 = vmatpush1.msra.mxu0 0.0
      %4513 = vmatprep.mubr.f32.mxu0 0.0
      %4514 = vmatmul.mubr.f32.gmra.mrb[0].mxu0 %v3516
      %v4515 = vpop.f32.mrb[0].mxu0
      %v4516 = vadd.f32 0.0, %v4515
      %v4517 = vpop.f32.mrb[0].mxu0
      %4518 = vmatprep.mubr.f32.mxu0 0.0
      %4519 = vmatmul.mubr.f32.gmra.mrb[0].mxu0 %v3519
      %v4520 = vpop.f32.mrb[0].mxu0
      %v4521 = vadd.f32 0.0, %v4520
      %v4522 = vpop.f32.mrb[0].mxu0
      %4523 = vmatprep.mubr.f32.mxu0 0.0
      %4524 = vmatmul.mubr.f32.gmra.mrb[0].mxu0 %v3522
      %v4525 = vpop.f32.mrb[0].mxu0
      %v4526 = vadd.f32 0.0, %v4525
      %v4527 = vpop.f32.mrb[0].mxu0
      %4528 = vmatprep.mubr.f32.mxu0 0.0
      %4529 = vmatmul.mubr.f32.gmra.mrb[0].mxu0 %v3525
      %v4530 = vpop.f32.mrb[0].mxu0
      %v4531 = vadd.f32 0.0, %v4530
      %v4532 = vpop.f32.mrb[0].mxu0
      %4533 = vdwg.mxu0
      %4534 = vset.pattern.permute.xlu0 3
      %4535 = vperm.xlu0 %4534, %v2964
      %v4536 = vpop.permute.xlu0 %4535
      %4538 = vset.pattern.permute.xlu0 3
      %4539 = vperm.xlu0 %4538, %v2965
      %v4540 = vpop.permute.xlu0 %4539
      %4542 = vset.pattern.permute.xlu0 3
      %4543 = vperm.xlu0 %4542, %v2966
      %v4544 = vpop.permute.xlu0 %4543
      %4546 = vset.pattern.permute.xlu0 3
      %4547 = vperm.xlu0 %4546, %v2967
      %v4548 = vpop.permute.xlu0 %4547
      %v4550 = vmul.f32 %v4516, %v4536
      %v4551 = vmul.f32 %v4521, %v4540
      %v4552 = vmul.f32 %v4526, %v4544
      %v4553 = vmul.f32 %v4531, %v4548
      %v4554 = vadd.f32 %v4550, %v3141
      %v4555 = vadd.f32 %v4551, %v3146
      %v4556 = vadd.f32 %v4552, %v3151
      %v4557 = vadd.f32 %v4553, %v3156
      %v4558 = vld [vmem:[%s45] sm:$0xff]
      %v4559 = vld [vmem:[%s45 + $0x8] sm:$0x1]
      %v4560 = vld [vmem:[%s47] sm:$0xff]
      %v4561 = vld [vmem:[%s47 + $0x8] sm:$0xff]
      %v4562 = vld [vmem:[%s47 + $0x10] sm:$0xff]
      %v4563 = vld [vmem:[%s47 + $0x18] sm:$0xff]
      %v4564 = vld [vmem:[%s47 + $0x20] sm:$0xff]
      %v4565 = vld [vmem:[%s47 + $0x28] sm:$0xff]
      %v4566 = vld [vmem:[%s47 + $0x30] sm:$0xff]
      %v4567 = vld [vmem:[%s47 + $0x38] sm:$0xff]
      %v4568 = vld [vmem:[%s47 + $0x40] sm:$0xff]
      %v4569 = vld [vmem:[%s49] sm:$0xff]
      %v4570 = vld [vmem:[%s49 + $0x8] sm:$0xff]
      %v4571 = vld [vmem:[%s49 + $0x10] sm:$0xff]
      %v4572 = vld [vmem:[%s49 + $0x18] sm:$0xff]
      %v4573 = vld [vmem:[%s49 + $0x20] sm:$0xff]
      %v4574 = vld [vmem:[%s49 + $0x28] sm:$0xff]
      %v4575 = vld [vmem:[%s49 + $0x30] sm:$0xff]
      %v4576 = vld [vmem:[%s49 + $0x38] sm:$0xff]
      %v4577 = vld [vmem:[%s49 + $0x40] sm:$0xff]
      %v4578 = vld [vmem:[%s51] sm:$0xff]
      %v4579 = vld [vmem:[%s51 + $0x8] sm:$0x1]
      %v4580 = vld [vmem:[%s53] sm:$0xff]
      %v4581 = vld [vmem:[%s53 + $0x8] sm:$0xff]
      %v4582 = vld [vmem:[%s53 + $0x10] sm:$0xff]
      %v4583 = vld [vmem:[%s53 + $0x18] sm:$0xff]
      %v4584 = vld [vmem:[%s53 + $0x20] sm:$0xff]
      %v4585 = vld [vmem:[%s53 + $0x28] sm:$0xff]
      %v4586 = vld [vmem:[%s53 + $0x30] sm:$0xff]
      %v4587 = vld [vmem:[%s53 + $0x38] sm:$0xff]
      %v4588 = vld [vmem:[%s53 + $0x40] sm:$0xff]
      %v4589 = vld [vmem:[%s55] sm:$0xff]
      %v4590 = vld [vmem:[%s55 + $0x8] sm:$0xff]
      %v4591 = vld [vmem:[%s55 + $0x10] sm:$0xff]
      %v4592 = vld [vmem:[%s55 + $0x18] sm:$0xff]
      %v4593 = vld [vmem:[%s55 + $0x20] sm:$0xff]
      %v4594 = vld [vmem:[%s55 + $0x28] sm:$0xff]
      %v4595 = vld [vmem:[%s55 + $0x30] sm:$0xff]
      %v4596 = vld [vmem:[%s55 + $0x38] sm:$0xff]
      %v4597 = vld [vmem:[%s55 + $0x40] sm:$0xff]
      %s4598 = scalar_lea.vmem %s7, 128
      %v4599 = vld [vmem:[%s4598] sm:$0xff]
      %v4600 = vld [vmem:[%s4598 + $0x8] sm:$0xff]
      %v4601 = vld [vmem:[%s4598 + $0x10] sm:$0xff]
      %v4602 = vld [vmem:[%s4598 + $0x18] sm:$0xff]
      %v4603 = vld [vmem:[%s4598 + $0x20] sm:$0xff]
      %v4604 = vld [vmem:[%s4598 + $0x28] sm:$0xff]
      %v4605 = vld [vmem:[%s4598 + $0x30] sm:$0xff]
      %v4606 = vld [vmem:[%s4598 + $0x38] sm:$0xff]
      %s4607 = scalar_lea.vmem %s9, 128
      %v4608 = vld [vmem:[%s4607] sm:$0xff]
      %v4609 = vld [vmem:[%s4607 + $0x8] sm:$0xff]
      %v4610 = vld [vmem:[%s4607 + $0x10] sm:$0xff]
      %v4611 = vld [vmem:[%s4607 + $0x18] sm:$0xff]
      %v4612 = vld [vmem:[%s4607 + $0x20] sm:$0xff]
      %v4613 = vld [vmem:[%s4607 + $0x28] sm:$0xff]
      %v4614 = vld [vmem:[%s4607 + $0x30] sm:$0xff]
      %v4615 = vld [vmem:[%s4607 + $0x38] sm:$0xff]
      %s4616 = scalar_lea.vmem %s11, 64
      %v4617 = vld [vmem:[%s4616] sm:$0xff]
      %v4618 = vld [vmem:[%s4616 + $0x8] sm:$0xff]
      %v4619 = vld [vmem:[%s4616 + $0x10] sm:$0xff]
      %v4620 = vld [vmem:[%s4616 + $0x18] sm:$0xff]
      %s4621 = scalar_lea.vmem %s13, 64
      %v4622 = vld [vmem:[%s4621] sm:$0xff]
      %v4623 = vld [vmem:[%s4621 + $0x8] sm:$0xff]
      %v4624 = vld [vmem:[%s4621 + $0x10] sm:$0xff]
      %v4625 = vld [vmem:[%s4621 + $0x18] sm:$0xff]
      %s4626 = scalar_lea.vmem %s15, 2
      %v4627 = vld [vmem:[%s4626] sm:$0x1]
      %s4628 = scalar_lea.vmem %s17, 16
      %v4629 = vld [vmem:[%s4628] sm:$0x7f]
      %s4630 = scalar_lea.vmem %s19, 16
      %v4631 = vld [vmem:[%s4630] sm:$0xff]
      %4636 = vrot.lane.b32.xlu0 %v4554, 96
      %v4637 = vpop.permute.xlu0 %4636
      %4638 = vrot.lane.b32.xlu0 %v4555, 96
      %v4639 = vpop.permute.xlu0 %4638
      %4640 = vrot.lane.b32.xlu0 %v4556, 96
      %v4641 = vpop.permute.xlu0 %4640
      %4642 = vrot.lane.b32.xlu0 %v4557, 96
      %v4643 = vpop.permute.xlu0 %4642
      %4649 = vset.pattern.permute.xlu0 0
      %4650 = vperm.xlu0 %4649, %v4608
      %v4651 = vpop.permute.xlu0 %4650
      %4654 = vset.pattern.permute.xlu0 0
      %4655 = vperm.xlu0 %4654, %v4609
      %v4656 = vpop.permute.xlu0 %4655
      %4659 = vset.pattern.permute.xlu0 0
      %4660 = vperm.xlu0 %4659, %v4610
      %v4661 = vpop.permute.xlu0 %4660
      %4664 = vset.pattern.permute.xlu0 0
      %4665 = vperm.xlu0 %4664, %v4611
      %v4666 = vpop.permute.xlu0 %4665
      %4669 = vset.pattern.permute.xlu0 0
      %4670 = vperm.xlu0 %4669, %v4612
      %v4671 = vpop.permute.xlu0 %4670
      %4674 = vset.pattern.permute.xlu0 0
      %4675 = vperm.xlu0 %4674, %v4613
      %v4676 = vpop.permute.xlu0 %4675
      %4679 = vset.pattern.permute.xlu0 0
      %4680 = vperm.xlu0 %4679, %v4614
      %v4681 = vpop.permute.xlu0 %4680
      %4684 = vset.pattern.permute.xlu0 0
      %4685 = vperm.xlu0 %4684, %v4615
      %v4686 = vpop.permute.xlu0 %4685
      %v4689 = vsel %vm1318, %v4599, 0
      %v4692 = vsel %vm1318, %v4600, 0
      %v4695 = vsel %vm1318, %v4601, 0
      %v4698 = vsel %vm1318, %v4602, 0
      %v4701 = vsel %vm1318, %v4603, 0
      %v4704 = vsel %vm1318, %v4604, 0
      %v4707 = vsel %vm1318, %v4605, 0
      %v4710 = vsel %vm1318, %v4606, 0
      %4712 = vmatprep.subr.mxu0 0.0
      %4713 = vmatpush1.msra.mxu0 %v4554
      %4714 = vmatprep.subr.mxu0 0.0
      %4715 = vmatpush1.msra.mxu0 %v4555
      %4716 = vmatprep.subr.mxu0 0.0
      %4717 = vmatpush1.msra.mxu0 %v4556
      %4718 = vmatprep.subr.mxu0 0.0
      %4719 = vmatpush1.msra.mxu0 %v4557
      %4720 = vmatprep.subr.mxu0 0.0
      %4721 = vmatpush1.msra.mxu0 %v4637
      %4722 = vmatprep.subr.mxu0 0.0
      %4723 = vmatpush1.msra.mxu0 %v4639
      %4724 = vmatprep.subr.mxu0 0.0
      %4725 = vmatpush1.msra.mxu0 %v4641
      %4726 = vmatprep.subr.mxu0 0.0
      %4727 = vmatpush1.msra.mxu0 %v4643
      %4728 = vmatprep.subr.mxu0 0.0
      %4729 = vmatpush1.msra.mxu0 0.0
      %4730 = vmatprep.subr.mxu0 0.0
      %4731 = vmatpush1.msra.mxu0 0.0
      %4732 = vmatprep.subr.mxu0 0.0
      %4733 = vmatpush1.msra.mxu0 0.0
      %4734 = vmatprep.subr.mxu0 0.0
      %4735 = vmatpush1.msra.mxu0 0.0
      %4736 = vmatprep.subr.mxu0 0.0
      %4737 = vmatpush1.msra.mxu0 0.0
      %4738 = vmatprep.subr.mxu0 0.0
      %4739 = vmatpush1.msra.mxu0 0.0
      %4740 = vmatprep.subr.mxu0 0.0
      %4741 = vmatpush1.msra.mxu0 0.0
      %4742 = vmatprep.subr.mxu0 0.0
      %4743 = vmatpush1.msra.mxu0 0.0
      %4744 = vmatprep.subr.mxu0 0.0
      %4745 = vmatpush1.msra.mxu0 0.0
      %4746 = vmatprep.subr.mxu0 0.0
      %4747 = vmatpush1.msra.mxu0 0.0
      %4748 = vmatprep.subr.mxu0 0.0
      %4749 = vmatpush1.msra.mxu0 0.0
      %4750 = vmatprep.subr.mxu0 0.0
      %4751 = vmatpush1.msra.mxu0 0.0
      %4752 = vmatprep.subr.mxu0 0.0
      %4753 = vmatpush1.msra.mxu0 0.0
      %4754 = vmatprep.subr.mxu0 0.0
      %4755 = vmatpush1.msra.mxu0 0.0
      %4756 = vmatprep.subr.mxu0 0.0
      %4757 = vmatpush1.msra.mxu0 0.0
      %4758 = vmatprep.subr.mxu0 0.0
      %4759 = vmatpush1.msra.mxu0 0.0
      %4760 = vmatprep.subr.mxu0 0.0
      %4761 = vmatpush1.msra.mxu0 0.0
      %4762 = vmatprep.subr.mxu0 0.0
      %4763 = vmatpush1.msra.mxu0 0.0
      %4764 = vmatprep.subr.mxu0 0.0
      %4765 = vmatpush1.msra.mxu0 0.0
      %4766 = vmatprep.subr.mxu0 0.0
      %4767 = vmatpush1.msra.mxu0 0.0
      %4768 = vmatprep.subr.mxu0 0.0
      %4769 = vmatpush1.msra.mxu0 0.0
      %4770 = vmatprep.subr.mxu0 0.0
      %4771 = vmatpush1.msra.mxu0 0.0
      %4772 = vmatprep.subr.mxu0 0.0
      %4773 = vmatpush1.msra.mxu0 0.0
      %4774 = vmatprep.subr.mxu0 0.0
      %4775 = vmatpush1.msra.mxu0 0.0
      %4776 = vmatprep.mubr.f32.mxu0 0.0
      %4777 = vmatmul.mubr.f32.gmra.mrb[0].mxu0 %v4689
      %v4778 = vpop.f32.mrb[0].mxu0
      %v4779 = vadd.f32 %v4651, %v4778
      %v4780 = vpop.f32.mrb[0].mxu0
      %4781 = vmatprep.mubr.f32.mxu0 0.0
      %4782 = vmatmul.mubr.f32.gmra.mrb[0].mxu0 %v4692
      %v4783 = vpop.f32.mrb[0].mxu0
      %v4784 = vadd.f32 %v4656, %v4783
      %v4785 = vpop.f32.mrb[0].mxu0
      %4786 = vmatprep.mubr.f32.mxu0 0.0
      %4787 = vmatmul.mubr.f32.gmra.mrb[0].mxu0 %v4695
      %v4788 = vpop.f32.mrb[0].mxu0
      %v4789 = vadd.f32 %v4661, %v4788
      %v4790 = vpop.f32.mrb[0].mxu0
      %4791 = vmatprep.mubr.f32.mxu0 0.0
      %4792 = vmatmul.mubr.f32.gmra.mrb[0].mxu0 %v4698
      %v4793 = vpop.f32.mrb[0].mxu0
      %v4794 = vadd.f32 %v4666, %v4793
      %v4795 = vpop.f32.mrb[0].mxu0
      %4796 = vmatprep.mubr.f32.mxu0 0.0
      %4797 = vmatmul.mubr.f32.gmra.mrb[0].mxu0 %v4701
      %v4798 = vpop.f32.mrb[0].mxu0
      %v4799 = vadd.f32 %v4671, %v4798
      %v4800 = vpop.f32.mrb[0].mxu0
      %4801 = vmatprep.mubr.f32.mxu0 0.0
      %4802 = vmatmul.mubr.f32.gmra.mrb[0].mxu0 %v4704
      %v4803 = vpop.f32.mrb[0].mxu0
      %v4804 = vadd.f32 %v4676, %v4803
      %v4805 = vpop.f32.mrb[0].mxu0
      %4806 = vmatprep.mubr.f32.mxu0 0.0
      %4807 = vmatmul.mubr.f32.gmra.mrb[0].mxu0 %v4707
      %v4808 = vpop.f32.mrb[0].mxu0
      %v4809 = vadd.f32 %v4681, %v4808
      %v4810 = vpop.f32.mrb[0].mxu0
      %4811 = vmatprep.mubr.f32.mxu0 0.0
      %4812 = vmatmul.mubr.f32.gmra.mrb[0].mxu0 %v4710
      %v4813 = vpop.f32.mrb[0].mxu0
      %v4814 = vadd.f32 %v4686, %v4813
      %v4815 = vpop.f32.mrb[0].mxu0
      %4816 = vdwg.mxu0
      %v4817 = vmax.f32 %v4779, 0.0
      %v4818 = vmax.f32 %v4784, 0.0
      %v4819 = vmax.f32 %v4789, 0.0
      %v4820 = vmax.f32 %v4794, 0.0
      %4822 = vset.pattern.permute.xlu0 0
      %4823 = vperm.xlu0 %4822, %v4622
      %v4824 = vpop.permute.xlu0 %4823
      %4827 = vset.pattern.permute.xlu0 0
      %4828 = vperm.xlu0 %4827, %v4623
      %v4829 = vpop.permute.xlu0 %4828
      %4832 = vset.pattern.permute.xlu0 0
      %4833 = vperm.xlu0 %4832, %v4624
      %v4834 = vpop.permute.xlu0 %4833
      %4837 = vset.pattern.permute.xlu0 0
      %4838 = vperm.xlu0 %4837, %v4625
      %v4839 = vpop.permute.xlu0 %4838
      %v4841 = vmul.f32 %v4817, %v4824
      %v4842 = vmul.f32 %v4818, %v4829
      %v4843 = vmul.f32 %v4819, %v4834
      %v4844 = vmul.f32 %v4820, %v4839
      %4845 = vset.pattern.permute.xlu0 1
      %4846 = vperm.xlu0 %4845, %v4622
      %v4847 = vpop.permute.xlu0 %4846
      %4849 = vset.pattern.permute.xlu0 1
      %4850 = vperm.xlu0 %4849, %v4623
      %v4851 = vpop.permute.xlu0 %4850
      %4853 = vset.pattern.permute.xlu0 1
      %4854 = vperm.xlu0 %4853, %v4624
      %v4855 = vpop.permute.xlu0 %4854
      %4857 = vset.pattern.permute.xlu0 1
      %4858 = vperm.xlu0 %4857, %v4625
      %v4859 = vpop.permute.xlu0 %4858
      %v4861 = vadd.f32 %v4841, %v4847
      %v4862 = vadd.f32 %v4842, %v4851
      %v4863 = vadd.f32 %v4843, %v4855
      %v4864 = vadd.f32 %v4844, %v4859
      %vm4865 = vcmask 588800
      %v4867 = vsel %vm4865, %v4861, 0
      %v4870 = vsel %vm4865, %v4862, 0
      %v4873 = vsel %vm4865, %v4863, 0
      %v4876 = vsel %vm4865, %v4864, 0
      %4878 = vmatprep.subr.mxu0 0.0
      %4879 = vmatpush1.msra.mxu0 %v4569
      %4880 = vmatprep.subr.mxu0 0.0
      %4881 = vmatpush1.msra.mxu0 %v4570
      %4882 = vmatprep.subr.mxu0 0.0
      %4883 = vmatpush1.msra.mxu0 %v4571
      %4884 = vmatprep.subr.mxu0 0.0
      %4885 = vmatpush1.msra.mxu0 %v4572
      %4886 = vmatprep.subr.mxu0 0.0
      %4887 = vmatpush1.msra.mxu0 %v4573
      %4888 = vmatprep.subr.mxu0 0.0
      %4889 = vmatpush1.msra.mxu0 %v4574
      %4890 = vmatprep.subr.mxu0 0.0
      %4891 = vmatpush1.msra.mxu0 %v4575
      %4892 = vmatprep.subr.mxu0 0.0
      %4893 = vmatpush1.msra.mxu0 %v4576
      %4894 = vmatprep.subr.mxu0 0.0
      %4895 = vmatpush1.msra.mxu0 %v4577
      %4896 = vmatprep.subr.mxu0 0.0
      %4897 = vmatpush1.msra.mxu0 0.0
      %4898 = vmatprep.subr.mxu0 0.0
      %4899 = vmatpush1.msra.mxu0 0.0
      %4900 = vmatprep.subr.mxu0 0.0
      %4901 = vmatpush1.msra.mxu0 0.0
      %4902 = vmatprep.subr.mxu0 0.0
      %4903 = vmatpush1.msra.mxu0 0.0
      %4904 = vmatprep.subr.mxu0 0.0
      %4905 = vmatpush1.msra.mxu0 0.0
      %4906 = vmatprep.subr.mxu0 0.0
      %4907 = vmatpush1.msra.mxu0 0.0
      %4908 = vmatprep.subr.mxu0 0.0
      %4909 = vmatpush1.msra.mxu0 0.0
      %4910 = vmatprep.subr.mxu0 0.0
      %4911 = vmatpush1.msra.mxu0 0.0
      %4912 = vmatprep.subr.mxu0 0.0
      %4913 = vmatpush1.msra.mxu0 0.0
      %4914 = vmatprep.subr.mxu0 0.0
      %4915 = vmatpush1.msra.mxu0 0.0
      %4916 = vmatprep.subr.mxu0 0.0
      %4917 = vmatpush1.msra.mxu0 0.0
      %4918 = vmatprep.subr.mxu0 0.0
      %4919 = vmatpush1.msra.mxu0 0.0
      %4920 = vmatprep.subr.mxu0 0.0
      %4921 = vmatpush1.msra.mxu0 0.0
      %4922 = vmatprep.subr.mxu0 0.0
      %4923 = vmatpush1.msra.mxu0 0.0
      %4924 = vmatprep.subr.mxu0 0.0
      %4925 = vmatpush1.msra.mxu0 0.0
      %4926 = vmatprep.subr.mxu0 0.0
      %4927 = vmatpush1.msra.mxu0 0.0
      %4928 = vmatprep.subr.mxu0 0.0
      %4929 = vmatpush1.msra.mxu0 0.0
      %4930 = vmatprep.subr.mxu0 0.0
      %4931 = vmatpush1.msra.mxu0 0.0
      %4932 = vmatprep.subr.mxu0 0.0
      %4933 = vmatpush1.msra.mxu0 0.0
      %4934 = vmatprep.subr.mxu0 0.0
      %4935 = vmatpush1.msra.mxu0 0.0
      %4936 = vmatprep.subr.mxu0 0.0
      %4937 = vmatpush1.msra.mxu0 0.0
      %4938 = vmatprep.subr.mxu0 0.0
      %4939 = vmatpush1.msra.mxu0 0.0
      %4940 = vmatprep.subr.mxu0 0.0
      %4941 = vmatpush1.msra.mxu0 0.0
      %4942 = vmatprep.mubr.f32.mxu0 0.0
      %4943 = vmatmul.mubr.f32.gmra.mrb[0].mxu0 %v4867
      %v4944 = vpop.f32.mrb[0].mxu0
      %v4945 = vadd.f32 0.0, %v4944
      %v4946 = vpop.f32.mrb[0].mxu0
      %4947 = vmatprep.mubr.f32.mxu0 0.0
      %4948 = vmatmul.mubr.f32.gmra.mrb[0].mxu0 %v4870
      %v4949 = vpop.f32.mrb[0].mxu0
      %v4950 = vadd.f32 0.0, %v4949
      %v4951 = vpop.f32.mrb[0].mxu0
      %4952 = vmatprep.mubr.f32.mxu0 0.0
      %4953 = vmatmul.mubr.f32.gmra.mrb[0].mxu0 %v4873
      %v4954 = vpop.f32.mrb[0].mxu0
      %v4955 = vadd.f32 0.0, %v4954
      %v4956 = vpop.f32.mrb[0].mxu0
      %4957 = vmatprep.mubr.f32.mxu0 0.0
      %4958 = vmatmul.mubr.f32.gmra.mrb[0].mxu0 %v4876
      %v4959 = vpop.f32.mrb[0].mxu0
      %v4960 = vadd.f32 0.0, %v4959
      %v4961 = vpop.f32.mrb[0].mxu0
      %4962 = vdwg.mxu0
      %v4964 = vsel %vm4865, %v4945, 0
      %v4967 = vsel %vm4865, %v4950, 0
      %v4970 = vsel %vm4865, %v4955, 0
      %v4973 = vsel %vm4865, %v4960, 0
      %4975 = vmatprep.subr.mxu0 0.0
      %4976 = vmatpush1.msra.mxu0 %v4569
      %4977 = vmatprep.subr.mxu0 0.0
      %4978 = vmatpush1.msra.mxu0 %v4570
      %4979 = vmatprep.subr.mxu0 0.0
      %4980 = vmatpush1.msra.mxu0 %v4571
      %4981 = vmatprep.subr.mxu0 0.0
      %4982 = vmatpush1.msra.mxu0 %v4572
      %4983 = vmatprep.subr.mxu0 0.0
      %4984 = vmatpush1.msra.mxu0 %v4573
      %4985 = vmatprep.subr.mxu0 0.0
      %4986 = vmatpush1.msra.mxu0 %v4574
      %4987 = vmatprep.subr.mxu0 0.0
      %4988 = vmatpush1.msra.mxu0 %v4575
      %4989 = vmatprep.subr.mxu0 0.0
      %4990 = vmatpush1.msra.mxu0 %v4576
      %4991 = vmatprep.subr.mxu0 0.0
      %4992 = vmatpush1.msra.mxu0 %v4577
      %4993 = vmatprep.subr.mxu0 0.0
      %4994 = vmatpush1.msra.mxu0 0.0
      %4995 = vmatprep.subr.mxu0 0.0
      %4996 = vmatpush1.msra.mxu0 0.0
      %4997 = vmatprep.subr.mxu0 0.0
      %4998 = vmatpush1.msra.mxu0 0.0
      %4999 = vmatprep.subr.mxu0 0.0
      %5000 = vmatpush1.msra.mxu0 0.0
      %5001 = vmatprep.subr.mxu0 0.0
      %5002 = vmatpush1.msra.mxu0 0.0
      %5003 = vmatprep.subr.mxu0 0.0
      %5004 = vmatpush1.msra.mxu0 0.0
      %5005 = vmatprep.subr.mxu0 0.0
      %5006 = vmatpush1.msra.mxu0 0.0
      %5007 = vmatprep.subr.mxu0 0.0
      %5008 = vmatpush1.msra.mxu0 0.0
      %5009 = vmatprep.subr.mxu0 0.0
      %5010 = vmatpush1.msra.mxu0 0.0
      %5011 = vmatprep.subr.mxu0 0.0
      %5012 = vmatpush1.msra.mxu0 0.0
      %5013 = vmatprep.subr.mxu0 0.0
      %5014 = vmatpush1.msra.mxu0 0.0
      %5015 = vmatprep.subr.mxu0 0.0
      %5016 = vmatpush1.msra.mxu0 0.0
      %5017 = vmatprep.subr.mxu0 0.0
      %5018 = vmatpush1.msra.mxu0 0.0
      %5019 = vmatprep.subr.mxu0 0.0
      %5020 = vmatpush1.msra.mxu0 0.0
      %5021 = vmatprep.subr.mxu0 0.0
      %5022 = vmatpush1.msra.mxu0 0.0
      %5023 = vmatprep.subr.mxu0 0.0
      %5024 = vmatpush1.msra.mxu0 0.0
      %5025 = vmatprep.subr.mxu0 0.0
      %5026 = vmatpush1.msra.mxu0 0.0
      %5027 = vmatprep.subr.mxu0 0.0
      %5028 = vmatpush1.msra.mxu0 0.0
      %5029 = vmatprep.subr.mxu0 0.0
      %5030 = vmatpush1.msra.mxu0 0.0
      %5031 = vmatprep.subr.mxu0 0.0
      %5032 = vmatpush1.msra.mxu0 0.0
      %5033 = vmatprep.subr.mxu0 0.0
      %5034 = vmatpush1.msra.mxu0 0.0
      %5035 = vmatprep.subr.mxu0 0.0
      %5036 = vmatpush1.msra.mxu0 0.0
      %5037 = vmatprep.subr.mxu0 0.0
      %5038 = vmatpush1.msra.mxu0 0.0
      %5039 = vmatprep.mubr.f32.mxu0 0.0
      %5040 = vmatmul.mubr.f32.gmra.mrb[0].mxu0 %v4964
      %v5041 = vpop.f32.mrb[0].mxu0
      %v5042 = vadd.f32 0.0, %v5041
      %v5043 = vpop.f32.mrb[0].mxu0
      %5044 = vmatprep.mubr.f32.mxu0 0.0
      %5045 = vmatmul.mubr.f32.gmra.mrb[0].mxu0 %v4967
      %v5046 = vpop.f32.mrb[0].mxu0
      %v5047 = vadd.f32 0.0, %v5046
      %v5048 = vpop.f32.mrb[0].mxu0
      %5049 = vmatprep.mubr.f32.mxu0 0.0
      %5050 = vmatmul.mubr.f32.gmra.mrb[0].mxu0 %v4970
      %v5051 = vpop.f32.mrb[0].mxu0
      %v5052 = vadd.f32 0.0, %v5051
      %v5053 = vpop.f32.mrb[0].mxu0
      %5054 = vmatprep.mubr.f32.mxu0 0.0
      %5055 = vmatmul.mubr.f32.gmra.mrb[0].mxu0 %v4973
      %v5056 = vpop.f32.mrb[0].mxu0
      %v5057 = vadd.f32 0.0, %v5056
      %v5058 = vpop.f32.mrb[0].mxu0
      %5059 = vdwg.mxu0
      %5060 = vset.pattern.permute.xlu0 2
      %5061 = vperm.xlu0 %5060, %v4622
      %v5062 = vpop.permute.xlu0 %5061
      %5064 = vset.pattern.permute.xlu0 2
      %5065 = vperm.xlu0 %5064, %v4623
      %v5066 = vpop.permute.xlu0 %5065
      %5068 = vset.pattern.permute.xlu0 2
      %5069 = vperm.xlu0 %5068, %v4624
      %v5070 = vpop.permute.xlu0 %5069
      %5072 = vset.pattern.permute.xlu0 2
      %5073 = vperm.xlu0 %5072, %v4625
      %v5074 = vpop.permute.xlu0 %5073
      %v5077 = vsel %vm1707, %v4617, 0
      %v5080 = vsel %vm1707, %v4618, 0
      %v5083 = vsel %vm1707, %v4619, 0
      %v5086 = vsel %vm1707, %v4620, 0
      %5088 = vmatprep.subr.mxu0 0.0
      %5089 = vmatpush1.msra.mxu0 %v4861
      %5090 = vmatprep.subr.mxu0 0.0
      %5091 = vmatpush1.msra.mxu0 %v4862
      %5092 = vmatprep.subr.mxu0 0.0
      %5093 = vmatpush1.msra.mxu0 %v4863
      %5094 = vmatprep.subr.mxu0 0.0
      %5095 = vmatpush1.msra.mxu0 %v4864
      %5096 = vmatprep.subr.mxu0 0.0
      %5097 = vmatpush1.msra.mxu0 %v4945
      %5098 = vmatprep.subr.mxu0 0.0
      %5099 = vmatpush1.msra.mxu0 %v4950
      %5100 = vmatprep.subr.mxu0 0.0
      %5101 = vmatpush1.msra.mxu0 %v4955
      %5102 = vmatprep.subr.mxu0 0.0
      %5103 = vmatpush1.msra.mxu0 %v4960
      %5104 = vmatprep.subr.mxu0 0.0
      %5105 = vmatpush1.msra.mxu0 %v5042
      %5106 = vmatprep.subr.mxu0 0.0
      %5107 = vmatpush1.msra.mxu0 %v5047
      %5108 = vmatprep.subr.mxu0 0.0
      %5109 = vmatpush1.msra.mxu0 %v5052
      %5110 = vmatprep.subr.mxu0 0.0
      %5111 = vmatpush1.msra.mxu0 %v5057
      %5112 = vmatprep.subr.mxu0 0.0
      %5113 = vmatpush1.msra.mxu0 0.0
      %5114 = vmatprep.subr.mxu0 0.0
      %5115 = vmatpush1.msra.mxu0 0.0
      %5116 = vmatprep.subr.mxu0 0.0
      %5117 = vmatpush1.msra.mxu0 0.0
      %5118 = vmatprep.subr.mxu0 0.0
      %5119 = vmatpush1.msra.mxu0 0.0
      %5120 = vmatprep.subr.mxu0 0.0
      %5121 = vmatpush1.msra.mxu0 0.0
      %5122 = vmatprep.subr.mxu0 0.0
      %5123 = vmatpush1.msra.mxu0 0.0
      %5124 = vmatprep.subr.mxu0 0.0
      %5125 = vmatpush1.msra.mxu0 0.0
      %5126 = vmatprep.subr.mxu0 0.0
      %5127 = vmatpush1.msra.mxu0 0.0
      %5128 = vmatprep.subr.mxu0 0.0
      %5129 = vmatpush1.msra.mxu0 0.0
      %5130 = vmatprep.subr.mxu0 0.0
      %5131 = vmatpush1.msra.mxu0 0.0
      %5132 = vmatprep.subr.mxu0 0.0
      %5133 = vmatpush1.msra.mxu0 0.0
      %5134 = vmatprep.subr.mxu0 0.0
      %5135 = vmatpush1.msra.mxu0 0.0
      %5136 = vmatprep.subr.mxu0 0.0
      %5137 = vmatpush1.msra.mxu0 0.0
      %5138 = vmatprep.subr.mxu0 0.0
      %5139 = vmatpush1.msra.mxu0 0.0
      %5140 = vmatprep.subr.mxu0 0.0
      %5141 = vmatpush1.msra.mxu0 0.0
      %5142 = vmatprep.subr.mxu0 0.0
      %5143 = vmatpush1.msra.mxu0 0.0
      %5144 = vmatprep.subr.mxu0 0.0
      %5145 = vmatpush1.msra.mxu0 0.0
      %5146 = vmatprep.subr.mxu0 0.0
      %5147 = vmatpush1.msra.mxu0 0.0
      %5148 = vmatprep.subr.mxu0 0.0
      %5149 = vmatpush1.msra.mxu0 0.0
      %5150 = vmatprep.subr.mxu0 0.0
      %5151 = vmatpush1.msra.mxu0 0.0
      %5152 = vmatprep.mubr.f32.mxu0 0.0
      %5153 = vmatmul.mubr.f32.gmra.mrb[0].mxu0 %v5077
      %v5154 = vpop.f32.mrb[0].mxu0
      %v5155 = vadd.f32 %v5062, %v5154
      %v5156 = vpop.f32.mrb[0].mxu0
      %5157 = vmatprep.mubr.f32.mxu0 0.0
      %5158 = vmatmul.mubr.f32.gmra.mrb[0].mxu0 %v5080
      %v5159 = vpop.f32.mrb[0].mxu0
      %v5160 = vadd.f32 %v5066, %v5159
      %v5161 = vpop.f32.mrb[0].mxu0
      %5162 = vmatprep.mubr.f32.mxu0 0.0
      %5163 = vmatmul.mubr.f32.gmra.mrb[0].mxu0 %v5083
      %v5164 = vpop.f32.mrb[0].mxu0
      %v5165 = vadd.f32 %v5070, %v5164
      %v5166 = vpop.f32.mrb[0].mxu0
      %5167 = vmatprep.mubr.f32.mxu0 0.0
      %5168 = vmatmul.mubr.f32.gmra.mrb[0].mxu0 %v5086
      %v5169 = vpop.f32.mrb[0].mxu0
      %v5170 = vadd.f32 %v5074, %v5169
      %v5171 = vpop.f32.mrb[0].mxu0
      %5172 = vdwg.mxu0
      %v5174 = vsel %vm4865, %v5155, 0
      %v5177 = vsel %vm4865, %v5160, 0
      %v5180 = vsel %vm4865, %v5165, 0
      %v5183 = vsel %vm4865, %v5170, 0
      %5185 = vmatprep.subr.mxu0 0.0
      %5186 = vmatpush1.msra.mxu0 %v4560
      %5187 = vmatprep.subr.mxu0 0.0
      %5188 = vmatpush1.msra.mxu0 %v4561
      %5189 = vmatprep.subr.mxu0 0.0
      %5190 = vmatpush1.msra.mxu0 %v4562
      %5191 = vmatprep.subr.mxu0 0.0
      %5192 = vmatpush1.msra.mxu0 %v4563
      %5193 = vmatprep.subr.mxu0 0.0
      %5194 = vmatpush1.msra.mxu0 %v4564
      %5195 = vmatprep.subr.mxu0 0.0
      %5196 = vmatpush1.msra.mxu0 %v4565
      %5197 = vmatprep.subr.mxu0 0.0
      %5198 = vmatpush1.msra.mxu0 %v4566
      %5199 = vmatprep.subr.mxu0 0.0
      %5200 = vmatpush1.msra.mxu0 %v4567
      %5201 = vmatprep.subr.mxu0 0.0
      %5202 = vmatpush1.msra.mxu0 %v4568
      %5203 = vmatprep.subr.mxu0 0.0
      %5204 = vmatpush1.msra.mxu0 0.0
      %5205 = vmatprep.subr.mxu0 0.0
      %5206 = vmatpush1.msra.mxu0 0.0
      %5207 = vmatprep.subr.mxu0 0.0
      %5208 = vmatpush1.msra.mxu0 0.0
      %5209 = vmatprep.subr.mxu0 0.0
      %5210 = vmatpush1.msra.mxu0 0.0
      %5211 = vmatprep.subr.mxu0 0.0
      %5212 = vmatpush1.msra.mxu0 0.0
      %5213 = vmatprep.subr.mxu0 0.0
      %5214 = vmatpush1.msra.mxu0 0.0
      %5215 = vmatprep.subr.mxu0 0.0
      %5216 = vmatpush1.msra.mxu0 0.0
      %5217 = vmatprep.subr.mxu0 0.0
      %5218 = vmatpush1.msra.mxu0 0.0
      %5219 = vmatprep.subr.mxu0 0.0
      %5220 = vmatpush1.msra.mxu0 0.0
      %5221 = vmatprep.subr.mxu0 0.0
      %5222 = vmatpush1.msra.mxu0 0.0
      %5223 = vmatprep.subr.mxu0 0.0
      %5224 = vmatpush1.msra.mxu0 0.0
      %5225 = vmatprep.subr.mxu0 0.0
      %5226 = vmatpush1.msra.mxu0 0.0
      %5227 = vmatprep.subr.mxu0 0.0
      %5228 = vmatpush1.msra.mxu0 0.0
      %5229 = vmatprep.subr.mxu0 0.0
      %5230 = vmatpush1.msra.mxu0 0.0
      %5231 = vmatprep.subr.mxu0 0.0
      %5232 = vmatpush1.msra.mxu0 0.0
      %5233 = vmatprep.subr.mxu0 0.0
      %5234 = vmatpush1.msra.mxu0 0.0
      %5235 = vmatprep.subr.mxu0 0.0
      %5236 = vmatpush1.msra.mxu0 0.0
      %5237 = vmatprep.subr.mxu0 0.0
      %5238 = vmatpush1.msra.mxu0 0.0
      %5239 = vmatprep.subr.mxu0 0.0
      %5240 = vmatpush1.msra.mxu0 0.0
      %5241 = vmatprep.subr.mxu0 0.0
      %5242 = vmatpush1.msra.mxu0 0.0
      %5243 = vmatprep.subr.mxu0 0.0
      %5244 = vmatpush1.msra.mxu0 0.0
      %5245 = vmatprep.subr.mxu0 0.0
      %5246 = vmatpush1.msra.mxu0 0.0
      %5247 = vmatprep.subr.mxu0 0.0
      %5248 = vmatpush1.msra.mxu0 0.0
      %5249 = vmatprep.mubr.f32.mxu0 0.0
      %5250 = vmatmul.mubr.f32.gmra.mrb[0].mxu0 %v5174
      %v5251 = vpop.f32.mrb[0].mxu0
      %v5252 = vadd.f32 0.0, %v5251
      %v5253 = vpop.f32.mrb[0].mxu0
      %5254 = vmatprep.mubr.f32.mxu0 0.0
      %5255 = vmatmul.mubr.f32.gmra.mrb[0].mxu0 %v5177
      %v5256 = vpop.f32.mrb[0].mxu0
      %v5257 = vadd.f32 0.0, %v5256
      %v5258 = vpop.f32.mrb[0].mxu0
      %5259 = vmatprep.mubr.f32.mxu0 0.0
      %5260 = vmatmul.mubr.f32.gmra.mrb[0].mxu0 %v5180
      %v5261 = vpop.f32.mrb[0].mxu0
      %v5262 = vadd.f32 0.0, %v5261
      %v5263 = vpop.f32.mrb[0].mxu0
      %5264 = vmatprep.mubr.f32.mxu0 0.0
      %5265 = vmatmul.mubr.f32.gmra.mrb[0].mxu0 %v5183
      %v5266 = vpop.f32.mrb[0].mxu0
      %v5267 = vadd.f32 0.0, %v5266
      %v5268 = vpop.f32.mrb[0].mxu0
      %5269 = vdwg.mxu0
      %v5270 = vlaneseq
      %v5271 = vshrl.u32 %v5270, 7
      %v5272 = vsub.s32 0, %v5271
      %v5273 = vrot.slane %v4629, %v5272
      %v5274 = vmul.f32 %v5252, %v5273
      %v5275 = vmul.f32 %v5257, %v5273
      %v5276 = vmul.f32 %v5262, %v5273
      %v5277 = vmul.f32 %v5267, %v5273
      %v5278 = vlaneseq
      %v5279 = vshrl.u32 %v5278, 7
      %v5280 = vsub.s32 1, %v5279
      %v5281 = vrot.slane %v4629, %v5280
      %v5282 = vadd.f32 %v5274, %v5281
      %v5283 = vadd.f32 %v5275, %v5281
      %v5284 = vadd.f32 %v5276, %v5281
      %v5285 = vadd.f32 %v5277, %v5281
      %v5287 = vsel %vm1918, %v4558, 0
      %v5290 = vsel %vm1918, %v4559, 0
      %5292 = vmatprep.subr.mxu0 0.0
      %5293 = vmatpush1.msra.mxu0 %v5282
      %5294 = vmatprep.subr.mxu0 0.0
      %5295 = vmatpush1.msra.mxu0 %v5283
      %5296 = vmatprep.subr.mxu0 0.0
      %5297 = vmatpush1.msra.mxu0 %v5284
      %5298 = vmatprep.subr.mxu0 0.0
      %5299 = vmatpush1.msra.mxu0 %v5285
      %5300 = vmatprep.subr.mxu0 0.0
      %5301 = vmatpush1.msra.mxu0 0.0
      %5302 = vmatprep.subr.mxu0 0.0
      %5303 = vmatpush1.msra.mxu0 0.0
      %5304 = vmatprep.subr.mxu0 0.0
      %5305 = vmatpush1.msra.mxu0 0.0
      %5306 = vmatprep.subr.mxu0 0.0
      %5307 = vmatpush1.msra.mxu0 0.0
      %5308 = vmatprep.subr.mxu0 0.0
      %5309 = vmatpush1.msra.mxu0 0.0
      %5310 = vmatprep.subr.mxu0 0.0
      %5311 = vmatpush1.msra.mxu0 0.0
      %5312 = vmatprep.subr.mxu0 0.0
      %5313 = vmatpush1.msra.mxu0 0.0
      %5314 = vmatprep.subr.mxu0 0.0
      %5315 = vmatpush1.msra.mxu0 0.0
      %5316 = vmatprep.subr.mxu0 0.0
      %5317 = vmatpush1.msra.mxu0 0.0
      %5318 = vmatprep.subr.mxu0 0.0
      %5319 = vmatpush1.msra.mxu0 0.0
      %5320 = vmatprep.subr.mxu0 0.0
      %5321 = vmatpush1.msra.mxu0 0.0
      %5322 = vmatprep.subr.mxu0 0.0
      %5323 = vmatpush1.msra.mxu0 0.0
      %5324 = vmatprep.subr.mxu0 0.0
      %5325 = vmatpush1.msra.mxu0 0.0
      %5326 = vmatprep.subr.mxu0 0.0
      %5327 = vmatpush1.msra.mxu0 0.0
      %5328 = vmatprep.subr.mxu0 0.0
      %5329 = vmatpush1.msra.mxu0 0.0
      %5330 = vmatprep.subr.mxu0 0.0
      %5331 = vmatpush1.msra.mxu0 0.0
      %5332 = vmatprep.subr.mxu0 0.0
      %5333 = vmatpush1.msra.mxu0 0.0
      %5334 = vmatprep.subr.mxu0 0.0
      %5335 = vmatpush1.msra.mxu0 0.0
      %5336 = vmatprep.subr.mxu0 0.0
      %5337 = vmatpush1.msra.mxu0 0.0
      %5338 = vmatprep.subr.mxu0 0.0
      %5339 = vmatpush1.msra.mxu0 0.0
      %5340 = vmatprep.subr.mxu0 0.0
      %5341 = vmatpush1.msra.mxu0 0.0
      %5342 = vmatprep.subr.mxu0 0.0
      %5343 = vmatpush1.msra.mxu0 0.0
      %5344 = vmatprep.subr.mxu0 0.0
      %5345 = vmatpush1.msra.mxu0 0.0
      %5346 = vmatprep.subr.mxu0 0.0
      %5347 = vmatpush1.msra.mxu0 0.0
      %5348 = vmatprep.subr.mxu0 0.0
      %5349 = vmatpush1.msra.mxu0 0.0
      %5350 = vmatprep.subr.mxu0 0.0
      %5351 = vmatpush1.msra.mxu0 0.0
      %5352 = vmatprep.subr.mxu0 0.0
      %5353 = vmatpush1.msra.mxu0 0.0
      %5354 = vmatprep.subr.mxu0 0.0
      %5355 = vmatpush1.msra.mxu0 0.0
      %5356 = vmatprep.mubr.f32.mxu0 0.0
      %5357 = vmatmul.mubr.f32.gmra.mrb[0].mxu0 %v5287
      %v5358 = vpop.f32.mrb[0].mxu0
      %v5359 = vadd.f32 0.0, %v5358
      %v5360 = vpop.f32.mrb[0].mxu0
      %5361 = vmatprep.mubr.f32.mxu0 0.0
      %5362 = vmatmul.mubr.f32.gmra.mrb[0].mxu0 %v5290
      %v5363 = vpop.f32.mrb[0].mxu0
      %v5364 = vadd.f32 0.0, %v5363
      %v5365 = vpop.f32.mrb[0].mxu0
      %5366 = vdwg.mxu0
      %v5367 = vlaneseq
      %v5368 = vshrl.u32 %v5367, 7
      %v5369 = vsub.s32 2, %v5368
      %v5370 = vrot.slane %v4629, %v5369
      %v5371 = vmul.f32 %v5359, %v5370
      %v5372 = vmul.f32 %v5364, %v5370
      %v5373 = vlaneseq
      %v5374 = vshrl.u32 %v5373, 7
      %v5375 = vsub.s32 3, %v5374
      %v5376 = vrot.slane %v4629, %v5375
      %v5377 = vadd.f32 %v5371, %v5376
      %v5378 = vadd.f32 %v5372, %v5376
      %v5380 = vsel %vm1918, %v4627, 0
      %5382 = vmatprep.subr.mxu0 0.0
      %5383 = vmatpush1.msra.mxu0 %v5155
      %5384 = vmatprep.subr.mxu0 0.0
      %5385 = vmatpush1.msra.mxu0 %v5160
      %5386 = vmatprep.subr.mxu0 0.0
      %5387 = vmatpush1.msra.mxu0 %v5165
      %5388 = vmatprep.subr.mxu0 0.0
      %5389 = vmatpush1.msra.mxu0 %v5170
      %5390 = vmatprep.subr.mxu0 0.0
      %5391 = vmatpush1.msra.mxu0 0.0
      %5392 = vmatprep.subr.mxu0 0.0
      %5393 = vmatpush1.msra.mxu0 0.0
      %5394 = vmatprep.subr.mxu0 0.0
      %5395 = vmatpush1.msra.mxu0 0.0
      %5396 = vmatprep.subr.mxu0 0.0
      %5397 = vmatpush1.msra.mxu0 0.0
      %5398 = vmatprep.subr.mxu0 0.0
      %5399 = vmatpush1.msra.mxu0 0.0
      %5400 = vmatprep.subr.mxu0 0.0
      %5401 = vmatpush1.msra.mxu0 0.0
      %5402 = vmatprep.subr.mxu0 0.0
      %5403 = vmatpush1.msra.mxu0 0.0
      %5404 = vmatprep.subr.mxu0 0.0
      %5405 = vmatpush1.msra.mxu0 0.0
      %5406 = vmatprep.subr.mxu0 0.0
      %5407 = vmatpush1.msra.mxu0 0.0
      %5408 = vmatprep.subr.mxu0 0.0
      %5409 = vmatpush1.msra.mxu0 0.0
      %5410 = vmatprep.subr.mxu0 0.0
      %5411 = vmatpush1.msra.mxu0 0.0
      %5412 = vmatprep.subr.mxu0 0.0
      %5413 = vmatpush1.msra.mxu0 0.0
      %5414 = vmatprep.subr.mxu0 0.0
      %5415 = vmatpush1.msra.mxu0 0.0
      %5416 = vmatprep.subr.mxu0 0.0
      %5417 = vmatpush1.msra.mxu0 0.0
      %5418 = vmatprep.subr.mxu0 0.0
      %5419 = vmatpush1.msra.mxu0 0.0
      %5420 = vmatprep.subr.mxu0 0.0
      %5421 = vmatpush1.msra.mxu0 0.0
      %5422 = vmatprep.subr.mxu0 0.0
      %5423 = vmatpush1.msra.mxu0 0.0
      %5424 = vmatprep.subr.mxu0 0.0
      %5425 = vmatpush1.msra.mxu0 0.0
      %5426 = vmatprep.subr.mxu0 0.0
      %5427 = vmatpush1.msra.mxu0 0.0
      %5428 = vmatprep.subr.mxu0 0.0
      %5429 = vmatpush1.msra.mxu0 0.0
      %5430 = vmatprep.subr.mxu0 0.0
      %5431 = vmatpush1.msra.mxu0 0.0
      %5432 = vmatprep.subr.mxu0 0.0
      %5433 = vmatpush1.msra.mxu0 0.0
      %5434 = vmatprep.subr.mxu0 0.0
      %5435 = vmatpush1.msra.mxu0 0.0
      %5436 = vmatprep.subr.mxu0 0.0
      %5437 = vmatpush1.msra.mxu0 0.0
      %5438 = vmatprep.subr.mxu0 0.0
      %5439 = vmatpush1.msra.mxu0 0.0
      %5440 = vmatprep.subr.mxu0 0.0
      %5441 = vmatpush1.msra.mxu0 0.0
      %5442 = vmatprep.subr.mxu0 0.0
      %5443 = vmatpush1.msra.mxu0 0.0
      %5444 = vmatprep.subr.mxu0 0.0
      %5445 = vmatpush1.msra.mxu0 0.0
      %5446 = vmatprep.mubr.f32.mxu0 0.0
      %5447 = vmatmul.mubr.f32.gmra.mrb[0].mxu0 %v5380
      %v5448 = vpop.f32.mrb[0].mxu0
      %v5449 = vadd.f32 0.0, %v5448
      %v5450 = vpop.f32.mrb[0].mxu0
      %5451 = vdwg.mxu0
      %v5452 = vlaneseq
      %v5453 = vshrl.u32 %v5452, 7
      %v5454 = vsub.s32 0, %v5453
      %v5455 = vrot.slane %v5449, %v5454
      %v5456 = vmul.f32 %v4578, %v5455
      %v5457 = vmul.f32 %v4579, %v5455
      %v5459 = vsel %vm4865, %v5456, 0
      %v5462 = vsel %vm4865, %v5457, 0
      %5464 = vmatprep.subr.mxu0 0.0
      %5465 = vmatpush1.msra.mxu0 %v4580
      %5466 = vmatprep.subr.mxu0 0.0
      %5467 = vmatpush1.msra.mxu0 %v4581
      %5468 = vmatprep.subr.mxu0 0.0
      %5469 = vmatpush1.msra.mxu0 %v4582
      %5470 = vmatprep.subr.mxu0 0.0
      %5471 = vmatpush1.msra.mxu0 %v4583
      %5472 = vmatprep.subr.mxu0 0.0
      %5473 = vmatpush1.msra.mxu0 %v4584
      %5474 = vmatprep.subr.mxu0 0.0
      %5475 = vmatpush1.msra.mxu0 %v4585
      %5476 = vmatprep.subr.mxu0 0.0
      %5477 = vmatpush1.msra.mxu0 %v4586
      %5478 = vmatprep.subr.mxu0 0.0
      %5479 = vmatpush1.msra.mxu0 %v4587
      %5480 = vmatprep.subr.mxu0 0.0
      %5481 = vmatpush1.msra.mxu0 %v4588
      %5482 = vmatprep.subr.mxu0 0.0
      %5483 = vmatpush1.msra.mxu0 0.0
      %5484 = vmatprep.subr.mxu0 0.0
      %5485 = vmatpush1.msra.mxu0 0.0
      %5486 = vmatprep.subr.mxu0 0.0
      %5487 = vmatpush1.msra.mxu0 0.0
      %5488 = vmatprep.subr.mxu0 0.0
      %5489 = vmatpush1.msra.mxu0 0.0
      %5490 = vmatprep.subr.mxu0 0.0
      %5491 = vmatpush1.msra.mxu0 0.0
      %5492 = vmatprep.subr.mxu0 0.0
      %5493 = vmatpush1.msra.mxu0 0.0
      %5494 = vmatprep.subr.mxu0 0.0
      %5495 = vmatpush1.msra.mxu0 0.0
      %5496 = vmatprep.subr.mxu0 0.0
      %5497 = vmatpush1.msra.mxu0 0.0
      %5498 = vmatprep.subr.mxu0 0.0
      %5499 = vmatpush1.msra.mxu0 0.0
      %5500 = vmatprep.subr.mxu0 0.0
      %5501 = vmatpush1.msra.mxu0 0.0
      %5502 = vmatprep.subr.mxu0 0.0
      %5503 = vmatpush1.msra.mxu0 0.0
      %5504 = vmatprep.subr.mxu0 0.0
      %5505 = vmatpush1.msra.mxu0 0.0
      %5506 = vmatprep.subr.mxu0 0.0
      %5507 = vmatpush1.msra.mxu0 0.0
      %5508 = vmatprep.subr.mxu0 0.0
      %5509 = vmatpush1.msra.mxu0 0.0
      %5510 = vmatprep.subr.mxu0 0.0
      %5511 = vmatpush1.msra.mxu0 0.0
      %5512 = vmatprep.subr.mxu0 0.0
      %5513 = vmatpush1.msra.mxu0 0.0
      %5514 = vmatprep.subr.mxu0 0.0
      %5515 = vmatpush1.msra.mxu0 0.0
      %5516 = vmatprep.subr.mxu0 0.0
      %5517 = vmatpush1.msra.mxu0 0.0
      %5518 = vmatprep.subr.mxu0 0.0
      %5519 = vmatpush1.msra.mxu0 0.0
      %5520 = vmatprep.subr.mxu0 0.0
      %5521 = vmatpush1.msra.mxu0 0.0
      %5522 = vmatprep.subr.mxu0 0.0
      %5523 = vmatpush1.msra.mxu0 0.0
      %5524 = vmatprep.subr.mxu0 0.0
      %5525 = vmatpush1.msra.mxu0 0.0
      %5526 = vmatprep.subr.mxu0 0.0
      %5527 = vmatpush1.msra.mxu0 0.0
      %5528 = vmatprep.mubr.f32.mxu0 0.0
      %5529 = vmatmul.mubr.f32.gmra.mrb[0].mxu0 %v5459
      %v5530 = vpop.f32.mrb[0].mxu0
      %v5531 = vadd.f32 0.0, %v5530
      %v5532 = vpop.f32.mrb[0].mxu0
      %5533 = vmatprep.mubr.f32.mxu0 0.0
      %5534 = vmatmul.mubr.f32.gmra.mrb[0].mxu0 %v5462
      %v5535 = vpop.f32.mrb[0].mxu0
      %v5536 = vadd.f32 0.0, %v5535
      %v5537 = vpop.f32.mrb[0].mxu0
      %5538 = vdwg.mxu0
      %v5539 = vlaneseq
      %v5540 = vshrl.u32 %v5539, 7
      %v5541 = vsub.s32 4, %v5540
      %v5542 = vrot.slane %v4629, %v5541
      %v5543 = vmul.f32 %v5531, %v5542
      %v5544 = vmul.f32 %v5536, %v5542
      %v5545 = vlaneseq
      %v5546 = vshrl.u32 %v5545, 7
      %v5547 = vsub.s32 5, %v5546
      %v5548 = vrot.slane %v4629, %v5547
      %v5549 = vadd.f32 %v5543, %v5548
      %v5550 = vadd.f32 %v5544, %v5548
      %5551 = vxpose.xlu0.b32.start [1/16] %v5377, 128
      %5552 = vxpose.xlu0.b32.cont [2/16] %v5378, 128
      %5553 = vxpose.xlu0.b32.cont [3/16] 0.0, 128
      %5554 = vxpose.xlu0.b32.cont [4/16] 0.0, 128
      %5555 = vxpose.xlu0.b32.cont [5/16] 0.0, 128
      %5556 = vxpose.xlu0.b32.cont [6/16] 0.0, 128
      %5557 = vxpose.xlu0.b32.cont [7/16] 0.0, 128
      %5558 = vxpose.xlu0.b32.cont [8/16] 0.0, 128
      %5559 = vxpose.xlu0.b32.cont [9/16] 0.0, 128
      %5560 = vxpose.xlu0.b32.cont [10/16] 0.0, 128
      %5561 = vxpose.xlu0.b32.cont [11/16] 0.0, 128
      %5562 = vxpose.xlu0.b32.cont [12/16] 0.0, 128
      %5563 = vxpose.xlu0.b32.cont [13/16] 0.0, 128
      %5564 = vxpose.xlu0.b32.cont [14/16] 0.0, 128
      %5565 = vxpose.xlu0.b32.cont [15/16] 0.0, 128
      %5566 = vxpose.xlu0.b32.end [16/16] 0.0, 128
      %v5567 = vpop.trf.xlu0
      %v5568 = vpop.trf.xlu0
      %v5569 = vpop.trf.xlu0
      %v5570 = vpop.trf.xlu0
      %v5571 = vpop.trf.xlu0
      %v5572 = vpop.trf.xlu0
      %v5573 = vpop.trf.xlu0
      %v5574 = vpop.trf.xlu0
      %v5575 = vpop.trf.xlu0
      %v5576 = vpop.trf.xlu0
      %v5577 = vpop.trf.xlu0
      %v5578 = vpop.trf.xlu0
      %v5579 = vpop.trf.xlu0
      %v5580 = vpop.trf.xlu0
      %v5581 = vpop.trf.xlu0
      %v5582 = vpop.trf.xlu0
      %vm5583 = vcmask 72704
      %v5585 = vsel %vm5583, %v5567, 0
      %vm5587 = vcmask 1040384
      %v5589 = vsel %vm5587, %v5550, 0
      %5591 = vmatprep.subr.mxu0 0.0
      %5592 = vmatpush1.msra.mxu0 %v5549
      %5593 = vmatprep.subr.mxu0 0.0
      %5594 = vmatpush1.msra.mxu0 %v5589
      %5595 = vmatprep.subr.mxu0 0.0
      %5596 = vmatpush1.msra.mxu0 0.0
      %5597 = vmatprep.subr.mxu0 0.0
      %5598 = vmatpush1.msra.mxu0 0.0
      %5599 = vmatprep.subr.mxu0 0.0
      %5600 = vmatpush1.msra.mxu0 0.0
      %5601 = vmatprep.subr.mxu0 0.0
      %5602 = vmatpush1.msra.mxu0 0.0
      %5603 = vmatprep.subr.mxu0 0.0
      %5604 = vmatpush1.msra.mxu0 0.0
      %5605 = vmatprep.subr.mxu0 0.0
      %5606 = vmatpush1.msra.mxu0 0.0
      %5607 = vmatprep.subr.mxu0 0.0
      %5608 = vmatpush1.msra.mxu0 0.0
      %5609 = vmatprep.subr.mxu0 0.0
      %5610 = vmatpush1.msra.mxu0 0.0
      %5611 = vmatprep.subr.mxu0 0.0
      %5612 = vmatpush1.msra.mxu0 0.0
      %5613 = vmatprep.subr.mxu0 0.0
      %5614 = vmatpush1.msra.mxu0 0.0
      %5615 = vmatprep.subr.mxu0 0.0
      %5616 = vmatpush1.msra.mxu0 0.0
      %5617 = vmatprep.subr.mxu0 0.0
      %5618 = vmatpush1.msra.mxu0 0.0
      %5619 = vmatprep.subr.mxu0 0.0
      %5620 = vmatpush1.msra.mxu0 0.0
      %5621 = vmatprep.subr.mxu0 0.0
      %5622 = vmatpush1.msra.mxu0 0.0
      %5623 = vmatprep.subr.mxu0 0.0
      %5624 = vmatpush1.msra.mxu0 0.0
      %5625 = vmatprep.subr.mxu0 0.0
      %5626 = vmatpush1.msra.mxu0 0.0
      %5627 = vmatprep.subr.mxu0 0.0
      %5628 = vmatpush1.msra.mxu0 0.0
      %5629 = vmatprep.subr.mxu0 0.0
      %5630 = vmatpush1.msra.mxu0 0.0
      %5631 = vmatprep.subr.mxu0 0.0
      %5632 = vmatpush1.msra.mxu0 0.0
      %5633 = vmatprep.subr.mxu0 0.0
      %5634 = vmatpush1.msra.mxu0 0.0
      %5635 = vmatprep.subr.mxu0 0.0
      %5636 = vmatpush1.msra.mxu0 0.0
      %5637 = vmatprep.subr.mxu0 0.0
      %5638 = vmatpush1.msra.mxu0 0.0
      %5639 = vmatprep.subr.mxu0 0.0
      %5640 = vmatpush1.msra.mxu0 0.0
      %5641 = vmatprep.subr.mxu0 0.0
      %5642 = vmatpush1.msra.mxu0 0.0
      %5643 = vmatprep.subr.mxu0 0.0
      %5644 = vmatpush1.msra.mxu0 0.0
      %5645 = vmatprep.subr.mxu0 0.0
      %5646 = vmatpush1.msra.mxu0 0.0
      %5647 = vmatprep.subr.mxu0 0.0
      %5648 = vmatpush1.msra.mxu0 0.0
      %5649 = vmatprep.subr.mxu0 0.0
      %5650 = vmatpush1.msra.mxu0 0.0
      %5651 = vmatprep.subr.mxu0 0.0
      %5652 = vmatpush1.msra.mxu0 0.0
      %5653 = vmatprep.subr.mxu0 0.0
      %5654 = vmatpush1.msra.mxu0 0.0
      %5655 = vmatprep.mubr.f32.mxu0 0.0
      %5656 = vmatmul.mubr.f32.gmra.mrb[0].mxu0 %v5585
      %v5657 = vpop.f32.mrb[0].mxu0
      %v5658 = vadd.f32 0.0, %v5657
      %v5659 = vpop.f32.mrb[0].mxu0
      %5660 = vdwg.mxu0
      %v5661 = vmax.f32 %v5658, 0.0
      %v5662 = vlaneseq
      %v5663 = vshrl.u32 %v5662, 7
      %v5664 = vsub.s32 6, %v5663
      %v5665 = vrot.slane %v4629, %v5664
      %v5667 = vsel %vm2299, %v5661, 0
      %v5670 = vsel %vm2299, %v4631, 0
      %5672 = vmatprep.subr.mxu0 0.0
      %5673 = vmatpush1.xpose.msra.mxu0 %v5670
      %5674 = vmatprep.subr.mxu0 0.0
      %5675 = vmatpush1.xpose.msra.mxu0 0.0
      %5676 = vmatprep.subr.mxu0 0.0
      %5677 = vmatpush1.xpose.msra.mxu0 0.0
      %5678 = vmatprep.subr.mxu0 0.0
      %5679 = vmatpush1.xpose.msra.mxu0 0.0
      %5680 = vmatprep.subr.mxu0 0.0
      %5681 = vmatpush1.xpose.msra.mxu0 0.0
      %5682 = vmatprep.subr.mxu0 0.0
      %5683 = vmatpush1.xpose.msra.mxu0 0.0
      %5684 = vmatprep.subr.mxu0 0.0
      %5685 = vmatpush1.xpose.msra.mxu0 0.0
      %5686 = vmatprep.subr.mxu0 0.0
      %5687 = vmatpush1.xpose.msra.mxu0 0.0
      %5688 = vmatprep.subr.mxu0 0.0
      %5689 = vmatpush1.xpose.msra.mxu0 0.0
      %5690 = vmatprep.subr.mxu0 0.0
      %5691 = vmatpush1.xpose.msra.mxu0 0.0
      %5692 = vmatprep.subr.mxu0 0.0
      %5693 = vmatpush1.xpose.msra.mxu0 0.0
      %5694 = vmatprep.subr.mxu0 0.0
      %5695 = vmatpush1.xpose.msra.mxu0 0.0
      %5696 = vmatprep.subr.mxu0 0.0
      %5697 = vmatpush1.xpose.msra.mxu0 0.0
      %5698 = vmatprep.subr.mxu0 0.0
      %5699 = vmatpush1.xpose.msra.mxu0 0.0
      %5700 = vmatprep.subr.mxu0 0.0
      %5701 = vmatpush1.xpose.msra.mxu0 0.0
      %5702 = vmatprep.subr.mxu0 0.0
      %5703 = vmatpush1.xpose.msra.mxu0 0.0
      %5704 = vmatprep.subr.mxu0 0.0
      %5705 = vmatpush1.xpose.msra.mxu0 0.0
      %5706 = vmatprep.subr.mxu0 0.0
      %5707 = vmatpush1.xpose.msra.mxu0 0.0
      %5708 = vmatprep.subr.mxu0 0.0
      %5709 = vmatpush1.xpose.msra.mxu0 0.0
      %5710 = vmatprep.subr.mxu0 0.0
      %5711 = vmatpush1.xpose.msra.mxu0 0.0
      %5712 = vmatprep.subr.mxu0 0.0
      %5713 = vmatpush1.xpose.msra.mxu0 0.0
      %5714 = vmatprep.subr.mxu0 0.0
      %5715 = vmatpush1.xpose.msra.mxu0 0.0
      %5716 = vmatprep.subr.mxu0 0.0
      %5717 = vmatpush1.xpose.msra.mxu0 0.0
      %5718 = vmatprep.subr.mxu0 0.0
      %5719 = vmatpush1.xpose.msra.mxu0 0.0
      %5720 = vmatprep.subr.mxu0 0.0
      %5721 = vmatpush1.xpose.msra.mxu0 0.0
      %5722 = vmatprep.subr.mxu0 0.0
      %5723 = vmatpush1.xpose.msra.mxu0 0.0
      %5724 = vmatprep.subr.mxu0 0.0
      %5725 = vmatpush1.xpose.msra.mxu0 0.0
      %5726 = vmatprep.subr.mxu0 0.0
      %5727 = vmatpush1.xpose.msra.mxu0 0.0
      %5728 = vmatprep.subr.mxu0 0.0
      %5729 = vmatpush1.xpose.msra.mxu0 0.0
      %5730 = vmatprep.subr.mxu0 0.0
      %5731 = vmatpush1.xpose.msra.mxu0 0.0
      %5732 = vmatprep.subr.mxu0 0.0
      %5733 = vmatpush1.xpose.msra.mxu0 0.0
      %5734 = vmatprep.subr.mxu0 0.0
      %5735 = vmatpush1.xpose.msra.mxu0 0.0
      %5736 = vmatprep.mubr.f32.mxu0 0.0
      %5737 = vmatmul.mubr.f32.gmra.mrb[0].mxu0 %v5667
      %v5738 = vpop.f32.mrb[0].mxu0
      %v5739 = vadd.f32 %v5665, %v5738
      %v5740 = vpop.f32.mrb[0].mxu0
      %5741 = vdwg.mxu0
      %v5742 = vsel %vm2299, %v5739, -inf
      %5743 = vmax.xlane.f32.xlu0 %v5742
      %v5744 = vpop.xlane.xlu0 %5743
      %v5745 = vsub.f32 %v5739, %v5744
      %v5746 = vmul.f32 %v5745, 1.442695
      %v5747 = vpow.pop %v5746
      %v5748 = vsel %vm2299, %v5747, 0.0
      %5749 = vadd.xlane.f32.xlu0 %v5748
      %v5750 = vpop.xlane.xlu0 %5749
      %v5751 = vrcp.pop %v5750
      %v5752 = vmul.f32 %v5747, %v5751
      %v5754 = vsel %vm2299, %v4580, 0
      %v5757 = vsel %vm2299, %v4581, 0
      %v5760 = vsel %vm2299, %v4582, 0
      %v5763 = vsel %vm2299, %v4583, 0
      %v5766 = vsel %vm2299, %v4584, 0
      %v5769 = vsel %vm2299, %v4585, 0
      %v5772 = vsel %vm2299, %v4586, 0
      %v5775 = vsel %vm2299, %v4587, 0
      %v5778 = vsel %vm2299, %v4588, 0
      %v5781 = vsel %vm2299, %v5752, 0
      %5783 = vmatprep.subr.mxu0 0.0
      %5784 = vmatpush1.xpose.msra.mxu0 %v5781
      %5785 = vmatprep.subr.mxu0 0.0
      %5786 = vmatpush1.xpose.msra.mxu0 0.0
      %5787 = vmatprep.subr.mxu0 0.0
      %5788 = vmatpush1.xpose.msra.mxu0 0.0
      %5789 = vmatprep.subr.mxu0 0.0
      %5790 = vmatpush1.xpose.msra.mxu0 0.0
      %5791 = vmatprep.subr.mxu0 0.0
      %5792 = vmatpush1.xpose.msra.mxu0 0.0
      %5793 = vmatprep.subr.mxu0 0.0
      %5794 = vmatpush1.xpose.msra.mxu0 0.0
      %5795 = vmatprep.subr.mxu0 0.0
      %5796 = vmatpush1.xpose.msra.mxu0 0.0
      %5797 = vmatprep.subr.mxu0 0.0
      %5798 = vmatpush1.xpose.msra.mxu0 0.0
      %5799 = vmatprep.subr.mxu0 0.0
      %5800 = vmatpush1.xpose.msra.mxu0 0.0
      %5801 = vmatprep.subr.mxu0 0.0
      %5802 = vmatpush1.xpose.msra.mxu0 0.0
      %5803 = vmatprep.subr.mxu0 0.0
      %5804 = vmatpush1.xpose.msra.mxu0 0.0
      %5805 = vmatprep.subr.mxu0 0.0
      %5806 = vmatpush1.xpose.msra.mxu0 0.0
      %5807 = vmatprep.subr.mxu0 0.0
      %5808 = vmatpush1.xpose.msra.mxu0 0.0
      %5809 = vmatprep.subr.mxu0 0.0
      %5810 = vmatpush1.xpose.msra.mxu0 0.0
      %5811 = vmatprep.subr.mxu0 0.0
      %5812 = vmatpush1.xpose.msra.mxu0 0.0
      %5813 = vmatprep.subr.mxu0 0.0
      %5814 = vmatpush1.xpose.msra.mxu0 0.0
      %5815 = vmatprep.subr.mxu0 0.0
      %5816 = vmatpush1.xpose.msra.mxu0 0.0
      %5817 = vmatprep.subr.mxu0 0.0
      %5818 = vmatpush1.xpose.msra.mxu0 0.0
      %5819 = vmatprep.subr.mxu0 0.0
      %5820 = vmatpush1.xpose.msra.mxu0 0.0
      %5821 = vmatprep.subr.mxu0 0.0
      %5822 = vmatpush1.xpose.msra.mxu0 0.0
      %5823 = vmatprep.subr.mxu0 0.0
      %5824 = vmatpush1.xpose.msra.mxu0 0.0
      %5825 = vmatprep.subr.mxu0 0.0
      %5826 = vmatpush1.xpose.msra.mxu0 0.0
      %5827 = vmatprep.subr.mxu0 0.0
      %5828 = vmatpush1.xpose.msra.mxu0 0.0
      %5829 = vmatprep.subr.mxu0 0.0
      %5830 = vmatpush1.xpose.msra.mxu0 0.0
      %5831 = vmatprep.subr.mxu0 0.0
      %5832 = vmatpush1.xpose.msra.mxu0 0.0
      %5833 = vmatprep.subr.mxu0 0.0
      %5834 = vmatpush1.xpose.msra.mxu0 0.0
      %5835 = vmatprep.subr.mxu0 0.0
      %5836 = vmatpush1.xpose.msra.mxu0 0.0
      %5837 = vmatprep.subr.mxu0 0.0
      %5838 = vmatpush1.xpose.msra.mxu0 0.0
      %5839 = vmatprep.subr.mxu0 0.0
      %5840 = vmatpush1.xpose.msra.mxu0 0.0
      %5841 = vmatprep.subr.mxu0 0.0
      %5842 = vmatpush1.xpose.msra.mxu0 0.0
      %5843 = vmatprep.subr.mxu0 0.0
      %5844 = vmatpush1.xpose.msra.mxu0 0.0
      %5845 = vmatprep.subr.mxu0 0.0
      %5846 = vmatpush1.xpose.msra.mxu0 0.0
      %5847 = vmatprep.mubr.f32.mxu0 0.0
      %5848 = vmatmul.mubr.f32.gmra.mrb[0].mxu0 %v5754
      %v5849 = vpop.f32.mrb[0].mxu0
      %v5850 = vadd.f32 0.0, %v5849
      %v5851 = vpop.f32.mrb[0].mxu0
      %5852 = vmatprep.mubr.f32.mxu0 0.0
      %5853 = vmatmul.mubr.f32.gmra.mrb[0].mxu0 %v5757
      %v5854 = vpop.f32.mrb[0].mxu0
      %v5855 = vadd.f32 0.0, %v5854
      %v5856 = vpop.f32.mrb[0].mxu0
      %5857 = vmatprep.mubr.f32.mxu0 0.0
      %5858 = vmatmul.mubr.f32.gmra.mrb[0].mxu0 %v5760
      %v5859 = vpop.f32.mrb[0].mxu0
      %v5860 = vadd.f32 0.0, %v5859
      %v5861 = vpop.f32.mrb[0].mxu0
      %5862 = vmatprep.mubr.f32.mxu0 0.0
      %5863 = vmatmul.mubr.f32.gmra.mrb[0].mxu0 %v5763
      %v5864 = vpop.f32.mrb[0].mxu0
      %v5865 = vadd.f32 0.0, %v5864
      %v5866 = vpop.f32.mrb[0].mxu0
      %5867 = vmatprep.mubr.f32.mxu0 0.0
      %5868 = vmatmul.mubr.f32.gmra.mrb[0].mxu0 %v5766
      %v5869 = vpop.f32.mrb[0].mxu0
      %v5870 = vadd.f32 0.0, %v5869
      %v5871 = vpop.f32.mrb[0].mxu0
      %5872 = vmatprep.mubr.f32.mxu0 0.0
      %5873 = vmatmul.mubr.f32.gmra.mrb[0].mxu0 %v5769
      %v5874 = vpop.f32.mrb[0].mxu0
      %v5875 = vadd.f32 0.0, %v5874
      %v5876 = vpop.f32.mrb[0].mxu0
      %5877 = vmatprep.mubr.f32.mxu0 0.0
      %5878 = vmatmul.mubr.f32.gmra.mrb[0].mxu0 %v5772
      %v5879 = vpop.f32.mrb[0].mxu0
      %v5880 = vadd.f32 0.0, %v5879
      %v5881 = vpop.f32.mrb[0].mxu0
      %5882 = vmatprep.mubr.f32.mxu0 0.0
      %5883 = vmatmul.mubr.f32.gmra.mrb[0].mxu0 %v5775
      %v5884 = vpop.f32.mrb[0].mxu0
      %v5885 = vadd.f32 0.0, %v5884
      %v5886 = vpop.f32.mrb[0].mxu0
      %5887 = vmatprep.mubr.f32.mxu0 0.0
      %5888 = vmatmul.mubr.f32.gmra.mrb[0].mxu0 %v5778
      %v5889 = vpop.f32.mrb[0].mxu0
      %v5890 = vadd.f32 0.0, %v5889
      %v5891 = vpop.f32.mrb[0].mxu0
      %5892 = vdwg.mxu0
      %v5894 = vsel %vm2299, %v5850, 0
      %v5897 = vsel %vm2299, %v5855, 0
      %v5900 = vsel %vm2299, %v5860, 0
      %v5903 = vsel %vm2299, %v5865, 0
      %v5906 = vsel %vm2299, %v5870, 0
      %v5909 = vsel %vm2299, %v5875, 0
      %v5912 = vsel %vm2299, %v5880, 0
      %v5915 = vsel %vm2299, %v5885, 0
      %v5918 = vsel %vm2299, %v5890, 0
      %5920 = vmatprep.subr.mxu0 0.0
      %5921 = vmatpush1.xpose.msra.mxu0 %v5754
      %5922 = vmatprep.subr.mxu0 0.0
      %5923 = vmatpush1.xpose.msra.mxu0 %v5757
      %5924 = vmatprep.subr.mxu0 0.0
      %5925 = vmatpush1.xpose.msra.mxu0 %v5760
      %5926 = vmatprep.subr.mxu0 0.0
      %5927 = vmatpush1.xpose.msra.mxu0 %v5763
      %5928 = vmatprep.subr.mxu0 0.0
      %5929 = vmatpush1.xpose.msra.mxu0 %v5766
      %5930 = vmatprep.subr.mxu0 0.0
      %5931 = vmatpush1.xpose.msra.mxu0 %v5769
      %5932 = vmatprep.subr.mxu0 0.0
      %5933 = vmatpush1.xpose.msra.mxu0 %v5772
      %5934 = vmatprep.subr.mxu0 0.0
      %5935 = vmatpush1.xpose.msra.mxu0 %v5775
      %5936 = vmatprep.subr.mxu0 0.0
      %5937 = vmatpush1.xpose.msra.mxu0 %v5778
      %5938 = vmatprep.subr.mxu0 0.0
      %5939 = vmatpush1.xpose.msra.mxu0 0.0
      %5940 = vmatprep.subr.mxu0 0.0
      %5941 = vmatpush1.xpose.msra.mxu0 0.0
      %5942 = vmatprep.subr.mxu0 0.0
      %5943 = vmatpush1.xpose.msra.mxu0 0.0
      %5944 = vmatprep.subr.mxu0 0.0
      %5945 = vmatpush1.xpose.msra.mxu0 0.0
      %5946 = vmatprep.subr.mxu0 0.0
      %5947 = vmatpush1.xpose.msra.mxu0 0.0
      %5948 = vmatprep.subr.mxu0 0.0
      %5949 = vmatpush1.xpose.msra.mxu0 0.0
      %5950 = vmatprep.subr.mxu0 0.0
      %5951 = vmatpush1.xpose.msra.mxu0 0.0
      %5952 = vmatprep.subr.mxu0 0.0
      %5953 = vmatpush1.xpose.msra.mxu0 0.0
      %5954 = vmatprep.subr.mxu0 0.0
      %5955 = vmatpush1.xpose.msra.mxu0 0.0
      %5956 = vmatprep.subr.mxu0 0.0
      %5957 = vmatpush1.xpose.msra.mxu0 0.0
      %5958 = vmatprep.subr.mxu0 0.0
      %5959 = vmatpush1.xpose.msra.mxu0 0.0
      %5960 = vmatprep.subr.mxu0 0.0
      %5961 = vmatpush1.xpose.msra.mxu0 0.0
      %5962 = vmatprep.subr.mxu0 0.0
      %5963 = vmatpush1.xpose.msra.mxu0 0.0
      %5964 = vmatprep.subr.mxu0 0.0
      %5965 = vmatpush1.xpose.msra.mxu0 0.0
      %5966 = vmatprep.subr.mxu0 0.0
      %5967 = vmatpush1.xpose.msra.mxu0 0.0
      %5968 = vmatprep.subr.mxu0 0.0
      %5969 = vmatpush1.xpose.msra.mxu0 0.0
      %5970 = vmatprep.subr.mxu0 0.0
      %5971 = vmatpush1.xpose.msra.mxu0 0.0
      %5972 = vmatprep.subr.mxu0 0.0
      %5973 = vmatpush1.xpose.msra.mxu0 0.0
      %5974 = vmatprep.subr.mxu0 0.0
      %5975 = vmatpush1.xpose.msra.mxu0 0.0
      %5976 = vmatprep.subr.mxu0 0.0
      %5977 = vmatpush1.xpose.msra.mxu0 0.0
      %5978 = vmatprep.subr.mxu0 0.0
      %5979 = vmatpush1.xpose.msra.mxu0 0.0
      %5980 = vmatprep.subr.mxu0 0.0
      %5981 = vmatpush1.xpose.msra.mxu0 0.0
      %5982 = vmatprep.subr.mxu0 0.0
      %5983 = vmatpush1.xpose.msra.mxu0 0.0
      %5984 = vmatprep.mubr.f32.mxu0 0.0
      %5985 = vmatmul.mubr.f32.gmra.mrb[0].mxu0 %v5894
      %v5986 = vpop.f32.mrb[0].mxu0
      %v5987 = vadd.f32 0.0, %v5986
      %v5988 = vpop.f32.mrb[0].mxu0
      %5989 = vmatprep.mubr.f32.mxu0 0.0
      %5990 = vmatmul.mubr.f32.gmra.mrb[0].mxu0 %v5897
      %v5991 = vpop.f32.mrb[0].mxu0
      %v5992 = vadd.f32 0.0, %v5991
      %v5993 = vpop.f32.mrb[0].mxu0
      %5994 = vmatprep.mubr.f32.mxu0 0.0
      %5995 = vmatmul.mubr.f32.gmra.mrb[0].mxu0 %v5900
      %v5996 = vpop.f32.mrb[0].mxu0
      %v5997 = vadd.f32 0.0, %v5996
      %v5998 = vpop.f32.mrb[0].mxu0
      %5999 = vmatprep.mubr.f32.mxu0 0.0
      %6000 = vmatmul.mubr.f32.gmra.mrb[0].mxu0 %v5903
      %v6001 = vpop.f32.mrb[0].mxu0
      %v6002 = vadd.f32 0.0, %v6001
      %v6003 = vpop.f32.mrb[0].mxu0
      %6004 = vmatprep.mubr.f32.mxu0 0.0
      %6005 = vmatmul.mubr.f32.gmra.mrb[0].mxu0 %v5906
      %v6006 = vpop.f32.mrb[0].mxu0
      %v6007 = vadd.f32 0.0, %v6006
      %v6008 = vpop.f32.mrb[0].mxu0
      %6009 = vmatprep.mubr.f32.mxu0 0.0
      %6010 = vmatmul.mubr.f32.gmra.mrb[0].mxu0 %v5909
      %v6011 = vpop.f32.mrb[0].mxu0
      %v6012 = vadd.f32 0.0, %v6011
      %v6013 = vpop.f32.mrb[0].mxu0
      %6014 = vmatprep.mubr.f32.mxu0 0.0
      %6015 = vmatmul.mubr.f32.gmra.mrb[0].mxu0 %v5912
      %v6016 = vpop.f32.mrb[0].mxu0
      %v6017 = vadd.f32 0.0, %v6016
      %v6018 = vpop.f32.mrb[0].mxu0
      %6019 = vmatprep.mubr.f32.mxu0 0.0
      %6020 = vmatmul.mubr.f32.gmra.mrb[0].mxu0 %v5915
      %v6021 = vpop.f32.mrb[0].mxu0
      %v6022 = vadd.f32 0.0, %v6021
      %v6023 = vpop.f32.mrb[0].mxu0
      %6024 = vmatprep.mubr.f32.mxu0 0.0
      %6025 = vmatmul.mubr.f32.gmra.mrb[0].mxu0 %v5918
      %v6026 = vpop.f32.mrb[0].mxu0
      %v6027 = vadd.f32 0.0, %v6026
      %v6028 = vpop.f32.mrb[0].mxu0
      %6029 = vdwg.mxu0
      %v6030 = vmul.f32 %v4589, %v5987
      %v6031 = vmul.f32 %v4590, %v5992
      %v6032 = vmul.f32 %v4591, %v5997
      %v6033 = vmul.f32 %v4592, %v6002
      %v6034 = vmul.f32 %v4593, %v6007
      %v6035 = vmul.f32 %v4594, %v6012
      %v6036 = vmul.f32 %v4595, %v6017
      %v6037 = vmul.f32 %v4596, %v6022
      %v6038 = vmul.f32 %v4597, %v6027
      %6039 = vmatprep.subr.mxu0 0.0
      %6040 = vmatpush1.msra.mxu0 %v6030
      %6041 = vmatprep.subr.mxu0 0.0
      %6042 = vmatpush1.msra.mxu0 %v6031
      %6043 = vmatprep.subr.mxu0 0.0
      %6044 = vmatpush1.msra.mxu0 %v6032
      %6045 = vmatprep.subr.mxu0 0.0
      %6046 = vmatpush1.msra.mxu0 %v6033
      %6047 = vmatprep.subr.mxu0 0.0
      %6048 = vmatpush1.msra.mxu0 %v6034
      %6049 = vmatprep.subr.mxu0 0.0
      %6050 = vmatpush1.msra.mxu0 %v6035
      %6051 = vmatprep.subr.mxu0 0.0
      %6052 = vmatpush1.msra.mxu0 %v6036
      %6053 = vmatprep.subr.mxu0 0.0
      %6054 = vmatpush1.msra.mxu0 %v6037
      %6055 = vmatprep.subr.mxu0 0.0
      %6056 = vmatpush1.msra.mxu0 %v6038
      %6057 = vmatprep.subr.mxu0 0.0
      %6058 = vmatpush1.msra.mxu0 0.0
      %6059 = vmatprep.subr.mxu0 0.0
      %6060 = vmatpush1.msra.mxu0 0.0
      %6061 = vmatprep.subr.mxu0 0.0
      %6062 = vmatpush1.msra.mxu0 0.0
      %6063 = vmatprep.subr.mxu0 0.0
      %6064 = vmatpush1.msra.mxu0 0.0
      %6065 = vmatprep.subr.mxu0 0.0
      %6066 = vmatpush1.msra.mxu0 0.0
      %6067 = vmatprep.subr.mxu0 0.0
      %6068 = vmatpush1.msra.mxu0 0.0
      %6069 = vmatprep.subr.mxu0 0.0
      %6070 = vmatpush1.msra.mxu0 0.0
      %6071 = vmatprep.subr.mxu0 0.0
      %6072 = vmatpush1.msra.mxu0 0.0
      %6073 = vmatprep.subr.mxu0 0.0
      %6074 = vmatpush1.msra.mxu0 0.0
      %6075 = vmatprep.subr.mxu0 0.0
      %6076 = vmatpush1.msra.mxu0 0.0
      %6077 = vmatprep.subr.mxu0 0.0
      %6078 = vmatpush1.msra.mxu0 0.0
      %6079 = vmatprep.subr.mxu0 0.0
      %6080 = vmatpush1.msra.mxu0 0.0
      %6081 = vmatprep.subr.mxu0 0.0
      %6082 = vmatpush1.msra.mxu0 0.0
      %6083 = vmatprep.subr.mxu0 0.0
      %6084 = vmatpush1.msra.mxu0 0.0
      %6085 = vmatprep.subr.mxu0 0.0
      %6086 = vmatpush1.msra.mxu0 0.0
      %6087 = vmatprep.subr.mxu0 0.0
      %6088 = vmatpush1.msra.mxu0 0.0
      %6089 = vmatprep.subr.mxu0 0.0
      %6090 = vmatpush1.msra.mxu0 0.0
      %6091 = vmatprep.subr.mxu0 0.0
      %6092 = vmatpush1.msra.mxu0 0.0
      %6093 = vmatprep.subr.mxu0 0.0
      %6094 = vmatpush1.msra.mxu0 0.0
      %6095 = vmatprep.subr.mxu0 0.0
      %6096 = vmatpush1.msra.mxu0 0.0
      %6097 = vmatprep.subr.mxu0 0.0
      %6098 = vmatpush1.msra.mxu0 0.0
      %6099 = vmatprep.subr.mxu0 0.0
      %6100 = vmatpush1.msra.mxu0 0.0
      %6101 = vmatprep.subr.mxu0 0.0
      %6102 = vmatpush1.msra.mxu0 0.0
      %6103 = vmatprep.mubr.f32.mxu0 0.0
      %6104 = vmatmul.mubr.f32.gmra.mrb[0].mxu0 %v5174
      %v6105 = vpop.f32.mrb[0].mxu0
      %v6106 = vadd.f32 0.0, %v6105
      %v6107 = vpop.f32.mrb[0].mxu0
      %6108 = vmatprep.mubr.f32.mxu0 0.0
      %6109 = vmatmul.mubr.f32.gmra.mrb[0].mxu0 %v5177
      %v6110 = vpop.f32.mrb[0].mxu0
      %v6111 = vadd.f32 0.0, %v6110
      %v6112 = vpop.f32.mrb[0].mxu0
      %6113 = vmatprep.mubr.f32.mxu0 0.0
      %6114 = vmatmul.mubr.f32.gmra.mrb[0].mxu0 %v5180
      %v6115 = vpop.f32.mrb[0].mxu0
      %v6116 = vadd.f32 0.0, %v6115
      %v6117 = vpop.f32.mrb[0].mxu0
      %6118 = vmatprep.mubr.f32.mxu0 0.0
      %6119 = vmatmul.mubr.f32.gmra.mrb[0].mxu0 %v5183
      %v6120 = vpop.f32.mrb[0].mxu0
      %v6121 = vadd.f32 0.0, %v6120
      %v6122 = vpop.f32.mrb[0].mxu0
      %6123 = vdwg.mxu0
      %6124 = vset.pattern.permute.xlu0 3
      %6125 = vperm.xlu0 %6124, %v4622
      %v6126 = vpop.permute.xlu0 %6125
      %6128 = vset.pattern.permute.xlu0 3
      %6129 = vperm.xlu0 %6128, %v4623
      %v6130 = vpop.permute.xlu0 %6129
      %6132 = vset.pattern.permute.xlu0 3
      %6133 = vperm.xlu0 %6132, %v4624
      %v6134 = vpop.permute.xlu0 %6133
      %6136 = vset.pattern.permute.xlu0 3
      %6137 = vperm.xlu0 %6136, %v4625
      %v6138 = vpop.permute.xlu0 %6137
      %v6140 = vmul.f32 %v6106, %v6126
      %v6141 = vmul.f32 %v6111, %v6130
      %v6142 = vmul.f32 %v6116, %v6134
      %v6143 = vmul.f32 %v6121, %v6138
      %v6144 = vadd.f32 %v6140, %v4799
      %v6145 = vadd.f32 %v6141, %v4804
      %v6146 = vadd.f32 %v6142, %v4809
      %v6147 = vadd.f32 %v6143, %v4814
      %v6148 = vld [vmem:[%s57] sm:$0x1]
      %v6149 = vld [vmem:[%s59] sm:$0xff]
      %v6150 = vld [vmem:[%s61] sm:$0xff]
      %v6151 = vld [vmem:[%s63] sm:$0x1]
      %v6152 = vld [vmem:[%s65] sm:$0xff]
      %v6153 = vld [vmem:[%s67] sm:$0xff]
      %s6154 = scalar_lea.vmem %s7, 192
      %v6155 = vld [vmem:[%s6154] sm:$0xff]
      %v6156 = vld [vmem:[%s6154 + $0x8] sm:$0xff]
      %v6157 = vld [vmem:[%s6154 + $0x10] sm:$0xff]
      %v6158 = vld [vmem:[%s6154 + $0x18] sm:$0xff]
      %v6159 = vld [vmem:[%s6154 + $0x20] sm:$0xff]
      %v6160 = vld [vmem:[%s6154 + $0x28] sm:$0xff]
      %v6161 = vld [vmem:[%s6154 + $0x30] sm:$0xff]
      %v6162 = vld [vmem:[%s6154 + $0x38] sm:$0xff]
      %s6163 = scalar_lea.vmem %s9, 192
      %v6164 = vld [vmem:[%s6163] sm:$0xff]
      %v6165 = vld [vmem:[%s6163 + $0x8] sm:$0xff]
      %v6166 = vld [vmem:[%s6163 + $0x10] sm:$0xff]
      %v6167 = vld [vmem:[%s6163 + $0x18] sm:$0xff]
      %v6168 = vld [vmem:[%s6163 + $0x20] sm:$0xff]
      %v6169 = vld [vmem:[%s6163 + $0x28] sm:$0xff]
      %v6170 = vld [vmem:[%s6163 + $0x30] sm:$0xff]
      %v6171 = vld [vmem:[%s6163 + $0x38] sm:$0xff]
      %s6172 = scalar_lea.vmem %s11, 96
      %v6173 = vld [vmem:[%s6172] sm:$0xff]
      %v6174 = vld [vmem:[%s6172 + $0x8] sm:$0xff]
      %v6175 = vld [vmem:[%s6172 + $0x10] sm:$0xff]
      %v6176 = vld [vmem:[%s6172 + $0x18] sm:$0xff]
      %s6177 = scalar_lea.vmem %s13, 96
      %v6178 = vld [vmem:[%s6177] sm:$0xff]
      %v6179 = vld [vmem:[%s6177 + $0x8] sm:$0xff]
      %v6180 = vld [vmem:[%s6177 + $0x10] sm:$0xff]
      %v6181 = vld [vmem:[%s6177 + $0x18] sm:$0xff]
      %s6182 = scalar_lea.vmem %s15, 3
      %v6183 = vld [vmem:[%s6182] sm:$0x1]
      %s6184 = scalar_lea.vmem %s17, 24
      %v6185 = vld [vmem:[%s6184] sm:$0x7f]
      %s6186 = scalar_lea.vmem %s19, 24
      %v6187 = vld [vmem:[%s6186] sm:$0xff]
      %6192 = vrot.lane.b32.xlu0 %v6144, 64
      %v6193 = vpop.permute.xlu0 %6192
      %6194 = vrot.lane.b32.xlu0 %v6145, 64
      %v6195 = vpop.permute.xlu0 %6194
      %6196 = vrot.lane.b32.xlu0 %v6146, 64
      %v6197 = vpop.permute.xlu0 %6196
      %6198 = vrot.lane.b32.xlu0 %v6147, 64
      %v6199 = vpop.permute.xlu0 %6198
      %6205 = vset.pattern.permute.xlu0 0
      %6206 = vperm.xlu0 %6205, %v6164
      %v6207 = vpop.permute.xlu0 %6206
      %6210 = vset.pattern.permute.xlu0 0
      %6211 = vperm.xlu0 %6210, %v6165
      %v6212 = vpop.permute.xlu0 %6211
      %6215 = vset.pattern.permute.xlu0 0
      %6216 = vperm.xlu0 %6215, %v6166
      %v6217 = vpop.permute.xlu0 %6216
      %6220 = vset.pattern.permute.xlu0 0
      %6221 = vperm.xlu0 %6220, %v6167
      %v6222 = vpop.permute.xlu0 %6221
      %6225 = vset.pattern.permute.xlu0 0
      %6226 = vperm.xlu0 %6225, %v6168
      %v6227 = vpop.permute.xlu0 %6226
      %6230 = vset.pattern.permute.xlu0 0
      %6231 = vperm.xlu0 %6230, %v6169
      %v6232 = vpop.permute.xlu0 %6231
      %6235 = vset.pattern.permute.xlu0 0
      %6236 = vperm.xlu0 %6235, %v6170
      %v6237 = vpop.permute.xlu0 %6236
      %6240 = vset.pattern.permute.xlu0 0
      %6241 = vperm.xlu0 %6240, %v6171
      %v6242 = vpop.permute.xlu0 %6241
      %v6245 = vsel %vm1318, %v6155, 0
      %v6248 = vsel %vm1318, %v6156, 0
      %v6251 = vsel %vm1318, %v6157, 0
      %v6254 = vsel %vm1318, %v6158, 0
      %v6257 = vsel %vm1318, %v6159, 0
      %v6260 = vsel %vm1318, %v6160, 0
      %v6263 = vsel %vm1318, %v6161, 0
      %v6266 = vsel %vm1318, %v6162, 0
      %6268 = vmatprep.subr.mxu0 0.0
      %6269 = vmatpush1.msra.mxu0 %v6144
      %6270 = vmatprep.subr.mxu0 0.0
      %6271 = vmatpush1.msra.mxu0 %v6145
      %6272 = vmatprep.subr.mxu0 0.0
      %6273 = vmatpush1.msra.mxu0 %v6146
      %6274 = vmatprep.subr.mxu0 0.0
      %6275 = vmatpush1.msra.mxu0 %v6147
      %6276 = vmatprep.subr.mxu0 0.0
      %6277 = vmatpush1.msra.mxu0 %v6193
      %6278 = vmatprep.subr.mxu0 0.0
      %6279 = vmatpush1.msra.mxu0 %v6195
      %6280 = vmatprep.subr.mxu0 0.0
      %6281 = vmatpush1.msra.mxu0 %v6197
      %6282 = vmatprep.subr.mxu0 0.0
      %6283 = vmatpush1.msra.mxu0 %v6199
      %6284 = vmatprep.subr.mxu0 0.0
      %6285 = vmatpush1.msra.mxu0 0.0
      %6286 = vmatprep.subr.mxu0 0.0
      %6287 = vmatpush1.msra.mxu0 0.0
      %6288 = vmatprep.subr.mxu0 0.0
      %6289 = vmatpush1.msra.mxu0 0.0
      %6290 = vmatprep.subr.mxu0 0.0
      %6291 = vmatpush1.msra.mxu0 0.0
      %6292 = vmatprep.subr.mxu0 0.0
      %6293 = vmatpush1.msra.mxu0 0.0
      %6294 = vmatprep.subr.mxu0 0.0
      %6295 = vmatpush1.msra.mxu0 0.0
      %6296 = vmatprep.subr.mxu0 0.0
      %6297 = vmatpush1.msra.mxu0 0.0
      %6298 = vmatprep.subr.mxu0 0.0
      %6299 = vmatpush1.msra.mxu0 0.0
      %6300 = vmatprep.subr.mxu0 0.0
      %6301 = vmatpush1.msra.mxu0 0.0
      %6302 = vmatprep.subr.mxu0 0.0
      %6303 = vmatpush1.msra.mxu0 0.0
      %6304 = vmatprep.subr.mxu0 0.0
      %6305 = vmatpush1.msra.mxu0 0.0
      %6306 = vmatprep.subr.mxu0 0.0
      %6307 = vmatpush1.msra.mxu0 0.0
      %6308 = vmatprep.subr.mxu0 0.0
      %6309 = vmatpush1.msra.mxu0 0.0
      %6310 = vmatprep.subr.mxu0 0.0
      %6311 = vmatpush1.msra.mxu0 0.0
      %6312 = vmatprep.subr.mxu0 0.0
      %6313 = vmatpush1.msra.mxu0 0.0
      %6314 = vmatprep.subr.mxu0 0.0
      %6315 = vmatpush1.msra.mxu0 0.0
      %6316 = vmatprep.subr.mxu0 0.0
      %6317 = vmatpush1.msra.mxu0 0.0
      %6318 = vmatprep.subr.mxu0 0.0
      %6319 = vmatpush1.msra.mxu0 0.0
      %6320 = vmatprep.subr.mxu0 0.0
      %6321 = vmatpush1.msra.mxu0 0.0
      %6322 = vmatprep.subr.mxu0 0.0
      %6323 = vmatpush1.msra.mxu0 0.0
      %6324 = vmatprep.subr.mxu0 0.0
      %6325 = vmatpush1.msra.mxu0 0.0
      %6326 = vmatprep.subr.mxu0 0.0
      %6327 = vmatpush1.msra.mxu0 0.0
      %6328 = vmatprep.subr.mxu0 0.0
      %6329 = vmatpush1.msra.mxu0 0.0
      %6330 = vmatprep.subr.mxu0 0.0
      %6331 = vmatpush1.msra.mxu0 0.0
      %6332 = vmatprep.mubr.f32.mxu0 0.0
      %6333 = vmatmul.mubr.f32.gmra.mrb[0].mxu0 %v6245
      %v6334 = vpop.f32.mrb[0].mxu0
      %v6335 = vadd.f32 %v6207, %v6334
      %v6336 = vpop.f32.mrb[0].mxu0
      %6337 = vmatprep.mubr.f32.mxu0 0.0
      %6338 = vmatmul.mubr.f32.gmra.mrb[0].mxu0 %v6248
      %v6339 = vpop.f32.mrb[0].mxu0
      %v6340 = vadd.f32 %v6212, %v6339
      %v6341 = vpop.f32.mrb[0].mxu0
      %6342 = vmatprep.mubr.f32.mxu0 0.0
      %6343 = vmatmul.mubr.f32.gmra.mrb[0].mxu0 %v6251
      %v6344 = vpop.f32.mrb[0].mxu0
      %v6345 = vadd.f32 %v6217, %v6344
      %v6346 = vpop.f32.mrb[0].mxu0
      %6347 = vmatprep.mubr.f32.mxu0 0.0
      %6348 = vmatmul.mubr.f32.gmra.mrb[0].mxu0 %v6254
      %v6349 = vpop.f32.mrb[0].mxu0
      %v6350 = vadd.f32 %v6222, %v6349
      %v6351 = vpop.f32.mrb[0].mxu0
      %6352 = vmatprep.mubr.f32.mxu0 0.0
      %6353 = vmatmul.mubr.f32.gmra.mrb[0].mxu0 %v6257
      %v6354 = vpop.f32.mrb[0].mxu0
      %v6355 = vadd.f32 %v6227, %v6354
      %v6356 = vpop.f32.mrb[0].mxu0
      %6357 = vmatprep.mubr.f32.mxu0 0.0
      %6358 = vmatmul.mubr.f32.gmra.mrb[0].mxu0 %v6260
      %v6359 = vpop.f32.mrb[0].mxu0
      %v6360 = vadd.f32 %v6232, %v6359
      %v6361 = vpop.f32.mrb[0].mxu0
      %6362 = vmatprep.mubr.f32.mxu0 0.0
      %6363 = vmatmul.mubr.f32.gmra.mrb[0].mxu0 %v6263
      %v6364 = vpop.f32.mrb[0].mxu0
      %v6365 = vadd.f32 %v6237, %v6364
      %v6366 = vpop.f32.mrb[0].mxu0
      %6367 = vmatprep.mubr.f32.mxu0 0.0
      %6368 = vmatmul.mubr.f32.gmra.mrb[0].mxu0 %v6266
      %v6369 = vpop.f32.mrb[0].mxu0
      %v6370 = vadd.f32 %v6242, %v6369
      %v6371 = vpop.f32.mrb[0].mxu0
      %6372 = vdwg.mxu0
      %v6373 = vmax.f32 %v6335, 0.0
      %v6374 = vmax.f32 %v6340, 0.0
      %v6375 = vmax.f32 %v6345, 0.0
      %v6376 = vmax.f32 %v6350, 0.0
      %6378 = vset.pattern.permute.xlu0 0
      %6379 = vperm.xlu0 %6378, %v6178
      %v6380 = vpop.permute.xlu0 %6379
      %6383 = vset.pattern.permute.xlu0 0
      %6384 = vperm.xlu0 %6383, %v6179
      %v6385 = vpop.permute.xlu0 %6384
      %6388 = vset.pattern.permute.xlu0 0
      %6389 = vperm.xlu0 %6388, %v6180
      %v6390 = vpop.permute.xlu0 %6389
      %6393 = vset.pattern.permute.xlu0 0
      %6394 = vperm.xlu0 %6393, %v6181
      %v6395 = vpop.permute.xlu0 %6394
      %v6397 = vmul.f32 %v6373, %v6380
      %v6398 = vmul.f32 %v6374, %v6385
      %v6399 = vmul.f32 %v6375, %v6390
      %v6400 = vmul.f32 %v6376, %v6395
      %6401 = vset.pattern.permute.xlu0 1
      %6402 = vperm.xlu0 %6401, %v6178
      %v6403 = vpop.permute.xlu0 %6402
      %6405 = vset.pattern.permute.xlu0 1
      %6406 = vperm.xlu0 %6405, %v6179
      %v6407 = vpop.permute.xlu0 %6406
      %6409 = vset.pattern.permute.xlu0 1
      %6410 = vperm.xlu0 %6409, %v6180
      %v6411 = vpop.permute.xlu0 %6410
      %6413 = vset.pattern.permute.xlu0 1
      %6414 = vperm.xlu0 %6413, %v6181
      %v6415 = vpop.permute.xlu0 %6414
      %v6417 = vadd.f32 %v6397, %v6403
      %v6418 = vadd.f32 %v6398, %v6407
      %v6419 = vadd.f32 %v6399, %v6411
      %v6420 = vadd.f32 %v6400, %v6415
      %v6422 = vsel %vm2299, %v6417, 0
      %v6425 = vsel %vm2299, %v6418, 0
      %v6428 = vsel %vm2299, %v6419, 0
      %v6431 = vsel %vm2299, %v6420, 0
      %6433 = vmatprep.subr.mxu0 0.0
      %6434 = vmatpush1.msra.mxu0 %v6150
      %6435 = vmatprep.subr.mxu0 0.0
      %6436 = vmatpush1.msra.mxu0 0.0
      %6437 = vmatprep.subr.mxu0 0.0
      %6438 = vmatpush1.msra.mxu0 0.0
      %6439 = vmatprep.subr.mxu0 0.0
      %6440 = vmatpush1.msra.mxu0 0.0
      %6441 = vmatprep.subr.mxu0 0.0
      %6442 = vmatpush1.msra.mxu0 0.0
      %6443 = vmatprep.subr.mxu0 0.0
      %6444 = vmatpush1.msra.mxu0 0.0
      %6445 = vmatprep.subr.mxu0 0.0
      %6446 = vmatpush1.msra.mxu0 0.0
      %6447 = vmatprep.subr.mxu0 0.0
      %6448 = vmatpush1.msra.mxu0 0.0
      %6449 = vmatprep.subr.mxu0 0.0
      %6450 = vmatpush1.msra.mxu0 0.0
      %6451 = vmatprep.subr.mxu0 0.0
      %6452 = vmatpush1.msra.mxu0 0.0
      %6453 = vmatprep.subr.mxu0 0.0
      %6454 = vmatpush1.msra.mxu0 0.0
      %6455 = vmatprep.subr.mxu0 0.0
      %6456 = vmatpush1.msra.mxu0 0.0
      %6457 = vmatprep.subr.mxu0 0.0
      %6458 = vmatpush1.msra.mxu0 0.0
      %6459 = vmatprep.subr.mxu0 0.0
      %6460 = vmatpush1.msra.mxu0 0.0
      %6461 = vmatprep.subr.mxu0 0.0
      %6462 = vmatpush1.msra.mxu0 0.0
      %6463 = vmatprep.subr.mxu0 0.0
      %6464 = vmatpush1.msra.mxu0 0.0
      %6465 = vmatprep.subr.mxu0 0.0
      %6466 = vmatpush1.msra.mxu0 0.0
      %6467 = vmatprep.subr.mxu0 0.0
      %6468 = vmatpush1.msra.mxu0 0.0
      %6469 = vmatprep.subr.mxu0 0.0
      %6470 = vmatpush1.msra.mxu0 0.0
      %6471 = vmatprep.subr.mxu0 0.0
      %6472 = vmatpush1.msra.mxu0 0.0
      %6473 = vmatprep.subr.mxu0 0.0
      %6474 = vmatpush1.msra.mxu0 0.0
      %6475 = vmatprep.subr.mxu0 0.0
      %6476 = vmatpush1.msra.mxu0 0.0
      %6477 = vmatprep.subr.mxu0 0.0
      %6478 = vmatpush1.msra.mxu0 0.0
      %6479 = vmatprep.subr.mxu0 0.0
      %6480 = vmatpush1.msra.mxu0 0.0
      %6481 = vmatprep.subr.mxu0 0.0
      %6482 = vmatpush1.msra.mxu0 0.0
      %6483 = vmatprep.subr.mxu0 0.0
      %6484 = vmatpush1.msra.mxu0 0.0
      %6485 = vmatprep.subr.mxu0 0.0
      %6486 = vmatpush1.msra.mxu0 0.0
      %6487 = vmatprep.subr.mxu0 0.0
      %6488 = vmatpush1.msra.mxu0 0.0
      %6489 = vmatprep.subr.mxu0 0.0
      %6490 = vmatpush1.msra.mxu0 0.0
      %6491 = vmatprep.subr.mxu0 0.0
      %6492 = vmatpush1.msra.mxu0 0.0
      %6493 = vmatprep.subr.mxu0 0.0
      %6494 = vmatpush1.msra.mxu0 0.0
      %6495 = vmatprep.subr.mxu0 0.0
      %6496 = vmatpush1.msra.mxu0 0.0
      %6497 = vmatprep.mubr.f32.mxu0 0.0
      %6498 = vmatmul.mubr.f32.gmra.mrb[0].mxu0 %v6422
      %v6499 = vpop.f32.mrb[0].mxu0
      %v6500 = vadd.f32 0.0, %v6499
      %v6501 = vpop.f32.mrb[0].mxu0
      %6502 = vmatprep.mubr.f32.mxu0 0.0
      %6503 = vmatmul.mubr.f32.gmra.mrb[0].mxu0 %v6425
      %v6504 = vpop.f32.mrb[0].mxu0
      %v6505 = vadd.f32 0.0, %v6504
      %v6506 = vpop.f32.mrb[0].mxu0
      %6507 = vmatprep.mubr.f32.mxu0 0.0
      %6508 = vmatmul.mubr.f32.gmra.mrb[0].mxu0 %v6428
      %v6509 = vpop.f32.mrb[0].mxu0
      %v6510 = vadd.f32 0.0, %v6509
      %v6511 = vpop.f32.mrb[0].mxu0
      %6512 = vmatprep.mubr.f32.mxu0 0.0
      %6513 = vmatmul.mubr.f32.gmra.mrb[0].mxu0 %v6431
      %v6514 = vpop.f32.mrb[0].mxu0
      %v6515 = vadd.f32 0.0, %v6514
      %v6516 = vpop.f32.mrb[0].mxu0
      %6517 = vdwg.mxu0
      %v6519 = vsel %vm2299, %v6500, 0
      %v6522 = vsel %vm2299, %v6505, 0
      %v6525 = vsel %vm2299, %v6510, 0
      %v6528 = vsel %vm2299, %v6515, 0
      %6530 = vmatprep.subr.mxu0 0.0
      %6531 = vmatpush1.msra.mxu0 %v6150
      %6532 = vmatprep.subr.mxu0 0.0
      %6533 = vmatpush1.msra.mxu0 0.0
      %6534 = vmatprep.subr.mxu0 0.0
      %6535 = vmatpush1.msra.mxu0 0.0
      %6536 = vmatprep.subr.mxu0 0.0
      %6537 = vmatpush1.msra.mxu0 0.0
      %6538 = vmatprep.subr.mxu0 0.0
      %6539 = vmatpush1.msra.mxu0 0.0
      %6540 = vmatprep.subr.mxu0 0.0
      %6541 = vmatpush1.msra.mxu0 0.0
      %6542 = vmatprep.subr.mxu0 0.0
      %6543 = vmatpush1.msra.mxu0 0.0
      %6544 = vmatprep.subr.mxu0 0.0
      %6545 = vmatpush1.msra.mxu0 0.0
      %6546 = vmatprep.subr.mxu0 0.0
      %6547 = vmatpush1.msra.mxu0 0.0
      %6548 = vmatprep.subr.mxu0 0.0
      %6549 = vmatpush1.msra.mxu0 0.0
      %6550 = vmatprep.subr.mxu0 0.0
      %6551 = vmatpush1.msra.mxu0 0.0
      %6552 = vmatprep.subr.mxu0 0.0
      %6553 = vmatpush1.msra.mxu0 0.0
      %6554 = vmatprep.subr.mxu0 0.0
      %6555 = vmatpush1.msra.mxu0 0.0
      %6556 = vmatprep.subr.mxu0 0.0
      %6557 = vmatpush1.msra.mxu0 0.0
      %6558 = vmatprep.subr.mxu0 0.0
      %6559 = vmatpush1.msra.mxu0 0.0
      %6560 = vmatprep.subr.mxu0 0.0
      %6561 = vmatpush1.msra.mxu0 0.0
      %6562 = vmatprep.subr.mxu0 0.0
      %6563 = vmatpush1.msra.mxu0 0.0
      %6564 = vmatprep.subr.mxu0 0.0
      %6565 = vmatpush1.msra.mxu0 0.0
      %6566 = vmatprep.subr.mxu0 0.0
      %6567 = vmatpush1.msra.mxu0 0.0
      %6568 = vmatprep.subr.mxu0 0.0
      %6569 = vmatpush1.msra.mxu0 0.0
      %6570 = vmatprep.subr.mxu0 0.0
      %6571 = vmatpush1.msra.mxu0 0.0
      %6572 = vmatprep.subr.mxu0 0.0
      %6573 = vmatpush1.msra.mxu0 0.0
      %6574 = vmatprep.subr.mxu0 0.0
      %6575 = vmatpush1.msra.mxu0 0.0
      %6576 = vmatprep.subr.mxu0 0.0
      %6577 = vmatpush1.msra.mxu0 0.0
      %6578 = vmatprep.subr.mxu0 0.0
      %6579 = vmatpush1.msra.mxu0 0.0
      %6580 = vmatprep.subr.mxu0 0.0
      %6581 = vmatpush1.msra.mxu0 0.0
      %6582 = vmatprep.subr.mxu0 0.0
      %6583 = vmatpush1.msra.mxu0 0.0
      %6584 = vmatprep.subr.mxu0 0.0
      %6585 = vmatpush1.msra.mxu0 0.0
      %6586 = vmatprep.subr.mxu0 0.0
      %6587 = vmatpush1.msra.mxu0 0.0
      %6588 = vmatprep.subr.mxu0 0.0
      %6589 = vmatpush1.msra.mxu0 0.0
      %6590 = vmatprep.subr.mxu0 0.0
      %6591 = vmatpush1.msra.mxu0 0.0
      %6592 = vmatprep.subr.mxu0 0.0
      %6593 = vmatpush1.msra.mxu0 0.0
      %6594 = vmatprep.mubr.f32.mxu0 0.0
      %6595 = vmatmul.mubr.f32.gmra.mrb[0].mxu0 %v6519
      %v6596 = vpop.f32.mrb[0].mxu0
      %v6597 = vadd.f32 0.0, %v6596
      %v6598 = vpop.f32.mrb[0].mxu0
      %6599 = vmatprep.mubr.f32.mxu0 0.0
      %6600 = vmatmul.mubr.f32.gmra.mrb[0].mxu0 %v6522
      %v6601 = vpop.f32.mrb[0].mxu0
      %v6602 = vadd.f32 0.0, %v6601
      %v6603 = vpop.f32.mrb[0].mxu0
      %6604 = vmatprep.mubr.f32.mxu0 0.0
      %6605 = vmatmul.mubr.f32.gmra.mrb[0].mxu0 %v6525
      %v6606 = vpop.f32.mrb[0].mxu0
      %v6607 = vadd.f32 0.0, %v6606
      %v6608 = vpop.f32.mrb[0].mxu0
      %6609 = vmatprep.mubr.f32.mxu0 0.0
      %6610 = vmatmul.mubr.f32.gmra.mrb[0].mxu0 %v6528
      %v6611 = vpop.f32.mrb[0].mxu0
      %v6612 = vadd.f32 0.0, %v6611
      %v6613 = vpop.f32.mrb[0].mxu0
      %6614 = vdwg.mxu0
      %6615 = vset.pattern.permute.xlu0 2
      %6616 = vperm.xlu0 %6615, %v6178
      %v6617 = vpop.permute.xlu0 %6616
      %6619 = vset.pattern.permute.xlu0 2
      %6620 = vperm.xlu0 %6619, %v6179
      %v6621 = vpop.permute.xlu0 %6620
      %6623 = vset.pattern.permute.xlu0 2
      %6624 = vperm.xlu0 %6623, %v6180
      %v6625 = vpop.permute.xlu0 %6624
      %6627 = vset.pattern.permute.xlu0 2
      %6628 = vperm.xlu0 %6627, %v6181
      %v6629 = vpop.permute.xlu0 %6628
      %v6632 = vsel %vm1707, %v6173, 0
      %v6635 = vsel %vm1707, %v6174, 0
      %v6638 = vsel %vm1707, %v6175, 0
      %v6641 = vsel %vm1707, %v6176, 0
      %6643 = vmatprep.subr.mxu0 0.0
      %6644 = vmatpush1.msra.mxu0 %v6417
      %6645 = vmatprep.subr.mxu0 0.0
      %6646 = vmatpush1.msra.mxu0 %v6418
      %6647 = vmatprep.subr.mxu0 0.0
      %6648 = vmatpush1.msra.mxu0 %v6419
      %6649 = vmatprep.subr.mxu0 0.0
      %6650 = vmatpush1.msra.mxu0 %v6420
      %6651 = vmatprep.subr.mxu0 0.0
      %6652 = vmatpush1.msra.mxu0 %v6500
      %6653 = vmatprep.subr.mxu0 0.0
      %6654 = vmatpush1.msra.mxu0 %v6505
      %6655 = vmatprep.subr.mxu0 0.0
      %6656 = vmatpush1.msra.mxu0 %v6510
      %6657 = vmatprep.subr.mxu0 0.0
      %6658 = vmatpush1.msra.mxu0 %v6515
      %6659 = vmatprep.subr.mxu0 0.0
      %6660 = vmatpush1.msra.mxu0 %v6597
      %6661 = vmatprep.subr.mxu0 0.0
      %6662 = vmatpush1.msra.mxu0 %v6602
      %6663 = vmatprep.subr.mxu0 0.0
      %6664 = vmatpush1.msra.mxu0 %v6607
      %6665 = vmatprep.subr.mxu0 0.0
      %6666 = vmatpush1.msra.mxu0 %v6612
      %6667 = vmatprep.subr.mxu0 0.0
      %6668 = vmatpush1.msra.mxu0 0.0
      %6669 = vmatprep.subr.mxu0 0.0
      %6670 = vmatpush1.msra.mxu0 0.0
      %6671 = vmatprep.subr.mxu0 0.0
      %6672 = vmatpush1.msra.mxu0 0.0
      %6673 = vmatprep.subr.mxu0 0.0
      %6674 = vmatpush1.msra.mxu0 0.0
      %6675 = vmatprep.subr.mxu0 0.0
      %6676 = vmatpush1.msra.mxu0 0.0
      %6677 = vmatprep.subr.mxu0 0.0
      %6678 = vmatpush1.msra.mxu0 0.0
      %6679 = vmatprep.subr.mxu0 0.0
      %6680 = vmatpush1.msra.mxu0 0.0
      %6681 = vmatprep.subr.mxu0 0.0
      %6682 = vmatpush1.msra.mxu0 0.0
      %6683 = vmatprep.subr.mxu0 0.0
      %6684 = vmatpush1.msra.mxu0 0.0
      %6685 = vmatprep.subr.mxu0 0.0
      %6686 = vmatpush1.msra.mxu0 0.0
      %6687 = vmatprep.subr.mxu0 0.0
      %6688 = vmatpush1.msra.mxu0 0.0
      %6689 = vmatprep.subr.mxu0 0.0
      %6690 = vmatpush1.msra.mxu0 0.0
      %6691 = vmatprep.subr.mxu0 0.0
      %6692 = vmatpush1.msra.mxu0 0.0
      %6693 = vmatprep.subr.mxu0 0.0
      %6694 = vmatpush1.msra.mxu0 0.0
      %6695 = vmatprep.subr.mxu0 0.0
      %6696 = vmatpush1.msra.mxu0 0.0
      %6697 = vmatprep.subr.mxu0 0.0
      %6698 = vmatpush1.msra.mxu0 0.0
      %6699 = vmatprep.subr.mxu0 0.0
      %6700 = vmatpush1.msra.mxu0 0.0
      %6701 = vmatprep.subr.mxu0 0.0
      %6702 = vmatpush1.msra.mxu0 0.0
      %6703 = vmatprep.subr.mxu0 0.0
      %6704 = vmatpush1.msra.mxu0 0.0
      %6705 = vmatprep.subr.mxu0 0.0
      %6706 = vmatpush1.msra.mxu0 0.0
      %6707 = vmatprep.mubr.f32.mxu0 0.0
      %6708 = vmatmul.mubr.f32.gmra.mrb[0].mxu0 %v6632
      %v6709 = vpop.f32.mrb[0].mxu0
      %v6710 = vadd.f32 %v6617, %v6709
      %v6711 = vpop.f32.mrb[0].mxu0
      %6712 = vmatprep.mubr.f32.mxu0 0.0
      %6713 = vmatmul.mubr.f32.gmra.mrb[0].mxu0 %v6635
      %v6714 = vpop.f32.mrb[0].mxu0
      %v6715 = vadd.f32 %v6621, %v6714
      %v6716 = vpop.f32.mrb[0].mxu0
      %6717 = vmatprep.mubr.f32.mxu0 0.0
      %6718 = vmatmul.mubr.f32.gmra.mrb[0].mxu0 %v6638
      %v6719 = vpop.f32.mrb[0].mxu0
      %v6720 = vadd.f32 %v6625, %v6719
      %v6721 = vpop.f32.mrb[0].mxu0
      %6722 = vmatprep.mubr.f32.mxu0 0.0
      %6723 = vmatmul.mubr.f32.gmra.mrb[0].mxu0 %v6641
      %v6724 = vpop.f32.mrb[0].mxu0
      %v6725 = vadd.f32 %v6629, %v6724
      %v6726 = vpop.f32.mrb[0].mxu0
      %6727 = vdwg.mxu0
      %v6729 = vsel %vm2299, %v6710, 0
      %v6732 = vsel %vm2299, %v6715, 0
      %v6735 = vsel %vm2299, %v6720, 0
      %v6738 = vsel %vm2299, %v6725, 0
      %6740 = vmatprep.subr.mxu0 0.0
      %6741 = vmatpush1.msra.mxu0 %v6149
      %6742 = vmatprep.subr.mxu0 0.0
      %6743 = vmatpush1.msra.mxu0 0.0
      %6744 = vmatprep.subr.mxu0 0.0
      %6745 = vmatpush1.msra.mxu0 0.0
      %6746 = vmatprep.subr.mxu0 0.0
      %6747 = vmatpush1.msra.mxu0 0.0
      %6748 = vmatprep.subr.mxu0 0.0
      %6749 = vmatpush1.msra.mxu0 0.0
      %6750 = vmatprep.subr.mxu0 0.0
      %6751 = vmatpush1.msra.mxu0 0.0
      %6752 = vmatprep.subr.mxu0 0.0
      %6753 = vmatpush1.msra.mxu0 0.0
      %6754 = vmatprep.subr.mxu0 0.0
      %6755 = vmatpush1.msra.mxu0 0.0
      %6756 = vmatprep.subr.mxu0 0.0
      %6757 = vmatpush1.msra.mxu0 0.0
      %6758 = vmatprep.subr.mxu0 0.0
      %6759 = vmatpush1.msra.mxu0 0.0
      %6760 = vmatprep.subr.mxu0 0.0
      %6761 = vmatpush1.msra.mxu0 0.0
      %6762 = vmatprep.subr.mxu0 0.0
      %6763 = vmatpush1.msra.mxu0 0.0
      %6764 = vmatprep.subr.mxu0 0.0
      %6765 = vmatpush1.msra.mxu0 0.0
      %6766 = vmatprep.subr.mxu0 0.0
      %6767 = vmatpush1.msra.mxu0 0.0
      %6768 = vmatprep.subr.mxu0 0.0
      %6769 = vmatpush1.msra.mxu0 0.0
      %6770 = vmatprep.subr.mxu0 0.0
      %6771 = vmatpush1.msra.mxu0 0.0
      %6772 = vmatprep.subr.mxu0 0.0
      %6773 = vmatpush1.msra.mxu0 0.0
      %6774 = vmatprep.subr.mxu0 0.0
      %6775 = vmatpush1.msra.mxu0 0.0
      %6776 = vmatprep.subr.mxu0 0.0
      %6777 = vmatpush1.msra.mxu0 0.0
      %6778 = vmatprep.subr.mxu0 0.0
      %6779 = vmatpush1.msra.mxu0 0.0
      %6780 = vmatprep.subr.mxu0 0.0
      %6781 = vmatpush1.msra.mxu0 0.0
      %6782 = vmatprep.subr.mxu0 0.0
      %6783 = vmatpush1.msra.mxu0 0.0
      %6784 = vmatprep.subr.mxu0 0.0
      %6785 = vmatpush1.msra.mxu0 0.0
      %6786 = vmatprep.subr.mxu0 0.0
      %6787 = vmatpush1.msra.mxu0 0.0
      %6788 = vmatprep.subr.mxu0 0.0
      %6789 = vmatpush1.msra.mxu0 0.0
      %6790 = vmatprep.subr.mxu0 0.0
      %6791 = vmatpush1.msra.mxu0 0.0
      %6792 = vmatprep.subr.mxu0 0.0
      %6793 = vmatpush1.msra.mxu0 0.0
      %6794 = vmatprep.subr.mxu0 0.0
      %6795 = vmatpush1.msra.mxu0 0.0
      %6796 = vmatprep.subr.mxu0 0.0
      %6797 = vmatpush1.msra.mxu0 0.0
      %6798 = vmatprep.subr.mxu0 0.0
      %6799 = vmatpush1.msra.mxu0 0.0
      %6800 = vmatprep.subr.mxu0 0.0
      %6801 = vmatpush1.msra.mxu0 0.0
      %6802 = vmatprep.subr.mxu0 0.0
      %6803 = vmatpush1.msra.mxu0 0.0
      %6804 = vmatprep.mubr.f32.mxu0 0.0
      %6805 = vmatmul.mubr.f32.gmra.mrb[0].mxu0 %v6729
      %v6806 = vpop.f32.mrb[0].mxu0
      %v6807 = vadd.f32 0.0, %v6806
      %v6808 = vpop.f32.mrb[0].mxu0
      %6809 = vmatprep.mubr.f32.mxu0 0.0
      %6810 = vmatmul.mubr.f32.gmra.mrb[0].mxu0 %v6732
      %v6811 = vpop.f32.mrb[0].mxu0
      %v6812 = vadd.f32 0.0, %v6811
      %v6813 = vpop.f32.mrb[0].mxu0
      %6814 = vmatprep.mubr.f32.mxu0 0.0
      %6815 = vmatmul.mubr.f32.gmra.mrb[0].mxu0 %v6735
      %v6816 = vpop.f32.mrb[0].mxu0
      %v6817 = vadd.f32 0.0, %v6816
      %v6818 = vpop.f32.mrb[0].mxu0
      %6819 = vmatprep.mubr.f32.mxu0 0.0
      %6820 = vmatmul.mubr.f32.gmra.mrb[0].mxu0 %v6738
      %v6821 = vpop.f32.mrb[0].mxu0
      %v6822 = vadd.f32 0.0, %v6821
      %v6823 = vpop.f32.mrb[0].mxu0
      %6824 = vdwg.mxu0
      %v6825 = vlaneseq
      %v6826 = vshrl.u32 %v6825, 7
      %v6827 = vsub.s32 0, %v6826
      %v6828 = vrot.slane %v6185, %v6827
      %v6829 = vmul.f32 %v6807, %v6828
      %v6830 = vmul.f32 %v6812, %v6828
      %v6831 = vmul.f32 %v6817, %v6828
      %v6832 = vmul.f32 %v6822, %v6828
      %v6833 = vlaneseq
      %v6834 = vshrl.u32 %v6833, 7
      %v6835 = vsub.s32 1, %v6834
      %v6836 = vrot.slane %v6185, %v6835
      %v6837 = vadd.f32 %v6829, %v6836
      %v6838 = vadd.f32 %v6830, %v6836
      %v6839 = vadd.f32 %v6831, %v6836
      %v6840 = vadd.f32 %v6832, %v6836
      %v6842 = vsel %vm1918, %v6148, 0
      %6844 = vmatprep.subr.mxu0 0.0
      %6845 = vmatpush1.msra.mxu0 %v6837
      %6846 = vmatprep.subr.mxu0 0.0
      %6847 = vmatpush1.msra.mxu0 %v6838
      %6848 = vmatprep.subr.mxu0 0.0
      %6849 = vmatpush1.msra.mxu0 %v6839
      %6850 = vmatprep.subr.mxu0 0.0
      %6851 = vmatpush1.msra.mxu0 %v6840
      %6852 = vmatprep.subr.mxu0 0.0
      %6853 = vmatpush1.msra.mxu0 0.0
      %6854 = vmatprep.subr.mxu0 0.0
      %6855 = vmatpush1.msra.mxu0 0.0
      %6856 = vmatprep.subr.mxu0 0.0
      %6857 = vmatpush1.msra.mxu0 0.0
      %6858 = vmatprep.subr.mxu0 0.0
      %6859 = vmatpush1.msra.mxu0 0.0
      %6860 = vmatprep.subr.mxu0 0.0
      %6861 = vmatpush1.msra.mxu0 0.0
      %6862 = vmatprep.subr.mxu0 0.0
      %6863 = vmatpush1.msra.mxu0 0.0
      %6864 = vmatprep.subr.mxu0 0.0
      %6865 = vmatpush1.msra.mxu0 0.0
      %6866 = vmatprep.subr.mxu0 0.0
      %6867 = vmatpush1.msra.mxu0 0.0
      %6868 = vmatprep.subr.mxu0 0.0
      %6869 = vmatpush1.msra.mxu0 0.0
      %6870 = vmatprep.subr.mxu0 0.0
      %6871 = vmatpush1.msra.mxu0 0.0
      %6872 = vmatprep.subr.mxu0 0.0
      %6873 = vmatpush1.msra.mxu0 0.0
      %6874 = vmatprep.subr.mxu0 0.0
      %6875 = vmatpush1.msra.mxu0 0.0
      %6876 = vmatprep.subr.mxu0 0.0
      %6877 = vmatpush1.msra.mxu0 0.0
      %6878 = vmatprep.subr.mxu0 0.0
      %6879 = vmatpush1.msra.mxu0 0.0
      %6880 = vmatprep.subr.mxu0 0.0
      %6881 = vmatpush1.msra.mxu0 0.0
      %6882 = vmatprep.subr.mxu0 0.0
      %6883 = vmatpush1.msra.mxu0 0.0
      %6884 = vmatprep.subr.mxu0 0.0
      %6885 = vmatpush1.msra.mxu0 0.0
      %6886 = vmatprep.subr.mxu0 0.0
      %6887 = vmatpush1.msra.mxu0 0.0
      %6888 = vmatprep.subr.mxu0 0.0
      %6889 = vmatpush1.msra.mxu0 0.0
      %6890 = vmatprep.subr.mxu0 0.0
      %6891 = vmatpush1.msra.mxu0 0.0
      %6892 = vmatprep.subr.mxu0 0.0
      %6893 = vmatpush1.msra.mxu0 0.0
      %6894 = vmatprep.subr.mxu0 0.0
      %6895 = vmatpush1.msra.mxu0 0.0
      %6896 = vmatprep.subr.mxu0 0.0
      %6897 = vmatpush1.msra.mxu0 0.0
      %6898 = vmatprep.subr.mxu0 0.0
      %6899 = vmatpush1.msra.mxu0 0.0
      %6900 = vmatprep.subr.mxu0 0.0
      %6901 = vmatpush1.msra.mxu0 0.0
      %6902 = vmatprep.subr.mxu0 0.0
      %6903 = vmatpush1.msra.mxu0 0.0
      %6904 = vmatprep.subr.mxu0 0.0
      %6905 = vmatpush1.msra.mxu0 0.0
      %6906 = vmatprep.subr.mxu0 0.0
      %6907 = vmatpush1.msra.mxu0 0.0
      %6908 = vmatprep.mubr.f32.mxu0 0.0
      %6909 = vmatmul.mubr.f32.gmra.mrb[0].mxu0 %v6842
      %v6910 = vpop.f32.mrb[0].mxu0
      %v6911 = vadd.f32 0.0, %v6910
      %v6912 = vpop.f32.mrb[0].mxu0
      %6913 = vdwg.mxu0
      %v6915 = vrot.slane %v6185, 2
      %v6917 = vmul.f32 %v6911, %v6915
      %v6918 = vrot.slane %v6185, 3
      %v6920 = vadd.f32 %v6917, %v6918
      %v6922 = vsel %vm1918, %v6183, 0
      %6924 = vmatprep.subr.mxu0 0.0
      %6925 = vmatpush1.msra.mxu0 %v6710
      %6926 = vmatprep.subr.mxu0 0.0
      %6927 = vmatpush1.msra.mxu0 %v6715
      %6928 = vmatprep.subr.mxu0 0.0
      %6929 = vmatpush1.msra.mxu0 %v6720
      %6930 = vmatprep.subr.mxu0 0.0
      %6931 = vmatpush1.msra.mxu0 %v6725
      %6932 = vmatprep.subr.mxu0 0.0
      %6933 = vmatpush1.msra.mxu0 0.0
      %6934 = vmatprep.subr.mxu0 0.0
      %6935 = vmatpush1.msra.mxu0 0.0
      %6936 = vmatprep.subr.mxu0 0.0
      %6937 = vmatpush1.msra.mxu0 0.0
      %6938 = vmatprep.subr.mxu0 0.0
      %6939 = vmatpush1.msra.mxu0 0.0
      %6940 = vmatprep.subr.mxu0 0.0
      %6941 = vmatpush1.msra.mxu0 0.0
      %6942 = vmatprep.subr.mxu0 0.0
      %6943 = vmatpush1.msra.mxu0 0.0
      %6944 = vmatprep.subr.mxu0 0.0
      %6945 = vmatpush1.msra.mxu0 0.0
      %6946 = vmatprep.subr.mxu0 0.0
      %6947 = vmatpush1.msra.mxu0 0.0
      %6948 = vmatprep.subr.mxu0 0.0
      %6949 = vmatpush1.msra.mxu0 0.0
      %6950 = vmatprep.subr.mxu0 0.0
      %6951 = vmatpush1.msra.mxu0 0.0
      %6952 = vmatprep.subr.mxu0 0.0
      %6953 = vmatpush1.msra.mxu0 0.0
      %6954 = vmatprep.subr.mxu0 0.0
      %6955 = vmatpush1.msra.mxu0 0.0
      %6956 = vmatprep.subr.mxu0 0.0
      %6957 = vmatpush1.msra.mxu0 0.0
      %6958 = vmatprep.subr.mxu0 0.0
      %6959 = vmatpush1.msra.mxu0 0.0
      %6960 = vmatprep.subr.mxu0 0.0
      %6961 = vmatpush1.msra.mxu0 0.0
      %6962 = vmatprep.subr.mxu0 0.0
      %6963 = vmatpush1.msra.mxu0 0.0
      %6964 = vmatprep.subr.mxu0 0.0
      %6965 = vmatpush1.msra.mxu0 0.0
      %6966 = vmatprep.subr.mxu0 0.0
      %6967 = vmatpush1.msra.mxu0 0.0
      %6968 = vmatprep.subr.mxu0 0.0
      %6969 = vmatpush1.msra.mxu0 0.0
      %6970 = vmatprep.subr.mxu0 0.0
      %6971 = vmatpush1.msra.mxu0 0.0
      %6972 = vmatprep.subr.mxu0 0.0
      %6973 = vmatpush1.msra.mxu0 0.0
      %6974 = vmatprep.subr.mxu0 0.0
      %6975 = vmatpush1.msra.mxu0 0.0
      %6976 = vmatprep.subr.mxu0 0.0
      %6977 = vmatpush1.msra.mxu0 0.0
      %6978 = vmatprep.subr.mxu0 0.0
      %6979 = vmatpush1.msra.mxu0 0.0
      %6980 = vmatprep.subr.mxu0 0.0
      %6981 = vmatpush1.msra.mxu0 0.0
      %6982 = vmatprep.subr.mxu0 0.0
      %6983 = vmatpush1.msra.mxu0 0.0
      %6984 = vmatprep.subr.mxu0 0.0
      %6985 = vmatpush1.msra.mxu0 0.0
      %6986 = vmatprep.subr.mxu0 0.0
      %6987 = vmatpush1.msra.mxu0 0.0
      %6988 = vmatprep.mubr.f32.mxu0 0.0
      %6989 = vmatmul.mubr.f32.gmra.mrb[0].mxu0 %v6922
      %v6990 = vpop.f32.mrb[0].mxu0
      %v6991 = vadd.f32 0.0, %v6990
      %v6992 = vpop.f32.mrb[0].mxu0
      %6993 = vdwg.mxu0
      %v6994 = vmul.f32 %v6151, %v6991
      %v6996 = vsel %vm2299, %v6994, 0
      %6998 = vmatprep.subr.mxu0 0.0
      %6999 = vmatpush1.msra.mxu0 %v6152
      %7000 = vmatprep.subr.mxu0 0.0
      %7001 = vmatpush1.msra.mxu0 0.0
      %7002 = vmatprep.subr.mxu0 0.0
      %7003 = vmatpush1.msra.mxu0 0.0
      %7004 = vmatprep.subr.mxu0 0.0
      %7005 = vmatpush1.msra.mxu0 0.0
      %7006 = vmatprep.subr.mxu0 0.0
      %7007 = vmatpush1.msra.mxu0 0.0
      %7008 = vmatprep.subr.mxu0 0.0
      %7009 = vmatpush1.msra.mxu0 0.0
      %7010 = vmatprep.subr.mxu0 0.0
      %7011 = vmatpush1.msra.mxu0 0.0
      %7012 = vmatprep.subr.mxu0 0.0
      %7013 = vmatpush1.msra.mxu0 0.0
      %7014 = vmatprep.subr.mxu0 0.0
      %7015 = vmatpush1.msra.mxu0 0.0
      %7016 = vmatprep.subr.mxu0 0.0
      %7017 = vmatpush1.msra.mxu0 0.0
      %7018 = vmatprep.subr.mxu0 0.0
      %7019 = vmatpush1.msra.mxu0 0.0
      %7020 = vmatprep.subr.mxu0 0.0
      %7021 = vmatpush1.msra.mxu0 0.0
      %7022 = vmatprep.subr.mxu0 0.0
      %7023 = vmatpush1.msra.mxu0 0.0
      %7024 = vmatprep.subr.mxu0 0.0
      %7025 = vmatpush1.msra.mxu0 0.0
      %7026 = vmatprep.subr.mxu0 0.0
      %7027 = vmatpush1.msra.mxu0 0.0
      %7028 = vmatprep.subr.mxu0 0.0
      %7029 = vmatpush1.msra.mxu0 0.0
      %7030 = vmatprep.subr.mxu0 0.0
      %7031 = vmatpush1.msra.mxu0 0.0
      %7032 = vmatprep.subr.mxu0 0.0
      %7033 = vmatpush1.msra.mxu0 0.0
      %7034 = vmatprep.subr.mxu0 0.0
      %7035 = vmatpush1.msra.mxu0 0.0
      %7036 = vmatprep.subr.mxu0 0.0
      %7037 = vmatpush1.msra.mxu0 0.0
      %7038 = vmatprep.subr.mxu0 0.0
      %7039 = vmatpush1.msra.mxu0 0.0
      %7040 = vmatprep.subr.mxu0 0.0
      %7041 = vmatpush1.msra.mxu0 0.0
      %7042 = vmatprep.subr.mxu0 0.0
      %7043 = vmatpush1.msra.mxu0 0.0
      %7044 = vmatprep.subr.mxu0 0.0
      %7045 = vmatpush1.msra.mxu0 0.0
      %7046 = vmatprep.subr.mxu0 0.0
      %7047 = vmatpush1.msra.mxu0 0.0
      %7048 = vmatprep.subr.mxu0 0.0
      %7049 = vmatpush1.msra.mxu0 0.0
      %7050 = vmatprep.subr.mxu0 0.0
      %7051 = vmatpush1.msra.mxu0 0.0
      %7052 = vmatprep.subr.mxu0 0.0
      %7053 = vmatpush1.msra.mxu0 0.0
      %7054 = vmatprep.subr.mxu0 0.0
      %7055 = vmatpush1.msra.mxu0 0.0
      %7056 = vmatprep.subr.mxu0 0.0
      %7057 = vmatpush1.msra.mxu0 0.0
      %7058 = vmatprep.subr.mxu0 0.0
      %7059 = vmatpush1.msra.mxu0 0.0
      %7060 = vmatprep.subr.mxu0 0.0
      %7061 = vmatpush1.msra.mxu0 0.0
      %7062 = vmatprep.mubr.f32.mxu0 0.0
      %7063 = vmatmul.mubr.f32.gmra.mrb[0].mxu0 %v6996
      %v7064 = vpop.f32.mrb[0].mxu0
      %v7065 = vadd.f32 0.0, %v7064
      %v7066 = vpop.f32.mrb[0].mxu0
      %7067 = vdwg.mxu0
      %v7068 = vrot.slane %v6185, 4
      %v7070 = vmul.f32 %v7065, %v7068
      %v7071 = vrot.slane %v6185, 5
      %v7073 = vadd.f32 %v7070, %v7071
      %7074 = vxpose.xlu0.b32.start [1/16] %v6920, 128
      %7075 = vxpose.xlu0.b32.cont [2/16] 0.0, 128
      %7076 = vxpose.xlu0.b32.cont [3/16] 0.0, 128
      %7077 = vxpose.xlu0.b32.cont [4/16] 0.0, 128
      %7078 = vxpose.xlu0.b32.cont [5/16] 0.0, 128
      %7079 = vxpose.xlu0.b32.cont [6/16] 0.0, 128
      %7080 = vxpose.xlu0.b32.cont [7/16] 0.0, 128
      %7081 = vxpose.xlu0.b32.cont [8/16] 0.0, 128
      %7082 = vxpose.xlu0.b32.cont [9/16] 0.0, 128
      %7083 = vxpose.xlu0.b32.cont [10/16] 0.0, 128
      %7084 = vxpose.xlu0.b32.cont [11/16] 0.0, 128
      %7085 = vxpose.xlu0.b32.cont [12/16] 0.0, 128
      %7086 = vxpose.xlu0.b32.cont [13/16] 0.0, 128
      %7087 = vxpose.xlu0.b32.cont [14/16] 0.0, 128
      %7088 = vxpose.xlu0.b32.cont [15/16] 0.0, 128
      %7089 = vxpose.xlu0.b32.end [16/16] 0.0, 128
      %v7090 = vpop.trf.xlu0
      %v7091 = vpop.trf.xlu0
      %v7092 = vpop.trf.xlu0
      %v7093 = vpop.trf.xlu0
      %v7094 = vpop.trf.xlu0
      %v7095 = vpop.trf.xlu0
      %v7096 = vpop.trf.xlu0
      %v7097 = vpop.trf.xlu0
      %v7098 = vpop.trf.xlu0
      %v7099 = vpop.trf.xlu0
      %v7100 = vpop.trf.xlu0
      %v7101 = vpop.trf.xlu0
      %v7102 = vpop.trf.xlu0
      %v7103 = vpop.trf.xlu0
      %v7104 = vpop.trf.xlu0
      %v7105 = vpop.trf.xlu0
      %vm7106 = vcmask 7168
      %v7108 = vsel %vm7106, %v7090, 0
      %v7111 = vsel %vm5587, %v7073, 0
      %7113 = vmatprep.subr.mxu0 0.0
      %7114 = vmatpush1.msra.mxu0 %v7111
      %7115 = vmatprep.subr.mxu0 0.0
      %7116 = vmatpush1.msra.mxu0 0.0
      %7117 = vmatprep.subr.mxu0 0.0
      %7118 = vmatpush1.msra.mxu0 0.0
      %7119 = vmatprep.subr.mxu0 0.0
      %7120 = vmatpush1.msra.mxu0 0.0
      %7121 = vmatprep.subr.mxu0 0.0
      %7122 = vmatpush1.msra.mxu0 0.0
      %7123 = vmatprep.subr.mxu0 0.0
      %7124 = vmatpush1.msra.mxu0 0.0
      %7125 = vmatprep.subr.mxu0 0.0
      %7126 = vmatpush1.msra.mxu0 0.0
      %7127 = vmatprep.subr.mxu0 0.0
      %7128 = vmatpush1.msra.mxu0 0.0
      %7129 = vmatprep.subr.mxu0 0.0
      %7130 = vmatpush1.msra.mxu0 0.0
      %7131 = vmatprep.subr.mxu0 0.0
      %7132 = vmatpush1.msra.mxu0 0.0
      %7133 = vmatprep.subr.mxu0 0.0
      %7134 = vmatpush1.msra.mxu0 0.0
      %7135 = vmatprep.subr.mxu0 0.0
      %7136 = vmatpush1.msra.mxu0 0.0
      %7137 = vmatprep.subr.mxu0 0.0
      %7138 = vmatpush1.msra.mxu0 0.0
      %7139 = vmatprep.subr.mxu0 0.0
      %7140 = vmatpush1.msra.mxu0 0.0
      %7141 = vmatprep.subr.mxu0 0.0
      %7142 = vmatpush1.msra.mxu0 0.0
      %7143 = vmatprep.subr.mxu0 0.0
      %7144 = vmatpush1.msra.mxu0 0.0
      %7145 = vmatprep.subr.mxu0 0.0
      %7146 = vmatpush1.msra.mxu0 0.0
      %7147 = vmatprep.subr.mxu0 0.0
      %7148 = vmatpush1.msra.mxu0 0.0
      %7149 = vmatprep.subr.mxu0 0.0
      %7150 = vmatpush1.msra.mxu0 0.0
      %7151 = vmatprep.subr.mxu0 0.0
      %7152 = vmatpush1.msra.mxu0 0.0
      %7153 = vmatprep.subr.mxu0 0.0
      %7154 = vmatpush1.msra.mxu0 0.0
      %7155 = vmatprep.subr.mxu0 0.0
      %7156 = vmatpush1.msra.mxu0 0.0
      %7157 = vmatprep.subr.mxu0 0.0
      %7158 = vmatpush1.msra.mxu0 0.0
      %7159 = vmatprep.subr.mxu0 0.0
      %7160 = vmatpush1.msra.mxu0 0.0
      %7161 = vmatprep.subr.mxu0 0.0
      %7162 = vmatpush1.msra.mxu0 0.0
      %7163 = vmatprep.subr.mxu0 0.0
      %7164 = vmatpush1.msra.mxu0 0.0
      %7165 = vmatprep.subr.mxu0 0.0
      %7166 = vmatpush1.msra.mxu0 0.0
      %7167 = vmatprep.subr.mxu0 0.0
      %7168 = vmatpush1.msra.mxu0 0.0
      %7169 = vmatprep.subr.mxu0 0.0
      %7170 = vmatpush1.msra.mxu0 0.0
      %7171 = vmatprep.subr.mxu0 0.0
      %7172 = vmatpush1.msra.mxu0 0.0
      %7173 = vmatprep.subr.mxu0 0.0
      %7174 = vmatpush1.msra.mxu0 0.0
      %7175 = vmatprep.subr.mxu0 0.0
      %7176 = vmatpush1.msra.mxu0 0.0
      %7177 = vmatprep.mubr.f32.mxu0 0.0
      %7178 = vmatmul.mubr.f32.gmra.mrb[0].mxu0 %v7108
      %v7179 = vpop.f32.mrb[0].mxu0
      %v7180 = vadd.f32 0.0, %v7179
      %v7181 = vpop.f32.mrb[0].mxu0
      %7182 = vdwg.mxu0
      %v7183 = vmax.f32 %v7180, 0.0
      %v7184 = vlaneseq
      %v7185 = vshrl.u32 %v7184, 7
      %v7186 = vsub.s32 6, %v7185
      %v7187 = vrot.slane %v6185, %v7186
      %v7189 = vsel %vm2299, %v7183, 0
      %v7192 = vsel %vm2299, %v6187, 0
      %7194 = vmatprep.subr.mxu0 0.0
      %7195 = vmatpush1.xpose.msra.mxu0 %v7192
      %7196 = vmatprep.subr.mxu0 0.0
      %7197 = vmatpush1.xpose.msra.mxu0 0.0
      %7198 = vmatprep.subr.mxu0 0.0
      %7199 = vmatpush1.xpose.msra.mxu0 0.0
      %7200 = vmatprep.subr.mxu0 0.0
      %7201 = vmatpush1.xpose.msra.mxu0 0.0
      %7202 = vmatprep.subr.mxu0 0.0
      %7203 = vmatpush1.xpose.msra.mxu0 0.0
      %7204 = vmatprep.subr.mxu0 0.0
      %7205 = vmatpush1.xpose.msra.mxu0 0.0
      %7206 = vmatprep.subr.mxu0 0.0
      %7207 = vmatpush1.xpose.msra.mxu0 0.0
      %7208 = vmatprep.subr.mxu0 0.0
      %7209 = vmatpush1.xpose.msra.mxu0 0.0
      %7210 = vmatprep.subr.mxu0 0.0
      %7211 = vmatpush1.xpose.msra.mxu0 0.0
      %7212 = vmatprep.subr.mxu0 0.0
      %7213 = vmatpush1.xpose.msra.mxu0 0.0
      %7214 = vmatprep.subr.mxu0 0.0
      %7215 = vmatpush1.xpose.msra.mxu0 0.0
      %7216 = vmatprep.subr.mxu0 0.0
      %7217 = vmatpush1.xpose.msra.mxu0 0.0
      %7218 = vmatprep.subr.mxu0 0.0
      %7219 = vmatpush1.xpose.msra.mxu0 0.0
      %7220 = vmatprep.subr.mxu0 0.0
      %7221 = vmatpush1.xpose.msra.mxu0 0.0
      %7222 = vmatprep.subr.mxu0 0.0
      %7223 = vmatpush1.xpose.msra.mxu0 0.0
      %7224 = vmatprep.subr.mxu0 0.0
      %7225 = vmatpush1.xpose.msra.mxu0 0.0
      %7226 = vmatprep.subr.mxu0 0.0
      %7227 = vmatpush1.xpose.msra.mxu0 0.0
      %7228 = vmatprep.subr.mxu0 0.0
      %7229 = vmatpush1.xpose.msra.mxu0 0.0
      %7230 = vmatprep.subr.mxu0 0.0
      %7231 = vmatpush1.xpose.msra.mxu0 0.0
      %7232 = vmatprep.subr.mxu0 0.0
      %7233 = vmatpush1.xpose.msra.mxu0 0.0
      %7234 = vmatprep.subr.mxu0 0.0
      %7235 = vmatpush1.xpose.msra.mxu0 0.0
      %7236 = vmatprep.subr.mxu0 0.0
      %7237 = vmatpush1.xpose.msra.mxu0 0.0
      %7238 = vmatprep.subr.mxu0 0.0
      %7239 = vmatpush1.xpose.msra.mxu0 0.0
      %7240 = vmatprep.subr.mxu0 0.0
      %7241 = vmatpush1.xpose.msra.mxu0 0.0
      %7242 = vmatprep.subr.mxu0 0.0
      %7243 = vmatpush1.xpose.msra.mxu0 0.0
      %7244 = vmatprep.subr.mxu0 0.0
      %7245 = vmatpush1.xpose.msra.mxu0 0.0
      %7246 = vmatprep.subr.mxu0 0.0
      %7247 = vmatpush1.xpose.msra.mxu0 0.0
      %7248 = vmatprep.subr.mxu0 0.0
      %7249 = vmatpush1.xpose.msra.mxu0 0.0
      %7250 = vmatprep.subr.mxu0 0.0
      %7251 = vmatpush1.xpose.msra.mxu0 0.0
      %7252 = vmatprep.subr.mxu0 0.0
      %7253 = vmatpush1.xpose.msra.mxu0 0.0
      %7254 = vmatprep.subr.mxu0 0.0
      %7255 = vmatpush1.xpose.msra.mxu0 0.0
      %7256 = vmatprep.subr.mxu0 0.0
      %7257 = vmatpush1.xpose.msra.mxu0 0.0
      %7258 = vmatprep.mubr.f32.mxu0 0.0
      %7259 = vmatmul.mubr.f32.gmra.mrb[0].mxu0 %v7189
      %v7260 = vpop.f32.mrb[0].mxu0
      %v7261 = vadd.f32 %v7187, %v7260
      %v7262 = vpop.f32.mrb[0].mxu0
      %7263 = vdwg.mxu0
      %v7264 = vsel %vm2299, %v7261, -inf
      %7265 = vmax.xlane.f32.xlu0 %v7264
      %v7266 = vpop.xlane.xlu0 %7265
      %v7267 = vsub.f32 %v7261, %v7266
      %v7268 = vmul.f32 %v7267, 1.442695
      %v7269 = vpow.pop %v7268
      %v7270 = vsel %vm2299, %v7269, 0.0
      %7271 = vadd.xlane.f32.xlu0 %v7270
      %v7272 = vpop.xlane.xlu0 %7271
      %v7273 = vrcp.pop %v7272
      %v7274 = vmul.f32 %v7269, %v7273
      %v7276 = vsel %vm2299, %v6152, 0
      %v7279 = vsel %vm2299, %v7274, 0
      %7281 = vmatprep.subr.mxu0 0.0
      %7282 = vmatpush1.xpose.msra.mxu0 %v7279
      %7283 = vmatprep.subr.mxu0 0.0
      %7284 = vmatpush1.xpose.msra.mxu0 0.0
      %7285 = vmatprep.subr.mxu0 0.0
      %7286 = vmatpush1.xpose.msra.mxu0 0.0
      %7287 = vmatprep.subr.mxu0 0.0
      %7288 = vmatpush1.xpose.msra.mxu0 0.0
      %7289 = vmatprep.subr.mxu0 0.0
      %7290 = vmatpush1.xpose.msra.mxu0 0.0
      %7291 = vmatprep.subr.mxu0 0.0
      %7292 = vmatpush1.xpose.msra.mxu0 0.0
      %7293 = vmatprep.subr.mxu0 0.0
      %7294 = vmatpush1.xpose.msra.mxu0 0.0
      %7295 = vmatprep.subr.mxu0 0.0
      %7296 = vmatpush1.xpose.msra.mxu0 0.0
      %7297 = vmatprep.subr.mxu0 0.0
      %7298 = vmatpush1.xpose.msra.mxu0 0.0
      %7299 = vmatprep.subr.mxu0 0.0
      %7300 = vmatpush1.xpose.msra.mxu0 0.0
      %7301 = vmatprep.subr.mxu0 0.0
      %7302 = vmatpush1.xpose.msra.mxu0 0.0
      %7303 = vmatprep.subr.mxu0 0.0
      %7304 = vmatpush1.xpose.msra.mxu0 0.0
      %7305 = vmatprep.subr.mxu0 0.0
      %7306 = vmatpush1.xpose.msra.mxu0 0.0
      %7307 = vmatprep.subr.mxu0 0.0
      %7308 = vmatpush1.xpose.msra.mxu0 0.0
      %7309 = vmatprep.subr.mxu0 0.0
      %7310 = vmatpush1.xpose.msra.mxu0 0.0
      %7311 = vmatprep.subr.mxu0 0.0
      %7312 = vmatpush1.xpose.msra.mxu0 0.0
      %7313 = vmatprep.subr.mxu0 0.0
      %7314 = vmatpush1.xpose.msra.mxu0 0.0
      %7315 = vmatprep.subr.mxu0 0.0
      %7316 = vmatpush1.xpose.msra.mxu0 0.0
      %7317 = vmatprep.subr.mxu0 0.0
      %7318 = vmatpush1.xpose.msra.mxu0 0.0
      %7319 = vmatprep.subr.mxu0 0.0
      %7320 = vmatpush1.xpose.msra.mxu0 0.0
      %7321 = vmatprep.subr.mxu0 0.0
      %7322 = vmatpush1.xpose.msra.mxu0 0.0
      %7323 = vmatprep.subr.mxu0 0.0
      %7324 = vmatpush1.xpose.msra.mxu0 0.0
      %7325 = vmatprep.subr.mxu0 0.0
      %7326 = vmatpush1.xpose.msra.mxu0 0.0
      %7327 = vmatprep.subr.mxu0 0.0
      %7328 = vmatpush1.xpose.msra.mxu0 0.0
      %7329 = vmatprep.subr.mxu0 0.0
      %7330 = vmatpush1.xpose.msra.mxu0 0.0
      %7331 = vmatprep.subr.mxu0 0.0
      %7332 = vmatpush1.xpose.msra.mxu0 0.0
      %7333 = vmatprep.subr.mxu0 0.0
      %7334 = vmatpush1.xpose.msra.mxu0 0.0
      %7335 = vmatprep.subr.mxu0 0.0
      %7336 = vmatpush1.xpose.msra.mxu0 0.0
      %7337 = vmatprep.subr.mxu0 0.0
      %7338 = vmatpush1.xpose.msra.mxu0 0.0
      %7339 = vmatprep.subr.mxu0 0.0
      %7340 = vmatpush1.xpose.msra.mxu0 0.0
      %7341 = vmatprep.subr.mxu0 0.0
      %7342 = vmatpush1.xpose.msra.mxu0 0.0
      %7343 = vmatprep.subr.mxu0 0.0
      %7344 = vmatpush1.xpose.msra.mxu0 0.0
      %7345 = vmatprep.mubr.f32.mxu0 0.0
      %7346 = vmatmul.mubr.f32.gmra.mrb[0].mxu0 %v7276
      %v7347 = vpop.f32.mrb[0].mxu0
      %v7348 = vadd.f32 0.0, %v7347
      %v7349 = vpop.f32.mrb[0].mxu0
      %7350 = vdwg.mxu0
      %v7352 = vsel %vm2299, %v7348, 0
      %7354 = vmatprep.subr.mxu0 0.0
      %7355 = vmatpush1.xpose.msra.mxu0 %v7276
      %7356 = vmatprep.subr.mxu0 0.0
      %7357 = vmatpush1.xpose.msra.mxu0 0.0
      %7358 = vmatprep.subr.mxu0 0.0
      %7359 = vmatpush1.xpose.msra.mxu0 0.0
      %7360 = vmatprep.subr.mxu0 0.0
      %7361 = vmatpush1.xpose.msra.mxu0 0.0
      %7362 = vmatprep.subr.mxu0 0.0
      %7363 = vmatpush1.xpose.msra.mxu0 0.0
      %7364 = vmatprep.subr.mxu0 0.0
      %7365 = vmatpush1.xpose.msra.mxu0 0.0
      %7366 = vmatprep.subr.mxu0 0.0
      %7367 = vmatpush1.xpose.msra.mxu0 0.0
      %7368 = vmatprep.subr.mxu0 0.0
      %7369 = vmatpush1.xpose.msra.mxu0 0.0
      %7370 = vmatprep.subr.mxu0 0.0
      %7371 = vmatpush1.xpose.msra.mxu0 0.0
      %7372 = vmatprep.subr.mxu0 0.0
      %7373 = vmatpush1.xpose.msra.mxu0 0.0
      %7374 = vmatprep.subr.mxu0 0.0
      %7375 = vmatpush1.xpose.msra.mxu0 0.0
      %7376 = vmatprep.subr.mxu0 0.0
      %7377 = vmatpush1.xpose.msra.mxu0 0.0
      %7378 = vmatprep.subr.mxu0 0.0
      %7379 = vmatpush1.xpose.msra.mxu0 0.0
      %7380 = vmatprep.subr.mxu0 0.0
      %7381 = vmatpush1.xpose.msra.mxu0 0.0
      %7382 = vmatprep.subr.mxu0 0.0
      %7383 = vmatpush1.xpose.msra.mxu0 0.0
      %7384 = vmatprep.subr.mxu0 0.0
      %7385 = vmatpush1.xpose.msra.mxu0 0.0
      %7386 = vmatprep.subr.mxu0 0.0
      %7387 = vmatpush1.xpose.msra.mxu0 0.0
      %7388 = vmatprep.subr.mxu0 0.0
      %7389 = vmatpush1.xpose.msra.mxu0 0.0
      %7390 = vmatprep.subr.mxu0 0.0
      %7391 = vmatpush1.xpose.msra.mxu0 0.0
      %7392 = vmatprep.subr.mxu0 0.0
      %7393 = vmatpush1.xpose.msra.mxu0 0.0
      %7394 = vmatprep.subr.mxu0 0.0
      %7395 = vmatpush1.xpose.msra.mxu0 0.0
      %7396 = vmatprep.subr.mxu0 0.0
      %7397 = vmatpush1.xpose.msra.mxu0 0.0
      %7398 = vmatprep.subr.mxu0 0.0
      %7399 = vmatpush1.xpose.msra.mxu0 0.0
      %7400 = vmatprep.subr.mxu0 0.0
      %7401 = vmatpush1.xpose.msra.mxu0 0.0
      %7402 = vmatprep.subr.mxu0 0.0
      %7403 = vmatpush1.xpose.msra.mxu0 0.0
      %7404 = vmatprep.subr.mxu0 0.0
      %7405 = vmatpush1.xpose.msra.mxu0 0.0
      %7406 = vmatprep.subr.mxu0 0.0
      %7407 = vmatpush1.xpose.msra.mxu0 0.0
      %7408 = vmatprep.subr.mxu0 0.0
      %7409 = vmatpush1.xpose.msra.mxu0 0.0
      %7410 = vmatprep.subr.mxu0 0.0
      %7411 = vmatpush1.xpose.msra.mxu0 0.0
      %7412 = vmatprep.subr.mxu0 0.0
      %7413 = vmatpush1.xpose.msra.mxu0 0.0
      %7414 = vmatprep.subr.mxu0 0.0
      %7415 = vmatpush1.xpose.msra.mxu0 0.0
      %7416 = vmatprep.subr.mxu0 0.0
      %7417 = vmatpush1.xpose.msra.mxu0 0.0
      %7418 = vmatprep.mubr.f32.mxu0 0.0
      %7419 = vmatmul.mubr.f32.gmra.mrb[0].mxu0 %v7352
      %v7420 = vpop.f32.mrb[0].mxu0
      %v7421 = vadd.f32 0.0, %v7420
      %v7422 = vpop.f32.mrb[0].mxu0
      %7423 = vdwg.mxu0
      %v7424 = vmul.f32 %v6153, %v7421
      %7425 = vmatprep.subr.mxu0 0.0
      %7426 = vmatpush1.msra.mxu0 %v7424
      %7427 = vmatprep.subr.mxu0 0.0
      %7428 = vmatpush1.msra.mxu0 0.0
      %7429 = vmatprep.subr.mxu0 0.0
      %7430 = vmatpush1.msra.mxu0 0.0
      %7431 = vmatprep.subr.mxu0 0.0
      %7432 = vmatpush1.msra.mxu0 0.0
      %7433 = vmatprep.subr.mxu0 0.0
      %7434 = vmatpush1.msra.mxu0 0.0
      %7435 = vmatprep.subr.mxu0 0.0
      %7436 = vmatpush1.msra.mxu0 0.0
      %7437 = vmatprep.subr.mxu0 0.0
      %7438 = vmatpush1.msra.mxu0 0.0
      %7439 = vmatprep.subr.mxu0 0.0
      %7440 = vmatpush1.msra.mxu0 0.0
      %7441 = vmatprep.subr.mxu0 0.0
      %7442 = vmatpush1.msra.mxu0 0.0
      %7443 = vmatprep.subr.mxu0 0.0
      %7444 = vmatpush1.msra.mxu0 0.0
      %7445 = vmatprep.subr.mxu0 0.0
      %7446 = vmatpush1.msra.mxu0 0.0
      %7447 = vmatprep.subr.mxu0 0.0
      %7448 = vmatpush1.msra.mxu0 0.0
      %7449 = vmatprep.subr.mxu0 0.0
      %7450 = vmatpush1.msra.mxu0 0.0
      %7451 = vmatprep.subr.mxu0 0.0
      %7452 = vmatpush1.msra.mxu0 0.0
      %7453 = vmatprep.subr.mxu0 0.0
      %7454 = vmatpush1.msra.mxu0 0.0
      %7455 = vmatprep.subr.mxu0 0.0
      %7456 = vmatpush1.msra.mxu0 0.0
      %7457 = vmatprep.subr.mxu0 0.0
      %7458 = vmatpush1.msra.mxu0 0.0
      %7459 = vmatprep.subr.mxu0 0.0
      %7460 = vmatpush1.msra.mxu0 0.0
      %7461 = vmatprep.subr.mxu0 0.0
      %7462 = vmatpush1.msra.mxu0 0.0
      %7463 = vmatprep.subr.mxu0 0.0
      %7464 = vmatpush1.msra.mxu0 0.0
      %7465 = vmatprep.subr.mxu0 0.0
      %7466 = vmatpush1.msra.mxu0 0.0
      %7467 = vmatprep.subr.mxu0 0.0
      %7468 = vmatpush1.msra.mxu0 0.0
      %7469 = vmatprep.subr.mxu0 0.0
      %7470 = vmatpush1.msra.mxu0 0.0
      %7471 = vmatprep.subr.mxu0 0.0
      %7472 = vmatpush1.msra.mxu0 0.0
      %7473 = vmatprep.subr.mxu0 0.0
      %7474 = vmatpush1.msra.mxu0 0.0
      %7475 = vmatprep.subr.mxu0 0.0
      %7476 = vmatpush1.msra.mxu0 0.0
      %7477 = vmatprep.subr.mxu0 0.0
      %7478 = vmatpush1.msra.mxu0 0.0
      %7479 = vmatprep.subr.mxu0 0.0
      %7480 = vmatpush1.msra.mxu0 0.0
      %7481 = vmatprep.subr.mxu0 0.0
      %7482 = vmatpush1.msra.mxu0 0.0
      %7483 = vmatprep.subr.mxu0 0.0
      %7484 = vmatpush1.msra.mxu0 0.0
      %7485 = vmatprep.subr.mxu0 0.0
      %7486 = vmatpush1.msra.mxu0 0.0
      %7487 = vmatprep.subr.mxu0 0.0
      %7488 = vmatpush1.msra.mxu0 0.0
      %7489 = vmatprep.mubr.f32.mxu0 0.0
      %7490 = vmatmul.mubr.f32.gmra.mrb[0].mxu0 %v6729
      %v7491 = vpop.f32.mrb[0].mxu0
      %v7492 = vadd.f32 0.0, %v7491
      %v7493 = vpop.f32.mrb[0].mxu0
      %7494 = vmatprep.mubr.f32.mxu0 0.0
      %7495 = vmatmul.mubr.f32.gmra.mrb[0].mxu0 %v6732
      %v7496 = vpop.f32.mrb[0].mxu0
      %v7497 = vadd.f32 0.0, %v7496
      %v7498 = vpop.f32.mrb[0].mxu0
      %7499 = vmatprep.mubr.f32.mxu0 0.0
      %7500 = vmatmul.mubr.f32.gmra.mrb[0].mxu0 %v6735
      %v7501 = vpop.f32.mrb[0].mxu0
      %v7502 = vadd.f32 0.0, %v7501
      %v7503 = vpop.f32.mrb[0].mxu0
      %7504 = vmatprep.mubr.f32.mxu0 0.0
      %7505 = vmatmul.mubr.f32.gmra.mrb[0].mxu0 %v6738
      %v7506 = vpop.f32.mrb[0].mxu0
      %v7507 = vadd.f32 0.0, %v7506
      %v7508 = vpop.f32.mrb[0].mxu0
      %7509 = vdwg.mxu0
      %7510 = vset.pattern.permute.xlu0 3
      %7511 = vperm.xlu0 %7510, %v6178
      %v7512 = vpop.permute.xlu0 %7511
      %7514 = vset.pattern.permute.xlu0 3
      %7515 = vperm.xlu0 %7514, %v6179
      %v7516 = vpop.permute.xlu0 %7515
      %7518 = vset.pattern.permute.xlu0 3
      %7519 = vperm.xlu0 %7518, %v6180
      %v7520 = vpop.permute.xlu0 %7519
      %7522 = vset.pattern.permute.xlu0 3
      %7523 = vperm.xlu0 %7522, %v6181
      %v7524 = vpop.permute.xlu0 %7523
      %v7526 = vmul.f32 %v7492, %v7512
      %v7527 = vmul.f32 %v7497, %v7516
      %v7528 = vmul.f32 %v7502, %v7520
      %v7529 = vmul.f32 %v7507, %v7524
      %v7530 = vadd.f32 %v7526, %v6355
      %v7531 = vadd.f32 %v7527, %v6360
      %v7532 = vadd.f32 %v7528, %v6365
      %v7533 = vadd.f32 %v7529, %v6370
      %7534 = vst.msk [vmem:[%s1039] sm:$0xff] %vm2299, %v7530
      %7535 = vst.msk [vmem:[%s1039 + $0x8] sm:$0xff] %vm2299, %v7531
      %7536 = vst.msk [vmem:[%s1039 + $0x10] sm:$0xff] %vm2299, %v7532
      %7537 = vst.msk [vmem:[%s1039 + $0x18] sm:$0xff] %vm2299, %v7533
      %p7538 = scmp.lt.s32.totalorder %s80, 1
      %s7539 = scalar_select %p7538, %s80, 1
      %s7540 = smul.addr %s7539, 4
      %s7541 = smul.addr %s7540, 8
      %s7542 = scalar_lea.vmem %s69, %s7541
      // Predicated region
      $region157: #{sagcn_forward.1} parent=155 // pred_check
        %p7543 = pneg %p817
      $region158: #{sagcn_forward.1} parent=155 // pred_check_branch
        %7545 = sbr.rel (%p7543) target = $region160
      $region159: #{sagcn_forward.1} parent=155 // pred_region
        _
      $region160: #{sagcn_forward.1} parent=155 // pred_fallthru
        _
    $region156: #{sagcn_forward.1} parent=5 // pred_fallthru
      _
    %p7546 = scmp.le.s32.totalorder 2, %s75
    // Predicated region
    $region161: #{sagcn_forward.1} parent=5 // pred_check
      %p7547 = pneg %p7546
    $region162: #{sagcn_forward.1} parent=5 // pred_check_branch
      %7549 = sbr.rel (%p7547) target = $region164
    $region163: #{sagcn_forward.1} parent=5 // pred_region
      %s7550 = ssub.s32 %s75, 2
      // Predicated region
      $region165: #{sagcn_forward.1} parent=163 // pred_check
        %p7551 = pneg %p823
      $region166: #{sagcn_forward.1} parent=163 // pred_check_branch
        %7553 = sbr.rel (%p7551) target = $region168
      $region167: #{sagcn_forward.1} parent=163 // pred_region
        %p7554 = scmp.lt.s32.totalorder %s81, 1
        %s7555 = scalar_select %p7554, %s81, 1
        %s7556 = smul.addr %s7555, 4
        %s7557 = smul.addr %s7556, 8
        %s7558 = scalar_lea.vmem %s69, %s7557
      $region168: #{sagcn_forward.1} parent=163 // pred_fallthru
        _
    $region164: #{sagcn_forward.1} parent=5 // pred_fallthru
      _
  $region6: #{sagcn_forward.1} parent=0 // loop_footer
    %s79 = sadd.s32 1, %s75
  $region7: #{sagcn_forward.1} parent=0 // loop_footer_branch
    %74 = sbr.rel target = $region3
  $region8: #{sagcn_forward.1} parent=0 // loop_exit
    _

</llo_original>
